<compile_context>
chip_gen: v5e
topology: v5e:2x2
jax: 0.10.0
libtpu: 0.0.40
codegen_flags: <defaults>
</compile_context>

<pallas_src>
from functools import partial

import jax
import jax.numpy as jnp
from jax.experimental import pallas as pl
from jax.experimental.pallas import tpu as pltpu  # noqa: F401  (kept for memory-space/compiler-param use)

_EPS = 1e-5


# ---------------------------------------------------------------------------
# In-kernel helpers (operate on values, not refs)
# ---------------------------------------------------------------------------

def _bn_relu(x, gamma, beta, eps):
    """Training-mode BatchNorm1d + ReLU over rows. x:(R,C), gamma/beta:(1,C)."""
    mean = jnp.mean(x, axis=0, keepdims=True)
    var = jnp.mean(jnp.square(x - mean), axis=0, keepdims=True)
    y = (x - mean) * jax.lax.rsqrt(var + eps)
    return jnp.maximum(y * gamma + beta, 0.0)


def _store_batched_max(out_ref, x, bs, n):
    """Per-batch max over the point axis of row-major (bs*n, C); write (bs, C)."""
    for b in range(bs):
        out_ref[b:b + 1, :] = jnp.max(x[b * n:(b + 1) * n, :], axis=0, keepdims=True)


def _batched_bcast(g, bs, n):
    """Broadcast per-batch rows (bs, C) to row-major (bs*n, C)."""
    c = g.shape[1]
    pieces = [jnp.broadcast_to(g[b:b + 1, :], (n, c)) for b in range(bs)]
    return pieces[0] if bs == 1 else jnp.concatenate(pieces, axis=0)


# ---------------------------------------------------------------------------
# Pallas kernels
# ---------------------------------------------------------------------------

def _pcn_stage1_kernel(x_ref, w11_ref, b11_ref, bn1g_ref, bn1b_ref,
                       w12_ref, b12_ref, h_ref, gmax_ref, *, bs, n, eps):
    # Conv1d(3,128,1) + BN(128) + ReLU + Conv1d(128,256,1) + per-batch max, fused.
    h1 = jnp.dot(x_ref[...], w11_ref[...],
                 preferred_element_type=jnp.float32) + b11_ref[...]
    h1 = _bn_relu(h1, bn1g_ref[...], bn1b_ref[...], eps)
    h2 = jnp.dot(h1, w12_ref[...],
                 preferred_element_type=jnp.float32) + b12_ref[...]
    h_ref[...] = h2                                  # per-point features (R, 256)
    _store_batched_max(gmax_ref, h2, bs, n)          # global features   (bs, 256)


def _pcn_stage2_kernel(h_ref, g_ref, wg_ref, wh_ref, b21_ref, bn2g_ref, bn2b_ref,
                       w22_ref, b22_ref, out_ref, *, bs, n, eps):
    # Conv1d(512,512,1) on cat([global, per-point], dim=channel) done as a
    # split-weight matmul, then BN(512)+ReLU, Conv1d(512,L,1), per-batch max.
    yg = jnp.dot(g_ref[...], wg_ref[...],
                 preferred_element_type=jnp.float32)          # (bs, 512)
    yh = jnp.dot(h_ref[...], wh_ref[...],
                 preferred_element_type=jnp.float32)          # (R, 512)
    y = yh + _batched_bcast(yg, bs, n) + b21_ref[...]
    y = _bn_relu(y, bn2g_ref[...], bn2b_ref[...], eps)
    z = jnp.dot(y, w22_ref[...],
                preferred_element_type=jnp.float32) + b22_ref[...]   # (R, L)
    _store_batched_max(out_ref, z, bs, n)                            # (bs, L)


def _feature_transform_kernel(x_ref,
                              m1w, m1b, bn1g, bn1b,
                              m2w, m2b, bn2g, bn2b,
                              m3w, m3b,
                              c1w, c1b, cbng, cbnb,
                              c2w, c2b, out_ref, *, eps):
    # Whole FeatureTransform.transform_x layer in one kernel:
    #   h = mlp(x) ; out = h + correction(h)
    def lin(v, w, b):
        return jnp.dot(v, w[...], preferred_element_type=jnp.float32) + b[...]

    h = _bn_relu(lin(x_ref[...], m1w, m1b), bn1g[...], bn1b[...], eps)
    h = _bn_relu(lin(h, m2w, m2b), bn2g[...], bn2b[...], eps)
    h = lin(h, m3w, m3b)
    c = _bn_relu(lin(h, c1w, c1b), cbng[...], cbnb[...], eps)
    out_ref[...] = h + lin(c, c2w, c2b)              # fused residual add


# ---------------------------------------------------------------------------
# Module wrappers (glue in plain JAX)
# ---------------------------------------------------------------------------

def pcn_forward(p, x):
    """PCN encoder. x: (bs, n, 3) -> (bs, latent)."""
    bs, n, _ = x.shape
    R = bs * n
    latent = p["c22_w"].shape[1]
    # pad K from 3 -> 8 for sublane alignment (weight rows 3..7 are zero)
    xf = jnp.pad(x.reshape(R, 3), ((0, 0), (0, 5)))

    h, g = pl.pallas_call(
        partial(_pcn_stage1_kernel, bs=bs, n=n, eps=_EPS),
        out_shape=(jax.ShapeDtypeStruct((R, 256), jnp.float32),
                   jax.ShapeDtypeStruct((bs, 256), jnp.float32)),
    )(xf, p["c11_w"], p["c11_b"], p["bn1_g"], p["bn1_b"],
      p["c12_w"], p["c12_b"])

    return pl.pallas_call(
        partial(_pcn_stage2_kernel, bs=bs, n=n, eps=_EPS),
        out_shape=jax.ShapeDtypeStruct((bs, latent), jnp.float32),
    )(h, g, p["c21_wg"], p["c21_wh"], p["c21_b"],
      p["bn2_g"], p["bn2_b"], p["c22_w"], p["c22_b"])


def feature_transform_x(p, x):
    """FeatureTransform.transform_x: one fused pallas_call per layer."""
    return pl.pallas_call(
        partial(_feature_transform_kernel, eps=_EPS),
        out_shape=jax.ShapeDtypeStruct(x.shape, jnp.float32),
    )(x,
      p["m1_w"], p["m1_b"], p["mbn1_g"], p["mbn1_b"],
      p["m2_w"], p["m2_b"], p["mbn2_g"], p["mbn2_b"],
      p["m3_w"], p["m3_b"],
      p["c1_w"], p["c1_b"], p["cbn_g"], p["cbn_b"],
      p["c2_w"], p["c2_b"])


def mfm_forward(params, x):
    latent = pcn_forward(params["pcn"], x)
    for lp in params["layers"]:
        latent = feature_transform_x(lp, latent)
    # TODO(synk): AttentionDecoder definition not provided; return final latent.
    return latent


# ---------------------------------------------------------------------------
# Deterministic parameter construction (all layout massaging hoisted here)
# ---------------------------------------------------------------------------

def _init_linear(key, fan_in, fan_out):
    kw, kb = jax.random.split(key)
    s = 1.0 / jnp.sqrt(jnp.float32(fan_in))
    w = jax.random.uniform(kw, (fan_in, fan_out), jnp.float32, -s, s)
    b = jax.random.uniform(kb, (1, fan_out), jnp.float32, -s, s)
    return w, b


def _bn_params(c):
    return jnp.ones((1, c), jnp.float32), jnp.zeros((1, c), jnp.float32)


def build_params(key, latent_dim, layers):
    keys = iter(jax.random.split(key, 64))
    pcn = {}
    w11, pcn["c11_b"] = _init_linear(next(keys), 3, 128)
    pcn["c11_w"] = jnp.zeros((8, 128), jnp.float32).at[:3].set(w11)   # K padded 3->8
    pcn["bn1_g"], pcn["bn1_b"] = _bn_params(128)
    pcn["c12_w"], pcn["c12_b"] = _init_linear(next(keys), 128, 256)
    w21, pcn["c21_b"] = _init_linear(next(keys), 512, 512)
    pcn["c21_wg"] = w21[:256]    # weight rows hit by the expanded global feature
    pcn["c21_wh"] = w21[256:]    # weight rows hit by the per-point feature
    pcn["bn2_g"], pcn["bn2_b"] = _bn_params(512)
    pcn["c22_w"], pcn["c22_b"] = _init_linear(next(keys), 512, latent_dim)

    layer_params = []
    for _ in range(layers):
        lp = {}
        lp["m1_w"], lp["m1_b"] = _init_linear(next(keys), latent_dim, latent_dim)
        lp["mbn1_g"], lp["mbn1_b"] = _bn_params(latent_dim)
        lp["m2_w"], lp["m2_b"] = _init_linear(next(keys), latent_dim, latent_dim)
        lp["mbn2_g"], lp["mbn2_b"] = _bn_params(latent_dim)
        lp["m3_w"], lp["m3_b"] = _init_linear(next(keys), latent_dim, latent_dim)
        lp["c1_w"], lp["c1_b"] = _init_linear(next(keys), latent_dim, latent_dim)
        lp["cbn_g"], lp["cbn_b"] = _bn_params(latent_dim)
        lp["c2_w"], lp["c2_b"] = _init_linear(next(keys), latent_dim, latent_dim)
        layer_params.append(lp)

    return {"pcn": pcn, "layers": layer_params}


# ---------------------------------------------------------------------------

if __name__ == "__main__":
    latent_dim = 256
    num_layers = 2
    bs, n_points = 2, 128

    key = jax.random.PRNGKey(0)
    k_params, k_x = jax.random.split(key)
    params = build_params(k_params, latent_dim, num_layers)
    x = jax.random.normal(k_x, (bs, n_points, 3), dtype=jnp.float32)

    fwd = jax.jit(mfm_forward)
    out = jax.block_until_ready(fwd(params, x))
    assert out.shape == (bs, latent_dim), out.shape
    assert bool(jnp.all(jnp.isfinite(out)))
    print("KERNEL_OK")
</pallas_src>

<mosaic_0001>
module attributes {stable_mosaic.version = 11 : i64} {
  func.func @_pcn_stage1_kernel(%arg0: memref<256x8xf32, #tpu.memory_space<vmem>>, %arg1: memref<8x128xf32, #tpu.memory_space<vmem>>, %arg2: memref<1x128xf32, #tpu.memory_space<vmem>>, %arg3: memref<1x128xf32, #tpu.memory_space<vmem>>, %arg4: memref<1x128xf32, #tpu.memory_space<vmem>>, %arg5: memref<128x256xf32, #tpu.memory_space<vmem>>, %arg6: memref<1x256xf32, #tpu.memory_space<vmem>>, %arg7: memref<256x256xf32, #tpu.memory_space<vmem>>, %arg8: memref<2x256xf32, #tpu.memory_space<vmem>>) attributes {dimension_semantics = [], scalar_prefetch = 0 : i64, scratch_operands = 0 : i64, tpu.core_type = #tpu.core_type<tc>} {
    %c0 = arith.constant 0 : index
    %c0_0 = arith.constant 0 : index
    %0 = vector.load %arg0[%c0, %c0_0] : memref<256x8xf32, #tpu.memory_space<vmem>>, vector<256x8xf32>
    %c0_1 = arith.constant 0 : index
    %c0_2 = arith.constant 0 : index
    %1 = vector.load %arg1[%c0_1, %c0_2] : memref<8x128xf32, #tpu.memory_space<vmem>>, vector<8x128xf32>
    %cst = arith.constant dense<0.000000e+00> : vector<256x128xf32>
    %2 = tpu.matmul %0, %1, %cst {dimension_numbers = #tpu.dot_dimension_numbers<[1], [0], [0], [1], [0, 0, 1, 1], [], []>} : vector<256x8xf32>, vector<8x128xf32>, vector<256x128xf32> -> vector<256x128xf32>
    %c0_3 = arith.constant 0 : index
    %c0_4 = arith.constant 0 : index
    %3 = vector.load %arg2[%c0_3, %c0_4] : memref<1x128xf32, #tpu.memory_space<vmem>>, vector<1x128xf32>
    %4 = vector.broadcast %3 : vector<1x128xf32> to vector<256x128xf32>
    %5 = arith.addf %2, %4 : vector<256x128xf32>
    %c0_5 = arith.constant 0 : index
    %c0_6 = arith.constant 0 : index
    %6 = vector.load %arg3[%c0_5, %c0_6] : memref<1x128xf32, #tpu.memory_space<vmem>>, vector<1x128xf32>
    %c0_7 = arith.constant 0 : index
    %c0_8 = arith.constant 0 : index
    %7 = vector.load %arg4[%c0_7, %c0_8] : memref<1x128xf32, #tpu.memory_space<vmem>>, vector<1x128xf32>
    %cst_9 = arith.constant dense<0.000000e+00> : vector<128xf32>
    %8 = vector.multi_reduction <add>, %5, %cst_9 [0] : vector<256x128xf32> to vector<128xf32>
    %9 = vector.shape_cast %8 : vector<128xf32> to vector<1x128xf32>
    %cst_10 = arith.constant 2.560000e+02 : f32
    %10 = vector.broadcast %cst_10 : f32 to vector<1x128xf32>
    %11 = arith.divf %9, %10 : vector<1x128xf32>
    %12 = vector.broadcast %11 : vector<1x128xf32> to vector<256x128xf32>
    %13 = arith.subf %5, %12 : vector<256x128xf32>
    %14 = arith.mulf %13, %13 : vector<256x128xf32>
    %cst_11 = arith.constant dense<0.000000e+00> : vector<128xf32>
    %15 = vector.multi_reduction <add>, %14, %cst_11 [0] : vector<256x128xf32> to vector<128xf32>
    %16 = vector.shape_cast %15 : vector<128xf32> to vector<1x128xf32>
    %cst_12 = arith.constant 2.560000e+02 : f32
    %17 = vector.broadcast %cst_12 : f32 to vector<1x128xf32>
    %18 = arith.divf %16, %17 : vector<1x128xf32>
    %19 = vector.broadcast %11 : vector<1x128xf32> to vector<256x128xf32>
    %20 = arith.subf %5, %19 : vector<256x128xf32>
    %cst_13 = arith.constant 9.99999974E-6 : f32
    %21 = vector.broadcast %cst_13 : f32 to vector<1x128xf32>
    %22 = arith.addf %18, %21 : vector<1x128xf32>
    %23 = math.rsqrt %22 : vector<1x128xf32>
    %24 = vector.broadcast %23 : vector<1x128xf32> to vector<256x128xf32>
    %25 = arith.mulf %20, %24 : vector<256x128xf32>
    %26 = vector.broadcast %6 : vector<1x128xf32> to vector<256x128xf32>
    %27 = arith.mulf %25, %26 : vector<256x128xf32>
    %28 = vector.broadcast %7 : vector<1x128xf32> to vector<256x128xf32>
    %29 = arith.addf %27, %28 : vector<256x128xf32>
    %cst_14 = arith.constant 0.000000e+00 : f32
    %30 = vector.broadcast %cst_14 : f32 to vector<256x128xf32>
    %31 = arith.maximumf %29, %30 : vector<256x128xf32>
    %c0_15 = arith.constant 0 : index
    %c0_16 = arith.constant 0 : index
    %32 = vector.load %arg5[%c0_15, %c0_16] : memref<128x256xf32, #tpu.memory_space<vmem>>, vector<128x256xf32>
    %cst_17 = arith.constant dense<0.000000e+00> : vector<256x256xf32>
    %33 = tpu.matmul %31, %32, %cst_17 {dimension_numbers = #tpu.dot_dimension_numbers<[1], [0], [0], [1], [0, 0, 1, 1], [], []>} : vector<256x128xf32>, vector<128x256xf32>, vector<256x256xf32> -> vector<256x256xf32>
    %c0_18 = arith.constant 0 : index
    %c0_19 = arith.constant 0 : index
    %34 = vector.load %arg6[%c0_18, %c0_19] : memref<1x256xf32, #tpu.memory_space<vmem>>, vector<1x256xf32>
    %35 = vector.broadcast %34 : vector<1x256xf32> to vector<256x256xf32>
    %36 = arith.addf %33, %35 : vector<256x256xf32>
    %c0_20 = arith.constant 0 : index
    %c0_21 = arith.constant 0 : index
    %37 = vector.load %arg7[%c0_20, %c0_21] : memref<256x256xf32, #tpu.memory_space<vmem>>, vector<256x256xf32>
    tpu.vector_store %arg7[%c0_20, %c0_21], %36 {strides = array<i32>} : memref<256x256xf32, #tpu.memory_space<vmem>>, vector<256x256xf32>,
    %38 = vector.extract_strided_slice %36 {offsets = [0, 0], sizes = [128, 256], strides = [1, 1]} : vector<256x256xf32> to vector<128x256xf32>
    %cst_22 = arith.constant dense<0xFF800000> : vector<256xf32>
    %39 = vector.multi_reduction <maximumf>, %38, %cst_22 [0] : vector<128x256xf32> to vector<256xf32>
    %40 = vector.shape_cast %39 : vector<256xf32> to vector<1x256xf32>
    %c0_23 = arith.constant 0 : index
    %c0_24 = arith.constant 0 : index
    %41 = vector.load %arg8[%c0_23, %c0_24] : memref<2x256xf32, #tpu.memory_space<vmem>>, vector<1x256xf32>
    tpu.vector_store %arg8[%c0_23, %c0_24], %40 {strides = array<i32>} : memref<2x256xf32, #tpu.memory_space<vmem>>, vector<1x256xf32>,
    %42 = vector.extract_strided_slice %36 {offsets = [128, 0], sizes = [128, 256], strides = [1, 1]} : vector<256x256xf32> to vector<128x256xf32>
    %cst_25 = arith.constant dense<0xFF800000> : vector<256xf32>
    %43 = vector.multi_reduction <maximumf>, %42, %cst_25 [0] : vector<128x256xf32> to vector<256xf32>
    %44 = vector.shape_cast %43 : vector<256xf32> to vector<1x256xf32>
    %c1 = arith.constant 1 : index
    %c0_26 = arith.constant 0 : index
    %45 = vector.load %arg8[%c1, %c0_26] : memref<2x256xf32, #tpu.memory_space<vmem>>, vector<1x256xf32>
    tpu.vector_store %arg8[%c1, %c0_26], %44 {strides = array<i32>} : memref<2x256xf32, #tpu.memory_space<vmem>>, vector<1x256xf32>,
    return
  }
}

module attributes {stable_mosaic.version = 11 : i64} {
  func.func @_pcn_stage2_kernel(%arg0: memref<256x256xf32, #tpu.memory_space<vmem>>, %arg1: memref<2x256xf32, #tpu.memory_space<vmem>>, %arg2: memref<256x512xf32, #tpu.memory_space<vmem>>, %arg3: memref<256x512xf32, #tpu.memory_space<vmem>>, %arg4: memref<1x512xf32, #tpu.memory_space<vmem>>, %arg5: memref<1x512xf32, #tpu.memory_space<vmem>>, %arg6: memref<1x512xf32, #tpu.memory_space<vmem>>, %arg7: memref<512x256xf32, #tpu.memory_space<vmem>>, %arg8: memref<1x256xf32, #tpu.memory_space<vmem>>, %arg9: memref<2x256xf32, #tpu.memory_space<vmem>>) attributes {dimension_semantics = [], scalar_prefetch = 0 : i64, scratch_operands = 0 : i64, tpu.core_type = #tpu.core_type<tc>} {
    %c0 = arith.constant 0 : index
    %c0_0 = arith.constant 0 : index
    %0 = vector.load %arg1[%c0, %c0_0] : memref<2x256xf32, #tpu.memory_space<vmem>>, vector<2x256xf32>
    %c0_1 = arith.constant 0 : index
    %c0_2 = arith.constant 0 : index
    %1 = vector.load %arg2[%c0_1, %c0_2] : memref<256x512xf32, #tpu.memory_space<vmem>>, vector<256x512xf32>
    %cst = arith.constant dense<0.000000e+00> : vector<2x512xf32>
    %2 = tpu.matmul %0, %1, %cst {dimension_numbers = #tpu.dot_dimension_numbers<[1], [0], [0], [1], [0, 0, 1, 1], [], []>} : vector<2x256xf32>, vector<256x512xf32>, vector<2x512xf32> -> vector<2x512xf32>
    %c0_3 = arith.constant 0 : index
    %c0_4 = arith.constant 0 : index
    %3 = vector.load %arg0[%c0_3, %c0_4] : memref<256x256xf32, #tpu.memory_space<vmem>>, vector<256x256xf32>
    %c0_5 = arith.constant 0 : index
    %c0_6 = arith.constant 0 : index
    %4 = vector.load %arg3[%c0_5, %c0_6] : memref<256x512xf32, #tpu.memory_space<vmem>>, vector<256x512xf32>
    %cst_7 = arith.constant dense<0.000000e+00> : vector<256x512xf32>
    %5 = tpu.matmul %3, %4, %cst_7 {dimension_numbers = #tpu.dot_dimension_numbers<[1], [0], [0], [1], [0, 0, 1, 1], [], []>} : vector<256x256xf32>, vector<256x512xf32>, vector<256x512xf32> -> vector<256x512xf32>
    %6 = vector.extract_strided_slice %2 {offsets = [0, 0], sizes = [1, 512], strides = [1, 1]} : vector<2x512xf32> to vector<1x512xf32>
    %7 = vector.shape_cast %6 : vector<1x512xf32> to vector<1x512xf32>
    %8 = vector.broadcast %7 : vector<1x512xf32> to vector<128x512xf32>
    %9 = vector.extract_strided_slice %2 {offsets = [1, 0], sizes = [1, 512], strides = [1, 1]} : vector<2x512xf32> to vector<1x512xf32>
    %10 = vector.shape_cast %9 : vector<1x512xf32> to vector<1x512xf32>
    %11 = vector.broadcast %10 : vector<1x512xf32> to vector<128x512xf32>
    %12 = tpu.concatenate %8, %11 in 0 : vector<128x512xf32>, vector<128x512xf32> -> vector<256x512xf32>
    %13 = arith.addf %5, %12 : vector<256x512xf32>
    %c0_8 = arith.constant 0 : index
    %c0_9 = arith.constant 0 : index
    %14 = vector.load %arg4[%c0_8, %c0_9] : memref<1x512xf32, #tpu.memory_space<vmem>>, vector<1x512xf32>
    %15 = vector.broadcast %14 : vector<1x512xf32> to vector<256x512xf32>
    %16 = arith.addf %13, %15 : vector<256x512xf32>
    %c0_10 = arith.constant 0 : index
    %c0_11 = arith.constant 0 : index
    %17 = vector.load %arg5[%c0_10, %c0_11] : memref<1x512xf32, #tpu.memory_space<vmem>>, vector<1x512xf32>
    %c0_12 = arith.constant 0 : index
    %c0_13 = arith.constant 0 : index
    %18 = vector.load %arg6[%c0_12, %c0_13] : memref<1x512xf32, #tpu.memory_space<vmem>>, vector<1x512xf32>
    %cst_14 = arith.constant dense<0.000000e+00> : vector<512xf32>
    %19 = vector.multi_reduction <add>, %16, %cst_14 [0] : vector<256x512xf32> to vector<512xf32>
    %20 = vector.shape_cast %19 : vector<512xf32> to vector<1x512xf32>
    %cst_15 = arith.constant 2.560000e+02 : f32
    %21 = vector.broadcast %cst_15 : f32 to vector<1x512xf32>
    %22 = arith.divf %20, %21 : vector<1x512xf32>
    %23 = vector.broadcast %22 : vector<1x512xf32> to vector<256x512xf32>
    %24 = arith.subf %16, %23 : vector<256x512xf32>
    %25 = arith.mulf %24, %24 : vector<256x512xf32>
    %cst_16 = arith.constant dense<0.000000e+00> : vector<512xf32>
    %26 = vector.multi_reduction <add>, %25, %cst_16 [0] : vector<256x512xf32> to vector<512xf32>
    %27 = vector.shape_cast %26 : vector<512xf32> to vector<1x512xf32>
    %cst_17 = arith.constant 2.560000e+02 : f32
    %28 = vector.broadcast %cst_17 : f32 to vector<1x512xf32>
    %29 = arith.divf %27, %28 : vector<1x512xf32>
    %30 = vector.broadcast %22 : vector<1x512xf32> to vector<256x512xf32>
    %31 = arith.subf %16, %30 : vector<256x512xf32>
    %cst_18 = arith.constant 9.99999974E-6 : f32
    %32 = vector.broadcast %cst_18 : f32 to vector<1x512xf32>
    %33 = arith.addf %29, %32 : vector<1x512xf32>
    %34 = math.rsqrt %33 : vector<1x512xf32>
    %35 = vector.broadcast %34 : vector<1x512xf32> to vector<256x512xf32>
    %36 = arith.mulf %31, %35 : vector<256x512xf32>
    %37 = vector.broadcast %17 : vector<1x512xf32> to vector<256x512xf32>
    %38 = arith.mulf %36, %37 : vector<256x512xf32>
    %39 = vector.broadcast %18 : vector<1x512xf32> to vector<256x512xf32>
    %40 = arith.addf %38, %39 : vector<256x512xf32>
    %cst_19 = arith.constant 0.000000e+00 : f32
    %41 = vector.broadcast %cst_19 : f32 to vector<256x512xf32>
    %42 = arith.maximumf %40, %41 : vector<256x512xf32>
    %c0_20 = arith.constant 0 : index
    %c0_21 = arith.constant 0 : index
    %43 = vector.load %arg7[%c0_20, %c0_21] : memref<512x256xf32, #tpu.memory_space<vmem>>, vector<512x256xf32>
    %cst_22 = arith.constant dense<0.000000e+00> : vector<256x256xf32>
    %44 = tpu.matmul %42, %43, %cst_22 {dimension_numbers = #tpu.dot_dimension_numbers<[1], [0], [0], [1], [0, 0, 1, 1], [], []>} : vector<256x512xf32>, vector<512x256xf32>, vector<256x256xf32> -> vector<256x256xf32>
    %c0_23 = arith.constant 0 : index
    %c0_24 = arith.constant 0 : index
    %45 = vector.load %arg8[%c0_23, %c0_24] : memref<1x256xf32, #tpu.memory_space<vmem>>, vector<1x256xf32>
    %46 = vector.broadcast %45 : vector<1x256xf32> to vector<256x256xf32>
    %47 = arith.addf %44, %46 : vector<256x256xf32>
    %48 = vector.extract_strided_slice %47 {offsets = [0, 0], sizes = [128, 256], strides = [1, 1]} : vector<256x256xf32> to vector<128x256xf32>
    %cst_25 = arith.constant dense<0xFF800000> : vector<256xf32>
    %49 = vector.multi_reduction <maximumf>, %48, %cst_25 [0] : vector<128x256xf32> to vector<256xf32>
    %50 = vector.shape_cast %49 : vector<256xf32> to vector<1x256xf32>
    %c0_26 = arith.constant 0 : index
    %c0_27 = arith.constant 0 : index
    %51 = vector.load %arg9[%c0_26, %c0_27] : memref<2x256xf32, #tpu.memory_space<vmem>>, vector<1x256xf32>
    tpu.vector_store %arg9[%c0_26, %c0_27], %50 {strides = array<i32>} : memref<2x256xf32, #tpu.memory_space<vmem>>, vector<1x256xf32>,
    %52 = vector.extract_strided_slice %47 {offsets = [128, 0], sizes = [128, 256], strides = [1, 1]} : vector<256x256xf32> to vector<128x256xf32>
    %cst_28 = arith.constant dense<0xFF800000> : vector<256xf32>
    %53 = vector.multi_reduction <maximumf>, %52, %cst_28 [0] : vector<128x256xf32> to vector<256xf32>
    %54 = vector.shape_cast %53 : vector<256xf32> to vector<1x256xf32>
    %c1 = arith.constant 1 : index
    %c0_29 = arith.constant 0 : index
    %55 = vector.load %arg9[%c1, %c0_29] : memref<2x256xf32, #tpu.memory_space<vmem>>, vector<1x256xf32>
    tpu.vector_store %arg9[%c1, %c0_29], %54 {strides = array<i32>} : memref<2x256xf32, #tpu.memory_space<vmem>>, vector<1x256xf32>,
    return
  }
}

module attributes {stable_mosaic.version = 11 : i64} {
  func.func @_feature_transform_kernel(%arg0: memref<2x256xf32, #tpu.memory_space<vmem>>, %arg1: memref<256x256xf32, #tpu.memory_space<vmem>>, %arg2: memref<1x256xf32, #tpu.memory_space<vmem>>, %arg3: memref<1x256xf32, #tpu.memory_space<vmem>>, %arg4: memref<1x256xf32, #tpu.memory_space<vmem>>, %arg5: memref<256x256xf32, #tpu.memory_space<vmem>>, %arg6: memref<1x256xf32, #tpu.memory_space<vmem>>, %arg7: memref<1x256xf32, #tpu.memory_space<vmem>>, %arg8: memref<1x256xf32, #tpu.memory_space<vmem>>, %arg9: memref<256x256xf32, #tpu.memory_space<vmem>>, %arg10: memref<1x256xf32, #tpu.memory_space<vmem>>, %arg11: memref<256x256xf32, #tpu.memory_space<vmem>>, %arg12: memref<1x256xf32, #tpu.memory_space<vmem>>, %arg13: memref<1x256xf32, #tpu.memory_space<vmem>>, %arg14: memref<1x256xf32, #tpu.memory_space<vmem>>, %arg15: memref<256x256xf32, #tpu.memory_space<vmem>>, %arg16: memref<1x256xf32, #tpu.memory_space<vmem>>, %arg17: memref<2x256xf32, #tpu.memory_space<vmem>>) attributes {dimension_semantics = [], scalar_prefetch = 0 : i64, scratch_operands = 0 : i64, tpu.core_type = #tpu.core_type<tc>} {
    %c0 = arith.constant 0 : index
    %c0_0 = arith.constant 0 : index
    %0 = vector.load %arg0[%c0, %c0_0] : memref<2x256xf32, #tpu.memory_space<vmem>>, vector<2x256xf32>
    %c0_1 = arith.constant 0 : index
    %c0_2 = arith.constant 0 : index
    %1 = vector.load %arg1[%c0_1, %c0_2] : memref<256x256xf32, #tpu.memory_space<vmem>>, vector<256x256xf32>
    %cst = arith.constant dense<0.000000e+00> : vector<2x256xf32>
    %2 = tpu.matmul %0, %1, %cst {dimension_numbers = #tpu.dot_dimension_numbers<[1], [0], [0], [1], [0, 0, 1, 1], [], []>} : vector<2x256xf32>, vector<256x256xf32>, vector<2x256xf32> -> vector<2x256xf32>
    %c0_3 = arith.constant 0 : index
    %c0_4 = arith.constant 0 : index
    %3 = vector.load %arg2[%c0_3, %c0_4] : memref<1x256xf32, #tpu.memory_space<vmem>>, vector<1x256xf32>
    %4 = vector.broadcast %3 : vector<1x256xf32> to vector<2x256xf32>
    %5 = arith.addf %2, %4 : vector<2x256xf32>
    %c0_5 = arith.constant 0 : index
    %c0_6 = arith.constant 0 : index
    %6 = vector.load %arg3[%c0_5, %c0_6] : memref<1x256xf32, #tpu.memory_space<vmem>>, vector<1x256xf32>
    %c0_7 = arith.constant 0 : index
    %c0_8 = arith.constant 0 : index
    %7 = vector.load %arg4[%c0_7, %c0_8] : memref<1x256xf32, #tpu.memory_space<vmem>>, vector<1x256xf32>
    %cst_9 = arith.constant dense<0.000000e+00> : vector<256xf32>
    %8 = vector.multi_reduction <add>, %5, %cst_9 [0] : vector<2x256xf32> to vector<256xf32>
    %9 = vector.shape_cast %8 : vector<256xf32> to vector<1x256xf32>
    %cst_10 = arith.constant 2.000000e+00 : f32
    %10 = vector.broadcast %cst_10 : f32 to vector<1x256xf32>
    %11 = arith.divf %9, %10 : vector<1x256xf32>
    %12 = vector.broadcast %11 : vector<1x256xf32> to vector<2x256xf32>
    %13 = arith.subf %5, %12 : vector<2x256xf32>
    %14 = arith.mulf %13, %13 : vector<2x256xf32>
    %cst_11 = arith.constant dense<0.000000e+00> : vector<256xf32>
    %15 = vector.multi_reduction <add>, %14, %cst_11 [0] : vector<2x256xf32> to vector<256xf32>
    %16 = vector.shape_cast %15 : vector<256xf32> to vector<1x256xf32>
    %cst_12 = arith.constant 2.000000e+00 : f32
    %17 = vector.broadcast %cst_12 : f32 to vector<1x256xf32>
    %18 = arith.divf %16, %17 : vector<1x256xf32>
    %19 = vector.broadcast %11 : vector<1x256xf32> to vector<2x256xf32>
    %20 = arith.subf %5, %19 : vector<2x256xf32>
    %cst_13 = arith.constant 9.99999974E-6 : f32
    %21 = vector.broadcast %cst_13 : f32 to vector<1x256xf32>
    %22 = arith.addf %18, %21 : vector<1x256xf32>
    %23 = math.rsqrt %22 : vector<1x256xf32>
    %24 = vector.broadcast %23 : vector<1x256xf32> to vector<2x256xf32>
    %25 = arith.mulf %20, %24 : vector<2x256xf32>
    %26 = vector.broadcast %6 : vector<1x256xf32> to vector<2x256xf32>
    %27 = arith.mulf %25, %26 : vector<2x256xf32>
    %28 = vector.broadcast %7 : vector<1x256xf32> to vector<2x256xf32>
    %29 = arith.addf %27, %28 : vector<2x256xf32>
    %cst_14 = arith.constant 0.000000e+00 : f32
    %30 = vector.broadcast %cst_14 : f32 to vector<2x256xf32>
    %31 = arith.maximumf %29, %30 : vector<2x256xf32>
    %c0_15 = arith.constant 0 : index
    %c0_16 = arith.constant 0 : index
    %32 = vector.load %arg5[%c0_15, %c0_16] : memref<256x256xf32, #tpu.memory_space<vmem>>, vector<256x256xf32>
    %cst_17 = arith.constant dense<0.000000e+00> : vector<2x256xf32>
    %33 = tpu.matmul %31, %32, %cst_17 {dimension_numbers = #tpu.dot_dimension_numbers<[1], [0], [0], [1], [0, 0, 1, 1], [], []>} : vector<2x256xf32>, vector<256x256xf32>, vector<2x256xf32> -> vector<2x256xf32>
    %c0_18 = arith.constant 0 : index
    %c0_19 = arith.constant 0 : index
    %34 = vector.load %arg6[%c0_18, %c0_19] : memref<1x256xf32, #tpu.memory_space<vmem>>, vector<1x256xf32>
    %35 = vector.broadcast %34 : vector<1x256xf32> to vector<2x256xf32>
    %36 = arith.addf %33, %35 : vector<2x256xf32>
    %c0_20 = arith.constant 0 : index
    %c0_21 = arith.constant 0 : index
    %37 = vector.load %arg7[%c0_20, %c0_21] : memref<1x256xf32, #tpu.memory_space<vmem>>, vector<1x256xf32>
    %c0_22 = arith.constant 0 : index
    %c0_23 = arith.constant 0 : index
    %38 = vector.load %arg8[%c0_22, %c0_23] : memref<1x256xf32, #tpu.memory_space<vmem>>, vector<1x256xf32>
    %cst_24 = arith.constant dense<0.000000e+00> : vector<256xf32>
    %39 = vector.multi_reduction <add>, %36, %cst_24 [0] : vector<2x256xf32> to vector<256xf32>
    %40 = vector.shape_cast %39 : vector<256xf32> to vector<1x256xf32>
    %cst_25 = arith.constant 2.000000e+00 : f32
    %41 = vector.broadcast %cst_25 : f32 to vector<1x256xf32>
    %42 = arith.divf %40, %41 : vector<1x256xf32>
    %43 = vector.broadcast %42 : vector<1x256xf32> to vector<2x256xf32>
    %44 = arith.subf %36, %43 : vector<2x256xf32>
    %45 = arith.mulf %44, %44 : vector<2x256xf32>
    %cst_26 = arith.constant dense<0.000000e+00> : vector<256xf32>
    %46 = vector.multi_reduction <add>, %45, %cst_26 [0] : vector<2x256xf32> to vector<256xf32>
    %47 = vector.shape_cast %46 : vector<256xf32> to vector<1x256xf32>
    %cst_27 = arith.constant 2.000000e+00 : f32
    %48 = vector.broadcast %cst_27 : f32 to vector<1x256xf32>
    %49 = arith.divf %47, %48 : vector<1x256xf32>
    %50 = vector.broadcast %42 : vector<1x256xf32> to vector<2x256xf32>
    %51 = arith.subf %36, %50 : vector<2x256xf32>
    %cst_28 = arith.constant 9.99999974E-6 : f32
    %52 = vector.broadcast %cst_28 : f32 to vector<1x256xf32>
    %53 = arith.addf %49, %52 : vector<1x256xf32>
    %54 = math.rsqrt %53 : vector<1x256xf32>
    %55 = vector.broadcast %54 : vector<1x256xf32> to vector<2x256xf32>
    %56 = arith.mulf %51, %55 : vector<2x256xf32>
    %57 = vector.broadcast %37 : vector<1x256xf32> to vector<2x256xf32>
    %58 = arith.mulf %56, %57 : vector<2x256xf32>
    %59 = vector.broadcast %38 : vector<1x256xf32> to vector<2x256xf32>
    %60 = arith.addf %58, %59 : vector<2x256xf32>
    %cst_29 = arith.constant 0.000000e+00 : f32
    %61 = vector.broadcast %cst_29 : f32 to vector<2x256xf32>
    %62 = arith.maximumf %60, %61 : vector<2x256xf32>
    %c0_30 = arith.constant 0 : index
    %c0_31 = arith.constant 0 : index
    %63 = vector.load %arg9[%c0_30, %c0_31] : memref<256x256xf32, #tpu.memory_space<vmem>>, vector<256x256xf32>
    %cst_32 = arith.constant dense<0.000000e+00> : vector<2x256xf32>
    %64 = tpu.matmul %62, %63, %cst_32 {dimension_numbers = #tpu.dot_dimension_numbers<[1], [0], [0], [1], [0, 0, 1, 1], [], []>} : vector<2x256xf32>, vector<256x256xf32>, vector<2x256xf32> -> vector<2x256xf32>
    %c0_33 = arith.constant 0 : index
    %c0_34 = arith.constant 0 : index
    %65 = vector.load %arg10[%c0_33, %c0_34] : memref<1x256xf32, #tpu.memory_space<vmem>>, vector<1x256xf32>
    %66 = vector.broadcast %65 : vector<1x256xf32> to vector<2x256xf32>
    %67 = arith.addf %64, %66 : vector<2x256xf32>
    %c0_35 = arith.constant 0 : index
    %c0_36 = arith.constant 0 : index
    %68 = vector.load %arg11[%c0_35, %c0_36] : memref<256x256xf32, #tpu.memory_space<vmem>>, vector<256x256xf32>
    %cst_37 = arith.constant dense<0.000000e+00> : vector<2x256xf32>
    %69 = tpu.matmul %67, %68, %cst_37 {dimension_numbers = #tpu.dot_dimension_numbers<[1], [0], [0], [1], [0, 0, 1, 1], [], []>} : vector<2x256xf32>, vector<256x256xf32>, vector<2x256xf32> -> vector<2x256xf32>
    %c0_38 = arith.constant 0 : index
    %c0_39 = arith.constant 0 : index
    %70 = vector.load %arg12[%c0_38, %c0_39] : memref<1x256xf32, #tpu.memory_space<vmem>>, vector<1x256xf32>
    %71 = vector.broadcast %70 : vector<1x256xf32> to vector<2x256xf32>
    %72 = arith.addf %69, %71 : vector<2x256xf32>
    %c0_40 = arith.constant 0 : index
    %c0_41 = arith.constant 0 : index
    %73 = vector.load %arg13[%c0_40, %c0_41] : memref<1x256xf32, #tpu.memory_space<vmem>>, vector<1x256xf32>
    %c0_42 = arith.constant 0 : index
    %c0_43 = arith.constant 0 : index
    %74 = vector.load %arg14[%c0_42, %c0_43] : memref<1x256xf32, #tpu.memory_space<vmem>>, vector<1x256xf32>
    %cst_44 = arith.constant dense<0.000000e+00> : vector<256xf32>
    %75 = vector.multi_reduction <add>, %72, %cst_44 [0] : vector<2x256xf32> to vector<256xf32>
    %76 = vector.shape_cast %75 : vector<256xf32> to vector<1x256xf32>
    %cst_45 = arith.constant 2.000000e+00 : f32
    %77 = vector.broadcast %cst_45 : f32 to vector<1x256xf32>
    %78 = arith.divf %76, %77 : vector<1x256xf32>
    %79 = vector.broadcast %78 : vector<1x256xf32> to vector<2x256xf32>
    %80 = arith.subf %72, %79 : vector<2x256xf32>
    %81 = arith.mulf %80, %80 : vector<2x256xf32>
    %cst_46 = arith.constant dense<0.000000e+00> : vector<256xf32>
    %82 = vector.multi_reduction <add>, %81, %cst_46 [0] : vector<2x256xf32> to vector<256xf32>
    %83 = vector.shape_cast %82 : vector<256xf32> to vector<1x256xf32>
    %cst_47 = arith.constant 2.000000e+00 : f32
    %84 = vector.broadcast %cst_47 : f32 to vector<1x256xf32>
    %85 = arith.divf %83, %84 : vector<1x256xf32>
    %86 = vector.broadcast %78 : vector<1x256xf32> to vector<2x256xf32>
    %87 = arith.subf %72, %86 : vector<2x256xf32>
    %cst_48 = arith.constant 9.99999974E-6 : f32
    %88 = vector.broadcast %cst_48 : f32 to vector<1x256xf32>
    %89 = arith.addf %85, %88 : vector<1x256xf32>
    %90 = math.rsqrt %89 : vector<1x256xf32>
    %91 = vector.broadcast %90 : vector<1x256xf32> to vector<2x256xf32>
    %92 = arith.mulf %87, %91 : vector<2x256xf32>
    %93 = vector.broadcast %73 : vector<1x256xf32> to vector<2x256xf32>
    %94 = arith.mulf %92, %93 : vector<2x256xf32>
    %95 = vector.broadcast %74 : vector<1x256xf32> to vector<2x256xf32>
    %96 = arith.addf %94, %95 : vector<2x256xf32>
    %cst_49 = arith.constant 0.000000e+00 : f32
    %97 = vector.broadcast %cst_49 : f32 to vector<2x256xf32>
    %98 = arith.maximumf %96, %97 : vector<2x256xf32>
    %c0_50 = arith.constant 0 : index
    %c0_51 = arith.constant 0 : index
    %99 = vector.load %arg15[%c0_50, %c0_51] : memref<256x256xf32, #tpu.memory_space<vmem>>, vector<256x256xf32>
    %cst_52 = arith.constant dense<0.000000e+00> : vector<2x256xf32>
    %100 = tpu.matmul %98, %99, %cst_52 {dimension_numbers = #tpu.dot_dimension_numbers<[1], [0], [0], [1], [0, 0, 1, 1], [], []>} : vector<2x256xf32>, vector<256x256xf32>, vector<2x256xf32> -> vector<2x256xf32>
    %c0_53 = arith.constant 0 : index
    %c0_54 = arith.constant 0 : index
    %101 = vector.load %arg16[%c0_53, %c0_54] : memref<1x256xf32, #tpu.memory_space<vmem>>, vector<1x256xf32>
    %102 = vector.broadcast %101 : vector<1x256xf32> to vector<2x256xf32>
    %103 = arith.addf %100, %102 : vector<2x256xf32>
    %104 = arith.addf %67, %103 : vector<2x256xf32>
    %c0_55 = arith.constant 0 : index
    %c0_56 = arith.constant 0 : index
    %105 = vector.load %arg17[%c0_55, %c0_56] : memref<2x256xf32, #tpu.memory_space<vmem>>, vector<2x256xf32>
    tpu.vector_store %arg17[%c0_55, %c0_56], %104 {strides = array<i32>} : memref<2x256xf32, #tpu.memory_space<vmem>>, vector<2x256xf32>,
    return
  }
}

module attributes {stable_mosaic.version = 11 : i64} {
  func.func @_feature_transform_kernel(%arg0: memref<2x256xf32, #tpu.memory_space<vmem>>, %arg1: memref<256x256xf32, #tpu.memory_space<vmem>>, %arg2: memref<1x256xf32, #tpu.memory_space<vmem>>, %arg3: memref<1x256xf32, #tpu.memory_space<vmem>>, %arg4: memref<1x256xf32, #tpu.memory_space<vmem>>, %arg5: memref<256x256xf32, #tpu.memory_space<vmem>>, %arg6: memref<1x256xf32, #tpu.memory_space<vmem>>, %arg7: memref<1x256xf32, #tpu.memory_space<vmem>>, %arg8: memref<1x256xf32, #tpu.memory_space<vmem>>, %arg9: memref<256x256xf32, #tpu.memory_space<vmem>>, %arg10: memref<1x256xf32, #tpu.memory_space<vmem>>, %arg11: memref<256x256xf32, #tpu.memory_space<vmem>>, %arg12: memref<1x256xf32, #tpu.memory_space<vmem>>, %arg13: memref<1x256xf32, #tpu.memory_space<vmem>>, %arg14: memref<1x256xf32, #tpu.memory_space<vmem>>, %arg15: memref<256x256xf32, #tpu.memory_space<vmem>>, %arg16: memref<1x256xf32, #tpu.memory_space<vmem>>, %arg17: memref<2x256xf32, #tpu.memory_space<vmem>>) attributes {dimension_semantics = [], scalar_prefetch = 0 : i64, scratch_operands = 0 : i64, tpu.core_type = #tpu.core_type<tc>} {
    %c0 = arith.constant 0 : index
    %c0_0 = arith.constant 0 : index
    %0 = vector.load %arg0[%c0, %c0_0] : memref<2x256xf32, #tpu.memory_space<vmem>>, vector<2x256xf32>
    %c0_1 = arith.constant 0 : index
    %c0_2 = arith.constant 0 : index
    %1 = vector.load %arg1[%c0_1, %c0_2] : memref<256x256xf32, #tpu.memory_space<vmem>>, vector<256x256xf32>
    %cst = arith.constant dense<0.000000e+00> : vector<2x256xf32>
    %2 = tpu.matmul %0, %1, %cst {dimension_numbers = #tpu.dot_dimension_numbers<[1], [0], [0], [1], [0, 0, 1, 1], [], []>} : vector<2x256xf32>, vector<256x256xf32>, vector<2x256xf32> -> vector<2x256xf32>
    %c0_3 = arith.constant 0 : index
    %c0_4 = arith.constant 0 : index
    %3 = vector.load %arg2[%c0_3, %c0_4] : memref<1x256xf32, #tpu.memory_space<vmem>>, vector<1x256xf32>
    %4 = vector.broadcast %3 : vector<1x256xf32> to vector<2x256xf32>
    %5 = arith.addf %2, %4 : vector<2x256xf32>
    %c0_5 = arith.constant 0 : index
    %c0_6 = arith.constant 0 : index
    %6 = vector.load %arg3[%c0_5, %c0_6] : memref<1x256xf32, #tpu.memory_space<vmem>>, vector<1x256xf32>
    %c0_7 = arith.constant 0 : index
    %c0_8 = arith.constant 0 : index
    %7 = vector.load %arg4[%c0_7, %c0_8] : memref<1x256xf32, #tpu.memory_space<vmem>>, vector<1x256xf32>
    %cst_9 = arith.constant dense<0.000000e+00> : vector<256xf32>
    %8 = vector.multi_reduction <add>, %5, %cst_9 [0] : vector<2x256xf32> to vector<256xf32>
    %9 = vector.shape_cast %8 : vector<256xf32> to vector<1x256xf32>
    %cst_10 = arith.constant 2.000000e+00 : f32
    %10 = vector.broadcast %cst_10 : f32 to vector<1x256xf32>
    %11 = arith.divf %9, %10 : vector<1x256xf32>
    %12 = vector.broadcast %11 : vector<1x256xf32> to vector<2x256xf32>
    %13 = arith.subf %5, %12 : vector<2x256xf32>
    %14 = arith.mulf %13, %13 : vector<2x256xf32>
    %cst_11 = arith.constant dense<0.000000e+00> : vector<256xf32>
    %15 = vector.multi_reduction <add>, %14, %cst_11 [0] : vector<2x256xf32> to vector<256xf32>
    %16 = vector.shape_cast %15 : vector<256xf32> to vector<1x256xf32>
    %cst_12 = arith.constant 2.000000e+00 : f32
    %17 = vector.broadcast %cst_12 : f32 to vector<1x256xf32>
    %18 = arith.divf %16, %17 : vector<1x256xf32>
    %19 = vector.broadcast %11 : vector<1x256xf32> to vector<2x256xf32>
    %20 = arith.subf %5, %19 : vector<2x256xf32>
    %cst_13 = arith.constant 9.99999974E-6 : f32
    %21 = vector.broadcast %cst_13 : f32 to vector<1x256xf32>
    %22 = arith.addf %18, %21 : vector<1x256xf32>
    %23 = math.rsqrt %22 : vector<1x256xf32>
    %24 = vector.broadcast %23 : vector<1x256xf32> to vector<2x256xf32>
    %25 = arith.mulf %20, %24 : vector<2x256xf32>
    %26 = vector.broadcast %6 : vector<1x256xf32> to vector<2x256xf32>
    %27 = arith.mulf %25, %26 : vector<2x256xf32>
    %28 = vector.broadcast %7 : vector<1x256xf32> to vector<2x256xf32>
    %29 = arith.addf %27, %28 : vector<2x256xf32>
    %cst_14 = arith.constant 0.000000e+00 : f32
    %30 = vector.broadcast %cst_14 : f32 to vector<2x256xf32>
    %31 = arith.maximumf %29, %30 : vector<2x256xf32>
    %c0_15 = arith.constant 0 : index
    %c0_16 = arith.constant 0 : index
    %32 = vector.load %arg5[%c0_15, %c0_16] : memref<256x256xf32, #tpu.memory_space<vmem>>, vector<256x256xf32>
    %cst_17 = arith.constant dense<0.000000e+00> : vector<2x256xf32>
    %33 = tpu.matmul %31, %32, %cst_17 {dimension_numbers = #tpu.dot_dimension_numbers<[1], [0], [0], [1], [0, 0, 1, 1], [], []>} : vector<2x256xf32>, vector<256x256xf32>, vector<2x256xf32> -> vector<2x256xf32>
    %c0_18 = arith.constant 0 : index
    %c0_19 = arith.constant 0 : index
    %34 = vector.load %arg6[%c0_18, %c0_19] : memref<1x256xf32, #tpu.memory_space<vmem>>, vector<1x256xf32>
    %35 = vector.broadcast %34 : vector<1x256xf32> to vector<2x256xf32>
    %36 = arith.addf %33, %35 : vector<2x256xf32>
    %c0_20 = arith.constant 0 : index
    %c0_21 = arith.constant 0 : index
    %37 = vector.load %arg7[%c0_20, %c0_21] : memref<1x256xf32, #tpu.memory_space<vmem>>, vector<1x256xf32>
    %c0_22 = arith.constant 0 : index
    %c0_23 = arith.constant 0 : index
    %38 = vector.load %arg8[%c0_22, %c0_23] : memref<1x256xf32, #tpu.memory_space<vmem>>, vector<1x256xf32>
    %cst_24 = arith.constant dense<0.000000e+00> : vector<256xf32>
    %39 = vector.multi_reduction <add>, %36, %cst_24 [0] : vector<2x256xf32> to vector<256xf32>
    %40 = vector.shape_cast %39 : vector<256xf32> to vector<1x256xf32>
    %cst_25 = arith.constant 2.000000e+00 : f32
    %41 = vector.broadcast %cst_25 : f32 to vector<1x256xf32>
    %42 = arith.divf %40, %41 : vector<1x256xf32>
    %43 = vector.broadcast %42 : vector<1x256xf32> to vector<2x256xf32>
    %44 = arith.subf %36, %43 : vector<2x256xf32>
    %45 = arith.mulf %44, %44 : vector<2x256xf32>
    %cst_26 = arith.constant dense<0.000000e+00> : vector<256xf32>
    %46 = vector.multi_reduction <add>, %45, %cst_26 [0] : vector<2x256xf32> to vector<256xf32>
    %47 = vector.shape_cast %46 : vector<256xf32> to vector<1x256xf32>
    %cst_27 = arith.constant 2.000000e+00 : f32
    %48 = vector.broadcast %cst_27 : f32 to vector<1x256xf32>
    %49 = arith.divf %47, %48 : vector<1x256xf32>
    %50 = vector.broadcast %42 : vector<1x256xf32> to vector<2x256xf32>
    %51 = arith.subf %36, %50 : vector<2x256xf32>
    %cst_28 = arith.constant 9.99999974E-6 : f32
    %52 = vector.broadcast %cst_28 : f32 to vector<1x256xf32>
    %53 = arith.addf %49, %52 : vector<1x256xf32>
    %54 = math.rsqrt %53 : vector<1x256xf32>
    %55 = vector.broadcast %54 : vector<1x256xf32> to vector<2x256xf32>
    %56 = arith.mulf %51, %55 : vector<2x256xf32>
    %57 = vector.broadcast %37 : vector<1x256xf32> to vector<2x256xf32>
    %58 = arith.mulf %56, %57 : vector<2x256xf32>
    %59 = vector.broadcast %38 : vector<1x256xf32> to vector<2x256xf32>
    %60 = arith.addf %58, %59 : vector<2x256xf32>
    %cst_29 = arith.constant 0.000000e+00 : f32
    %61 = vector.broadcast %cst_29 : f32 to vector<2x256xf32>
    %62 = arith.maximumf %60, %61 : vector<2x256xf32>
    %c0_30 = arith.constant 0 : index
    %c0_31 = arith.constant 0 : index
    %63 = vector.load %arg9[%c0_30, %c0_31] : memref<256x256xf32, #tpu.memory_space<vmem>>, vector<256x256xf32>
    %cst_32 = arith.constant dense<0.000000e+00> : vector<2x256xf32>
    %64 = tpu.matmul %62, %63, %cst_32 {dimension_numbers = #tpu.dot_dimension_numbers<[1], [0], [0], [1], [0, 0, 1, 1], [], []>} : vector<2x256xf32>, vector<256x256xf32>, vector<2x256xf32> -> vector<2x256xf32>
    %c0_33 = arith.constant 0 : index
    %c0_34 = arith.constant 0 : index
    %65 = vector.load %arg10[%c0_33, %c0_34] : memref<1x256xf32, #tpu.memory_space<vmem>>, vector<1x256xf32>
    %66 = vector.broadcast %65 : vector<1x256xf32> to vector<2x256xf32>
    %67 = arith.addf %64, %66 : vector<2x256xf32>
    %c0_35 = arith.constant 0 : index
    %c0_36 = arith.constant 0 : index
    %68 = vector.load %arg11[%c0_35, %c0_36] : memref<256x256xf32, #tpu.memory_space<vmem>>, vector<256x256xf32>
    %cst_37 = arith.constant dense<0.000000e+00> : vector<2x256xf32>
    %69 = tpu.matmul %67, %68, %cst_37 {dimension_numbers = #tpu.dot_dimension_numbers<[1], [0], [0], [1], [0, 0, 1, 1], [], []>} : vector<2x256xf32>, vector<256x256xf32>, vector<2x256xf32> -> vector<2x256xf32>
    %c0_38 = arith.constant 0 : index
    %c0_39 = arith.constant 0 : index
    %70 = vector.load %arg12[%c0_38, %c0_39] : memref<1x256xf32, #tpu.memory_space<vmem>>, vector<1x256xf32>
    %71 = vector.broadcast %70 : vector<1x256xf32> to vector<2x256xf32>
    %72 = arith.addf %69, %71 : vector<2x256xf32>
    %c0_40 = arith.constant 0 : index
    %c0_41 = arith.constant 0 : index
    %73 = vector.load %arg13[%c0_40, %c0_41] : memref<1x256xf32, #tpu.memory_space<vmem>>, vector<1x256xf32>
    %c0_42 = arith.constant 0 : index
    %c0_43 = arith.constant 0 : index
    %74 = vector.load %arg14[%c0_42, %c0_43] : memref<1x256xf32, #tpu.memory_space<vmem>>, vector<1x256xf32>
    %cst_44 = arith.constant dense<0.000000e+00> : vector<256xf32>
    %75 = vector.multi_reduction <add>, %72, %cst_44 [0] : vector<2x256xf32> to vector<256xf32>
    %76 = vector.shape_cast %75 : vector<256xf32> to vector<1x256xf32>
    %cst_45 = arith.constant 2.000000e+00 : f32
    %77 = vector.broadcast %cst_45 : f32 to vector<1x256xf32>
    %78 = arith.divf %76, %77 : vector<1x256xf32>
    %79 = vector.broadcast %78 : vector<1x256xf32> to vector<2x256xf32>
    %80 = arith.subf %72, %79 : vector<2x256xf32>
    %81 = arith.mulf %80, %80 : vector<2x256xf32>
    %cst_46 = arith.constant dense<0.000000e+00> : vector<256xf32>
    %82 = vector.multi_reduction <add>, %81, %cst_46 [0] : vector<2x256xf32> to vector<256xf32>
    %83 = vector.shape_cast %82 : vector<256xf32> to vector<1x256xf32>
    %cst_47 = arith.constant 2.000000e+00 : f32
    %84 = vector.broadcast %cst_47 : f32 to vector<1x256xf32>
    %85 = arith.divf %83, %84 : vector<1x256xf32>
    %86 = vector.broadcast %78 : vector<1x256xf32> to vector<2x256xf32>
    %87 = arith.subf %72, %86 : vector<2x256xf32>
    %cst_48 = arith.constant 9.99999974E-6 : f32
    %88 = vector.broadcast %cst_48 : f32 to vector<1x256xf32>
    %89 = arith.addf %85, %88 : vector<1x256xf32>
    %90 = math.rsqrt %89 : vector<1x256xf32>
    %91 = vector.broadcast %90 : vector<1x256xf32> to vector<2x256xf32>
    %92 = arith.mulf %87, %91 : vector<2x256xf32>
    %93 = vector.broadcast %73 : vector<1x256xf32> to vector<2x256xf32>
    %94 = arith.mulf %92, %93 : vector<2x256xf32>
    %95 = vector.broadcast %74 : vector<1x256xf32> to vector<2x256xf32>
    %96 = arith.addf %94, %95 : vector<2x256xf32>
    %cst_49 = arith.constant 0.000000e+00 : f32
    %97 = vector.broadcast %cst_49 : f32 to vector<2x256xf32>
    %98 = arith.maximumf %96, %97 : vector<2x256xf32>
    %c0_50 = arith.constant 0 : index
    %c0_51 = arith.constant 0 : index
    %99 = vector.load %arg15[%c0_50, %c0_51] : memref<256x256xf32, #tpu.memory_space<vmem>>, vector<256x256xf32>
    %cst_52 = arith.constant dense<0.000000e+00> : vector<2x256xf32>
    %100 = tpu.matmul %98, %99, %cst_52 {dimension_numbers = #tpu.dot_dimension_numbers<[1], [0], [0], [1], [0, 0, 1, 1], [], []>} : vector<2x256xf32>, vector<256x256xf32>, vector<2x256xf32> -> vector<2x256xf32>
    %c0_53 = arith.constant 0 : index
    %c0_54 = arith.constant 0 : index
    %101 = vector.load %arg16[%c0_53, %c0_54] : memref<1x256xf32, #tpu.memory_space<vmem>>, vector<1x256xf32>
    %102 = vector.broadcast %101 : vector<1x256xf32> to vector<2x256xf32>
    %103 = arith.addf %100, %102 : vector<2x256xf32>
    %104 = arith.addf %67, %103 : vector<2x256xf32>
    %c0_55 = arith.constant 0 : index
    %c0_56 = arith.constant 0 : index
    %105 = vector.load %arg17[%c0_55, %c0_56] : memref<2x256xf32, #tpu.memory_space<vmem>>, vector<2x256xf32>
    tpu.vector_store %arg17[%c0_55, %c0_56], %104 {strides = array<i32>} : memref<2x256xf32, #tpu.memory_space<vmem>>, vector<2x256xf32>,
    return
  }
}

</mosaic_0001>

<llo_original>
// kernel: mfm_forward.4
$region0: #{mfm_forward.4}
  #allocation0 [shape = 'u32[]', space=smem, size = 0x4, offset = 0x4, fixed_abs, tag = 'smem constant byte address 0x4 - core index']
  #allocation1 [shape = 'u32[72,128]{1,0:T(1,128)}', space=vmem, size = 0x9000, scoped, tag = 'internal scratch']
  %s0 = inlined_call_operand.vmem [shape: f32[256,8], index: 0, kind: input, shape index: {}]
  %s1 = inlined_call_operand.vmem [shape: f32[8,128], index: 1, kind: input, shape index: {}]
  %s2 = inlined_call_operand.vmem [shape: f32[1,128], index: 2, kind: input, shape index: {}]
  %s3 = inlined_call_operand.hbm [shape: f32[1,128], index: 3, kind: input, shape index: {}]
  %s4 = inlined_call_operand.hbm [shape: f32[1,128], index: 4, kind: input, shape index: {}]
  %s5 = inlined_call_operand.vmem [shape: f32[128,256], index: 5, kind: input, shape index: {}]
  %s6 = inlined_call_operand.vmem [shape: f32[1,256], index: 6, kind: input, shape index: {}]
  %s7 = inlined_call_operand.vmem [shape: f32[256,256], index: 7, kind: output, shape index: {0}]
  %s8 = inlined_call_operand.vmem [shape: f32[2,256], index: 8, kind: output, shape index: {1}]
  %9 = xla_tuple %s7, %s8
  %s10 = sld [smem:[#allocation0]]
  $region54: #{mfm_forward.4} parent=0
    _
  %s12 = ssub.s32 1, %s10
  %s13 = scalar_select 0, %s12, %s10
  $region1: #{mfm_forward.4} parent=0
    #allocation2 [shape = 'u8[512]{0}', space=vmem, size = 0x400, scoped, tag = 'input window, operand 3, single buffered']
    #allocation3 [shape = 's32[1]{0}', space=sflag, size = 0x4, scoped, tag = 'scoped memory for mfm_forward.4']
    #allocation4 [shape = 'u8[512]{0}', space=vmem, size = 0x400, scoped, tag = 'input window, operand 4, single buffered']
    #allocation5 [shape = 's32[1]{0}', space=sflag, size = 0x4, scoped, tag = 'scoped memory for mfm_forward.4']
    %14 = vsyncpa [#allocation3], 0
    %15 = vsyncpa [#allocation5], 0
    // Predicated region
    $region2: #{mfm_forward.4} parent=1 // pred_check
      _
    $region3: #{mfm_forward.4} parent=1 // pred_check_branch
      %17 = sbr.rel (0) target = $region5
    $region4: #{mfm_forward.4} parent=1 // pred_region
      _
    $region5: #{mfm_forward.4} parent=1 // pred_fallthru
      _
    // Predicated region
    $region6: #{mfm_forward.4} parent=1 // pred_check
      _
    $region7: #{mfm_forward.4} parent=1 // pred_check_branch
      %19 = sbr.rel (0) target = $region9
    $region8: #{mfm_forward.4} parent=1 // pred_region
      _
    $region9: #{mfm_forward.4} parent=1 // pred_fallthru
      _
    // Predicated region
    $region10: #{mfm_forward.4} parent=1 // pred_check
      _
    $region11: #{mfm_forward.4} parent=1 // pred_check_branch
      %21 = sbr.rel (0) target = $region13
    $region12: #{mfm_forward.4} parent=1 // pred_region
      _
    $region13: #{mfm_forward.4} parent=1 // pred_fallthru
      _
    // Predicated region
    $region14: #{mfm_forward.4} parent=1 // pred_check
      _
    $region15: #{mfm_forward.4} parent=1 // pred_check_branch
      %23 = sbr.rel (0) target = $region17
    $region16: #{mfm_forward.4} parent=1 // pred_region
      %25 = vsyncadd [#allocation3], 0
      %s27 = sshll.u32 %s3, 4
      %s28 = int_to_ptr.hbm [resolvable:$true] %s27
      %s29 = sshll.u32 [#allocation2], 4
      %s30 = int_to_ptr.vmem [resolvable:$true] %s29
      %32 = dma.hbm_to_vmem [thread:$0]  %s28, 16, %s30, [#allocation3]
    $region17: #{mfm_forward.4} parent=1 // pred_fallthru
      _
    // Predicated region
    $region18: #{mfm_forward.4} parent=1 // pred_check
      _
    $region19: #{mfm_forward.4} parent=1 // pred_check_branch
      %34 = sbr.rel (0) target = $region21
    $region20: #{mfm_forward.4} parent=1 // pred_region
      %36 = vsyncadd [#allocation5], 0
      %s38 = sshll.u32 %s4, 4
      %s39 = int_to_ptr.hbm [resolvable:$true] %s38
      %s40 = sshll.u32 [#allocation4], 4
      %s41 = int_to_ptr.vmem [resolvable:$true] %s40
      %43 = dma.hbm_to_vmem [thread:$0]  %s39, 16, %s41, [#allocation5]
    $region21: #{mfm_forward.4} parent=1 // pred_fallthru
      _
    // Predicated region
    $region22: #{mfm_forward.4} parent=1 // pred_check
      _
    $region23: #{mfm_forward.4} parent=1 // pred_check_branch
      %45 = sbr.rel (0) target = $region25
    $region24: #{mfm_forward.4} parent=1 // pred_region
      _
    $region25: #{mfm_forward.4} parent=1 // pred_fallthru
      _
    // Predicated region
    $region26: #{mfm_forward.4} parent=1 // pred_check
      _
    $region27: #{mfm_forward.4} parent=1 // pred_check_branch
      %47 = sbr.rel (0) target = $region29
    $region28: #{mfm_forward.4} parent=1 // pred_region
      _
    $region29: #{mfm_forward.4} parent=1 // pred_fallthru
      _
    // Predicated region
    $region30: #{mfm_forward.4} parent=1 // pred_check
      _
    $region31: #{mfm_forward.4} parent=1 // pred_check_branch
      %49 = sbr.rel (0) target = $region33
    $region32: #{mfm_forward.4} parent=1 // pred_region
      %51 = dma.done [#allocation3], 16
    $region33: #{mfm_forward.4} parent=1 // pred_fallthru
      _
    // Predicated region
    $region34: #{mfm_forward.4} parent=1 // pred_check
      _
    $region35: #{mfm_forward.4} parent=1 // pred_check_branch
      %53 = sbr.rel (0) target = $region37
    $region36: #{mfm_forward.4} parent=1 // pred_region
      %55 = dma.done [#allocation5], 16
    $region37: #{mfm_forward.4} parent=1 // pred_fallthru
      _
    %v56 = vld [vmem:[%s0] sm:$0xff]
    %v57 = vld [vmem:[%s0 + $0x8] sm:$0xff]
    %v58 = vld [vmem:[%s0 + $0x10] sm:$0xff]
    %v59 = vld [vmem:[%s0 + $0x18] sm:$0xff]
    %v60 = vld [vmem:[%s0 + $0x20] sm:$0xff]
    %v61 = vld [vmem:[%s0 + $0x28] sm:$0xff]
    %v62 = vld [vmem:[%s0 + $0x30] sm:$0xff]
    %v63 = vld [vmem:[%s0 + $0x38] sm:$0xff]
    %v64 = vld [vmem:[%s0 + $0x40] sm:$0xff]
    %v65 = vld [vmem:[%s0 + $0x48] sm:$0xff]
    %v66 = vld [vmem:[%s0 + $0x50] sm:$0xff]
    %v67 = vld [vmem:[%s0 + $0x58] sm:$0xff]
    %v68 = vld [vmem:[%s0 + $0x60] sm:$0xff]
    %v69 = vld [vmem:[%s0 + $0x68] sm:$0xff]
    %v70 = vld [vmem:[%s0 + $0x70] sm:$0xff]
    %v71 = vld [vmem:[%s0 + $0x78] sm:$0xff]
    %v72 = vld [vmem:[%s0 + $0x80] sm:$0xff]
    %v73 = vld [vmem:[%s0 + $0x88] sm:$0xff]
    %v74 = vld [vmem:[%s0 + $0x90] sm:$0xff]
    %v75 = vld [vmem:[%s0 + $0x98] sm:$0xff]
    %v76 = vld [vmem:[%s0 + $0xa0] sm:$0xff]
    %v77 = vld [vmem:[%s0 + $0xa8] sm:$0xff]
    %v78 = vld [vmem:[%s0 + $0xb0] sm:$0xff]
    %v79 = vld [vmem:[%s0 + $0xb8] sm:$0xff]
    %v80 = vld [vmem:[%s0 + $0xc0] sm:$0xff]
    %v81 = vld [vmem:[%s0 + $0xc8] sm:$0xff]
    %v82 = vld [vmem:[%s0 + $0xd0] sm:$0xff]
    %v83 = vld [vmem:[%s0 + $0xd8] sm:$0xff]
    %v84 = vld [vmem:[%s0 + $0xe0] sm:$0xff]
    %v85 = vld [vmem:[%s0 + $0xe8] sm:$0xff]
    %v86 = vld [vmem:[%s0 + $0xf0] sm:$0xff]
    %v87 = vld [vmem:[%s0 + $0xf8] sm:$0xff]
    %v88 = vld [vmem:[%s1] sm:$0xff]
    %v89 = vld [vmem:[%s2] sm:$0x1]
    %v91 = vperm.slane %v89, 0
    %vm93 = vcmask 64512
    %v95 = vsel %vm93, %v56, 0
    %v98 = vsel %vm93, %v57, 0
    %v101 = vsel %vm93, %v58, 0
    %v104 = vsel %vm93, %v59, 0
    %v107 = vsel %vm93, %v60, 0
    %v110 = vsel %vm93, %v61, 0
    %v113 = vsel %vm93, %v62, 0
    %v116 = vsel %vm93, %v63, 0
    %v119 = vsel %vm93, %v64, 0
    %v122 = vsel %vm93, %v65, 0
    %v125 = vsel %vm93, %v66, 0
    %v128 = vsel %vm93, %v67, 0
    %v131 = vsel %vm93, %v68, 0
    %v134 = vsel %vm93, %v69, 0
    %v137 = vsel %vm93, %v70, 0
    %v140 = vsel %vm93, %v71, 0
    %v143 = vsel %vm93, %v72, 0
    %v146 = vsel %vm93, %v73, 0
    %v149 = vsel %vm93, %v74, 0
    %v152 = vsel %vm93, %v75, 0
    %v155 = vsel %vm93, %v76, 0
    %v158 = vsel %vm93, %v77, 0
    %v161 = vsel %vm93, %v78, 0
    %v164 = vsel %vm93, %v79, 0
    %v167 = vsel %vm93, %v80, 0
    %v170 = vsel %vm93, %v81, 0
    %v173 = vsel %vm93, %v82, 0
    %v176 = vsel %vm93, %v83, 0
    %v179 = vsel %vm93, %v84, 0
    %v182 = vsel %vm93, %v85, 0
    %v185 = vsel %vm93, %v86, 0
    %v188 = vsel %vm93, %v87, 0
    %190 = vmatpush.msra.mxu0 0.0
    %191 = vmatpush.msra.mxu0 0.0
    %192 = vmatpush.msra.mxu0 0.0
    %193 = vmatpush.msra.mxu0 0.0
    %194 = vmatpush.msra.mxu0 0.0
    %195 = vmatpush.msra.mxu0 0.0
    %196 = vmatpush.msra.mxu0 0.0
    %197 = vmatpush.msra.mxu0 0.0
    %198 = vmatpush.msra.mxu0 0.0
    %199 = vmatpush.msra.mxu0 0.0
    %200 = vmatpush.msra.mxu0 0.0
    %201 = vmatpush.msra.mxu0 0.0
    %202 = vmatpush.msra.mxu0 0.0
    %203 = vmatpush.msra.mxu0 0.0
    %204 = vmatpush.msra.mxu0 0.0
    %205 = vmatpush.msra.mxu0 %v88
    %206 = vmatmul.f32.gmra.mxu0 %v95
    %v207 = vpop.f32.mrf.mxu0
    %v208 = vadd.f32 %v91, %v207
    %209 = vmatmul.f32.gmra.mxu0 %v98
    %v210 = vpop.f32.mrf.mxu0
    %v211 = vadd.f32 %v91, %v210
    %212 = vmatmul.f32.gmra.mxu0 %v101
    %v213 = vpop.f32.mrf.mxu0
    %v214 = vadd.f32 %v91, %v213
    %215 = vmatmul.f32.gmra.mxu0 %v104
    %v216 = vpop.f32.mrf.mxu0
    %v217 = vadd.f32 %v91, %v216
    %218 = vmatmul.f32.gmra.mxu0 %v107
    %v219 = vpop.f32.mrf.mxu0
    %v220 = vadd.f32 %v91, %v219
    %221 = vmatmul.f32.gmra.mxu0 %v110
    %v222 = vpop.f32.mrf.mxu0
    %v223 = vadd.f32 %v91, %v222
    %224 = vmatmul.f32.gmra.mxu0 %v113
    %v225 = vpop.f32.mrf.mxu0
    %v226 = vadd.f32 %v91, %v225
    %227 = vmatmul.f32.gmra.mxu0 %v116
    %v228 = vpop.f32.mrf.mxu0
    %v229 = vadd.f32 %v91, %v228
    %230 = vmatmul.f32.gmra.mxu0 %v119
    %v231 = vpop.f32.mrf.mxu0
    %v232 = vadd.f32 %v91, %v231
    %233 = vmatmul.f32.gmra.mxu0 %v122
    %v234 = vpop.f32.mrf.mxu0
    %v235 = vadd.f32 %v91, %v234
    %236 = vmatmul.f32.gmra.mxu0 %v125
    %v237 = vpop.f32.mrf.mxu0
    %v238 = vadd.f32 %v91, %v237
    %239 = vmatmul.f32.gmra.mxu0 %v128
    %v240 = vpop.f32.mrf.mxu0
    %v241 = vadd.f32 %v91, %v240
    %242 = vmatmul.f32.gmra.mxu0 %v131
    %v243 = vpop.f32.mrf.mxu0
    %v244 = vadd.f32 %v91, %v243
    %245 = vmatmul.f32.gmra.mxu0 %v134
    %v246 = vpop.f32.mrf.mxu0
    %v247 = vadd.f32 %v91, %v246
    %248 = vmatmul.f32.gmra.mxu0 %v137
    %v249 = vpop.f32.mrf.mxu0
    %v250 = vadd.f32 %v91, %v249
    %251 = vmatmul.f32.gmra.mxu0 %v140
    %v252 = vpop.f32.mrf.mxu0
    %v253 = vadd.f32 %v91, %v252
    %254 = vmatmul.f32.gmra.mxu0 %v143
    %v255 = vpop.f32.mrf.mxu0
    %v256 = vadd.f32 %v91, %v255
    %257 = vmatmul.f32.gmra.mxu0 %v146
    %v258 = vpop.f32.mrf.mxu0
    %v259 = vadd.f32 %v91, %v258
    %260 = vmatmul.f32.gmra.mxu0 %v149
    %v261 = vpop.f32.mrf.mxu0
    %v262 = vadd.f32 %v91, %v261
    %263 = vmatmul.f32.gmra.mxu0 %v152
    %v264 = vpop.f32.mrf.mxu0
    %v265 = vadd.f32 %v91, %v264
    %266 = vmatmul.f32.gmra.mxu0 %v155
    %v267 = vpop.f32.mrf.mxu0
    %v268 = vadd.f32 %v91, %v267
    %269 = vmatmul.f32.gmra.mxu0 %v158
    %v270 = vpop.f32.mrf.mxu0
    %v271 = vadd.f32 %v91, %v270
    %272 = vmatmul.f32.gmra.mxu0 %v161
    %v273 = vpop.f32.mrf.mxu0
    %v274 = vadd.f32 %v91, %v273
    %275 = vmatmul.f32.gmra.mxu0 %v164
    %v276 = vpop.f32.mrf.mxu0
    %v277 = vadd.f32 %v91, %v276
    %278 = vmatmul.f32.gmra.mxu0 %v167
    %v279 = vpop.f32.mrf.mxu0
    %v280 = vadd.f32 %v91, %v279
    %281 = vmatmul.f32.gmra.mxu0 %v170
    %v282 = vpop.f32.mrf.mxu0
    %v283 = vadd.f32 %v91, %v282
    %284 = vmatmul.f32.gmra.mxu0 %v173
    %v285 = vpop.f32.mrf.mxu0
    %v286 = vadd.f32 %v91, %v285
    %287 = vmatmul.f32.gmra.mxu0 %v176
    %v288 = vpop.f32.mrf.mxu0
    %v289 = vadd.f32 %v91, %v288
    %290 = vmatmul.f32.gmra.mxu0 %v179
    %v291 = vpop.f32.mrf.mxu0
    %v292 = vadd.f32 %v91, %v291
    %293 = vmatmul.f32.gmra.mxu0 %v182
    %v294 = vpop.f32.mrf.mxu0
    %v295 = vadd.f32 %v91, %v294
    %296 = vmatmul.f32.gmra.mxu0 %v185
    %v297 = vpop.f32.mrf.mxu0
    %v298 = vadd.f32 %v91, %v297
    %299 = vmatmul.f32.gmra.mxu0 %v188
    %v300 = vpop.f32.mrf.mxu0
    %v301 = vadd.f32 %v91, %v300
    %302 = vdwg.mxu0
    %v303 = vld [vmem:[#allocation2] sm:$0x1]
    %v304 = vld [vmem:[#allocation4] sm:$0x1]
    %v305 = vadd.f32 %v208, %v211
    %v306 = vadd.f32 %v305, %v214
    %v307 = vadd.f32 %v306, %v217
    %v308 = vadd.f32 %v307, %v220
    %v309 = vadd.f32 %v308, %v223
    %v310 = vadd.f32 %v309, %v226
    %v311 = vadd.f32 %v310, %v229
    %v312 = vadd.f32 %v311, %v232
    %v313 = vadd.f32 %v312, %v235
    %v314 = vadd.f32 %v313, %v238
    %v315 = vadd.f32 %v314, %v241
    %v316 = vadd.f32 %v315, %v244
    %v317 = vadd.f32 %v316, %v247
    %v318 = vadd.f32 %v317, %v250
    %v319 = vadd.f32 %v318, %v253
    %v320 = vadd.f32 %v319, %v256
    %v321 = vadd.f32 %v320, %v259
    %v322 = vadd.f32 %v321, %v262
    %v323 = vadd.f32 %v322, %v265
    %v324 = vadd.f32 %v323, %v268
    %v325 = vadd.f32 %v324, %v271
    %v326 = vadd.f32 %v325, %v274
    %v327 = vadd.f32 %v326, %v277
    %v328 = vadd.f32 %v327, %v280
    %v329 = vadd.f32 %v328, %v283
    %v330 = vadd.f32 %v329, %v286
    %v331 = vadd.f32 %v330, %v289
    %v332 = vadd.f32 %v331, %v292
    %v333 = vadd.f32 %v332, %v295
    %v334 = vadd.f32 %v333, %v298
    %v335 = vadd.f32 %v334, %v301
    %v336 = vrot.slane %v335, 4
    %v337 = vadd.f32 %v335, %v336
    %v338 = vrot.slane %v337, 2
    %v339 = vadd.f32 %v337, %v338
    %v340 = vrot.slane %v339, 1
    %v341 = vadd.f32 %v339, %v340
    %v342 = vrcp.pop 256.0
    %v343 = vmul.f32 256.0, %v342
    %v344 = vsub.f32 1.0, %v343
    %v345 = vmul.f32 %v342, %v344
    %v346 = vadd.f32 %v342, %v345
    %vm347 = vweird.f32 %v342
    %v348 = vsel %vm347, %v342, %v346
    %v349 = vmul.f32 %v341, %v348
    %v350 = vsub.f32 %v208, %v349
    %v351 = vsub.f32 %v211, %v349
    %v352 = vsub.f32 %v214, %v349
    %v353 = vsub.f32 %v217, %v349
    %v354 = vsub.f32 %v220, %v349
    %v355 = vsub.f32 %v223, %v349
    %v356 = vsub.f32 %v226, %v349
    %v357 = vsub.f32 %v229, %v349
    %v358 = vsub.f32 %v232, %v349
    %v359 = vsub.f32 %v235, %v349
    %v360 = vsub.f32 %v238, %v349
    %v361 = vsub.f32 %v241, %v349
    %v362 = vsub.f32 %v244, %v349
    %v363 = vsub.f32 %v247, %v349
    %v364 = vsub.f32 %v250, %v349
    %v365 = vsub.f32 %v253, %v349
    %v366 = vsub.f32 %v256, %v349
    %v367 = vsub.f32 %v259, %v349
    %v368 = vsub.f32 %v262, %v349
    %v369 = vsub.f32 %v265, %v349
    %v370 = vsub.f32 %v268, %v349
    %v371 = vsub.f32 %v271, %v349
    %v372 = vsub.f32 %v274, %v349
    %v373 = vsub.f32 %v277, %v349
    %v374 = vsub.f32 %v280, %v349
    %v375 = vsub.f32 %v283, %v349
    %v376 = vsub.f32 %v286, %v349
    %v377 = vsub.f32 %v289, %v349
    %v378 = vsub.f32 %v292, %v349
    %v379 = vsub.f32 %v295, %v349
    %v380 = vsub.f32 %v298, %v349
    %v381 = vsub.f32 %v301, %v349
    %v382 = vmul.f32 %v350, %v350
    %v383 = vmul.f32 %v351, %v351
    %v384 = vmul.f32 %v352, %v352
    %v385 = vmul.f32 %v353, %v353
    %v386 = vmul.f32 %v354, %v354
    %v387 = vmul.f32 %v355, %v355
    %v388 = vmul.f32 %v356, %v356
    %v389 = vmul.f32 %v357, %v357
    %v390 = vmul.f32 %v358, %v358
    %v391 = vmul.f32 %v359, %v359
    %v392 = vmul.f32 %v360, %v360
    %v393 = vmul.f32 %v361, %v361
    %v394 = vmul.f32 %v362, %v362
    %v395 = vmul.f32 %v363, %v363
    %v396 = vmul.f32 %v364, %v364
    %v397 = vmul.f32 %v365, %v365
    %v398 = vmul.f32 %v366, %v366
    %v399 = vmul.f32 %v367, %v367
    %v400 = vmul.f32 %v368, %v368
    %v401 = vmul.f32 %v369, %v369
    %v402 = vmul.f32 %v370, %v370
    %v403 = vmul.f32 %v371, %v371
    %v404 = vmul.f32 %v372, %v372
    %v405 = vmul.f32 %v373, %v373
    %v406 = vmul.f32 %v374, %v374
    %v407 = vmul.f32 %v375, %v375
    %v408 = vmul.f32 %v376, %v376
    %v409 = vmul.f32 %v377, %v377
    %v410 = vmul.f32 %v378, %v378
    %v411 = vmul.f32 %v379, %v379
    %v412 = vmul.f32 %v380, %v380
    %v413 = vmul.f32 %v381, %v381
    %v414 = vadd.f32 %v382, %v383
    %v415 = vadd.f32 %v414, %v384
    %v416 = vadd.f32 %v415, %v385
    %v417 = vadd.f32 %v416, %v386
    %v418 = vadd.f32 %v417, %v387
    %v419 = vadd.f32 %v418, %v388
    %v420 = vadd.f32 %v419, %v389
    %v421 = vadd.f32 %v420, %v390
    %v422 = vadd.f32 %v421, %v391
    %v423 = vadd.f32 %v422, %v392
    %v424 = vadd.f32 %v423, %v393
    %v425 = vadd.f32 %v424, %v394
    %v426 = vadd.f32 %v425, %v395
    %v427 = vadd.f32 %v426, %v396
    %v428 = vadd.f32 %v427, %v397
    %v429 = vadd.f32 %v428, %v398
    %v430 = vadd.f32 %v429, %v399
    %v431 = vadd.f32 %v430, %v400
    %v432 = vadd.f32 %v431, %v401
    %v433 = vadd.f32 %v432, %v402
    %v434 = vadd.f32 %v433, %v403
    %v435 = vadd.f32 %v434, %v404
    %v436 = vadd.f32 %v435, %v405
    %v437 = vadd.f32 %v436, %v406
    %v438 = vadd.f32 %v437, %v407
    %v439 = vadd.f32 %v438, %v408
    %v440 = vadd.f32 %v439, %v409
    %v441 = vadd.f32 %v440, %v410
    %v442 = vadd.f32 %v441, %v411
    %v443 = vadd.f32 %v442, %v412
    %v444 = vadd.f32 %v443, %v413
    %v445 = vrot.slane %v444, 4
    %v446 = vadd.f32 %v444, %v445
    %v447 = vrot.slane %v446, 2
    %v448 = vadd.f32 %v446, %v447
    %v449 = vrot.slane %v448, 1
    %v450 = vadd.f32 %v448, %v449
    %v451 = vmul.f32 %v450, %v348
    %v452 = vadd.f32 %v451, 1e-05
    %v453 = vrsqrt.pop %v452
    %v454 = vmul.f32 %v453, %v452
    %v455 = vmul.f32 %v454, %v453
    %v456 = vmul.f32 0.5, %v455
    %v457 = vsub.f32 1.5, %v456
    %v458 = vmul.f32 %v453, %v457
    %vm459 = vweird.f32 %v452
    %vm460 = vweird.f32 %v453
    %vm461 = vmor %vm459, %vm460
    %v462 = vsel %vm461, %v453, %v458
    %v463 = vmul.f32 %v350, %v462
    %v464 = vmul.f32 %v351, %v462
    %v465 = vmul.f32 %v352, %v462
    %v466 = vmul.f32 %v353, %v462
    %v467 = vmul.f32 %v354, %v462
    %v468 = vmul.f32 %v355, %v462
    %v469 = vmul.f32 %v356, %v462
    %v470 = vmul.f32 %v357, %v462
    %v471 = vmul.f32 %v358, %v462
    %v472 = vmul.f32 %v359, %v462
    %v473 = vmul.f32 %v360, %v462
    %v474 = vmul.f32 %v361, %v462
    %v475 = vmul.f32 %v362, %v462
    %v476 = vmul.f32 %v363, %v462
    %v477 = vmul.f32 %v364, %v462
    %v478 = vmul.f32 %v365, %v462
    %v479 = vmul.f32 %v366, %v462
    %v480 = vmul.f32 %v367, %v462
    %v481 = vmul.f32 %v368, %v462
    %v482 = vmul.f32 %v369, %v462
    %v483 = vmul.f32 %v370, %v462
    %v484 = vmul.f32 %v371, %v462
    %v485 = vmul.f32 %v372, %v462
    %v486 = vmul.f32 %v373, %v462
    %v487 = vmul.f32 %v374, %v462
    %v488 = vmul.f32 %v375, %v462
    %v489 = vmul.f32 %v376, %v462
    %v490 = vmul.f32 %v377, %v462
    %v491 = vmul.f32 %v378, %v462
    %v492 = vmul.f32 %v379, %v462
    %v493 = vmul.f32 %v380, %v462
    %v494 = vmul.f32 %v381, %v462
    %v496 = vperm.slane %v303, 0
    %v498 = vmul.f32 %v463, %v496
    %v499 = vmul.f32 %v464, %v496
    %v500 = vmul.f32 %v465, %v496
    %v501 = vmul.f32 %v466, %v496
    %v502 = vmul.f32 %v467, %v496
    %v503 = vmul.f32 %v468, %v496
    %v504 = vmul.f32 %v469, %v496
    %v505 = vmul.f32 %v470, %v496
    %v506 = vmul.f32 %v471, %v496
    %v507 = vmul.f32 %v472, %v496
    %v508 = vmul.f32 %v473, %v496
    %v509 = vmul.f32 %v474, %v496
    %v510 = vmul.f32 %v475, %v496
    %v511 = vmul.f32 %v476, %v496
    %v512 = vmul.f32 %v477, %v496
    %v513 = vmul.f32 %v478, %v496
    %v514 = vmul.f32 %v479, %v496
    %v515 = vmul.f32 %v480, %v496
    %v516 = vmul.f32 %v481, %v496
    %v517 = vmul.f32 %v482, %v496
    %v518 = vmul.f32 %v483, %v496
    %v519 = vmul.f32 %v484, %v496
    %v520 = vmul.f32 %v485, %v496
    %v521 = vmul.f32 %v486, %v496
    %v522 = vmul.f32 %v487, %v496
    %v523 = vmul.f32 %v488, %v496
    %v524 = vmul.f32 %v489, %v496
    %v525 = vmul.f32 %v490, %v496
    %v526 = vmul.f32 %v491, %v496
    %v527 = vmul.f32 %v492, %v496
    %v528 = vmul.f32 %v493, %v496
    %v529 = vmul.f32 %v494, %v496
    %v531 = vperm.slane %v304, 0
    %v533 = vadd.f32 %v498, %v531
    %v534 = vadd.f32 %v499, %v531
    %v535 = vadd.f32 %v500, %v531
    %v536 = vadd.f32 %v501, %v531
    %v537 = vadd.f32 %v502, %v531
    %v538 = vadd.f32 %v503, %v531
    %v539 = vadd.f32 %v504, %v531
    %v540 = vadd.f32 %v505, %v531
    %v541 = vadd.f32 %v506, %v531
    %v542 = vadd.f32 %v507, %v531
    %v543 = vadd.f32 %v508, %v531
    %v544 = vadd.f32 %v509, %v531
    %v545 = vadd.f32 %v510, %v531
    %v546 = vadd.f32 %v511, %v531
    %v547 = vadd.f32 %v512, %v531
    %v548 = vadd.f32 %v513, %v531
    %v549 = vadd.f32 %v514, %v531
    %v550 = vadd.f32 %v515, %v531
    %v551 = vadd.f32 %v516, %v531
    %v552 = vadd.f32 %v517, %v531
    %v553 = vadd.f32 %v518, %v531
    %v554 = vadd.f32 %v519, %v531
    %v555 = vadd.f32 %v520, %v531
    %v556 = vadd.f32 %v521, %v531
    %v557 = vadd.f32 %v522, %v531
    %v558 = vadd.f32 %v523, %v531
    %v559 = vadd.f32 %v524, %v531
    %v560 = vadd.f32 %v525, %v531
    %v561 = vadd.f32 %v526, %v531
    %v562 = vadd.f32 %v527, %v531
    %v563 = vadd.f32 %v528, %v531
    %v564 = vadd.f32 %v529, %v531
    %v565 = vmax.f32 %v533, 0.0
    %v566 = vmax.f32 %v534, 0.0
    %v567 = vmax.f32 %v535, 0.0
    %v568 = vmax.f32 %v536, 0.0
    %v569 = vmax.f32 %v537, 0.0
    %v570 = vmax.f32 %v538, 0.0
    %v571 = vmax.f32 %v539, 0.0
    %v572 = vmax.f32 %v540, 0.0
    %v573 = vmax.f32 %v541, 0.0
    %v574 = vmax.f32 %v542, 0.0
    %v575 = vmax.f32 %v543, 0.0
    %v576 = vmax.f32 %v544, 0.0
    %v577 = vmax.f32 %v545, 0.0
    %v578 = vmax.f32 %v546, 0.0
    %v579 = vmax.f32 %v547, 0.0
    %v580 = vmax.f32 %v548, 0.0
    %v581 = vmax.f32 %v549, 0.0
    %v582 = vmax.f32 %v550, 0.0
    %v583 = vmax.f32 %v551, 0.0
    %v584 = vmax.f32 %v552, 0.0
    %v585 = vmax.f32 %v553, 0.0
    %v586 = vmax.f32 %v554, 0.0
    %v587 = vmax.f32 %v555, 0.0
    %v588 = vmax.f32 %v556, 0.0
    %v589 = vmax.f32 %v557, 0.0
    %v590 = vmax.f32 %v558, 0.0
    %v591 = vmax.f32 %v559, 0.0
    %v592 = vmax.f32 %v560, 0.0
    %v593 = vmax.f32 %v561, 0.0
    %v594 = vmax.f32 %v562, 0.0
    %v595 = vmax.f32 %v563, 0.0
    %v596 = vmax.f32 %v564, 0.0
    %v597 = vld [vmem:[%s5] sm:$0xff]
    %v598 = vld [vmem:[%s5 + $0x8] sm:$0xff]
    %v599 = vld [vmem:[%s5 + $0x10] sm:$0xff]
    %v600 = vld [vmem:[%s5 + $0x18] sm:$0xff]
    %v601 = vld [vmem:[%s5 + $0x20] sm:$0xff]
    %v602 = vld [vmem:[%s5 + $0x28] sm:$0xff]
    %v603 = vld [vmem:[%s5 + $0x30] sm:$0xff]
    %v604 = vld [vmem:[%s5 + $0x38] sm:$0xff]
    %v605 = vld [vmem:[%s5 + $0x40] sm:$0xff]
    %v606 = vld [vmem:[%s5 + $0x48] sm:$0xff]
    %v607 = vld [vmem:[%s5 + $0x50] sm:$0xff]
    %v608 = vld [vmem:[%s5 + $0x58] sm:$0xff]
    %v609 = vld [vmem:[%s5 + $0x60] sm:$0xff]
    %v610 = vld [vmem:[%s5 + $0x68] sm:$0xff]
    %v611 = vld [vmem:[%s5 + $0x70] sm:$0xff]
    %v612 = vld [vmem:[%s5 + $0x78] sm:$0xff]
    %v613 = vld [vmem:[%s5 + $0x80] sm:$0xff]
    %v614 = vld [vmem:[%s5 + $0x88] sm:$0xff]
    %v615 = vld [vmem:[%s5 + $0x90] sm:$0xff]
    %v616 = vld [vmem:[%s5 + $0x98] sm:$0xff]
    %v617 = vld [vmem:[%s5 + $0xa0] sm:$0xff]
    %v618 = vld [vmem:[%s5 + $0xa8] sm:$0xff]
    %v619 = vld [vmem:[%s5 + $0xb0] sm:$0xff]
    %v620 = vld [vmem:[%s5 + $0xb8] sm:$0xff]
    %v621 = vld [vmem:[%s5 + $0xc0] sm:$0xff]
    %v622 = vld [vmem:[%s5 + $0xc8] sm:$0xff]
    %v623 = vld [vmem:[%s5 + $0xd0] sm:$0xff]
    %v624 = vld [vmem:[%s5 + $0xd8] sm:$0xff]
    %v625 = vld [vmem:[%s5 + $0xe0] sm:$0xff]
    %v626 = vld [vmem:[%s5 + $0xe8] sm:$0xff]
    %v627 = vld [vmem:[%s5 + $0xf0] sm:$0xff]
    %v628 = vld [vmem:[%s5 + $0xf8] sm:$0xff]
    %v629 = vld [vmem:[%s6] sm:$0x3]
    %v631 = vperm.slane %v629, 0
    %v632 = vperm.slane %v629, 1
    %635 = vmatpush.msra.mxu0 %v627
    %636 = vmatpush.msra.mxu0 %v625
    %637 = vmatpush.msra.mxu0 %v623
    %638 = vmatpush.msra.mxu0 %v621
    %639 = vmatpush.msra.mxu0 %v619
    %640 = vmatpush.msra.mxu0 %v617
    %641 = vmatpush.msra.mxu0 %v615
    %642 = vmatpush.msra.mxu0 %v613
    %643 = vmatpush.msra.mxu0 %v611
    %644 = vmatpush.msra.mxu0 %v609
    %645 = vmatpush.msra.mxu0 %v607
    %646 = vmatpush.msra.mxu0 %v605
    %647 = vmatpush.msra.mxu0 %v603
    %648 = vmatpush.msra.mxu0 %v601
    %649 = vmatpush.msra.mxu0 %v599
    %650 = vmatpush.msra.mxu0 %v597
    %651 = vmatmul.f32.gmra.mxu0 %v565
    %v652 = vpop.f32.mrf.mxu0
    %v653 = vadd.f32 %v631, %v652
    %654 = vmatmul.f32.gmra.mxu0 %v566
    %v655 = vpop.f32.mrf.mxu0
    %v656 = vadd.f32 %v631, %v655
    %657 = vmatmul.f32.gmra.mxu0 %v567
    %v658 = vpop.f32.mrf.mxu0
    %v659 = vadd.f32 %v631, %v658
    %660 = vmatmul.f32.gmra.mxu0 %v568
    %v661 = vpop.f32.mrf.mxu0
    %v662 = vadd.f32 %v631, %v661
    %663 = vmatmul.f32.gmra.mxu0 %v569
    %v664 = vpop.f32.mrf.mxu0
    %v665 = vadd.f32 %v631, %v664
    %666 = vmatmul.f32.gmra.mxu0 %v570
    %v667 = vpop.f32.mrf.mxu0
    %v668 = vadd.f32 %v631, %v667
    %669 = vmatmul.f32.gmra.mxu0 %v571
    %v670 = vpop.f32.mrf.mxu0
    %v671 = vadd.f32 %v631, %v670
    %672 = vmatmul.f32.gmra.mxu0 %v572
    %v673 = vpop.f32.mrf.mxu0
    %v674 = vadd.f32 %v631, %v673
    %675 = vmatmul.f32.gmra.mxu0 %v573
    %v676 = vpop.f32.mrf.mxu0
    %v677 = vadd.f32 %v631, %v676
    %678 = vmatmul.f32.gmra.mxu0 %v574
    %v679 = vpop.f32.mrf.mxu0
    %v680 = vadd.f32 %v631, %v679
    %681 = vmatmul.f32.gmra.mxu0 %v575
    %v682 = vpop.f32.mrf.mxu0
    %v683 = vadd.f32 %v631, %v682
    %684 = vmatmul.f32.gmra.mxu0 %v576
    %v685 = vpop.f32.mrf.mxu0
    %v686 = vadd.f32 %v631, %v685
    %687 = vmatmul.f32.gmra.mxu0 %v577
    %v688 = vpop.f32.mrf.mxu0
    %v689 = vadd.f32 %v631, %v688
    %690 = vmatmul.f32.gmra.mxu0 %v578
    %v691 = vpop.f32.mrf.mxu0
    %v692 = vadd.f32 %v631, %v691
    %693 = vmatmul.f32.gmra.mxu0 %v579
    %v694 = vpop.f32.mrf.mxu0
    %v695 = vadd.f32 %v631, %v694
    %696 = vmatmul.f32.gmra.mxu0 %v580
    %v697 = vpop.f32.mrf.mxu0
    %v698 = vadd.f32 %v631, %v697
    %699 = vmatmul.f32.gmra.mxu0 %v581
    %v700 = vpop.f32.mrf.mxu0
    %v701 = vadd.f32 %v631, %v700
    %702 = vmatmul.f32.gmra.mxu0 %v582
    %v703 = vpop.f32.mrf.mxu0
    %v704 = vadd.f32 %v631, %v703
    %705 = vmatmul.f32.gmra.mxu0 %v583
    %v706 = vpop.f32.mrf.mxu0
    %v707 = vadd.f32 %v631, %v706
    %708 = vmatmul.f32.gmra.mxu0 %v584
    %v709 = vpop.f32.mrf.mxu0
    %v710 = vadd.f32 %v631, %v709
    %711 = vmatmul.f32.gmra.mxu0 %v585
    %v712 = vpop.f32.mrf.mxu0
    %v713 = vadd.f32 %v631, %v712
    %714 = vmatmul.f32.gmra.mxu0 %v586
    %v715 = vpop.f32.mrf.mxu0
    %v716 = vadd.f32 %v631, %v715
    %717 = vmatmul.f32.gmra.mxu0 %v587
    %v718 = vpop.f32.mrf.mxu0
    %v719 = vadd.f32 %v631, %v718
    %720 = vmatmul.f32.gmra.mxu0 %v588
    %v721 = vpop.f32.mrf.mxu0
    %v722 = vadd.f32 %v631, %v721
    %723 = vmatmul.f32.gmra.mxu0 %v589
    %v724 = vpop.f32.mrf.mxu0
    %v725 = vadd.f32 %v631, %v724
    %726 = vmatmul.f32.gmra.mxu0 %v590
    %v727 = vpop.f32.mrf.mxu0
    %v728 = vadd.f32 %v631, %v727
    %729 = vmatmul.f32.gmra.mxu0 %v591
    %v730 = vpop.f32.mrf.mxu0
    %v731 = vadd.f32 %v631, %v730
    %732 = vmatmul.f32.gmra.mxu0 %v592
    %v733 = vpop.f32.mrf.mxu0
    %v734 = vadd.f32 %v631, %v733
    %735 = vmatmul.f32.gmra.mxu0 %v593
    %v736 = vpop.f32.mrf.mxu0
    %v737 = vadd.f32 %v631, %v736
    %738 = vmatmul.f32.gmra.mxu0 %v594
    %v739 = vpop.f32.mrf.mxu0
    %v740 = vadd.f32 %v631, %v739
    %741 = vmatmul.f32.gmra.mxu0 %v595
    %v742 = vpop.f32.mrf.mxu0
    %v743 = vadd.f32 %v631, %v742
    %744 = vmatmul.f32.gmra.mxu0 %v596
    %v745 = vpop.f32.mrf.mxu0
    %v746 = vadd.f32 %v631, %v745
    %747 = vdwg.mxu0
    %748 = vmatpush.msra.mxu0 %v628
    %749 = vmatpush.msra.mxu0 %v626
    %750 = vmatpush.msra.mxu0 %v624
    %751 = vmatpush.msra.mxu0 %v622
    %752 = vmatpush.msra.mxu0 %v620
    %753 = vmatpush.msra.mxu0 %v618
    %754 = vmatpush.msra.mxu0 %v616
    %755 = vmatpush.msra.mxu0 %v614
    %756 = vmatpush.msra.mxu0 %v612
    %757 = vmatpush.msra.mxu0 %v610
    %758 = vmatpush.msra.mxu0 %v608
    %759 = vmatpush.msra.mxu0 %v606
    %760 = vmatpush.msra.mxu0 %v604
    %761 = vmatpush.msra.mxu0 %v602
    %762 = vmatpush.msra.mxu0 %v600
    %763 = vmatpush.msra.mxu0 %v598
    %764 = vmatmul.f32.gmra.mxu0 %v565
    %v765 = vpop.f32.mrf.mxu0
    %v766 = vadd.f32 %v632, %v765
    %767 = vmatmul.f32.gmra.mxu0 %v566
    %v768 = vpop.f32.mrf.mxu0
    %v769 = vadd.f32 %v632, %v768
    %770 = vmatmul.f32.gmra.mxu0 %v567
    %v771 = vpop.f32.mrf.mxu0
    %v772 = vadd.f32 %v632, %v771
    %773 = vmatmul.f32.gmra.mxu0 %v568
    %v774 = vpop.f32.mrf.mxu0
    %v775 = vadd.f32 %v632, %v774
    %776 = vmatmul.f32.gmra.mxu0 %v569
    %v777 = vpop.f32.mrf.mxu0
    %v778 = vadd.f32 %v632, %v777
    %779 = vmatmul.f32.gmra.mxu0 %v570
    %v780 = vpop.f32.mrf.mxu0
    %v781 = vadd.f32 %v632, %v780
    %782 = vmatmul.f32.gmra.mxu0 %v571
    %v783 = vpop.f32.mrf.mxu0
    %v784 = vadd.f32 %v632, %v783
    %785 = vmatmul.f32.gmra.mxu0 %v572
    %v786 = vpop.f32.mrf.mxu0
    %v787 = vadd.f32 %v632, %v786
    %788 = vmatmul.f32.gmra.mxu0 %v573
    %v789 = vpop.f32.mrf.mxu0
    %v790 = vadd.f32 %v632, %v789
    %791 = vmatmul.f32.gmra.mxu0 %v574
    %v792 = vpop.f32.mrf.mxu0
    %v793 = vadd.f32 %v632, %v792
    %794 = vmatmul.f32.gmra.mxu0 %v575
    %v795 = vpop.f32.mrf.mxu0
    %v796 = vadd.f32 %v632, %v795
    %797 = vmatmul.f32.gmra.mxu0 %v576
    %v798 = vpop.f32.mrf.mxu0
    %v799 = vadd.f32 %v632, %v798
    %800 = vmatmul.f32.gmra.mxu0 %v577
    %v801 = vpop.f32.mrf.mxu0
    %v802 = vadd.f32 %v632, %v801
    %803 = vmatmul.f32.gmra.mxu0 %v578
    %v804 = vpop.f32.mrf.mxu0
    %v805 = vadd.f32 %v632, %v804
    %806 = vmatmul.f32.gmra.mxu0 %v579
    %v807 = vpop.f32.mrf.mxu0
    %v808 = vadd.f32 %v632, %v807
    %809 = vmatmul.f32.gmra.mxu0 %v580
    %v810 = vpop.f32.mrf.mxu0
    %v811 = vadd.f32 %v632, %v810
    %812 = vmatmul.f32.gmra.mxu0 %v581
    %v813 = vpop.f32.mrf.mxu0
    %v814 = vadd.f32 %v632, %v813
    %815 = vmatmul.f32.gmra.mxu0 %v582
    %v816 = vpop.f32.mrf.mxu0
    %v817 = vadd.f32 %v632, %v816
    %818 = vmatmul.f32.gmra.mxu0 %v583
    %v819 = vpop.f32.mrf.mxu0
    %v820 = vadd.f32 %v632, %v819
    %821 = vmatmul.f32.gmra.mxu0 %v584
    %v822 = vpop.f32.mrf.mxu0
    %v823 = vadd.f32 %v632, %v822
    %824 = vmatmul.f32.gmra.mxu0 %v585
    %v825 = vpop.f32.mrf.mxu0
    %v826 = vadd.f32 %v632, %v825
    %827 = vmatmul.f32.gmra.mxu0 %v586
    %v828 = vpop.f32.mrf.mxu0
    %v829 = vadd.f32 %v632, %v828
    %830 = vmatmul.f32.gmra.mxu0 %v587
    %v831 = vpop.f32.mrf.mxu0
    %v832 = vadd.f32 %v632, %v831
    %833 = vmatmul.f32.gmra.mxu0 %v588
    %v834 = vpop.f32.mrf.mxu0
    %v835 = vadd.f32 %v632, %v834
    %836 = vmatmul.f32.gmra.mxu0 %v589
    %v837 = vpop.f32.mrf.mxu0
    %v838 = vadd.f32 %v632, %v837
    %839 = vmatmul.f32.gmra.mxu0 %v590
    %v840 = vpop.f32.mrf.mxu0
    %v841 = vadd.f32 %v632, %v840
    %842 = vmatmul.f32.gmra.mxu0 %v591
    %v843 = vpop.f32.mrf.mxu0
    %v844 = vadd.f32 %v632, %v843
    %845 = vmatmul.f32.gmra.mxu0 %v592
    %v846 = vpop.f32.mrf.mxu0
    %v847 = vadd.f32 %v632, %v846
    %848 = vmatmul.f32.gmra.mxu0 %v593
    %v849 = vpop.f32.mrf.mxu0
    %v850 = vadd.f32 %v632, %v849
    %851 = vmatmul.f32.gmra.mxu0 %v594
    %v852 = vpop.f32.mrf.mxu0
    %v853 = vadd.f32 %v632, %v852
    %854 = vmatmul.f32.gmra.mxu0 %v595
    %v855 = vpop.f32.mrf.mxu0
    %v856 = vadd.f32 %v632, %v855
    %857 = vmatmul.f32.gmra.mxu0 %v596
    %v858 = vpop.f32.mrf.mxu0
    %v859 = vadd.f32 %v632, %v858
    %860 = vdwg.mxu0
    %861 = vst [vmem:[%s7] sm:$0xff] %v653
    %862 = vst [vmem:[%s7 + $0x8] sm:$0xff] %v766
    %863 = vst [vmem:[%s7 + $0x10] sm:$0xff] %v656
    %864 = vst [vmem:[%s7 + $0x18] sm:$0xff] %v769
    %865 = vst [vmem:[%s7 + $0x20] sm:$0xff] %v659
    %866 = vst [vmem:[%s7 + $0x28] sm:$0xff] %v772
    %867 = vst [vmem:[%s7 + $0x30] sm:$0xff] %v662
    %868 = vst [vmem:[%s7 + $0x38] sm:$0xff] %v775
    %869 = vst [vmem:[%s7 + $0x40] sm:$0xff] %v665
    %870 = vst [vmem:[%s7 + $0x48] sm:$0xff] %v778
    %871 = vst [vmem:[%s7 + $0x50] sm:$0xff] %v668
    %872 = vst [vmem:[%s7 + $0x58] sm:$0xff] %v781
    %873 = vst [vmem:[%s7 + $0x60] sm:$0xff] %v671
    %874 = vst [vmem:[%s7 + $0x68] sm:$0xff] %v784
    %875 = vst [vmem:[%s7 + $0x70] sm:$0xff] %v674
    %876 = vst [vmem:[%s7 + $0x78] sm:$0xff] %v787
    %877 = vst [vmem:[%s7 + $0x80] sm:$0xff] %v677
    %878 = vst [vmem:[%s7 + $0x88] sm:$0xff] %v790
    %879 = vst [vmem:[%s7 + $0x90] sm:$0xff] %v680
    %880 = vst [vmem:[%s7 + $0x98] sm:$0xff] %v793
    %881 = vst [vmem:[%s7 + $0xa0] sm:$0xff] %v683
    %882 = vst [vmem:[%s7 + $0xa8] sm:$0xff] %v796
    %883 = vst [vmem:[%s7 + $0xb0] sm:$0xff] %v686
    %884 = vst [vmem:[%s7 + $0xb8] sm:$0xff] %v799
    %885 = vst [vmem:[%s7 + $0xc0] sm:$0xff] %v689
    %886 = vst [vmem:[%s7 + $0xc8] sm:$0xff] %v802
    %887 = vst [vmem:[%s7 + $0xd0] sm:$0xff] %v692
    %888 = vst [vmem:[%s7 + $0xd8] sm:$0xff] %v805
    %889 = vst [vmem:[%s7 + $0xe0] sm:$0xff] %v695
    %890 = vst [vmem:[%s7 + $0xe8] sm:$0xff] %v808
    %891 = vst [vmem:[%s7 + $0xf0] sm:$0xff] %v698
    %892 = vst [vmem:[%s7 + $0xf8] sm:$0xff] %v811
    %893 = vst [vmem:[%s7 + $0x100] sm:$0xff] %v701
    %894 = vst [vmem:[%s7 + $0x108] sm:$0xff] %v814
    %895 = vst [vmem:[%s7 + $0x110] sm:$0xff] %v704
    %896 = vst [vmem:[%s7 + $0x118] sm:$0xff] %v817
    %897 = vst [vmem:[%s7 + $0x120] sm:$0xff] %v707
    %898 = vst [vmem:[%s7 + $0x128] sm:$0xff] %v820
    %899 = vst [vmem:[%s7 + $0x130] sm:$0xff] %v710
    %900 = vst [vmem:[%s7 + $0x138] sm:$0xff] %v823
    %901 = vst [vmem:[%s7 + $0x140] sm:$0xff] %v713
    %902 = vst [vmem:[%s7 + $0x148] sm:$0xff] %v826
    %903 = vst [vmem:[%s7 + $0x150] sm:$0xff] %v716
    %904 = vst [vmem:[%s7 + $0x158] sm:$0xff] %v829
    %905 = vst [vmem:[%s7 + $0x160] sm:$0xff] %v719
    %906 = vst [vmem:[%s7 + $0x168] sm:$0xff] %v832
    %907 = vst [vmem:[%s7 + $0x170] sm:$0xff] %v722
    %908 = vst [vmem:[%s7 + $0x178] sm:$0xff] %v835
    %909 = vst [vmem:[%s7 + $0x180] sm:$0xff] %v725
    %910 = vst [vmem:[%s7 + $0x188] sm:$0xff] %v838
    %911 = vst [vmem:[%s7 + $0x190] sm:$0xff] %v728
    %912 = vst [vmem:[%s7 + $0x198] sm:$0xff] %v841
    %913 = vst [vmem:[%s7 + $0x1a0] sm:$0xff] %v731
    %914 = vst [vmem:[%s7 + $0x1a8] sm:$0xff] %v844
    %915 = vst [vmem:[%s7 + $0x1b0] sm:$0xff] %v734
    %916 = vst [vmem:[%s7 + $0x1b8] sm:$0xff] %v847
    %917 = vst [vmem:[%s7 + $0x1c0] sm:$0xff] %v737
    %918 = vst [vmem:[%s7 + $0x1c8] sm:$0xff] %v850
    %919 = vst [vmem:[%s7 + $0x1d0] sm:$0xff] %v740
    %920 = vst [vmem:[%s7 + $0x1d8] sm:$0xff] %v853
    %921 = vst [vmem:[%s7 + $0x1e0] sm:$0xff] %v743
    %922 = vst [vmem:[%s7 + $0x1e8] sm:$0xff] %v856
    %923 = vst [vmem:[%s7 + $0x1f0] sm:$0xff] %v746
    %924 = vst [vmem:[%s7 + $0x1f8] sm:$0xff] %v859
    %v925 = vmax.f32 %v653, %v659
    %v926 = vmax.f32 %v656, %v662
    %v927 = vmax.f32 %v925, %v665
    %v928 = vmax.f32 %v926, %v668
    %v929 = vmax.f32 %v927, %v671
    %v930 = vmax.f32 %v928, %v674
    %v931 = vmax.f32 %v929, %v677
    %v932 = vmax.f32 %v930, %v680
    %v933 = vmax.f32 %v931, %v683
    %v934 = vmax.f32 %v932, %v686
    %v935 = vmax.f32 %v933, %v689
    %v936 = vmax.f32 %v934, %v692
    %v937 = vmax.f32 %v935, %v695
    %v938 = vmax.f32 %v936, %v698
    %v939 = vmax.f32 %v937, %v938
    %v940 = vrot.slane %v939, 4
    %v941 = vmax.f32 %v939, %v940
    %v942 = vrot.slane %v941, 2
    %v943 = vmax.f32 %v941, %v942
    %v944 = vrot.slane %v943, 1
    %v945 = vmax.f32 %v943, %v944
    %v946 = vmax.f32 %v766, %v772
    %v947 = vmax.f32 %v769, %v775
    %v948 = vmax.f32 %v946, %v778
    %v949 = vmax.f32 %v947, %v781
    %v950 = vmax.f32 %v948, %v784
    %v951 = vmax.f32 %v949, %v787
    %v952 = vmax.f32 %v950, %v790
    %v953 = vmax.f32 %v951, %v793
    %v954 = vmax.f32 %v952, %v796
    %v955 = vmax.f32 %v953, %v799
    %v956 = vmax.f32 %v954, %v802
    %v957 = vmax.f32 %v955, %v805
    %v958 = vmax.f32 %v956, %v808
    %v959 = vmax.f32 %v957, %v811
    %v960 = vmax.f32 %v958, %v959
    %v961 = vrot.slane %v960, 4
    %v962 = vmax.f32 %v960, %v961
    %v963 = vrot.slane %v962, 2
    %v964 = vmax.f32 %v962, %v963
    %v965 = vrot.slane %v964, 1
    %v966 = vmax.f32 %v964, %v965
    %v969 = vrot.slane %v966, 7
    %vm970 = vcmask 1040384
    %v971 = vsel %vm970, %v945, %v969
    %v973 = vlaneseq
    %vm974 = vcmp.ge.s32.totalorder %v973, 0
    %vm975 = vcmp.lt.s32.totalorder %v973, 256
    %vm976 = vmand %vm974, %vm975
    %977 = vst.msk [vmem:[%s8] ss:$2 sm:$0x3] %vm976, %v971
    %v978 = vmax.f32 %v701, %v707
    %v979 = vmax.f32 %v704, %v710
    %v980 = vmax.f32 %v978, %v713
    %v981 = vmax.f32 %v979, %v716
    %v982 = vmax.f32 %v980, %v719
    %v983 = vmax.f32 %v981, %v722
    %v984 = vmax.f32 %v982, %v725
    %v985 = vmax.f32 %v983, %v728
    %v986 = vmax.f32 %v984, %v731
    %v987 = vmax.f32 %v985, %v734
    %v988 = vmax.f32 %v986, %v737
    %v989 = vmax.f32 %v987, %v740
    %v990 = vmax.f32 %v988, %v743
    %v991 = vmax.f32 %v989, %v746
    %v992 = vmax.f32 %v990, %v991
    %v993 = vrot.slane %v992, 4
    %v994 = vmax.f32 %v992, %v993
    %v995 = vrot.slane %v994, 2
    %v996 = vmax.f32 %v994, %v995
    %v997 = vrot.slane %v996, 1
    %v998 = vmax.f32 %v996, %v997
    %v999 = vmax.f32 %v814, %v820
    %v1000 = vmax.f32 %v817, %v823
    %v1001 = vmax.f32 %v999, %v826
    %v1002 = vmax.f32 %v1000, %v829
    %v1003 = vmax.f32 %v1001, %v832
    %v1004 = vmax.f32 %v1002, %v835
    %v1005 = vmax.f32 %v1003, %v838
    %v1006 = vmax.f32 %v1004, %v841
    %v1007 = vmax.f32 %v1005, %v844
    %v1008 = vmax.f32 %v1006, %v847
    %v1009 = vmax.f32 %v1007, %v850
    %v1010 = vmax.f32 %v1008, %v853
    %v1011 = vmax.f32 %v1009, %v856
    %v1012 = vmax.f32 %v1010, %v859
    %v1013 = vmax.f32 %v1011, %v1012
    %v1014 = vrot.slane %v1013, 4
    %v1015 = vmax.f32 %v1013, %v1014
    %v1016 = vrot.slane %v1015, 2
    %v1017 = vmax.f32 %v1015, %v1016
    %v1018 = vrot.slane %v1017, 1
    %v1019 = vmax.f32 %v1017, %v1018
    %v1022 = vrot.slane %v1019, 7
    %v1023 = vsel %vm970, %v998, %v1022
    %s1025 = scalar_lea.vmem %s8, 1
    %1026 = vst.msk [vmem:[%s1025] ss:$2 sm:$0x3] %vm976, %v1023
    // Predicated region
    $region38: #{mfm_forward.4} parent=1 // pred_check
      _
    $region39: #{mfm_forward.4} parent=1 // pred_check_branch
      %1028 = sbr.rel (0) target = $region41
    $region40: #{mfm_forward.4} parent=1 // pred_region
      _
    $region41: #{mfm_forward.4} parent=1 // pred_fallthru
      _
    // Predicated region
    $region42: #{mfm_forward.4} parent=1 // pred_check
      _
    $region43: #{mfm_forward.4} parent=1 // pred_check_branch
      %1030 = sbr.rel (0) target = $region45
    $region44: #{mfm_forward.4} parent=1 // pred_region
      _
    $region45: #{mfm_forward.4} parent=1 // pred_fallthru
      _
    // Predicated region
    $region46: #{mfm_forward.4} parent=1 // pred_check
      _
    $region47: #{mfm_forward.4} parent=1 // pred_check_branch
      %1032 = sbr.rel (0) target = $region49
    $region48: #{mfm_forward.4} parent=1 // pred_region
      _
    $region49: #{mfm_forward.4} parent=1 // pred_fallthru
      _
    // Predicated region
    $region50: #{mfm_forward.4} parent=1 // pred_check
      _
    $region51: #{mfm_forward.4} parent=1 // pred_check_branch
      %1034 = sbr.rel (0) target = $region53
    $region52: #{mfm_forward.4} parent=1 // pred_region
      _
    $region53: #{mfm_forward.4} parent=1 // pred_fallthru
      _
    %1035 = vsyncpa [#allocation3], 1
    %1036 = vsyncpa [#allocation5], 1

// kernel: mfm_forward.7
$region0: #{mfm_forward.7}
  #allocation0 [shape = 'u32[]', space=smem, size = 0x4, offset = 0x4, fixed_abs, tag = 'smem constant byte address 0x4 - core index']
  #allocation1 [shape = 'u32[72,128]{1,0:T(1,128)}', space=vmem, size = 0x9000, scoped, tag = 'internal scratch']
  %s0 = inlined_call_operand.vmem [shape: f32[2,256], index: 0, kind: input, shape index: {}]
  %s1 = inlined_call_operand.hbm [shape: f32[256,256], index: 1, kind: input, shape index: {}]
  %s2 = inlined_call_operand.vmem [shape: f32[1,256], index: 2, kind: input, shape index: {}]
  %s3 = inlined_call_operand.vmem [shape: f32[1,256], index: 3, kind: input, shape index: {}]
  %s4 = inlined_call_operand.vmem [shape: f32[1,256], index: 4, kind: input, shape index: {}]
  %s5 = inlined_call_operand.hbm [shape: f32[256,256], index: 5, kind: input, shape index: {}]
  %s6 = inlined_call_operand.hbm [shape: f32[1,256], index: 6, kind: input, shape index: {}]
  %s7 = inlined_call_operand.vmem [shape: f32[1,256], index: 7, kind: input, shape index: {}]
  %s8 = inlined_call_operand.hbm [shape: f32[1,256], index: 8, kind: input, shape index: {}]
  %s9 = inlined_call_operand.hbm [shape: f32[256,256], index: 9, kind: input, shape index: {}]
  %s10 = inlined_call_operand.hbm [shape: f32[1,256], index: 10, kind: input, shape index: {}]
  %s11 = inlined_call_operand.hbm [shape: f32[256,256], index: 11, kind: input, shape index: {}]
  %s12 = inlined_call_operand.hbm [shape: f32[1,256], index: 12, kind: input, shape index: {}]
  %s13 = inlined_call_operand.hbm [shape: f32[1,256], index: 13, kind: input, shape index: {}]
  %s14 = inlined_call_operand.hbm [shape: f32[1,256], index: 14, kind: input, shape index: {}]
  %s15 = inlined_call_operand.hbm [shape: f32[256,256], index: 15, kind: input, shape index: {}]
  %s16 = inlined_call_operand.hbm [shape: f32[1,256], index: 16, kind: input, shape index: {}]
  %s17 = inlined_call_operand.hbm [shape: f32[2,256], index: 17, kind: output, shape index: {}]
  %s18 = sld [smem:[#allocation0]]
  $region126: #{mfm_forward.7} parent=0
    _
  %s20 = ssub.s32 1, %s18
  %s21 = scalar_select 0, %s20, %s18
  $region1: #{mfm_forward.7} parent=0
    #allocation2 [shape = 'u8[262144]{0}', space=vmem, size = 0x40000, scoped, tag = 'input window, operand 1, single buffered']
    #allocation3 [shape = 's32[1]{0}', space=sflag, size = 0x4, scoped, tag = 'scoped memory for mfm_forward.7']
    #allocation4 [shape = 's32[1]{0}', space=sflag, size = 0x4, scoped, tag = 'scoped memory for mfm_forward.7']
    #allocation5 [shape = 'u8[262144]{0}', space=vmem, size = 0x40000, scoped, tag = 'input window, operand 5, single buffered']
    #allocation6 [shape = 's32[1]{0}', space=sflag, size = 0x4, scoped, tag = 'scoped memory for mfm_forward.7']
    #allocation7 [shape = 'u8[1024]{0}', space=vmem, size = 0x400, scoped, tag = 'input window, operand 6, single buffered']
    #allocation8 [shape = 'u8[1024]{0}', space=vmem, size = 0x400, scoped, tag = 'input window, operand 8, single buffered']
    #allocation9 [shape = 's32[1]{0}', space=sflag, size = 0x4, scoped, tag = 'scoped memory for mfm_forward.7']
    #allocation10 [shape = 'u8[262144]{0}', space=vmem, size = 0x40000, scoped, tag = 'input window, operand 9, single buffered']
    #allocation11 [shape = 'u8[1024]{0}', space=vmem, size = 0x400, scoped, tag = 'input window, operand 10, single buffered']
    #allocation12 [shape = 's32[1]{0}', space=sflag, size = 0x4, scoped, tag = 'scoped memory for mfm_forward.7']
    #allocation13 [shape = 'u8[262144]{0}', space=vmem, size = 0x40000, scoped, tag = 'input window, operand 11, single buffered']
    #allocation14 [shape = 'u8[1024]{0}', space=vmem, size = 0x400, scoped, tag = 'input window, operand 12, single buffered']
    #allocation15 [shape = 's32[1]{0}', space=sflag, size = 0x4, scoped, tag = 'scoped memory for mfm_forward.7']
    #allocation16 [shape = 'u8[1024]{0}', space=vmem, size = 0x400, scoped, tag = 'input window, operand 13, single buffered']
    #allocation17 [shape = 'u8[1024]{0}', space=vmem, size = 0x400, scoped, tag = 'input window, operand 14, single buffered']
    #allocation18 [shape = 's32[1]{0}', space=sflag, size = 0x4, scoped, tag = 'scoped memory for mfm_forward.7']
    #allocation19 [shape = 'u8[262144]{0}', space=vmem, size = 0x40000, scoped, tag = 'input window, operand 15, single buffered']
    #allocation20 [shape = 'u8[1024]{0}', space=vmem, size = 0x400, scoped, tag = 'input window, operand 16, single buffered']
    #allocation21 [shape = 's32[1]{0}', space=sflag, size = 0x4, scoped, tag = 'scoped memory for mfm_forward.7']
    #allocation22 [shape = 'u8[2048]{0}', space=vmem, size = 0x800, scoped, tag = 'output window, operand 0, single buffered']
    %22 = vsyncpa [#allocation3], 0
    %23 = vsyncpa [#allocation6], 0
    %24 = vsyncpa [#allocation9], 0
    %25 = vsyncpa [#allocation12], 0
    %26 = vsyncpa [#allocation15], 0
    %27 = vsyncpa [#allocation18], 0
    %28 = vsyncpa [#allocation21], 0
    %29 = vsyncpa [#allocation4], 0
    // Predicated region
    $region2: #{mfm_forward.7} parent=1 // pred_check
      _
    $region3: #{mfm_forward.7} parent=1 // pred_check_branch
      %31 = sbr.rel (0) target = $region5
    $region4: #{mfm_forward.7} parent=1 // pred_region
      _
    $region5: #{mfm_forward.7} parent=1 // pred_fallthru
      _
    // Predicated region
    $region6: #{mfm_forward.7} parent=1 // pred_check
      _
    $region7: #{mfm_forward.7} parent=1 // pred_check_branch
      %33 = sbr.rel (0) target = $region9
    $region8: #{mfm_forward.7} parent=1 // pred_region
      %35 = vsyncadd [#allocation3], 0
      %s36 = sshll.u32 %s1, 4
      %s37 = int_to_ptr.hbm [resolvable:$true] %s36
      %s38 = sshll.u32 [#allocation2], 4
      %s39 = int_to_ptr.vmem [resolvable:$true] %s38
      %44 = dma.hbm_to_vmem [thread:$0]  %s37, 8192, %s39, [#allocation3], 256, 256, 16
    $region9: #{mfm_forward.7} parent=1 // pred_fallthru
      _
    // Predicated region
    $region10: #{mfm_forward.7} parent=1 // pred_check
      _
    $region11: #{mfm_forward.7} parent=1 // pred_check_branch
      %46 = sbr.rel (0) target = $region13
    $region12: #{mfm_forward.7} parent=1 // pred_region
      _
    $region13: #{mfm_forward.7} parent=1 // pred_fallthru
      _
    // Predicated region
    $region14: #{mfm_forward.7} parent=1 // pred_check
      _
    $region15: #{mfm_forward.7} parent=1 // pred_check_branch
      %48 = sbr.rel (0) target = $region17
    $region16: #{mfm_forward.7} parent=1 // pred_region
      _
    $region17: #{mfm_forward.7} parent=1 // pred_fallthru
      _
    // Predicated region
    $region18: #{mfm_forward.7} parent=1 // pred_check
      _
    $region19: #{mfm_forward.7} parent=1 // pred_check_branch
      %50 = sbr.rel (0) target = $region21
    $region20: #{mfm_forward.7} parent=1 // pred_region
      _
    $region21: #{mfm_forward.7} parent=1 // pred_fallthru
      _
    // Predicated region
    $region22: #{mfm_forward.7} parent=1 // pred_check
      _
    $region23: #{mfm_forward.7} parent=1 // pred_check_branch
      %52 = sbr.rel (0) target = $region25
    $region24: #{mfm_forward.7} parent=1 // pred_region
      %54 = vsyncadd [#allocation6], 0
      %s55 = sshll.u32 %s5, 4
      %s56 = int_to_ptr.hbm [resolvable:$true] %s55
      %s57 = sshll.u32 [#allocation5], 4
      %s58 = int_to_ptr.vmem [resolvable:$true] %s57
      %63 = dma.hbm_to_vmem [thread:$0]  %s56, 8192, %s58, [#allocation6], 256, 256, 16
    $region25: #{mfm_forward.7} parent=1 // pred_fallthru
      _
    // Predicated region
    $region26: #{mfm_forward.7} parent=1 // pred_check
      _
    $region27: #{mfm_forward.7} parent=1 // pred_check_branch
      %65 = sbr.rel (0) target = $region29
    $region28: #{mfm_forward.7} parent=1 // pred_region
      %67 = vsyncadd [#allocation6], 0
      %s69 = sshll.u32 %s6, 4
      %s70 = int_to_ptr.hbm [resolvable:$true] %s69
      %s71 = sshll.u32 [#allocation7], 4
      %s72 = int_to_ptr.vmem [resolvable:$true] %s71
      %74 = dma.hbm_to_vmem [thread:$0]  %s70, 32, %s72, [#allocation6]
    $region29: #{mfm_forward.7} parent=1 // pred_fallthru
      _
    // Predicated region
    $region30: #{mfm_forward.7} parent=1 // pred_check
      _
    $region31: #{mfm_forward.7} parent=1 // pred_check_branch
      %76 = sbr.rel (0) target = $region33
    $region32: #{mfm_forward.7} parent=1 // pred_region
      _
    $region33: #{mfm_forward.7} parent=1 // pred_fallthru
      _
    // Predicated region
    $region34: #{mfm_forward.7} parent=1 // pred_check
      _
    $region35: #{mfm_forward.7} parent=1 // pred_check_branch
      %78 = sbr.rel (0) target = $region37
    $region36: #{mfm_forward.7} parent=1 // pred_region
      %80 = vsyncadd [#allocation9], 0
      %s82 = sshll.u32 %s8, 4
      %s83 = int_to_ptr.hbm [resolvable:$true] %s82
      %s84 = sshll.u32 [#allocation8], 4
      %s85 = int_to_ptr.vmem [resolvable:$true] %s84
      %87 = dma.hbm_to_vmem [thread:$0]  %s83, 32, %s85, [#allocation9]
    $region37: #{mfm_forward.7} parent=1 // pred_fallthru
      _
    // Predicated region
    $region38: #{mfm_forward.7} parent=1 // pred_check
      _
    $region39: #{mfm_forward.7} parent=1 // pred_check_branch
      %89 = sbr.rel (0) target = $region41
    $region40: #{mfm_forward.7} parent=1 // pred_region
      %91 = vsyncadd [#allocation9], 0
      %s92 = sshll.u32 %s9, 4
      %s93 = int_to_ptr.hbm [resolvable:$true] %s92
      %s94 = sshll.u32 [#allocation10], 4
      %s95 = int_to_ptr.vmem [resolvable:$true] %s94
      %100 = dma.hbm_to_vmem [thread:$0]  %s93, 8192, %s95, [#allocation9], 256, 256, 16
    $region41: #{mfm_forward.7} parent=1 // pred_fallthru
      _
    // Predicated region
    $region42: #{mfm_forward.7} parent=1 // pred_check
      _
    $region43: #{mfm_forward.7} parent=1 // pred_check_branch
      %102 = sbr.rel (0) target = $region45
    $region44: #{mfm_forward.7} parent=1 // pred_region
      %104 = vsyncadd [#allocation12], 0
      %s106 = sshll.u32 %s10, 4
      %s107 = int_to_ptr.hbm [resolvable:$true] %s106
      %s108 = sshll.u32 [#allocation11], 4
      %s109 = int_to_ptr.vmem [resolvable:$true] %s108
      %111 = dma.hbm_to_vmem [thread:$0]  %s107, 32, %s109, [#allocation12]
    $region45: #{mfm_forward.7} parent=1 // pred_fallthru
      _
    // Predicated region
    $region46: #{mfm_forward.7} parent=1 // pred_check
      _
    $region47: #{mfm_forward.7} parent=1 // pred_check_branch
      %113 = sbr.rel (0) target = $region49
    $region48: #{mfm_forward.7} parent=1 // pred_region
      %115 = vsyncadd [#allocation12], 0
      %s116 = sshll.u32 %s11, 4
      %s117 = int_to_ptr.hbm [resolvable:$true] %s116
      %s118 = sshll.u32 [#allocation13], 4
      %s119 = int_to_ptr.vmem [resolvable:$true] %s118
      %124 = dma.hbm_to_vmem [thread:$0]  %s117, 8192, %s119, [#allocation12], 256, 256, 16
    $region49: #{mfm_forward.7} parent=1 // pred_fallthru
      _
    // Predicated region
    $region50: #{mfm_forward.7} parent=1 // pred_check
      _
    $region51: #{mfm_forward.7} parent=1 // pred_check_branch
      %126 = sbr.rel (0) target = $region53
    $region52: #{mfm_forward.7} parent=1 // pred_region
      %128 = vsyncadd [#allocation15], 0
      %s130 = sshll.u32 %s12, 4
      %s131 = int_to_ptr.hbm [resolvable:$true] %s130
      %s132 = sshll.u32 [#allocation14], 4
      %s133 = int_to_ptr.vmem [resolvable:$true] %s132
      %135 = dma.hbm_to_vmem [thread:$0]  %s131, 32, %s133, [#allocation15]
    $region53: #{mfm_forward.7} parent=1 // pred_fallthru
      _
    // Predicated region
    $region54: #{mfm_forward.7} parent=1 // pred_check
      _
    $region55: #{mfm_forward.7} parent=1 // pred_check_branch
      %137 = sbr.rel (0) target = $region57
    $region56: #{mfm_forward.7} parent=1 // pred_region
      %139 = vsyncadd [#allocation15], 0
      %s141 = sshll.u32 %s13, 4
      %s142 = int_to_ptr.hbm [resolvable:$true] %s141
      %s143 = sshll.u32 [#allocation16], 4
      %s144 = int_to_ptr.vmem [resolvable:$true] %s143
      %146 = dma.hbm_to_vmem [thread:$0]  %s142, 32, %s144, [#allocation15]
    $region57: #{mfm_forward.7} parent=1 // pred_fallthru
      _
    // Predicated region
    $region58: #{mfm_forward.7} parent=1 // pred_check
      _
    $region59: #{mfm_forward.7} parent=1 // pred_check_branch
      %148 = sbr.rel (0) target = $region61
    $region60: #{mfm_forward.7} parent=1 // pred_region
      %150 = vsyncadd [#allocation18], 0
      %s152 = sshll.u32 %s14, 4
      %s153 = int_to_ptr.hbm [resolvable:$true] %s152
      %s154 = sshll.u32 [#allocation17], 4
      %s155 = int_to_ptr.vmem [resolvable:$true] %s154
      %157 = dma.hbm_to_vmem [thread:$0]  %s153, 32, %s155, [#allocation18]
    $region61: #{mfm_forward.7} parent=1 // pred_fallthru
      _
    // Predicated region
    $region62: #{mfm_forward.7} parent=1 // pred_check
      _
    $region63: #{mfm_forward.7} parent=1 // pred_check_branch
      %159 = sbr.rel (0) target = $region65
    $region64: #{mfm_forward.7} parent=1 // pred_region
      %161 = vsyncadd [#allocation18], 0
      %s162 = sshll.u32 %s15, 4
      %s163 = int_to_ptr.hbm [resolvable:$true] %s162
      %s164 = sshll.u32 [#allocation19], 4
      %s165 = int_to_ptr.vmem [resolvable:$true] %s164
      %170 = dma.hbm_to_vmem [thread:$0]  %s163, 8192, %s165, [#allocation18], 256, 256, 16
    $region65: #{mfm_forward.7} parent=1 // pred_fallthru
      _
    // Predicated region
    $region66: #{mfm_forward.7} parent=1 // pred_check
      _
    $region67: #{mfm_forward.7} parent=1 // pred_check_branch
      %172 = sbr.rel (0) target = $region69
    $region68: #{mfm_forward.7} parent=1 // pred_region
      %174 = vsyncadd [#allocation21], 0
      %s176 = sshll.u32 %s16, 4
      %s177 = int_to_ptr.hbm [resolvable:$true] %s176
      %s178 = sshll.u32 [#allocation20], 4
      %s179 = int_to_ptr.vmem [resolvable:$true] %s178
      %181 = dma.hbm_to_vmem [thread:$0]  %s177, 32, %s179, [#allocation21]
    $region69: #{mfm_forward.7} parent=1 // pred_fallthru
      _
    // Predicated region
    $region70: #{mfm_forward.7} parent=1 // pred_check
      _
    $region71: #{mfm_forward.7} parent=1 // pred_check_branch
      %183 = sbr.rel (0) target = $region73
    $region72: #{mfm_forward.7} parent=1 // pred_region
      %185 = dma.done [#allocation3], 8192
    $region73: #{mfm_forward.7} parent=1 // pred_fallthru
      _
    // Predicated region
    $region74: #{mfm_forward.7} parent=1 // pred_check
      _
    $region75: #{mfm_forward.7} parent=1 // pred_check_branch
      %187 = sbr.rel (0) target = $region77
    $region76: #{mfm_forward.7} parent=1 // pred_region
      %189 = dma.done [#allocation6], 8192
    $region77: #{mfm_forward.7} parent=1 // pred_fallthru
      _
    // Predicated region
    $region78: #{mfm_forward.7} parent=1 // pred_check
      _
    $region79: #{mfm_forward.7} parent=1 // pred_check_branch
      %191 = sbr.rel (0) target = $region81
    $region80: #{mfm_forward.7} parent=1 // pred_region
      %193 = dma.done [#allocation6], 32
    $region81: #{mfm_forward.7} parent=1 // pred_fallthru
      _
    // Predicated region
    $region82: #{mfm_forward.7} parent=1 // pred_check
      _
    $region83: #{mfm_forward.7} parent=1 // pred_check_branch
      %195 = sbr.rel (0) target = $region85
    $region84: #{mfm_forward.7} parent=1 // pred_region
      %197 = dma.done [#allocation9], 32
    $region85: #{mfm_forward.7} parent=1 // pred_fallthru
      _
    // Predicated region
    $region86: #{mfm_forward.7} parent=1 // pred_check
      _
    $region87: #{mfm_forward.7} parent=1 // pred_check_branch
      %199 = sbr.rel (0) target = $region89
    $region88: #{mfm_forward.7} parent=1 // pred_region
      %201 = dma.done [#allocation9], 8192
    $region89: #{mfm_forward.7} parent=1 // pred_fallthru
      _
    // Predicated region
    $region90: #{mfm_forward.7} parent=1 // pred_check
      _
    $region91: #{mfm_forward.7} parent=1 // pred_check_branch
      %203 = sbr.rel (0) target = $region93
    $region92: #{mfm_forward.7} parent=1 // pred_region
      %205 = dma.done [#allocation12], 32
    $region93: #{mfm_forward.7} parent=1 // pred_fallthru
      _
    // Predicated region
    $region94: #{mfm_forward.7} parent=1 // pred_check
      _
    $region95: #{mfm_forward.7} parent=1 // pred_check_branch
      %207 = sbr.rel (0) target = $region97
    $region96: #{mfm_forward.7} parent=1 // pred_region
      %209 = dma.done [#allocation12], 8192
    $region97: #{mfm_forward.7} parent=1 // pred_fallthru
      _
    // Predicated region
    $region98: #{mfm_forward.7} parent=1 // pred_check
      _
    $region99: #{mfm_forward.7} parent=1 // pred_check_branch
      %211 = sbr.rel (0) target = $region101
    $region100: #{mfm_forward.7} parent=1 // pred_region
      %213 = dma.done [#allocation15], 32
    $region101: #{mfm_forward.7} parent=1 // pred_fallthru
      _
    // Predicated region
    $region102: #{mfm_forward.7} parent=1 // pred_check
      _
    $region103: #{mfm_forward.7} parent=1 // pred_check_branch
      %215 = sbr.rel (0) target = $region105
    $region104: #{mfm_forward.7} parent=1 // pred_region
      %217 = dma.done [#allocation15], 32
    $region105: #{mfm_forward.7} parent=1 // pred_fallthru
      _
    // Predicated region
    $region106: #{mfm_forward.7} parent=1 // pred_check
      _
    $region107: #{mfm_forward.7} parent=1 // pred_check_branch
      %219 = sbr.rel (0) target = $region109
    $region108: #{mfm_forward.7} parent=1 // pred_region
      %221 = dma.done [#allocation18], 32
    $region109: #{mfm_forward.7} parent=1 // pred_fallthru
      _
    // Predicated region
    $region110: #{mfm_forward.7} parent=1 // pred_check
      _
    $region111: #{mfm_forward.7} parent=1 // pred_check_branch
      %223 = sbr.rel (0) target = $region113
    $region112: #{mfm_forward.7} parent=1 // pred_region
      %225 = dma.done [#allocation18], 8192
    $region113: #{mfm_forward.7} parent=1 // pred_fallthru
      _
    // Predicated region
    $region114: #{mfm_forward.7} parent=1 // pred_check
      _
    $region115: #{mfm_forward.7} parent=1 // pred_check_branch
      %227 = sbr.rel (0) target = $region117
    $region116: #{mfm_forward.7} parent=1 // pred_region
      %229 = dma.done [#allocation21], 32
    $region117: #{mfm_forward.7} parent=1 // pred_fallthru
      _
    %v230 = vld [vmem:[%s0] sm:$0xf]
    %v231 = vld [vmem:[#allocation2] sm:$0xff]
    %v232 = vld [vmem:[#allocation2 + $0x8] sm:$0xff]
    %v233 = vld [vmem:[#allocation2 + $0x10] sm:$0xff]
    %v234 = vld [vmem:[#allocation2 + $0x18] sm:$0xff]
    %v235 = vld [vmem:[#allocation2 + $0x20] sm:$0xff]
    %v236 = vld [vmem:[#allocation2 + $0x28] sm:$0xff]
    %v237 = vld [vmem:[#allocation2 + $0x30] sm:$0xff]
    %v238 = vld [vmem:[#allocation2 + $0x38] sm:$0xff]
    %v239 = vld [vmem:[#allocation2 + $0x40] sm:$0xff]
    %v240 = vld [vmem:[#allocation2 + $0x48] sm:$0xff]
    %v241 = vld [vmem:[#allocation2 + $0x50] sm:$0xff]
    %v242 = vld [vmem:[#allocation2 + $0x58] sm:$0xff]
    %v243 = vld [vmem:[#allocation2 + $0x60] sm:$0xff]
    %v244 = vld [vmem:[#allocation2 + $0x68] sm:$0xff]
    %v245 = vld [vmem:[#allocation2 + $0x70] sm:$0xff]
    %v246 = vld [vmem:[#allocation2 + $0x78] sm:$0xff]
    %v247 = vld [vmem:[#allocation2 + $0x80] sm:$0xff]
    %v248 = vld [vmem:[#allocation2 + $0x88] sm:$0xff]
    %v249 = vld [vmem:[#allocation2 + $0x90] sm:$0xff]
    %v250 = vld [vmem:[#allocation2 + $0x98] sm:$0xff]
    %v251 = vld [vmem:[#allocation2 + $0xa0] sm:$0xff]
    %v252 = vld [vmem:[#allocation2 + $0xa8] sm:$0xff]
    %v253 = vld [vmem:[#allocation2 + $0xb0] sm:$0xff]
    %v254 = vld [vmem:[#allocation2 + $0xb8] sm:$0xff]
    %v255 = vld [vmem:[#allocation2 + $0xc0] sm:$0xff]
    %v256 = vld [vmem:[#allocation2 + $0xc8] sm:$0xff]
    %v257 = vld [vmem:[#allocation2 + $0xd0] sm:$0xff]
    %v258 = vld [vmem:[#allocation2 + $0xd8] sm:$0xff]
    %v259 = vld [vmem:[#allocation2 + $0xe0] sm:$0xff]
    %v260 = vld [vmem:[#allocation2 + $0xe8] sm:$0xff]
    %v261 = vld [vmem:[#allocation2 + $0xf0] sm:$0xff]
    %v262 = vld [vmem:[#allocation2 + $0xf8] sm:$0xff]
    %v263 = vld [vmem:[#allocation2 + $0x100] sm:$0xff]
    %v264 = vld [vmem:[#allocation2 + $0x108] sm:$0xff]
    %v265 = vld [vmem:[#allocation2 + $0x110] sm:$0xff]
    %v266 = vld [vmem:[#allocation2 + $0x118] sm:$0xff]
    %v267 = vld [vmem:[#allocation2 + $0x120] sm:$0xff]
    %v268 = vld [vmem:[#allocation2 + $0x128] sm:$0xff]
    %v269 = vld [vmem:[#allocation2 + $0x130] sm:$0xff]
    %v270 = vld [vmem:[#allocation2 + $0x138] sm:$0xff]
    %v271 = vld [vmem:[#allocation2 + $0x140] sm:$0xff]
    %v272 = vld [vmem:[#allocation2 + $0x148] sm:$0xff]
    %v273 = vld [vmem:[#allocation2 + $0x150] sm:$0xff]
    %v274 = vld [vmem:[#allocation2 + $0x158] sm:$0xff]
    %v275 = vld [vmem:[#allocation2 + $0x160] sm:$0xff]
    %v276 = vld [vmem:[#allocation2 + $0x168] sm:$0xff]
    %v277 = vld [vmem:[#allocation2 + $0x170] sm:$0xff]
    %v278 = vld [vmem:[#allocation2 + $0x178] sm:$0xff]
    %v279 = vld [vmem:[#allocation2 + $0x180] sm:$0xff]
    %v280 = vld [vmem:[#allocation2 + $0x188] sm:$0xff]
    %v281 = vld [vmem:[#allocation2 + $0x190] sm:$0xff]
    %v282 = vld [vmem:[#allocation2 + $0x198] sm:$0xff]
    %v283 = vld [vmem:[#allocation2 + $0x1a0] sm:$0xff]
    %v284 = vld [vmem:[#allocation2 + $0x1a8] sm:$0xff]
    %v285 = vld [vmem:[#allocation2 + $0x1b0] sm:$0xff]
    %v286 = vld [vmem:[#allocation2 + $0x1b8] sm:$0xff]
    %v287 = vld [vmem:[#allocation2 + $0x1c0] sm:$0xff]
    %v288 = vld [vmem:[#allocation2 + $0x1c8] sm:$0xff]
    %v289 = vld [vmem:[#allocation2 + $0x1d0] sm:$0xff]
    %v290 = vld [vmem:[#allocation2 + $0x1d8] sm:$0xff]
    %v291 = vld [vmem:[#allocation2 + $0x1e0] sm:$0xff]
    %v292 = vld [vmem:[#allocation2 + $0x1e8] sm:$0xff]
    %v293 = vld [vmem:[#allocation2 + $0x1f0] sm:$0xff]
    %v294 = vld [vmem:[#allocation2 + $0x1f8] sm:$0xff]
    %v295 = vld [vmem:[%s2] sm:$0x3]
    %v297 = vperm.slane %v295, 0
    %v298 = vperm.slane %v295, 1
    %302 = vst [vmem:[#allocation1] ss:$4 sm:$0xff] %v230
    %v303 = vld.sshfl [vmem:[#allocation1] sm:$0xff pattern:$0x73625140]
    %v304 = vld.sshfl [vmem:[#allocation1 + $0x8] sm:$0xff pattern:$0x73625140]
    %307 = vmatpush.msra.mxu0 %v261
    %308 = vmatpush.msra.mxu0 %v259
    %309 = vmatpush.msra.mxu0 %v257
    %310 = vmatpush.msra.mxu0 %v255
    %311 = vmatpush.msra.mxu0 %v253
    %312 = vmatpush.msra.mxu0 %v251
    %313 = vmatpush.msra.mxu0 %v249
    %314 = vmatpush.msra.mxu0 %v247
    %315 = vmatpush.msra.mxu0 %v245
    %316 = vmatpush.msra.mxu0 %v243
    %317 = vmatpush.msra.mxu0 %v241
    %318 = vmatpush.msra.mxu0 %v239
    %319 = vmatpush.msra.mxu0 %v237
    %320 = vmatpush.msra.mxu0 %v235
    %321 = vmatpush.msra.mxu0 %v233
    %322 = vmatpush.msra.mxu0 %v231
    %323 = vmatmul.f32.gmra.mxu0 %v303
    %v324 = vpop.f32.mrf.mxu0
    %v325 = vadd.f32 %v297, %v324
    %326 = vdwg.mxu0
    %327 = vmatpush.msra.mxu0 %v293
    %328 = vmatpush.msra.mxu0 %v291
    %329 = vmatpush.msra.mxu0 %v289
    %330 = vmatpush.msra.mxu0 %v287
    %331 = vmatpush.msra.mxu0 %v285
    %332 = vmatpush.msra.mxu0 %v283
    %333 = vmatpush.msra.mxu0 %v281
    %334 = vmatpush.msra.mxu0 %v279
    %335 = vmatpush.msra.mxu0 %v277
    %336 = vmatpush.msra.mxu0 %v275
    %337 = vmatpush.msra.mxu0 %v273
    %338 = vmatpush.msra.mxu0 %v271
    %339 = vmatpush.msra.mxu0 %v269
    %340 = vmatpush.msra.mxu0 %v267
    %341 = vmatpush.msra.mxu0 %v265
    %342 = vmatpush.msra.mxu0 %v263
    %343 = vmatmul.f32.gmra.mxu0 %v304
    %v344 = vpop.f32.mrf.mxu0
    %v345 = vadd.f32 %v325, %v344
    %346 = vdwg.mxu0
    %347 = vmatpush.msra.mxu0 %v262
    %348 = vmatpush.msra.mxu0 %v260
    %349 = vmatpush.msra.mxu0 %v258
    %350 = vmatpush.msra.mxu0 %v256
    %351 = vmatpush.msra.mxu0 %v254
    %352 = vmatpush.msra.mxu0 %v252
    %353 = vmatpush.msra.mxu0 %v250
    %354 = vmatpush.msra.mxu0 %v248
    %355 = vmatpush.msra.mxu0 %v246
    %356 = vmatpush.msra.mxu0 %v244
    %357 = vmatpush.msra.mxu0 %v242
    %358 = vmatpush.msra.mxu0 %v240
    %359 = vmatpush.msra.mxu0 %v238
    %360 = vmatpush.msra.mxu0 %v236
    %361 = vmatpush.msra.mxu0 %v234
    %362 = vmatpush.msra.mxu0 %v232
    %363 = vmatmul.f32.gmra.mxu0 %v303
    %v364 = vpop.f32.mrf.mxu0
    %v365 = vadd.f32 %v298, %v364
    %366 = vdwg.mxu0
    %367 = vmatpush.msra.mxu0 %v294
    %368 = vmatpush.msra.mxu0 %v292
    %369 = vmatpush.msra.mxu0 %v290
    %370 = vmatpush.msra.mxu0 %v288
    %371 = vmatpush.msra.mxu0 %v286
    %372 = vmatpush.msra.mxu0 %v284
    %373 = vmatpush.msra.mxu0 %v282
    %374 = vmatpush.msra.mxu0 %v280
    %375 = vmatpush.msra.mxu0 %v278
    %376 = vmatpush.msra.mxu0 %v276
    %377 = vmatpush.msra.mxu0 %v274
    %378 = vmatpush.msra.mxu0 %v272
    %379 = vmatpush.msra.mxu0 %v270
    %380 = vmatpush.msra.mxu0 %v268
    %381 = vmatpush.msra.mxu0 %v266
    %382 = vmatpush.msra.mxu0 %v264
    %383 = vmatmul.f32.gmra.mxu0 %v304
    %v384 = vpop.f32.mrf.mxu0
    %v385 = vadd.f32 %v365, %v384
    %386 = vdwg.mxu0
    %v387 = vld [vmem:[%s3] sm:$0x3]
    %v388 = vld [vmem:[%s4] sm:$0x3]
    %vm389 = vcmask 1041408
    %v390 = vsel %vm389, %v345, 0.0
    %v391 = vrot.slane %v390, 4
    %v392 = vadd.f32 %v390, %v391
    %v393 = vrot.slane %v392, 2
    %v394 = vadd.f32 %v392, %v393
    %v395 = vrot.slane %v394, 1
    %v396 = vadd.f32 %v394, %v395
    %v397 = vsel %vm389, %v385, 0.0
    %v398 = vrot.slane %v397, 4
    %v399 = vadd.f32 %v397, %v398
    %v400 = vrot.slane %v399, 2
    %v401 = vadd.f32 %v399, %v400
    %v402 = vrot.slane %v401, 1
    %v403 = vadd.f32 %v401, %v402
    %v404 = vrcp.pop 2.0
    %v405 = vmul.f32 2.0, %v404
    %v406 = vsub.f32 1.0, %v405
    %v407 = vmul.f32 %v404, %v406
    %v408 = vadd.f32 %v404, %v407
    %vm409 = vweird.f32 %v404
    %v410 = vsel %vm409, %v404, %v408
    %v411 = vmul.f32 %v396, %v410
    %v412 = vmul.f32 %v403, %v410
    %v413 = vsub.f32 %v345, %v411
    %v414 = vsub.f32 %v385, %v412
    %v415 = vmul.f32 %v413, %v413
    %v416 = vmul.f32 %v414, %v414
    %v417 = vsel %vm389, %v415, 0.0
    %v418 = vrot.slane %v417, 4
    %v419 = vadd.f32 %v417, %v418
    %v420 = vrot.slane %v419, 2
    %v421 = vadd.f32 %v419, %v420
    %v422 = vrot.slane %v421, 1
    %v423 = vadd.f32 %v421, %v422
    %v424 = vsel %vm389, %v416, 0.0
    %v425 = vrot.slane %v424, 4
    %v426 = vadd.f32 %v424, %v425
    %v427 = vrot.slane %v426, 2
    %v428 = vadd.f32 %v426, %v427
    %v429 = vrot.slane %v428, 1
    %v430 = vadd.f32 %v428, %v429
    %v431 = vmul.f32 %v423, %v410
    %v432 = vmul.f32 %v430, %v410
    %v433 = vadd.f32 %v431, 1e-05
    %v434 = vadd.f32 %v432, 1e-05
    %v435 = vrsqrt.pop %v433
    %v436 = vmul.f32 %v435, %v433
    %v437 = vmul.f32 %v436, %v435
    %v438 = vmul.f32 0.5, %v437
    %v439 = vsub.f32 1.5, %v438
    %v440 = vmul.f32 %v435, %v439
    %vm441 = vweird.f32 %v433
    %vm442 = vweird.f32 %v435
    %vm443 = vmor %vm441, %vm442
    %v444 = vsel %vm443, %v435, %v440
    %v445 = vrsqrt.pop %v434
    %v446 = vmul.f32 %v445, %v434
    %v447 = vmul.f32 %v446, %v445
    %v448 = vmul.f32 0.5, %v447
    %v449 = vsub.f32 1.5, %v448
    %v450 = vmul.f32 %v445, %v449
    %vm451 = vweird.f32 %v434
    %vm452 = vweird.f32 %v445
    %vm453 = vmor %vm451, %vm452
    %v454 = vsel %vm453, %v445, %v450
    %v455 = vmul.f32 %v413, %v444
    %v456 = vmul.f32 %v414, %v454
    %v458 = vperm.slane %v387, 0
    %v459 = vperm.slane %v387, 1
    %v462 = vmul.f32 %v455, %v458
    %v463 = vmul.f32 %v456, %v459
    %v465 = vperm.slane %v388, 0
    %v466 = vperm.slane %v388, 1
    %v469 = vadd.f32 %v462, %v465
    %v470 = vadd.f32 %v463, %v466
    %v471 = vmax.f32 %v469, 0.0
    %v472 = vmax.f32 %v470, 0.0
    %v473 = vld [vmem:[#allocation5] sm:$0xff]
    %v474 = vld [vmem:[#allocation5 + $0x8] sm:$0xff]
    %v475 = vld [vmem:[#allocation5 + $0x10] sm:$0xff]
    %v476 = vld [vmem:[#allocation5 + $0x18] sm:$0xff]
    %v477 = vld [vmem:[#allocation5 + $0x20] sm:$0xff]
    %v478 = vld [vmem:[#allocation5 + $0x28] sm:$0xff]
    %v479 = vld [vmem:[#allocation5 + $0x30] sm:$0xff]
    %v480 = vld [vmem:[#allocation5 + $0x38] sm:$0xff]
    %v481 = vld [vmem:[#allocation5 + $0x40] sm:$0xff]
    %v482 = vld [vmem:[#allocation5 + $0x48] sm:$0xff]
    %v483 = vld [vmem:[#allocation5 + $0x50] sm:$0xff]
    %v484 = vld [vmem:[#allocation5 + $0x58] sm:$0xff]
    %v485 = vld [vmem:[#allocation5 + $0x60] sm:$0xff]
    %v486 = vld [vmem:[#allocation5 + $0x68] sm:$0xff]
    %v487 = vld [vmem:[#allocation5 + $0x70] sm:$0xff]
    %v488 = vld [vmem:[#allocation5 + $0x78] sm:$0xff]
    %v489 = vld [vmem:[#allocation5 + $0x80] sm:$0xff]
    %v490 = vld [vmem:[#allocation5 + $0x88] sm:$0xff]
    %v491 = vld [vmem:[#allocation5 + $0x90] sm:$0xff]
    %v492 = vld [vmem:[#allocation5 + $0x98] sm:$0xff]
    %v493 = vld [vmem:[#allocation5 + $0xa0] sm:$0xff]
    %v494 = vld [vmem:[#allocation5 + $0xa8] sm:$0xff]
    %v495 = vld [vmem:[#allocation5 + $0xb0] sm:$0xff]
    %v496 = vld [vmem:[#allocation5 + $0xb8] sm:$0xff]
    %v497 = vld [vmem:[#allocation5 + $0xc0] sm:$0xff]
    %v498 = vld [vmem:[#allocation5 + $0xc8] sm:$0xff]
    %v499 = vld [vmem:[#allocation5 + $0xd0] sm:$0xff]
    %v500 = vld [vmem:[#allocation5 + $0xd8] sm:$0xff]
    %v501 = vld [vmem:[#allocation5 + $0xe0] sm:$0xff]
    %v502 = vld [vmem:[#allocation5 + $0xe8] sm:$0xff]
    %v503 = vld [vmem:[#allocation5 + $0xf0] sm:$0xff]
    %v504 = vld [vmem:[#allocation5 + $0xf8] sm:$0xff]
    %v505 = vld [vmem:[#allocation5 + $0x100] sm:$0xff]
    %v506 = vld [vmem:[#allocation5 + $0x108] sm:$0xff]
    %v507 = vld [vmem:[#allocation5 + $0x110] sm:$0xff]
    %v508 = vld [vmem:[#allocation5 + $0x118] sm:$0xff]
    %v509 = vld [vmem:[#allocation5 + $0x120] sm:$0xff]
    %v510 = vld [vmem:[#allocation5 + $0x128] sm:$0xff]
    %v511 = vld [vmem:[#allocation5 + $0x130] sm:$0xff]
    %v512 = vld [vmem:[#allocation5 + $0x138] sm:$0xff]
    %v513 = vld [vmem:[#allocation5 + $0x140] sm:$0xff]
    %v514 = vld [vmem:[#allocation5 + $0x148] sm:$0xff]
    %v515 = vld [vmem:[#allocation5 + $0x150] sm:$0xff]
    %v516 = vld [vmem:[#allocation5 + $0x158] sm:$0xff]
    %v517 = vld [vmem:[#allocation5 + $0x160] sm:$0xff]
    %v518 = vld [vmem:[#allocation5 + $0x168] sm:$0xff]
    %v519 = vld [vmem:[#allocation5 + $0x170] sm:$0xff]
    %v520 = vld [vmem:[#allocation5 + $0x178] sm:$0xff]
    %v521 = vld [vmem:[#allocation5 + $0x180] sm:$0xff]
    %v522 = vld [vmem:[#allocation5 + $0x188] sm:$0xff]
    %v523 = vld [vmem:[#allocation5 + $0x190] sm:$0xff]
    %v524 = vld [vmem:[#allocation5 + $0x198] sm:$0xff]
    %v525 = vld [vmem:[#allocation5 + $0x1a0] sm:$0xff]
    %v526 = vld [vmem:[#allocation5 + $0x1a8] sm:$0xff]
    %v527 = vld [vmem:[#allocation5 + $0x1b0] sm:$0xff]
    %v528 = vld [vmem:[#allocation5 + $0x1b8] sm:$0xff]
    %v529 = vld [vmem:[#allocation5 + $0x1c0] sm:$0xff]
    %v530 = vld [vmem:[#allocation5 + $0x1c8] sm:$0xff]
    %v531 = vld [vmem:[#allocation5 + $0x1d0] sm:$0xff]
    %v532 = vld [vmem:[#allocation5 + $0x1d8] sm:$0xff]
    %v533 = vld [vmem:[#allocation5 + $0x1e0] sm:$0xff]
    %v534 = vld [vmem:[#allocation5 + $0x1e8] sm:$0xff]
    %v535 = vld [vmem:[#allocation5 + $0x1f0] sm:$0xff]
    %v536 = vld [vmem:[#allocation5 + $0x1f8] sm:$0xff]
    %v537 = vld [vmem:[#allocation7] sm:$0x3]
    %v539 = vperm.slane %v537, 0
    %v540 = vperm.slane %v537, 1
    %543 = vmatpush.msra.mxu0 %v503
    %544 = vmatpush.msra.mxu0 %v501
    %545 = vmatpush.msra.mxu0 %v499
    %546 = vmatpush.msra.mxu0 %v497
    %547 = vmatpush.msra.mxu0 %v495
    %548 = vmatpush.msra.mxu0 %v493
    %549 = vmatpush.msra.mxu0 %v491
    %550 = vmatpush.msra.mxu0 %v489
    %551 = vmatpush.msra.mxu0 %v487
    %552 = vmatpush.msra.mxu0 %v485
    %553 = vmatpush.msra.mxu0 %v483
    %554 = vmatpush.msra.mxu0 %v481
    %555 = vmatpush.msra.mxu0 %v479
    %556 = vmatpush.msra.mxu0 %v477
    %557 = vmatpush.msra.mxu0 %v475
    %558 = vmatpush.msra.mxu0 %v473
    %559 = vmatmul.f32.gmra.mxu0 %v471
    %v560 = vpop.f32.mrf.mxu0
    %v561 = vadd.f32 %v539, %v560
    %562 = vdwg.mxu0
    %563 = vmatpush.msra.mxu0 %v535
    %564 = vmatpush.msra.mxu0 %v533
    %565 = vmatpush.msra.mxu0 %v531
    %566 = vmatpush.msra.mxu0 %v529
    %567 = vmatpush.msra.mxu0 %v527
    %568 = vmatpush.msra.mxu0 %v525
    %569 = vmatpush.msra.mxu0 %v523
    %570 = vmatpush.msra.mxu0 %v521
    %571 = vmatpush.msra.mxu0 %v519
    %572 = vmatpush.msra.mxu0 %v517
    %573 = vmatpush.msra.mxu0 %v515
    %574 = vmatpush.msra.mxu0 %v513
    %575 = vmatpush.msra.mxu0 %v511
    %576 = vmatpush.msra.mxu0 %v509
    %577 = vmatpush.msra.mxu0 %v507
    %578 = vmatpush.msra.mxu0 %v505
    %579 = vmatmul.f32.gmra.mxu0 %v472
    %v580 = vpop.f32.mrf.mxu0
    %v581 = vadd.f32 %v561, %v580
    %582 = vdwg.mxu0
    %583 = vmatpush.msra.mxu0 %v504
    %584 = vmatpush.msra.mxu0 %v502
    %585 = vmatpush.msra.mxu0 %v500
    %586 = vmatpush.msra.mxu0 %v498
    %587 = vmatpush.msra.mxu0 %v496
    %588 = vmatpush.msra.mxu0 %v494
    %589 = vmatpush.msra.mxu0 %v492
    %590 = vmatpush.msra.mxu0 %v490
    %591 = vmatpush.msra.mxu0 %v488
    %592 = vmatpush.msra.mxu0 %v486
    %593 = vmatpush.msra.mxu0 %v484
    %594 = vmatpush.msra.mxu0 %v482
    %595 = vmatpush.msra.mxu0 %v480
    %596 = vmatpush.msra.mxu0 %v478
    %597 = vmatpush.msra.mxu0 %v476
    %598 = vmatpush.msra.mxu0 %v474
    %599 = vmatmul.f32.gmra.mxu0 %v471
    %v600 = vpop.f32.mrf.mxu0
    %v601 = vadd.f32 %v540, %v600
    %602 = vdwg.mxu0
    %603 = vmatpush.msra.mxu0 %v536
    %604 = vmatpush.msra.mxu0 %v534
    %605 = vmatpush.msra.mxu0 %v532
    %606 = vmatpush.msra.mxu0 %v530
    %607 = vmatpush.msra.mxu0 %v528
    %608 = vmatpush.msra.mxu0 %v526
    %609 = vmatpush.msra.mxu0 %v524
    %610 = vmatpush.msra.mxu0 %v522
    %611 = vmatpush.msra.mxu0 %v520
    %612 = vmatpush.msra.mxu0 %v518
    %613 = vmatpush.msra.mxu0 %v516
    %614 = vmatpush.msra.mxu0 %v514
    %615 = vmatpush.msra.mxu0 %v512
    %616 = vmatpush.msra.mxu0 %v510
    %617 = vmatpush.msra.mxu0 %v508
    %618 = vmatpush.msra.mxu0 %v506
    %619 = vmatmul.f32.gmra.mxu0 %v472
    %v620 = vpop.f32.mrf.mxu0
    %v621 = vadd.f32 %v601, %v620
    %622 = vdwg.mxu0
    %v623 = vld [vmem:[%s7] sm:$0x3]
    %v624 = vld [vmem:[#allocation8] sm:$0x3]
    %v625 = vsel %vm389, %v581, 0.0
    %v626 = vrot.slane %v625, 4
    %v627 = vadd.f32 %v625, %v626
    %v628 = vrot.slane %v627, 2
    %v629 = vadd.f32 %v627, %v628
    %v630 = vrot.slane %v629, 1
    %v631 = vadd.f32 %v629, %v630
    %v632 = vsel %vm389, %v621, 0.0
    %v633 = vrot.slane %v632, 4
    %v634 = vadd.f32 %v632, %v633
    %v635 = vrot.slane %v634, 2
    %v636 = vadd.f32 %v634, %v635
    %v637 = vrot.slane %v636, 1
    %v638 = vadd.f32 %v636, %v637
    %v639 = vmul.f32 %v631, %v410
    %v640 = vmul.f32 %v638, %v410
    %v641 = vsub.f32 %v581, %v639
    %v642 = vsub.f32 %v621, %v640
    %v643 = vmul.f32 %v641, %v641
    %v644 = vmul.f32 %v642, %v642
    %v645 = vsel %vm389, %v643, 0.0
    %v646 = vrot.slane %v645, 4
    %v647 = vadd.f32 %v645, %v646
    %v648 = vrot.slane %v647, 2
    %v649 = vadd.f32 %v647, %v648
    %v650 = vrot.slane %v649, 1
    %v651 = vadd.f32 %v649, %v650
    %v652 = vsel %vm389, %v644, 0.0
    %v653 = vrot.slane %v652, 4
    %v654 = vadd.f32 %v652, %v653
    %v655 = vrot.slane %v654, 2
    %v656 = vadd.f32 %v654, %v655
    %v657 = vrot.slane %v656, 1
    %v658 = vadd.f32 %v656, %v657
    %v659 = vmul.f32 %v651, %v410
    %v660 = vmul.f32 %v658, %v410
    %v661 = vadd.f32 %v659, 1e-05
    %v662 = vadd.f32 %v660, 1e-05
    %v663 = vrsqrt.pop %v661
    %v664 = vmul.f32 %v663, %v661
    %v665 = vmul.f32 %v664, %v663
    %v666 = vmul.f32 0.5, %v665
    %v667 = vsub.f32 1.5, %v666
    %v668 = vmul.f32 %v663, %v667
    %vm669 = vweird.f32 %v661
    %vm670 = vweird.f32 %v663
    %vm671 = vmor %vm669, %vm670
    %v672 = vsel %vm671, %v663, %v668
    %v673 = vrsqrt.pop %v662
    %v674 = vmul.f32 %v673, %v662
    %v675 = vmul.f32 %v674, %v673
    %v676 = vmul.f32 0.5, %v675
    %v677 = vsub.f32 1.5, %v676
    %v678 = vmul.f32 %v673, %v677
    %vm679 = vweird.f32 %v662
    %vm680 = vweird.f32 %v673
    %vm681 = vmor %vm679, %vm680
    %v682 = vsel %vm681, %v673, %v678
    %v683 = vmul.f32 %v641, %v672
    %v684 = vmul.f32 %v642, %v682
    %v686 = vperm.slane %v623, 0
    %v687 = vperm.slane %v623, 1
    %v690 = vmul.f32 %v683, %v686
    %v691 = vmul.f32 %v684, %v687
    %v693 = vperm.slane %v624, 0
    %v694 = vperm.slane %v624, 1
    %v697 = vadd.f32 %v690, %v693
    %v698 = vadd.f32 %v691, %v694
    %v699 = vmax.f32 %v697, 0.0
    %v700 = vmax.f32 %v698, 0.0
    %v701 = vld [vmem:[#allocation10] sm:$0xff]
    %v702 = vld [vmem:[#allocation10 + $0x8] sm:$0xff]
    %v703 = vld [vmem:[#allocation10 + $0x10] sm:$0xff]
    %v704 = vld [vmem:[#allocation10 + $0x18] sm:$0xff]
    %v705 = vld [vmem:[#allocation10 + $0x20] sm:$0xff]
    %v706 = vld [vmem:[#allocation10 + $0x28] sm:$0xff]
    %v707 = vld [vmem:[#allocation10 + $0x30] sm:$0xff]
    %v708 = vld [vmem:[#allocation10 + $0x38] sm:$0xff]
    %v709 = vld [vmem:[#allocation10 + $0x40] sm:$0xff]
    %v710 = vld [vmem:[#allocation10 + $0x48] sm:$0xff]
    %v711 = vld [vmem:[#allocation10 + $0x50] sm:$0xff]
    %v712 = vld [vmem:[#allocation10 + $0x58] sm:$0xff]
    %v713 = vld [vmem:[#allocation10 + $0x60] sm:$0xff]
    %v714 = vld [vmem:[#allocation10 + $0x68] sm:$0xff]
    %v715 = vld [vmem:[#allocation10 + $0x70] sm:$0xff]
    %v716 = vld [vmem:[#allocation10 + $0x78] sm:$0xff]
    %v717 = vld [vmem:[#allocation10 + $0x80] sm:$0xff]
    %v718 = vld [vmem:[#allocation10 + $0x88] sm:$0xff]
    %v719 = vld [vmem:[#allocation10 + $0x90] sm:$0xff]
    %v720 = vld [vmem:[#allocation10 + $0x98] sm:$0xff]
    %v721 = vld [vmem:[#allocation10 + $0xa0] sm:$0xff]
    %v722 = vld [vmem:[#allocation10 + $0xa8] sm:$0xff]
    %v723 = vld [vmem:[#allocation10 + $0xb0] sm:$0xff]
    %v724 = vld [vmem:[#allocation10 + $0xb8] sm:$0xff]
    %v725 = vld [vmem:[#allocation10 + $0xc0] sm:$0xff]
    %v726 = vld [vmem:[#allocation10 + $0xc8] sm:$0xff]
    %v727 = vld [vmem:[#allocation10 + $0xd0] sm:$0xff]
    %v728 = vld [vmem:[#allocation10 + $0xd8] sm:$0xff]
    %v729 = vld [vmem:[#allocation10 + $0xe0] sm:$0xff]
    %v730 = vld [vmem:[#allocation10 + $0xe8] sm:$0xff]
    %v731 = vld [vmem:[#allocation10 + $0xf0] sm:$0xff]
    %v732 = vld [vmem:[#allocation10 + $0xf8] sm:$0xff]
    %v733 = vld [vmem:[#allocation10 + $0x100] sm:$0xff]
    %v734 = vld [vmem:[#allocation10 + $0x108] sm:$0xff]
    %v735 = vld [vmem:[#allocation10 + $0x110] sm:$0xff]
    %v736 = vld [vmem:[#allocation10 + $0x118] sm:$0xff]
    %v737 = vld [vmem:[#allocation10 + $0x120] sm:$0xff]
    %v738 = vld [vmem:[#allocation10 + $0x128] sm:$0xff]
    %v739 = vld [vmem:[#allocation10 + $0x130] sm:$0xff]
    %v740 = vld [vmem:[#allocation10 + $0x138] sm:$0xff]
    %v741 = vld [vmem:[#allocation10 + $0x140] sm:$0xff]
    %v742 = vld [vmem:[#allocation10 + $0x148] sm:$0xff]
    %v743 = vld [vmem:[#allocation10 + $0x150] sm:$0xff]
    %v744 = vld [vmem:[#allocation10 + $0x158] sm:$0xff]
    %v745 = vld [vmem:[#allocation10 + $0x160] sm:$0xff]
    %v746 = vld [vmem:[#allocation10 + $0x168] sm:$0xff]
    %v747 = vld [vmem:[#allocation10 + $0x170] sm:$0xff]
    %v748 = vld [vmem:[#allocation10 + $0x178] sm:$0xff]
    %v749 = vld [vmem:[#allocation10 + $0x180] sm:$0xff]
    %v750 = vld [vmem:[#allocation10 + $0x188] sm:$0xff]
    %v751 = vld [vmem:[#allocation10 + $0x190] sm:$0xff]
    %v752 = vld [vmem:[#allocation10 + $0x198] sm:$0xff]
    %v753 = vld [vmem:[#allocation10 + $0x1a0] sm:$0xff]
    %v754 = vld [vmem:[#allocation10 + $0x1a8] sm:$0xff]
    %v755 = vld [vmem:[#allocation10 + $0x1b0] sm:$0xff]
    %v756 = vld [vmem:[#allocation10 + $0x1b8] sm:$0xff]
    %v757 = vld [vmem:[#allocation10 + $0x1c0] sm:$0xff]
    %v758 = vld [vmem:[#allocation10 + $0x1c8] sm:$0xff]
    %v759 = vld [vmem:[#allocation10 + $0x1d0] sm:$0xff]
    %v760 = vld [vmem:[#allocation10 + $0x1d8] sm:$0xff]
    %v761 = vld [vmem:[#allocation10 + $0x1e0] sm:$0xff]
    %v762 = vld [vmem:[#allocation10 + $0x1e8] sm:$0xff]
    %v763 = vld [vmem:[#allocation10 + $0x1f0] sm:$0xff]
    %v764 = vld [vmem:[#allocation10 + $0x1f8] sm:$0xff]
    %v765 = vld [vmem:[#allocation11] sm:$0x3]
    %v767 = vperm.slane %v765, 0
    %v768 = vperm.slane %v765, 1
    %771 = vmatpush.msra.mxu0 %v731
    %772 = vmatpush.msra.mxu0 %v729
    %773 = vmatpush.msra.mxu0 %v727
    %774 = vmatpush.msra.mxu0 %v725
    %775 = vmatpush.msra.mxu0 %v723
    %776 = vmatpush.msra.mxu0 %v721
    %777 = vmatpush.msra.mxu0 %v719
    %778 = vmatpush.msra.mxu0 %v717
    %779 = vmatpush.msra.mxu0 %v715
    %780 = vmatpush.msra.mxu0 %v713
    %781 = vmatpush.msra.mxu0 %v711
    %782 = vmatpush.msra.mxu0 %v709
    %783 = vmatpush.msra.mxu0 %v707
    %784 = vmatpush.msra.mxu0 %v705
    %785 = vmatpush.msra.mxu0 %v703
    %786 = vmatpush.msra.mxu0 %v701
    %787 = vmatmul.f32.gmra.mxu0 %v699
    %v788 = vpop.f32.mrf.mxu0
    %v789 = vadd.f32 %v767, %v788
    %790 = vdwg.mxu0
    %791 = vmatpush.msra.mxu0 %v763
    %792 = vmatpush.msra.mxu0 %v761
    %793 = vmatpush.msra.mxu0 %v759
    %794 = vmatpush.msra.mxu0 %v757
    %795 = vmatpush.msra.mxu0 %v755
    %796 = vmatpush.msra.mxu0 %v753
    %797 = vmatpush.msra.mxu0 %v751
    %798 = vmatpush.msra.mxu0 %v749
    %799 = vmatpush.msra.mxu0 %v747
    %800 = vmatpush.msra.mxu0 %v745
    %801 = vmatpush.msra.mxu0 %v743
    %802 = vmatpush.msra.mxu0 %v741
    %803 = vmatpush.msra.mxu0 %v739
    %804 = vmatpush.msra.mxu0 %v737
    %805 = vmatpush.msra.mxu0 %v735
    %806 = vmatpush.msra.mxu0 %v733
    %807 = vmatmul.f32.gmra.mxu0 %v700
    %v808 = vpop.f32.mrf.mxu0
    %v809 = vadd.f32 %v789, %v808
    %810 = vdwg.mxu0
    %811 = vmatpush.msra.mxu0 %v732
    %812 = vmatpush.msra.mxu0 %v730
    %813 = vmatpush.msra.mxu0 %v728
    %814 = vmatpush.msra.mxu0 %v726
    %815 = vmatpush.msra.mxu0 %v724
    %816 = vmatpush.msra.mxu0 %v722
    %817 = vmatpush.msra.mxu0 %v720
    %818 = vmatpush.msra.mxu0 %v718
    %819 = vmatpush.msra.mxu0 %v716
    %820 = vmatpush.msra.mxu0 %v714
    %821 = vmatpush.msra.mxu0 %v712
    %822 = vmatpush.msra.mxu0 %v710
    %823 = vmatpush.msra.mxu0 %v708
    %824 = vmatpush.msra.mxu0 %v706
    %825 = vmatpush.msra.mxu0 %v704
    %826 = vmatpush.msra.mxu0 %v702
    %827 = vmatmul.f32.gmra.mxu0 %v699
    %v828 = vpop.f32.mrf.mxu0
    %v829 = vadd.f32 %v768, %v828
    %830 = vdwg.mxu0
    %831 = vmatpush.msra.mxu0 %v764
    %832 = vmatpush.msra.mxu0 %v762
    %833 = vmatpush.msra.mxu0 %v760
    %834 = vmatpush.msra.mxu0 %v758
    %835 = vmatpush.msra.mxu0 %v756
    %836 = vmatpush.msra.mxu0 %v754
    %837 = vmatpush.msra.mxu0 %v752
    %838 = vmatpush.msra.mxu0 %v750
    %839 = vmatpush.msra.mxu0 %v748
    %840 = vmatpush.msra.mxu0 %v746
    %841 = vmatpush.msra.mxu0 %v744
    %842 = vmatpush.msra.mxu0 %v742
    %843 = vmatpush.msra.mxu0 %v740
    %844 = vmatpush.msra.mxu0 %v738
    %845 = vmatpush.msra.mxu0 %v736
    %846 = vmatpush.msra.mxu0 %v734
    %847 = vmatmul.f32.gmra.mxu0 %v700
    %v848 = vpop.f32.mrf.mxu0
    %v849 = vadd.f32 %v829, %v848
    %850 = vdwg.mxu0
    %v851 = vld [vmem:[#allocation13] sm:$0xff]
    %v852 = vld [vmem:[#allocation13 + $0x8] sm:$0xff]
    %v853 = vld [vmem:[#allocation13 + $0x10] sm:$0xff]
    %v854 = vld [vmem:[#allocation13 + $0x18] sm:$0xff]
    %v855 = vld [vmem:[#allocation13 + $0x20] sm:$0xff]
    %v856 = vld [vmem:[#allocation13 + $0x28] sm:$0xff]
    %v857 = vld [vmem:[#allocation13 + $0x30] sm:$0xff]
    %v858 = vld [vmem:[#allocation13 + $0x38] sm:$0xff]
    %v859 = vld [vmem:[#allocation13 + $0x40] sm:$0xff]
    %v860 = vld [vmem:[#allocation13 + $0x48] sm:$0xff]
    %v861 = vld [vmem:[#allocation13 + $0x50] sm:$0xff]
    %v862 = vld [vmem:[#allocation13 + $0x58] sm:$0xff]
    %v863 = vld [vmem:[#allocation13 + $0x60] sm:$0xff]
    %v864 = vld [vmem:[#allocation13 + $0x68] sm:$0xff]
    %v865 = vld [vmem:[#allocation13 + $0x70] sm:$0xff]
    %v866 = vld [vmem:[#allocation13 + $0x78] sm:$0xff]
    %v867 = vld [vmem:[#allocation13 + $0x80] sm:$0xff]
    %v868 = vld [vmem:[#allocation13 + $0x88] sm:$0xff]
    %v869 = vld [vmem:[#allocation13 + $0x90] sm:$0xff]
    %v870 = vld [vmem:[#allocation13 + $0x98] sm:$0xff]
    %v871 = vld [vmem:[#allocation13 + $0xa0] sm:$0xff]
    %v872 = vld [vmem:[#allocation13 + $0xa8] sm:$0xff]
    %v873 = vld [vmem:[#allocation13 + $0xb0] sm:$0xff]
    %v874 = vld [vmem:[#allocation13 + $0xb8] sm:$0xff]
    %v875 = vld [vmem:[#allocation13 + $0xc0] sm:$0xff]
    %v876 = vld [vmem:[#allocation13 + $0xc8] sm:$0xff]
    %v877 = vld [vmem:[#allocation13 + $0xd0] sm:$0xff]
    %v878 = vld [vmem:[#allocation13 + $0xd8] sm:$0xff]
    %v879 = vld [vmem:[#allocation13 + $0xe0] sm:$0xff]
    %v880 = vld [vmem:[#allocation13 + $0xe8] sm:$0xff]
    %v881 = vld [vmem:[#allocation13 + $0xf0] sm:$0xff]
    %v882 = vld [vmem:[#allocation13 + $0xf8] sm:$0xff]
    %v883 = vld [vmem:[#allocation13 + $0x100] sm:$0xff]
    %v884 = vld [vmem:[#allocation13 + $0x108] sm:$0xff]
    %v885 = vld [vmem:[#allocation13 + $0x110] sm:$0xff]
    %v886 = vld [vmem:[#allocation13 + $0x118] sm:$0xff]
    %v887 = vld [vmem:[#allocation13 + $0x120] sm:$0xff]
    %v888 = vld [vmem:[#allocation13 + $0x128] sm:$0xff]
    %v889 = vld [vmem:[#allocation13 + $0x130] sm:$0xff]
    %v890 = vld [vmem:[#allocation13 + $0x138] sm:$0xff]
    %v891 = vld [vmem:[#allocation13 + $0x140] sm:$0xff]
    %v892 = vld [vmem:[#allocation13 + $0x148] sm:$0xff]
    %v893 = vld [vmem:[#allocation13 + $0x150] sm:$0xff]
    %v894 = vld [vmem:[#allocation13 + $0x158] sm:$0xff]
    %v895 = vld [vmem:[#allocation13 + $0x160] sm:$0xff]
    %v896 = vld [vmem:[#allocation13 + $0x168] sm:$0xff]
    %v897 = vld [vmem:[#allocation13 + $0x170] sm:$0xff]
    %v898 = vld [vmem:[#allocation13 + $0x178] sm:$0xff]
    %v899 = vld [vmem:[#allocation13 + $0x180] sm:$0xff]
    %v900 = vld [vmem:[#allocation13 + $0x188] sm:$0xff]
    %v901 = vld [vmem:[#allocation13 + $0x190] sm:$0xff]
    %v902 = vld [vmem:[#allocation13 + $0x198] sm:$0xff]
    %v903 = vld [vmem:[#allocation13 + $0x1a0] sm:$0xff]
    %v904 = vld [vmem:[#allocation13 + $0x1a8] sm:$0xff]
    %v905 = vld [vmem:[#allocation13 + $0x1b0] sm:$0xff]
    %v906 = vld [vmem:[#allocation13 + $0x1b8] sm:$0xff]
    %v907 = vld [vmem:[#allocation13 + $0x1c0] sm:$0xff]
    %v908 = vld [vmem:[#allocation13 + $0x1c8] sm:$0xff]
    %v909 = vld [vmem:[#allocation13 + $0x1d0] sm:$0xff]
    %v910 = vld [vmem:[#allocation13 + $0x1d8] sm:$0xff]
    %v911 = vld [vmem:[#allocation13 + $0x1e0] sm:$0xff]
    %v912 = vld [vmem:[#allocation13 + $0x1e8] sm:$0xff]
    %v913 = vld [vmem:[#allocation13 + $0x1f0] sm:$0xff]
    %v914 = vld [vmem:[#allocation13 + $0x1f8] sm:$0xff]
    %v915 = vld [vmem:[#allocation14] sm:$0x3]
    %v917 = vperm.slane %v915, 0
    %v918 = vperm.slane %v915, 1
    %921 = vmatpush.msra.mxu0 %v881
    %922 = vmatpush.msra.mxu0 %v879
    %923 = vmatpush.msra.mxu0 %v877
    %924 = vmatpush.msra.mxu0 %v875
    %925 = vmatpush.msra.mxu0 %v873
    %926 = vmatpush.msra.mxu0 %v871
    %927 = vmatpush.msra.mxu0 %v869
    %928 = vmatpush.msra.mxu0 %v867
    %929 = vmatpush.msra.mxu0 %v865
    %930 = vmatpush.msra.mxu0 %v863
    %931 = vmatpush.msra.mxu0 %v861
    %932 = vmatpush.msra.mxu0 %v859
    %933 = vmatpush.msra.mxu0 %v857
    %934 = vmatpush.msra.mxu0 %v855
    %935 = vmatpush.msra.mxu0 %v853
    %936 = vmatpush.msra.mxu0 %v851
    %937 = vmatmul.f32.gmra.mxu0 %v809
    %v938 = vpop.f32.mrf.mxu0
    %v939 = vadd.f32 %v917, %v938
    %940 = vdwg.mxu0
    %941 = vmatpush.msra.mxu0 %v913
    %942 = vmatpush.msra.mxu0 %v911
    %943 = vmatpush.msra.mxu0 %v909
    %944 = vmatpush.msra.mxu0 %v907
    %945 = vmatpush.msra.mxu0 %v905
    %946 = vmatpush.msra.mxu0 %v903
    %947 = vmatpush.msra.mxu0 %v901
    %948 = vmatpush.msra.mxu0 %v899
    %949 = vmatpush.msra.mxu0 %v897
    %950 = vmatpush.msra.mxu0 %v895
    %951 = vmatpush.msra.mxu0 %v893
    %952 = vmatpush.msra.mxu0 %v891
    %953 = vmatpush.msra.mxu0 %v889
    %954 = vmatpush.msra.mxu0 %v887
    %955 = vmatpush.msra.mxu0 %v885
    %956 = vmatpush.msra.mxu0 %v883
    %957 = vmatmul.f32.gmra.mxu0 %v849
    %v958 = vpop.f32.mrf.mxu0
    %v959 = vadd.f32 %v939, %v958
    %960 = vdwg.mxu0
    %961 = vmatpush.msra.mxu0 %v882
    %962 = vmatpush.msra.mxu0 %v880
    %963 = vmatpush.msra.mxu0 %v878
    %964 = vmatpush.msra.mxu0 %v876
    %965 = vmatpush.msra.mxu0 %v874
    %966 = vmatpush.msra.mxu0 %v872
    %967 = vmatpush.msra.mxu0 %v870
    %968 = vmatpush.msra.mxu0 %v868
    %969 = vmatpush.msra.mxu0 %v866
    %970 = vmatpush.msra.mxu0 %v864
    %971 = vmatpush.msra.mxu0 %v862
    %972 = vmatpush.msra.mxu0 %v860
    %973 = vmatpush.msra.mxu0 %v858
    %974 = vmatpush.msra.mxu0 %v856
    %975 = vmatpush.msra.mxu0 %v854
    %976 = vmatpush.msra.mxu0 %v852
    %977 = vmatmul.f32.gmra.mxu0 %v809
    %v978 = vpop.f32.mrf.mxu0
    %v979 = vadd.f32 %v918, %v978
    %980 = vdwg.mxu0
    %981 = vmatpush.msra.mxu0 %v914
    %982 = vmatpush.msra.mxu0 %v912
    %983 = vmatpush.msra.mxu0 %v910
    %984 = vmatpush.msra.mxu0 %v908
    %985 = vmatpush.msra.mxu0 %v906
    %986 = vmatpush.msra.mxu0 %v904
    %987 = vmatpush.msra.mxu0 %v902
    %988 = vmatpush.msra.mxu0 %v900
    %989 = vmatpush.msra.mxu0 %v898
    %990 = vmatpush.msra.mxu0 %v896
    %991 = vmatpush.msra.mxu0 %v894
    %992 = vmatpush.msra.mxu0 %v892
    %993 = vmatpush.msra.mxu0 %v890
    %994 = vmatpush.msra.mxu0 %v888
    %995 = vmatpush.msra.mxu0 %v886
    %996 = vmatpush.msra.mxu0 %v884
    %997 = vmatmul.f32.gmra.mxu0 %v849
    %v998 = vpop.f32.mrf.mxu0
    %v999 = vadd.f32 %v979, %v998
    %1000 = vdwg.mxu0
    %v1001 = vld [vmem:[#allocation16] sm:$0x3]
    %v1002 = vld [vmem:[#allocation17] sm:$0x3]
    %v1003 = vsel %vm389, %v959, 0.0
    %v1004 = vrot.slane %v1003, 4
    %v1005 = vadd.f32 %v1003, %v1004
    %v1006 = vrot.slane %v1005, 2
    %v1007 = vadd.f32 %v1005, %v1006
    %v1008 = vrot.slane %v1007, 1
    %v1009 = vadd.f32 %v1007, %v1008
    %v1010 = vsel %vm389, %v999, 0.0
    %v1011 = vrot.slane %v1010, 4
    %v1012 = vadd.f32 %v1010, %v1011
    %v1013 = vrot.slane %v1012, 2
    %v1014 = vadd.f32 %v1012, %v1013
    %v1015 = vrot.slane %v1014, 1
    %v1016 = vadd.f32 %v1014, %v1015
    %v1017 = vmul.f32 %v1009, %v410
    %v1018 = vmul.f32 %v1016, %v410
    %v1019 = vsub.f32 %v959, %v1017
    %v1020 = vsub.f32 %v999, %v1018
    %v1021 = vmul.f32 %v1019, %v1019
    %v1022 = vmul.f32 %v1020, %v1020
    %v1023 = vsel %vm389, %v1021, 0.0
    %v1024 = vrot.slane %v1023, 4
    %v1025 = vadd.f32 %v1023, %v1024
    %v1026 = vrot.slane %v1025, 2
    %v1027 = vadd.f32 %v1025, %v1026
    %v1028 = vrot.slane %v1027, 1
    %v1029 = vadd.f32 %v1027, %v1028
    %v1030 = vsel %vm389, %v1022, 0.0
    %v1031 = vrot.slane %v1030, 4
    %v1032 = vadd.f32 %v1030, %v1031
    %v1033 = vrot.slane %v1032, 2
    %v1034 = vadd.f32 %v1032, %v1033
    %v1035 = vrot.slane %v1034, 1
    %v1036 = vadd.f32 %v1034, %v1035
    %v1037 = vmul.f32 %v1029, %v410
    %v1038 = vmul.f32 %v1036, %v410
    %v1039 = vadd.f32 %v1037, 1e-05
    %v1040 = vadd.f32 %v1038, 1e-05
    %v1041 = vrsqrt.pop %v1039
    %v1042 = vmul.f32 %v1041, %v1039
    %v1043 = vmul.f32 %v1042, %v1041
    %v1044 = vmul.f32 0.5, %v1043
    %v1045 = vsub.f32 1.5, %v1044
    %v1046 = vmul.f32 %v1041, %v1045
    %vm1047 = vweird.f32 %v1039
    %vm1048 = vweird.f32 %v1041
    %vm1049 = vmor %vm1047, %vm1048
    %v1050 = vsel %vm1049, %v1041, %v1046
    %v1051 = vrsqrt.pop %v1040
    %v1052 = vmul.f32 %v1051, %v1040
    %v1053 = vmul.f32 %v1052, %v1051
    %v1054 = vmul.f32 0.5, %v1053
    %v1055 = vsub.f32 1.5, %v1054
    %v1056 = vmul.f32 %v1051, %v1055
    %vm1057 = vweird.f32 %v1040
    %vm1058 = vweird.f32 %v1051
    %vm1059 = vmor %vm1057, %vm1058
    %v1060 = vsel %vm1059, %v1051, %v1056
    %v1061 = vmul.f32 %v1019, %v1050
    %v1062 = vmul.f32 %v1020, %v1060
    %v1064 = vperm.slane %v1001, 0
    %v1065 = vperm.slane %v1001, 1
    %v1068 = vmul.f32 %v1061, %v1064
    %v1069 = vmul.f32 %v1062, %v1065
    %v1071 = vperm.slane %v1002, 0
    %v1072 = vperm.slane %v1002, 1
    %v1075 = vadd.f32 %v1068, %v1071
    %v1076 = vadd.f32 %v1069, %v1072
    %v1077 = vmax.f32 %v1075, 0.0
    %v1078 = vmax.f32 %v1076, 0.0
    %v1079 = vld [vmem:[#allocation19] sm:$0xff]
    %v1080 = vld [vmem:[#allocation19 + $0x8] sm:$0xff]
    %v1081 = vld [vmem:[#allocation19 + $0x10] sm:$0xff]
    %v1082 = vld [vmem:[#allocation19 + $0x18] sm:$0xff]
    %v1083 = vld [vmem:[#allocation19 + $0x20] sm:$0xff]
    %v1084 = vld [vmem:[#allocation19 + $0x28] sm:$0xff]
    %v1085 = vld [vmem:[#allocation19 + $0x30] sm:$0xff]
    %v1086 = vld [vmem:[#allocation19 + $0x38] sm:$0xff]
    %v1087 = vld [vmem:[#allocation19 + $0x40] sm:$0xff]
    %v1088 = vld [vmem:[#allocation19 + $0x48] sm:$0xff]
    %v1089 = vld [vmem:[#allocation19 + $0x50] sm:$0xff]
    %v1090 = vld [vmem:[#allocation19 + $0x58] sm:$0xff]
    %v1091 = vld [vmem:[#allocation19 + $0x60] sm:$0xff]
    %v1092 = vld [vmem:[#allocation19 + $0x68] sm:$0xff]
    %v1093 = vld [vmem:[#allocation19 + $0x70] sm:$0xff]
    %v1094 = vld [vmem:[#allocation19 + $0x78] sm:$0xff]
    %v1095 = vld [vmem:[#allocation19 + $0x80] sm:$0xff]
    %v1096 = vld [vmem:[#allocation19 + $0x88] sm:$0xff]
    %v1097 = vld [vmem:[#allocation19 + $0x90] sm:$0xff]
    %v1098 = vld [vmem:[#allocation19 + $0x98] sm:$0xff]
    %v1099 = vld [vmem:[#allocation19 + $0xa0] sm:$0xff]
    %v1100 = vld [vmem:[#allocation19 + $0xa8] sm:$0xff]
    %v1101 = vld [vmem:[#allocation19 + $0xb0] sm:$0xff]
    %v1102 = vld [vmem:[#allocation19 + $0xb8] sm:$0xff]
    %v1103 = vld [vmem:[#allocation19 + $0xc0] sm:$0xff]
    %v1104 = vld [vmem:[#allocation19 + $0xc8] sm:$0xff]
    %v1105 = vld [vmem:[#allocation19 + $0xd0] sm:$0xff]
    %v1106 = vld [vmem:[#allocation19 + $0xd8] sm:$0xff]
    %v1107 = vld [vmem:[#allocation19 + $0xe0] sm:$0xff]
    %v1108 = vld [vmem:[#allocation19 + $0xe8] sm:$0xff]
    %v1109 = vld [vmem:[#allocation19 + $0xf0] sm:$0xff]
    %v1110 = vld [vmem:[#allocation19 + $0xf8] sm:$0xff]
    %v1111 = vld [vmem:[#allocation19 + $0x100] sm:$0xff]
    %v1112 = vld [vmem:[#allocation19 + $0x108] sm:$0xff]
    %v1113 = vld [vmem:[#allocation19 + $0x110] sm:$0xff]
    %v1114 = vld [vmem:[#allocation19 + $0x118] sm:$0xff]
    %v1115 = vld [vmem:[#allocation19 + $0x120] sm:$0xff]
    %v1116 = vld [vmem:[#allocation19 + $0x128] sm:$0xff]
    %v1117 = vld [vmem:[#allocation19 + $0x130] sm:$0xff]
    %v1118 = vld [vmem:[#allocation19 + $0x138] sm:$0xff]
    %v1119 = vld [vmem:[#allocation19 + $0x140] sm:$0xff]
    %v1120 = vld [vmem:[#allocation19 + $0x148] sm:$0xff]
    %v1121 = vld [vmem:[#allocation19 + $0x150] sm:$0xff]
    %v1122 = vld [vmem:[#allocation19 + $0x158] sm:$0xff]
    %v1123 = vld [vmem:[#allocation19 + $0x160] sm:$0xff]
    %v1124 = vld [vmem:[#allocation19 + $0x168] sm:$0xff]
    %v1125 = vld [vmem:[#allocation19 + $0x170] sm:$0xff]
    %v1126 = vld [vmem:[#allocation19 + $0x178] sm:$0xff]
    %v1127 = vld [vmem:[#allocation19 + $0x180] sm:$0xff]
    %v1128 = vld [vmem:[#allocation19 + $0x188] sm:$0xff]
    %v1129 = vld [vmem:[#allocation19 + $0x190] sm:$0xff]
    %v1130 = vld [vmem:[#allocation19 + $0x198] sm:$0xff]
    %v1131 = vld [vmem:[#allocation19 + $0x1a0] sm:$0xff]
    %v1132 = vld [vmem:[#allocation19 + $0x1a8] sm:$0xff]
    %v1133 = vld [vmem:[#allocation19 + $0x1b0] sm:$0xff]
    %v1134 = vld [vmem:[#allocation19 + $0x1b8] sm:$0xff]
    %v1135 = vld [vmem:[#allocation19 + $0x1c0] sm:$0xff]
    %v1136 = vld [vmem:[#allocation19 + $0x1c8] sm:$0xff]
    %v1137 = vld [vmem:[#allocation19 + $0x1d0] sm:$0xff]
    %v1138 = vld [vmem:[#allocation19 + $0x1d8] sm:$0xff]
    %v1139 = vld [vmem:[#allocation19 + $0x1e0] sm:$0xff]
    %v1140 = vld [vmem:[#allocation19 + $0x1e8] sm:$0xff]
    %v1141 = vld [vmem:[#allocation19 + $0x1f0] sm:$0xff]
    %v1142 = vld [vmem:[#allocation19 + $0x1f8] sm:$0xff]
    %v1143 = vld [vmem:[#allocation20] sm:$0x3]
    %v1145 = vperm.slane %v1143, 0
    %v1146 = vperm.slane %v1143, 1
    %1149 = vmatpush.msra.mxu0 %v1109
    %1150 = vmatpush.msra.mxu0 %v1107
    %1151 = vmatpush.msra.mxu0 %v1105
    %1152 = vmatpush.msra.mxu0 %v1103
    %1153 = vmatpush.msra.mxu0 %v1101
    %1154 = vmatpush.msra.mxu0 %v1099
    %1155 = vmatpush.msra.mxu0 %v1097
    %1156 = vmatpush.msra.mxu0 %v1095
    %1157 = vmatpush.msra.mxu0 %v1093
    %1158 = vmatpush.msra.mxu0 %v1091
    %1159 = vmatpush.msra.mxu0 %v1089
    %1160 = vmatpush.msra.mxu0 %v1087
    %1161 = vmatpush.msra.mxu0 %v1085
    %1162 = vmatpush.msra.mxu0 %v1083
    %1163 = vmatpush.msra.mxu0 %v1081
    %1164 = vmatpush.msra.mxu0 %v1079
    %1165 = vmatmul.f32.gmra.mxu0 %v1077
    %v1166 = vpop.f32.mrf.mxu0
    %v1167 = vadd.f32 %v1145, %v1166
    %1168 = vdwg.mxu0
    %1169 = vmatpush.msra.mxu0 %v1141
    %1170 = vmatpush.msra.mxu0 %v1139
    %1171 = vmatpush.msra.mxu0 %v1137
    %1172 = vmatpush.msra.mxu0 %v1135
    %1173 = vmatpush.msra.mxu0 %v1133
    %1174 = vmatpush.msra.mxu0 %v1131
    %1175 = vmatpush.msra.mxu0 %v1129
    %1176 = vmatpush.msra.mxu0 %v1127
    %1177 = vmatpush.msra.mxu0 %v1125
    %1178 = vmatpush.msra.mxu0 %v1123
    %1179 = vmatpush.msra.mxu0 %v1121
    %1180 = vmatpush.msra.mxu0 %v1119
    %1181 = vmatpush.msra.mxu0 %v1117
    %1182 = vmatpush.msra.mxu0 %v1115
    %1183 = vmatpush.msra.mxu0 %v1113
    %1184 = vmatpush.msra.mxu0 %v1111
    %1185 = vmatmul.f32.gmra.mxu0 %v1078
    %v1186 = vpop.f32.mrf.mxu0
    %v1187 = vadd.f32 %v1167, %v1186
    %1188 = vdwg.mxu0
    %1189 = vmatpush.msra.mxu0 %v1110
    %1190 = vmatpush.msra.mxu0 %v1108
    %1191 = vmatpush.msra.mxu0 %v1106
    %1192 = vmatpush.msra.mxu0 %v1104
    %1193 = vmatpush.msra.mxu0 %v1102
    %1194 = vmatpush.msra.mxu0 %v1100
    %1195 = vmatpush.msra.mxu0 %v1098
    %1196 = vmatpush.msra.mxu0 %v1096
    %1197 = vmatpush.msra.mxu0 %v1094
    %1198 = vmatpush.msra.mxu0 %v1092
    %1199 = vmatpush.msra.mxu0 %v1090
    %1200 = vmatpush.msra.mxu0 %v1088
    %1201 = vmatpush.msra.mxu0 %v1086
    %1202 = vmatpush.msra.mxu0 %v1084
    %1203 = vmatpush.msra.mxu0 %v1082
    %1204 = vmatpush.msra.mxu0 %v1080
    %1205 = vmatmul.f32.gmra.mxu0 %v1077
    %v1206 = vpop.f32.mrf.mxu0
    %v1207 = vadd.f32 %v1146, %v1206
    %1208 = vdwg.mxu0
    %1209 = vmatpush.msra.mxu0 %v1142
    %1210 = vmatpush.msra.mxu0 %v1140
    %1211 = vmatpush.msra.mxu0 %v1138
    %1212 = vmatpush.msra.mxu0 %v1136
    %1213 = vmatpush.msra.mxu0 %v1134
    %1214 = vmatpush.msra.mxu0 %v1132
    %1215 = vmatpush.msra.mxu0 %v1130
    %1216 = vmatpush.msra.mxu0 %v1128
    %1217 = vmatpush.msra.mxu0 %v1126
    %1218 = vmatpush.msra.mxu0 %v1124
    %1219 = vmatpush.msra.mxu0 %v1122
    %1220 = vmatpush.msra.mxu0 %v1120
    %1221 = vmatpush.msra.mxu0 %v1118
    %1222 = vmatpush.msra.mxu0 %v1116
    %1223 = vmatpush.msra.mxu0 %v1114
    %1224 = vmatpush.msra.mxu0 %v1112
    %1225 = vmatmul.f32.gmra.mxu0 %v1078
    %v1226 = vpop.f32.mrf.mxu0
    %v1227 = vadd.f32 %v1207, %v1226
    %1228 = vdwg.mxu0
    %v1229 = vadd.f32 %v809, %v1187
    %v1230 = vadd.f32 %v849, %v1227
    %v1233 = vrot.slane %v1230, 6
    %v1234 = vsel %vm389, %v1229, %v1233
    %1236 = vst [vmem:[#allocation22] sm:$0xf] %v1234
    // Predicated region
    $region118: #{mfm_forward.7} parent=1 // pred_check
      _
    $region119: #{mfm_forward.7} parent=1 // pred_check_branch
      %1238 = sbr.rel (0) target = $region121
    $region120: #{mfm_forward.7} parent=1 // pred_region
      %1240 = vsyncadd [#allocation4], 0
      %s1242 = sshll.u32 [#allocation22], 4
      %s1243 = int_to_ptr.vmem [resolvable:$true] %s1242
      %s1244 = sshll.u32 %s17, 4
      %s1245 = int_to_ptr.hbm [resolvable:$true] %s1244
      %1247 = dma.vmem_to_hbm [thread:$0]  %s1243, 64, %s1245, [#allocation4]
    $region121: #{mfm_forward.7} parent=1 // pred_fallthru
      _
    // Predicated region
    $region122: #{mfm_forward.7} parent=1 // pred_check
      _
    $region123: #{mfm_forward.7} parent=1 // pred_check_branch
      %1249 = sbr.rel (0) target = $region125
    $region124: #{mfm_forward.7} parent=1 // pred_region
      %1251 = dma.done [#allocation4], 64
    $region125: #{mfm_forward.7} parent=1 // pred_fallthru
      _
    %1252 = vsyncpa [#allocation3], 1
    %1253 = vsyncpa [#allocation6], 1
    %1254 = vsyncpa [#allocation9], 1
    %1255 = vsyncpa [#allocation12], 1
    %1256 = vsyncpa [#allocation15], 1
    %1257 = vsyncpa [#allocation18], 1
    %1258 = vsyncpa [#allocation21], 1
    %1259 = vsyncpa [#allocation4], 1

// kernel: mfm_forward.6
$region0: #{mfm_forward.6}
  #allocation0 [shape = 'u32[]', space=smem, size = 0x4, offset = 0x4, fixed_abs, tag = 'smem constant byte address 0x4 - core index']
  #allocation1 [shape = 'u32[72,128]{1,0:T(1,128)}', space=vmem, size = 0x9000, scoped, tag = 'internal scratch']
  %s0 = inlined_call_operand.vmem [shape: f32[2,256], index: 0, kind: input, shape index: {}]
  %s1 = inlined_call_operand.vmem [shape: f32[256,256], index: 1, kind: input, shape index: {}]
  %s2 = inlined_call_operand.hbm [shape: f32[1,256], index: 2, kind: input, shape index: {}]
  %s3 = inlined_call_operand.hbm [shape: f32[1,256], index: 3, kind: input, shape index: {}]
  %s4 = inlined_call_operand.hbm [shape: f32[1,256], index: 4, kind: input, shape index: {}]
  %s5 = inlined_call_operand.hbm [shape: f32[256,256], index: 5, kind: input, shape index: {}]
  %s6 = inlined_call_operand.hbm [shape: f32[1,256], index: 6, kind: input, shape index: {}]
  %s7 = inlined_call_operand.hbm [shape: f32[1,256], index: 7, kind: input, shape index: {}]
  %s8 = inlined_call_operand.hbm [shape: f32[1,256], index: 8, kind: input, shape index: {}]
  %s9 = inlined_call_operand.hbm [shape: f32[256,256], index: 9, kind: input, shape index: {}]
  %s10 = inlined_call_operand.hbm [shape: f32[1,256], index: 10, kind: input, shape index: {}]
  %s11 = inlined_call_operand.hbm [shape: f32[256,256], index: 11, kind: input, shape index: {}]
  %s12 = inlined_call_operand.hbm [shape: f32[1,256], index: 12, kind: input, shape index: {}]
  %s13 = inlined_call_operand.hbm [shape: f32[1,256], index: 13, kind: input, shape index: {}]
  %s14 = inlined_call_operand.hbm [shape: f32[1,256], index: 14, kind: input, shape index: {}]
  %s15 = inlined_call_operand.hbm [shape: f32[256,256], index: 15, kind: input, shape index: {}]
  %s16 = inlined_call_operand.hbm [shape: f32[1,256], index: 16, kind: input, shape index: {}]
  %s17 = inlined_call_operand.vmem [shape: f32[2,256], index: 17, kind: output, shape index: {}]
  %s18 = sld [smem:[#allocation0]]
  $region138: #{mfm_forward.6} parent=0
    _
  %s20 = ssub.s32 1, %s18
  %s21 = scalar_select 0, %s20, %s18
  $region1: #{mfm_forward.6} parent=0
    #allocation2 [shape = 'u8[1024]{0}', space=vmem, size = 0x400, scoped, tag = 'input window, operand 2, single buffered']
    #allocation3 [shape = 's32[1]{0}', space=sflag, size = 0x4, scoped, tag = 'scoped memory for mfm_forward.6']
    #allocation4 [shape = 'u8[1024]{0}', space=vmem, size = 0x400, scoped, tag = 'input window, operand 3, single buffered']
    #allocation5 [shape = 's32[1]{0}', space=sflag, size = 0x4, scoped, tag = 'scoped memory for mfm_forward.6']
    #allocation6 [shape = 'u8[1024]{0}', space=vmem, size = 0x400, scoped, tag = 'input window, operand 4, single buffered']
    #allocation7 [shape = 'u8[262144]{0}', space=vmem, size = 0x40000, scoped, tag = 'input window, operand 5, single buffered']
    #allocation8 [shape = 's32[1]{0}', space=sflag, size = 0x4, scoped, tag = 'scoped memory for mfm_forward.6']
    #allocation9 [shape = 'u8[1024]{0}', space=vmem, size = 0x400, scoped, tag = 'input window, operand 6, single buffered']
    #allocation10 [shape = 'u8[1024]{0}', space=vmem, size = 0x400, scoped, tag = 'input window, operand 7, single buffered']
    #allocation11 [shape = 's32[1]{0}', space=sflag, size = 0x4, scoped, tag = 'scoped memory for mfm_forward.6']
    #allocation12 [shape = 'u8[1024]{0}', space=vmem, size = 0x400, scoped, tag = 'input window, operand 8, single buffered']
    #allocation13 [shape = 'u8[262144]{0}', space=vmem, size = 0x40000, scoped, tag = 'input window, operand 9, single buffered']
    #allocation14 [shape = 's32[1]{0}', space=sflag, size = 0x4, scoped, tag = 'scoped memory for mfm_forward.6']
    #allocation15 [shape = 'u8[1024]{0}', space=vmem, size = 0x400, scoped, tag = 'input window, operand 10, single buffered']
    #allocation16 [shape = 'u8[262144]{0}', space=vmem, size = 0x40000, scoped, tag = 'input window, operand 11, single buffered']
    #allocation17 [shape = 's32[1]{0}', space=sflag, size = 0x4, scoped, tag = 'scoped memory for mfm_forward.6']
    #allocation18 [shape = 'u8[1024]{0}', space=vmem, size = 0x400, scoped, tag = 'input window, operand 12, single buffered']
    #allocation19 [shape = 'u8[1024]{0}', space=vmem, size = 0x400, scoped, tag = 'input window, operand 13, single buffered']
    #allocation20 [shape = 's32[1]{0}', space=sflag, size = 0x4, scoped, tag = 'scoped memory for mfm_forward.6']
    #allocation21 [shape = 'u8[1024]{0}', space=vmem, size = 0x400, scoped, tag = 'input window, operand 14, single buffered']
    #allocation22 [shape = 'u8[262144]{0}', space=vmem, size = 0x40000, scoped, tag = 'input window, operand 15, single buffered']
    #allocation23 [shape = 's32[1]{0}', space=sflag, size = 0x4, scoped, tag = 'scoped memory for mfm_forward.6']
    #allocation24 [shape = 'u8[1024]{0}', space=vmem, size = 0x400, scoped, tag = 'input window, operand 16, single buffered']
    %22 = vsyncpa [#allocation3], 0
    %23 = vsyncpa [#allocation5], 0
    %24 = vsyncpa [#allocation8], 0
    %25 = vsyncpa [#allocation11], 0
    %26 = vsyncpa [#allocation14], 0
    %27 = vsyncpa [#allocation17], 0
    %28 = vsyncpa [#allocation20], 0
    %29 = vsyncpa [#allocation23], 0
    // Predicated region
    $region2: #{mfm_forward.6} parent=1 // pred_check
      _
    $region3: #{mfm_forward.6} parent=1 // pred_check_branch
      %31 = sbr.rel (0) target = $region5
    $region4: #{mfm_forward.6} parent=1 // pred_region
      _
    $region5: #{mfm_forward.6} parent=1 // pred_fallthru
      _
    // Predicated region
    $region6: #{mfm_forward.6} parent=1 // pred_check
      _
    $region7: #{mfm_forward.6} parent=1 // pred_check_branch
      %33 = sbr.rel (0) target = $region9
    $region8: #{mfm_forward.6} parent=1 // pred_region
      _
    $region9: #{mfm_forward.6} parent=1 // pred_fallthru
      _
    // Predicated region
    $region10: #{mfm_forward.6} parent=1 // pred_check
      _
    $region11: #{mfm_forward.6} parent=1 // pred_check_branch
      %35 = sbr.rel (0) target = $region13
    $region12: #{mfm_forward.6} parent=1 // pred_region
      %37 = vsyncadd [#allocation3], 0
      %s39 = sshll.u32 %s2, 4
      %s40 = int_to_ptr.hbm [resolvable:$true] %s39
      %s41 = sshll.u32 [#allocation2], 4
      %s42 = int_to_ptr.vmem [resolvable:$true] %s41
      %44 = dma.hbm_to_vmem [thread:$0]  %s40, 32, %s42, [#allocation3]
    $region13: #{mfm_forward.6} parent=1 // pred_fallthru
      _
    // Predicated region
    $region14: #{mfm_forward.6} parent=1 // pred_check
      _
    $region15: #{mfm_forward.6} parent=1 // pred_check_branch
      %46 = sbr.rel (0) target = $region17
    $region16: #{mfm_forward.6} parent=1 // pred_region
      %48 = vsyncadd [#allocation5], 0
      %s50 = sshll.u32 %s3, 4
      %s51 = int_to_ptr.hbm [resolvable:$true] %s50
      %s52 = sshll.u32 [#allocation4], 4
      %s53 = int_to_ptr.vmem [resolvable:$true] %s52
      %55 = dma.hbm_to_vmem [thread:$0]  %s51, 32, %s53, [#allocation5]
    $region17: #{mfm_forward.6} parent=1 // pred_fallthru
      _
    // Predicated region
    $region18: #{mfm_forward.6} parent=1 // pred_check
      _
    $region19: #{mfm_forward.6} parent=1 // pred_check_branch
      %57 = sbr.rel (0) target = $region21
    $region20: #{mfm_forward.6} parent=1 // pred_region
      %59 = vsyncadd [#allocation5], 0
      %s61 = sshll.u32 %s4, 4
      %s62 = int_to_ptr.hbm [resolvable:$true] %s61
      %s63 = sshll.u32 [#allocation6], 4
      %s64 = int_to_ptr.vmem [resolvable:$true] %s63
      %66 = dma.hbm_to_vmem [thread:$0]  %s62, 32, %s64, [#allocation5]
    $region21: #{mfm_forward.6} parent=1 // pred_fallthru
      _
    // Predicated region
    $region22: #{mfm_forward.6} parent=1 // pred_check
      _
    $region23: #{mfm_forward.6} parent=1 // pred_check_branch
      %68 = sbr.rel (0) target = $region25
    $region24: #{mfm_forward.6} parent=1 // pred_region
      %70 = vsyncadd [#allocation8], 0
      %s71 = sshll.u32 %s5, 4
      %s72 = int_to_ptr.hbm [resolvable:$true] %s71
      %s73 = sshll.u32 [#allocation7], 4
      %s74 = int_to_ptr.vmem [resolvable:$true] %s73
      %79 = dma.hbm_to_vmem [thread:$0]  %s72, 8192, %s74, [#allocation8], 256, 256, 16
    $region25: #{mfm_forward.6} parent=1 // pred_fallthru
      _
    // Predicated region
    $region26: #{mfm_forward.6} parent=1 // pred_check
      _
    $region27: #{mfm_forward.6} parent=1 // pred_check_branch
      %81 = sbr.rel (0) target = $region29
    $region28: #{mfm_forward.6} parent=1 // pred_region
      %83 = vsyncadd [#allocation8], 0
      %s85 = sshll.u32 %s6, 4
      %s86 = int_to_ptr.hbm [resolvable:$true] %s85
      %s87 = sshll.u32 [#allocation9], 4
      %s88 = int_to_ptr.vmem [resolvable:$true] %s87
      %90 = dma.hbm_to_vmem [thread:$0]  %s86, 32, %s88, [#allocation8]
    $region29: #{mfm_forward.6} parent=1 // pred_fallthru
      _
    // Predicated region
    $region30: #{mfm_forward.6} parent=1 // pred_check
      _
    $region31: #{mfm_forward.6} parent=1 // pred_check_branch
      %92 = sbr.rel (0) target = $region33
    $region32: #{mfm_forward.6} parent=1 // pred_region
      %94 = vsyncadd [#allocation11], 0
      %s96 = sshll.u32 %s7, 4
      %s97 = int_to_ptr.hbm [resolvable:$true] %s96
      %s98 = sshll.u32 [#allocation10], 4
      %s99 = int_to_ptr.vmem [resolvable:$true] %s98
      %101 = dma.hbm_to_vmem [thread:$0]  %s97, 32, %s99, [#allocation11]
    $region33: #{mfm_forward.6} parent=1 // pred_fallthru
      _
    // Predicated region
    $region34: #{mfm_forward.6} parent=1 // pred_check
      _
    $region35: #{mfm_forward.6} parent=1 // pred_check_branch
      %103 = sbr.rel (0) target = $region37
    $region36: #{mfm_forward.6} parent=1 // pred_region
      %105 = vsyncadd [#allocation11], 0
      %s107 = sshll.u32 %s8, 4
      %s108 = int_to_ptr.hbm [resolvable:$true] %s107
      %s109 = sshll.u32 [#allocation12], 4
      %s110 = int_to_ptr.vmem [resolvable:$true] %s109
      %112 = dma.hbm_to_vmem [thread:$0]  %s108, 32, %s110, [#allocation11]
    $region37: #{mfm_forward.6} parent=1 // pred_fallthru
      _
    // Predicated region
    $region38: #{mfm_forward.6} parent=1 // pred_check
      _
    $region39: #{mfm_forward.6} parent=1 // pred_check_branch
      %114 = sbr.rel (0) target = $region41
    $region40: #{mfm_forward.6} parent=1 // pred_region
      %116 = vsyncadd [#allocation14], 0
      %s117 = sshll.u32 %s9, 4
      %s118 = int_to_ptr.hbm [resolvable:$true] %s117
      %s119 = sshll.u32 [#allocation13], 4
      %s120 = int_to_ptr.vmem [resolvable:$true] %s119
      %125 = dma.hbm_to_vmem [thread:$0]  %s118, 8192, %s120, [#allocation14], 256, 256, 16
    $region41: #{mfm_forward.6} parent=1 // pred_fallthru
      _
    // Predicated region
    $region42: #{mfm_forward.6} parent=1 // pred_check
      _
    $region43: #{mfm_forward.6} parent=1 // pred_check_branch
      %127 = sbr.rel (0) target = $region45
    $region44: #{mfm_forward.6} parent=1 // pred_region
      %129 = vsyncadd [#allocation14], 0
      %s131 = sshll.u32 %s10, 4
      %s132 = int_to_ptr.hbm [resolvable:$true] %s131
      %s133 = sshll.u32 [#allocation15], 4
      %s134 = int_to_ptr.vmem [resolvable:$true] %s133
      %136 = dma.hbm_to_vmem [thread:$0]  %s132, 32, %s134, [#allocation14]
    $region45: #{mfm_forward.6} parent=1 // pred_fallthru
      _
    // Predicated region
    $region46: #{mfm_forward.6} parent=1 // pred_check
      _
    $region47: #{mfm_forward.6} parent=1 // pred_check_branch
      %138 = sbr.rel (0) target = $region49
    $region48: #{mfm_forward.6} parent=1 // pred_region
      %140 = vsyncadd [#allocation17], 0
      %s141 = sshll.u32 %s11, 4
      %s142 = int_to_ptr.hbm [resolvable:$true] %s141
      %s143 = sshll.u32 [#allocation16], 4
      %s144 = int_to_ptr.vmem [resolvable:$true] %s143
      %149 = dma.hbm_to_vmem [thread:$0]  %s142, 8192, %s144, [#allocation17], 256, 256, 16
    $region49: #{mfm_forward.6} parent=1 // pred_fallthru
      _
    // Predicated region
    $region50: #{mfm_forward.6} parent=1 // pred_check
      _
    $region51: #{mfm_forward.6} parent=1 // pred_check_branch
      %151 = sbr.rel (0) target = $region53
    $region52: #{mfm_forward.6} parent=1 // pred_region
      %153 = vsyncadd [#allocation17], 0
      %s155 = sshll.u32 %s12, 4
      %s156 = int_to_ptr.hbm [resolvable:$true] %s155
      %s157 = sshll.u32 [#allocation18], 4
      %s158 = int_to_ptr.vmem [resolvable:$true] %s157
      %160 = dma.hbm_to_vmem [thread:$0]  %s156, 32, %s158, [#allocation17]
    $region53: #{mfm_forward.6} parent=1 // pred_fallthru
      _
    // Predicated region
    $region54: #{mfm_forward.6} parent=1 // pred_check
      _
    $region55: #{mfm_forward.6} parent=1 // pred_check_branch
      %162 = sbr.rel (0) target = $region57
    $region56: #{mfm_forward.6} parent=1 // pred_region
      %164 = vsyncadd [#allocation20], 0
      %s166 = sshll.u32 %s13, 4
      %s167 = int_to_ptr.hbm [resolvable:$true] %s166
      %s168 = sshll.u32 [#allocation19], 4
      %s169 = int_to_ptr.vmem [resolvable:$true] %s168
      %171 = dma.hbm_to_vmem [thread:$0]  %s167, 32, %s169, [#allocation20]
    $region57: #{mfm_forward.6} parent=1 // pred_fallthru
      _
    // Predicated region
    $region58: #{mfm_forward.6} parent=1 // pred_check
      _
    $region59: #{mfm_forward.6} parent=1 // pred_check_branch
      %173 = sbr.rel (0) target = $region61
    $region60: #{mfm_forward.6} parent=1 // pred_region
      %175 = vsyncadd [#allocation20], 0
      %s177 = sshll.u32 %s14, 4
      %s178 = int_to_ptr.hbm [resolvable:$true] %s177
      %s179 = sshll.u32 [#allocation21], 4
      %s180 = int_to_ptr.vmem [resolvable:$true] %s179
      %182 = dma.hbm_to_vmem [thread:$0]  %s178, 32, %s180, [#allocation20]
    $region61: #{mfm_forward.6} parent=1 // pred_fallthru
      _
    // Predicated region
    $region62: #{mfm_forward.6} parent=1 // pred_check
      _
    $region63: #{mfm_forward.6} parent=1 // pred_check_branch
      %184 = sbr.rel (0) target = $region65
    $region64: #{mfm_forward.6} parent=1 // pred_region
      %186 = vsyncadd [#allocation23], 0
      %s187 = sshll.u32 %s15, 4
      %s188 = int_to_ptr.hbm [resolvable:$true] %s187
      %s189 = sshll.u32 [#allocation22], 4
      %s190 = int_to_ptr.vmem [resolvable:$true] %s189
      %195 = dma.hbm_to_vmem [thread:$0]  %s188, 8192, %s190, [#allocation23], 256, 256, 16
    $region65: #{mfm_forward.6} parent=1 // pred_fallthru
      _
    // Predicated region
    $region66: #{mfm_forward.6} parent=1 // pred_check
      _
    $region67: #{mfm_forward.6} parent=1 // pred_check_branch
      %197 = sbr.rel (0) target = $region69
    $region68: #{mfm_forward.6} parent=1 // pred_region
      %199 = vsyncadd [#allocation23], 0
      %s201 = sshll.u32 %s16, 4
      %s202 = int_to_ptr.hbm [resolvable:$true] %s201
      %s203 = sshll.u32 [#allocation24], 4
      %s204 = int_to_ptr.vmem [resolvable:$true] %s203
      %206 = dma.hbm_to_vmem [thread:$0]  %s202, 32, %s204, [#allocation23]
    $region69: #{mfm_forward.6} parent=1 // pred_fallthru
      _
    // Predicated region
    $region70: #{mfm_forward.6} parent=1 // pred_check
      _
    $region71: #{mfm_forward.6} parent=1 // pred_check_branch
      %208 = sbr.rel (0) target = $region73
    $region72: #{mfm_forward.6} parent=1 // pred_region
      %210 = dma.done [#allocation3], 32
    $region73: #{mfm_forward.6} parent=1 // pred_fallthru
      _
    // Predicated region
    $region74: #{mfm_forward.6} parent=1 // pred_check
      _
    $region75: #{mfm_forward.6} parent=1 // pred_check_branch
      %212 = sbr.rel (0) target = $region77
    $region76: #{mfm_forward.6} parent=1 // pred_region
      %214 = dma.done [#allocation5], 32
    $region77: #{mfm_forward.6} parent=1 // pred_fallthru
      _
    // Predicated region
    $region78: #{mfm_forward.6} parent=1 // pred_check
      _
    $region79: #{mfm_forward.6} parent=1 // pred_check_branch
      %216 = sbr.rel (0) target = $region81
    $region80: #{mfm_forward.6} parent=1 // pred_region
      %218 = dma.done [#allocation5], 32
    $region81: #{mfm_forward.6} parent=1 // pred_fallthru
      _
    // Predicated region
    $region82: #{mfm_forward.6} parent=1 // pred_check
      _
    $region83: #{mfm_forward.6} parent=1 // pred_check_branch
      %220 = sbr.rel (0) target = $region85
    $region84: #{mfm_forward.6} parent=1 // pred_region
      %222 = dma.done [#allocation8], 8192
    $region85: #{mfm_forward.6} parent=1 // pred_fallthru
      _
    // Predicated region
    $region86: #{mfm_forward.6} parent=1 // pred_check
      _
    $region87: #{mfm_forward.6} parent=1 // pred_check_branch
      %224 = sbr.rel (0) target = $region89
    $region88: #{mfm_forward.6} parent=1 // pred_region
      %226 = dma.done [#allocation8], 32
    $region89: #{mfm_forward.6} parent=1 // pred_fallthru
      _
    // Predicated region
    $region90: #{mfm_forward.6} parent=1 // pred_check
      _
    $region91: #{mfm_forward.6} parent=1 // pred_check_branch
      %228 = sbr.rel (0) target = $region93
    $region92: #{mfm_forward.6} parent=1 // pred_region
      %230 = dma.done [#allocation11], 32
    $region93: #{mfm_forward.6} parent=1 // pred_fallthru
      _
    // Predicated region
    $region94: #{mfm_forward.6} parent=1 // pred_check
      _
    $region95: #{mfm_forward.6} parent=1 // pred_check_branch
      %232 = sbr.rel (0) target = $region97
    $region96: #{mfm_forward.6} parent=1 // pred_region
      %234 = dma.done [#allocation11], 32
    $region97: #{mfm_forward.6} parent=1 // pred_fallthru
      _
    // Predicated region
    $region98: #{mfm_forward.6} parent=1 // pred_check
      _
    $region99: #{mfm_forward.6} parent=1 // pred_check_branch
      %236 = sbr.rel (0) target = $region101
    $region100: #{mfm_forward.6} parent=1 // pred_region
      %238 = dma.done [#allocation14], 8192
    $region101: #{mfm_forward.6} parent=1 // pred_fallthru
      _
    // Predicated region
    $region102: #{mfm_forward.6} parent=1 // pred_check
      _
    $region103: #{mfm_forward.6} parent=1 // pred_check_branch
      %240 = sbr.rel (0) target = $region105
    $region104: #{mfm_forward.6} parent=1 // pred_region
      %242 = dma.done [#allocation14], 32
    $region105: #{mfm_forward.6} parent=1 // pred_fallthru
      _
    // Predicated region
    $region106: #{mfm_forward.6} parent=1 // pred_check
      _
    $region107: #{mfm_forward.6} parent=1 // pred_check_branch
      %244 = sbr.rel (0) target = $region109
    $region108: #{mfm_forward.6} parent=1 // pred_region
      %246 = dma.done [#allocation17], 8192
    $region109: #{mfm_forward.6} parent=1 // pred_fallthru
      _
    // Predicated region
    $region110: #{mfm_forward.6} parent=1 // pred_check
      _
    $region111: #{mfm_forward.6} parent=1 // pred_check_branch
      %248 = sbr.rel (0) target = $region113
    $region112: #{mfm_forward.6} parent=1 // pred_region
      %250 = dma.done [#allocation17], 32
    $region113: #{mfm_forward.6} parent=1 // pred_fallthru
      _
    // Predicated region
    $region114: #{mfm_forward.6} parent=1 // pred_check
      _
    $region115: #{mfm_forward.6} parent=1 // pred_check_branch
      %252 = sbr.rel (0) target = $region117
    $region116: #{mfm_forward.6} parent=1 // pred_region
      %254 = dma.done [#allocation20], 32
    $region117: #{mfm_forward.6} parent=1 // pred_fallthru
      _
    // Predicated region
    $region118: #{mfm_forward.6} parent=1 // pred_check
      _
    $region119: #{mfm_forward.6} parent=1 // pred_check_branch
      %256 = sbr.rel (0) target = $region121
    $region120: #{mfm_forward.6} parent=1 // pred_region
      %258 = dma.done [#allocation20], 32
    $region121: #{mfm_forward.6} parent=1 // pred_fallthru
      _
    // Predicated region
    $region122: #{mfm_forward.6} parent=1 // pred_check
      _
    $region123: #{mfm_forward.6} parent=1 // pred_check_branch
      %260 = sbr.rel (0) target = $region125
    $region124: #{mfm_forward.6} parent=1 // pred_region
      %262 = dma.done [#allocation23], 8192
    $region125: #{mfm_forward.6} parent=1 // pred_fallthru
      _
    // Predicated region
    $region126: #{mfm_forward.6} parent=1 // pred_check
      _
    $region127: #{mfm_forward.6} parent=1 // pred_check_branch
      %264 = sbr.rel (0) target = $region129
    $region128: #{mfm_forward.6} parent=1 // pred_region
      %266 = dma.done [#allocation23], 32
    $region129: #{mfm_forward.6} parent=1 // pred_fallthru
      _
    %v267 = vld [vmem:[%s0] sm:$0xf]
    %v268 = vld [vmem:[%s1] sm:$0xff]
    %v269 = vld [vmem:[%s1 + $0x8] sm:$0xff]
    %v270 = vld [vmem:[%s1 + $0x10] sm:$0xff]
    %v271 = vld [vmem:[%s1 + $0x18] sm:$0xff]
    %v272 = vld [vmem:[%s1 + $0x20] sm:$0xff]
    %v273 = vld [vmem:[%s1 + $0x28] sm:$0xff]
    %v274 = vld [vmem:[%s1 + $0x30] sm:$0xff]
    %v275 = vld [vmem:[%s1 + $0x38] sm:$0xff]
    %v276 = vld [vmem:[%s1 + $0x40] sm:$0xff]
    %v277 = vld [vmem:[%s1 + $0x48] sm:$0xff]
    %v278 = vld [vmem:[%s1 + $0x50] sm:$0xff]
    %v279 = vld [vmem:[%s1 + $0x58] sm:$0xff]
    %v280 = vld [vmem:[%s1 + $0x60] sm:$0xff]
    %v281 = vld [vmem:[%s1 + $0x68] sm:$0xff]
    %v282 = vld [vmem:[%s1 + $0x70] sm:$0xff]
    %v283 = vld [vmem:[%s1 + $0x78] sm:$0xff]
    %v284 = vld [vmem:[%s1 + $0x80] sm:$0xff]
    %v285 = vld [vmem:[%s1 + $0x88] sm:$0xff]
    %v286 = vld [vmem:[%s1 + $0x90] sm:$0xff]
    %v287 = vld [vmem:[%s1 + $0x98] sm:$0xff]
    %v288 = vld [vmem:[%s1 + $0xa0] sm:$0xff]
    %v289 = vld [vmem:[%s1 + $0xa8] sm:$0xff]
    %v290 = vld [vmem:[%s1 + $0xb0] sm:$0xff]
    %v291 = vld [vmem:[%s1 + $0xb8] sm:$0xff]
    %v292 = vld [vmem:[%s1 + $0xc0] sm:$0xff]
    %v293 = vld [vmem:[%s1 + $0xc8] sm:$0xff]
    %v294 = vld [vmem:[%s1 + $0xd0] sm:$0xff]
    %v295 = vld [vmem:[%s1 + $0xd8] sm:$0xff]
    %v296 = vld [vmem:[%s1 + $0xe0] sm:$0xff]
    %v297 = vld [vmem:[%s1 + $0xe8] sm:$0xff]
    %v298 = vld [vmem:[%s1 + $0xf0] sm:$0xff]
    %v299 = vld [vmem:[%s1 + $0xf8] sm:$0xff]
    %v300 = vld [vmem:[%s1 + $0x100] sm:$0xff]
    %v301 = vld [vmem:[%s1 + $0x108] sm:$0xff]
    %v302 = vld [vmem:[%s1 + $0x110] sm:$0xff]
    %v303 = vld [vmem:[%s1 + $0x118] sm:$0xff]
    %v304 = vld [vmem:[%s1 + $0x120] sm:$0xff]
    %v305 = vld [vmem:[%s1 + $0x128] sm:$0xff]
    %v306 = vld [vmem:[%s1 + $0x130] sm:$0xff]
    %v307 = vld [vmem:[%s1 + $0x138] sm:$0xff]
    %v308 = vld [vmem:[%s1 + $0x140] sm:$0xff]
    %v309 = vld [vmem:[%s1 + $0x148] sm:$0xff]
    %v310 = vld [vmem:[%s1 + $0x150] sm:$0xff]
    %v311 = vld [vmem:[%s1 + $0x158] sm:$0xff]
    %v312 = vld [vmem:[%s1 + $0x160] sm:$0xff]
    %v313 = vld [vmem:[%s1 + $0x168] sm:$0xff]
    %v314 = vld [vmem:[%s1 + $0x170] sm:$0xff]
    %v315 = vld [vmem:[%s1 + $0x178] sm:$0xff]
    %v316 = vld [vmem:[%s1 + $0x180] sm:$0xff]
    %v317 = vld [vmem:[%s1 + $0x188] sm:$0xff]
    %v318 = vld [vmem:[%s1 + $0x190] sm:$0xff]
    %v319 = vld [vmem:[%s1 + $0x198] sm:$0xff]
    %v320 = vld [vmem:[%s1 + $0x1a0] sm:$0xff]
    %v321 = vld [vmem:[%s1 + $0x1a8] sm:$0xff]
    %v322 = vld [vmem:[%s1 + $0x1b0] sm:$0xff]
    %v323 = vld [vmem:[%s1 + $0x1b8] sm:$0xff]
    %v324 = vld [vmem:[%s1 + $0x1c0] sm:$0xff]
    %v325 = vld [vmem:[%s1 + $0x1c8] sm:$0xff]
    %v326 = vld [vmem:[%s1 + $0x1d0] sm:$0xff]
    %v327 = vld [vmem:[%s1 + $0x1d8] sm:$0xff]
    %v328 = vld [vmem:[%s1 + $0x1e0] sm:$0xff]
    %v329 = vld [vmem:[%s1 + $0x1e8] sm:$0xff]
    %v330 = vld [vmem:[%s1 + $0x1f0] sm:$0xff]
    %v331 = vld [vmem:[%s1 + $0x1f8] sm:$0xff]
    %v332 = vld [vmem:[#allocation2] sm:$0x3]
    %v334 = vperm.slane %v332, 0
    %v335 = vperm.slane %v332, 1
    %339 = vst [vmem:[#allocation1] ss:$4 sm:$0xff] %v267
    %v340 = vld.sshfl [vmem:[#allocation1] sm:$0xff pattern:$0x73625140]
    %v341 = vld.sshfl [vmem:[#allocation1 + $0x8] sm:$0xff pattern:$0x73625140]
    %344 = vmatpush.msra.mxu0 %v298
    %345 = vmatpush.msra.mxu0 %v296
    %346 = vmatpush.msra.mxu0 %v294
    %347 = vmatpush.msra.mxu0 %v292
    %348 = vmatpush.msra.mxu0 %v290
    %349 = vmatpush.msra.mxu0 %v288
    %350 = vmatpush.msra.mxu0 %v286
    %351 = vmatpush.msra.mxu0 %v284
    %352 = vmatpush.msra.mxu0 %v282
    %353 = vmatpush.msra.mxu0 %v280
    %354 = vmatpush.msra.mxu0 %v278
    %355 = vmatpush.msra.mxu0 %v276
    %356 = vmatpush.msra.mxu0 %v274
    %357 = vmatpush.msra.mxu0 %v272
    %358 = vmatpush.msra.mxu0 %v270
    %359 = vmatpush.msra.mxu0 %v268
    %360 = vmatmul.f32.gmra.mxu0 %v340
    %v361 = vpop.f32.mrf.mxu0
    %v362 = vadd.f32 %v334, %v361
    %363 = vdwg.mxu0
    %364 = vmatpush.msra.mxu0 %v330
    %365 = vmatpush.msra.mxu0 %v328
    %366 = vmatpush.msra.mxu0 %v326
    %367 = vmatpush.msra.mxu0 %v324
    %368 = vmatpush.msra.mxu0 %v322
    %369 = vmatpush.msra.mxu0 %v320
    %370 = vmatpush.msra.mxu0 %v318
    %371 = vmatpush.msra.mxu0 %v316
    %372 = vmatpush.msra.mxu0 %v314
    %373 = vmatpush.msra.mxu0 %v312
    %374 = vmatpush.msra.mxu0 %v310
    %375 = vmatpush.msra.mxu0 %v308
    %376 = vmatpush.msra.mxu0 %v306
    %377 = vmatpush.msra.mxu0 %v304
    %378 = vmatpush.msra.mxu0 %v302
    %379 = vmatpush.msra.mxu0 %v300
    %380 = vmatmul.f32.gmra.mxu0 %v341
    %v381 = vpop.f32.mrf.mxu0
    %v382 = vadd.f32 %v362, %v381
    %383 = vdwg.mxu0
    %384 = vmatpush.msra.mxu0 %v299
    %385 = vmatpush.msra.mxu0 %v297
    %386 = vmatpush.msra.mxu0 %v295
    %387 = vmatpush.msra.mxu0 %v293
    %388 = vmatpush.msra.mxu0 %v291
    %389 = vmatpush.msra.mxu0 %v289
    %390 = vmatpush.msra.mxu0 %v287
    %391 = vmatpush.msra.mxu0 %v285
    %392 = vmatpush.msra.mxu0 %v283
    %393 = vmatpush.msra.mxu0 %v281
    %394 = vmatpush.msra.mxu0 %v279
    %395 = vmatpush.msra.mxu0 %v277
    %396 = vmatpush.msra.mxu0 %v275
    %397 = vmatpush.msra.mxu0 %v273
    %398 = vmatpush.msra.mxu0 %v271
    %399 = vmatpush.msra.mxu0 %v269
    %400 = vmatmul.f32.gmra.mxu0 %v340
    %v401 = vpop.f32.mrf.mxu0
    %v402 = vadd.f32 %v335, %v401
    %403 = vdwg.mxu0
    %404 = vmatpush.msra.mxu0 %v331
    %405 = vmatpush.msra.mxu0 %v329
    %406 = vmatpush.msra.mxu0 %v327
    %407 = vmatpush.msra.mxu0 %v325
    %408 = vmatpush.msra.mxu0 %v323
    %409 = vmatpush.msra.mxu0 %v321
    %410 = vmatpush.msra.mxu0 %v319
    %411 = vmatpush.msra.mxu0 %v317
    %412 = vmatpush.msra.mxu0 %v315
    %413 = vmatpush.msra.mxu0 %v313
    %414 = vmatpush.msra.mxu0 %v311
    %415 = vmatpush.msra.mxu0 %v309
    %416 = vmatpush.msra.mxu0 %v307
    %417 = vmatpush.msra.mxu0 %v305
    %418 = vmatpush.msra.mxu0 %v303
    %419 = vmatpush.msra.mxu0 %v301
    %420 = vmatmul.f32.gmra.mxu0 %v341
    %v421 = vpop.f32.mrf.mxu0
    %v422 = vadd.f32 %v402, %v421
    %423 = vdwg.mxu0
    %v424 = vld [vmem:[#allocation4] sm:$0x3]
    %v425 = vld [vmem:[#allocation6] sm:$0x3]
    %vm426 = vcmask 1041408
    %v427 = vsel %vm426, %v382, 0.0
    %v428 = vrot.slane %v427, 4
    %v429 = vadd.f32 %v427, %v428
    %v430 = vrot.slane %v429, 2
    %v431 = vadd.f32 %v429, %v430
    %v432 = vrot.slane %v431, 1
    %v433 = vadd.f32 %v431, %v432
    %v434 = vsel %vm426, %v422, 0.0
    %v435 = vrot.slane %v434, 4
    %v436 = vadd.f32 %v434, %v435
    %v437 = vrot.slane %v436, 2
    %v438 = vadd.f32 %v436, %v437
    %v439 = vrot.slane %v438, 1
    %v440 = vadd.f32 %v438, %v439
    %v441 = vrcp.pop 2.0
    %v442 = vmul.f32 2.0, %v441
    %v443 = vsub.f32 1.0, %v442
    %v444 = vmul.f32 %v441, %v443
    %v445 = vadd.f32 %v441, %v444
    %vm446 = vweird.f32 %v441
    %v447 = vsel %vm446, %v441, %v445
    %v448 = vmul.f32 %v433, %v447
    %v449 = vmul.f32 %v440, %v447
    %v450 = vsub.f32 %v382, %v448
    %v451 = vsub.f32 %v422, %v449
    %v452 = vmul.f32 %v450, %v450
    %v453 = vmul.f32 %v451, %v451
    %v454 = vsel %vm426, %v452, 0.0
    %v455 = vrot.slane %v454, 4
    %v456 = vadd.f32 %v454, %v455
    %v457 = vrot.slane %v456, 2
    %v458 = vadd.f32 %v456, %v457
    %v459 = vrot.slane %v458, 1
    %v460 = vadd.f32 %v458, %v459
    %v461 = vsel %vm426, %v453, 0.0
    %v462 = vrot.slane %v461, 4
    %v463 = vadd.f32 %v461, %v462
    %v464 = vrot.slane %v463, 2
    %v465 = vadd.f32 %v463, %v464
    %v466 = vrot.slane %v465, 1
    %v467 = vadd.f32 %v465, %v466
    %v468 = vmul.f32 %v460, %v447
    %v469 = vmul.f32 %v467, %v447
    %v470 = vadd.f32 %v468, 1e-05
    %v471 = vadd.f32 %v469, 1e-05
    %v472 = vrsqrt.pop %v470
    %v473 = vmul.f32 %v472, %v470
    %v474 = vmul.f32 %v473, %v472
    %v475 = vmul.f32 0.5, %v474
    %v476 = vsub.f32 1.5, %v475
    %v477 = vmul.f32 %v472, %v476
    %vm478 = vweird.f32 %v470
    %vm479 = vweird.f32 %v472
    %vm480 = vmor %vm478, %vm479
    %v481 = vsel %vm480, %v472, %v477
    %v482 = vrsqrt.pop %v471
    %v483 = vmul.f32 %v482, %v471
    %v484 = vmul.f32 %v483, %v482
    %v485 = vmul.f32 0.5, %v484
    %v486 = vsub.f32 1.5, %v485
    %v487 = vmul.f32 %v482, %v486
    %vm488 = vweird.f32 %v471
    %vm489 = vweird.f32 %v482
    %vm490 = vmor %vm488, %vm489
    %v491 = vsel %vm490, %v482, %v487
    %v492 = vmul.f32 %v450, %v481
    %v493 = vmul.f32 %v451, %v491
    %v495 = vperm.slane %v424, 0
    %v496 = vperm.slane %v424, 1
    %v499 = vmul.f32 %v492, %v495
    %v500 = vmul.f32 %v493, %v496
    %v502 = vperm.slane %v425, 0
    %v503 = vperm.slane %v425, 1
    %v506 = vadd.f32 %v499, %v502
    %v507 = vadd.f32 %v500, %v503
    %v508 = vmax.f32 %v506, 0.0
    %v509 = vmax.f32 %v507, 0.0
    %v510 = vld [vmem:[#allocation7] sm:$0xff]
    %v511 = vld [vmem:[#allocation7 + $0x8] sm:$0xff]
    %v512 = vld [vmem:[#allocation7 + $0x10] sm:$0xff]
    %v513 = vld [vmem:[#allocation7 + $0x18] sm:$0xff]
    %v514 = vld [vmem:[#allocation7 + $0x20] sm:$0xff]
    %v515 = vld [vmem:[#allocation7 + $0x28] sm:$0xff]
    %v516 = vld [vmem:[#allocation7 + $0x30] sm:$0xff]
    %v517 = vld [vmem:[#allocation7 + $0x38] sm:$0xff]
    %v518 = vld [vmem:[#allocation7 + $0x40] sm:$0xff]
    %v519 = vld [vmem:[#allocation7 + $0x48] sm:$0xff]
    %v520 = vld [vmem:[#allocation7 + $0x50] sm:$0xff]
    %v521 = vld [vmem:[#allocation7 + $0x58] sm:$0xff]
    %v522 = vld [vmem:[#allocation7 + $0x60] sm:$0xff]
    %v523 = vld [vmem:[#allocation7 + $0x68] sm:$0xff]
    %v524 = vld [vmem:[#allocation7 + $0x70] sm:$0xff]
    %v525 = vld [vmem:[#allocation7 + $0x78] sm:$0xff]
    %v526 = vld [vmem:[#allocation7 + $0x80] sm:$0xff]
    %v527 = vld [vmem:[#allocation7 + $0x88] sm:$0xff]
    %v528 = vld [vmem:[#allocation7 + $0x90] sm:$0xff]
    %v529 = vld [vmem:[#allocation7 + $0x98] sm:$0xff]
    %v530 = vld [vmem:[#allocation7 + $0xa0] sm:$0xff]
    %v531 = vld [vmem:[#allocation7 + $0xa8] sm:$0xff]
    %v532 = vld [vmem:[#allocation7 + $0xb0] sm:$0xff]
    %v533 = vld [vmem:[#allocation7 + $0xb8] sm:$0xff]
    %v534 = vld [vmem:[#allocation7 + $0xc0] sm:$0xff]
    %v535 = vld [vmem:[#allocation7 + $0xc8] sm:$0xff]
    %v536 = vld [vmem:[#allocation7 + $0xd0] sm:$0xff]
    %v537 = vld [vmem:[#allocation7 + $0xd8] sm:$0xff]
    %v538 = vld [vmem:[#allocation7 + $0xe0] sm:$0xff]
    %v539 = vld [vmem:[#allocation7 + $0xe8] sm:$0xff]
    %v540 = vld [vmem:[#allocation7 + $0xf0] sm:$0xff]
    %v541 = vld [vmem:[#allocation7 + $0xf8] sm:$0xff]
    %v542 = vld [vmem:[#allocation7 + $0x100] sm:$0xff]
    %v543 = vld [vmem:[#allocation7 + $0x108] sm:$0xff]
    %v544 = vld [vmem:[#allocation7 + $0x110] sm:$0xff]
    %v545 = vld [vmem:[#allocation7 + $0x118] sm:$0xff]
    %v546 = vld [vmem:[#allocation7 + $0x120] sm:$0xff]
    %v547 = vld [vmem:[#allocation7 + $0x128] sm:$0xff]
    %v548 = vld [vmem:[#allocation7 + $0x130] sm:$0xff]
    %v549 = vld [vmem:[#allocation7 + $0x138] sm:$0xff]
    %v550 = vld [vmem:[#allocation7 + $0x140] sm:$0xff]
    %v551 = vld [vmem:[#allocation7 + $0x148] sm:$0xff]
    %v552 = vld [vmem:[#allocation7 + $0x150] sm:$0xff]
    %v553 = vld [vmem:[#allocation7 + $0x158] sm:$0xff]
    %v554 = vld [vmem:[#allocation7 + $0x160] sm:$0xff]
    %v555 = vld [vmem:[#allocation7 + $0x168] sm:$0xff]
    %v556 = vld [vmem:[#allocation7 + $0x170] sm:$0xff]
    %v557 = vld [vmem:[#allocation7 + $0x178] sm:$0xff]
    %v558 = vld [vmem:[#allocation7 + $0x180] sm:$0xff]
    %v559 = vld [vmem:[#allocation7 + $0x188] sm:$0xff]
    %v560 = vld [vmem:[#allocation7 + $0x190] sm:$0xff]
    %v561 = vld [vmem:[#allocation7 + $0x198] sm:$0xff]
    %v562 = vld [vmem:[#allocation7 + $0x1a0] sm:$0xff]
    %v563 = vld [vmem:[#allocation7 + $0x1a8] sm:$0xff]
    %v564 = vld [vmem:[#allocation7 + $0x1b0] sm:$0xff]
    %v565 = vld [vmem:[#allocation7 + $0x1b8] sm:$0xff]
    %v566 = vld [vmem:[#allocation7 + $0x1c0] sm:$0xff]
    %v567 = vld [vmem:[#allocation7 + $0x1c8] sm:$0xff]
    %v568 = vld [vmem:[#allocation7 + $0x1d0] sm:$0xff]
    %v569 = vld [vmem:[#allocation7 + $0x1d8] sm:$0xff]
    %v570 = vld [vmem:[#allocation7 + $0x1e0] sm:$0xff]
    %v571 = vld [vmem:[#allocation7 + $0x1e8] sm:$0xff]
    %v572 = vld [vmem:[#allocation7 + $0x1f0] sm:$0xff]
    %v573 = vld [vmem:[#allocation7 + $0x1f8] sm:$0xff]
    %v574 = vld [vmem:[#allocation9] sm:$0x3]
    %v576 = vperm.slane %v574, 0
    %v577 = vperm.slane %v574, 1
    %580 = vmatpush.msra.mxu0 %v540
    %581 = vmatpush.msra.mxu0 %v538
    %582 = vmatpush.msra.mxu0 %v536
    %583 = vmatpush.msra.mxu0 %v534
    %584 = vmatpush.msra.mxu0 %v532
    %585 = vmatpush.msra.mxu0 %v530
    %586 = vmatpush.msra.mxu0 %v528
    %587 = vmatpush.msra.mxu0 %v526
    %588 = vmatpush.msra.mxu0 %v524
    %589 = vmatpush.msra.mxu0 %v522
    %590 = vmatpush.msra.mxu0 %v520
    %591 = vmatpush.msra.mxu0 %v518
    %592 = vmatpush.msra.mxu0 %v516
    %593 = vmatpush.msra.mxu0 %v514
    %594 = vmatpush.msra.mxu0 %v512
    %595 = vmatpush.msra.mxu0 %v510
    %596 = vmatmul.f32.gmra.mxu0 %v508
    %v597 = vpop.f32.mrf.mxu0
    %v598 = vadd.f32 %v576, %v597
    %599 = vdwg.mxu0
    %600 = vmatpush.msra.mxu0 %v572
    %601 = vmatpush.msra.mxu0 %v570
    %602 = vmatpush.msra.mxu0 %v568
    %603 = vmatpush.msra.mxu0 %v566
    %604 = vmatpush.msra.mxu0 %v564
    %605 = vmatpush.msra.mxu0 %v562
    %606 = vmatpush.msra.mxu0 %v560
    %607 = vmatpush.msra.mxu0 %v558
    %608 = vmatpush.msra.mxu0 %v556
    %609 = vmatpush.msra.mxu0 %v554
    %610 = vmatpush.msra.mxu0 %v552
    %611 = vmatpush.msra.mxu0 %v550
    %612 = vmatpush.msra.mxu0 %v548
    %613 = vmatpush.msra.mxu0 %v546
    %614 = vmatpush.msra.mxu0 %v544
    %615 = vmatpush.msra.mxu0 %v542
    %616 = vmatmul.f32.gmra.mxu0 %v509
    %v617 = vpop.f32.mrf.mxu0
    %v618 = vadd.f32 %v598, %v617
    %619 = vdwg.mxu0
    %620 = vmatpush.msra.mxu0 %v541
    %621 = vmatpush.msra.mxu0 %v539
    %622 = vmatpush.msra.mxu0 %v537
    %623 = vmatpush.msra.mxu0 %v535
    %624 = vmatpush.msra.mxu0 %v533
    %625 = vmatpush.msra.mxu0 %v531
    %626 = vmatpush.msra.mxu0 %v529
    %627 = vmatpush.msra.mxu0 %v527
    %628 = vmatpush.msra.mxu0 %v525
    %629 = vmatpush.msra.mxu0 %v523
    %630 = vmatpush.msra.mxu0 %v521
    %631 = vmatpush.msra.mxu0 %v519
    %632 = vmatpush.msra.mxu0 %v517
    %633 = vmatpush.msra.mxu0 %v515
    %634 = vmatpush.msra.mxu0 %v513
    %635 = vmatpush.msra.mxu0 %v511
    %636 = vmatmul.f32.gmra.mxu0 %v508
    %v637 = vpop.f32.mrf.mxu0
    %v638 = vadd.f32 %v577, %v637
    %639 = vdwg.mxu0
    %640 = vmatpush.msra.mxu0 %v573
    %641 = vmatpush.msra.mxu0 %v571
    %642 = vmatpush.msra.mxu0 %v569
    %643 = vmatpush.msra.mxu0 %v567
    %644 = vmatpush.msra.mxu0 %v565
    %645 = vmatpush.msra.mxu0 %v563
    %646 = vmatpush.msra.mxu0 %v561
    %647 = vmatpush.msra.mxu0 %v559
    %648 = vmatpush.msra.mxu0 %v557
    %649 = vmatpush.msra.mxu0 %v555
    %650 = vmatpush.msra.mxu0 %v553
    %651 = vmatpush.msra.mxu0 %v551
    %652 = vmatpush.msra.mxu0 %v549
    %653 = vmatpush.msra.mxu0 %v547
    %654 = vmatpush.msra.mxu0 %v545
    %655 = vmatpush.msra.mxu0 %v543
    %656 = vmatmul.f32.gmra.mxu0 %v509
    %v657 = vpop.f32.mrf.mxu0
    %v658 = vadd.f32 %v638, %v657
    %659 = vdwg.mxu0
    %v660 = vld [vmem:[#allocation10] sm:$0x3]
    %v661 = vld [vmem:[#allocation12] sm:$0x3]
    %v662 = vsel %vm426, %v618, 0.0
    %v663 = vrot.slane %v662, 4
    %v664 = vadd.f32 %v662, %v663
    %v665 = vrot.slane %v664, 2
    %v666 = vadd.f32 %v664, %v665
    %v667 = vrot.slane %v666, 1
    %v668 = vadd.f32 %v666, %v667
    %v669 = vsel %vm426, %v658, 0.0
    %v670 = vrot.slane %v669, 4
    %v671 = vadd.f32 %v669, %v670
    %v672 = vrot.slane %v671, 2
    %v673 = vadd.f32 %v671, %v672
    %v674 = vrot.slane %v673, 1
    %v675 = vadd.f32 %v673, %v674
    %v676 = vmul.f32 %v668, %v447
    %v677 = vmul.f32 %v675, %v447
    %v678 = vsub.f32 %v618, %v676
    %v679 = vsub.f32 %v658, %v677
    %v680 = vmul.f32 %v678, %v678
    %v681 = vmul.f32 %v679, %v679
    %v682 = vsel %vm426, %v680, 0.0
    %v683 = vrot.slane %v682, 4
    %v684 = vadd.f32 %v682, %v683
    %v685 = vrot.slane %v684, 2
    %v686 = vadd.f32 %v684, %v685
    %v687 = vrot.slane %v686, 1
    %v688 = vadd.f32 %v686, %v687
    %v689 = vsel %vm426, %v681, 0.0
    %v690 = vrot.slane %v689, 4
    %v691 = vadd.f32 %v689, %v690
    %v692 = vrot.slane %v691, 2
    %v693 = vadd.f32 %v691, %v692
    %v694 = vrot.slane %v693, 1
    %v695 = vadd.f32 %v693, %v694
    %v696 = vmul.f32 %v688, %v447
    %v697 = vmul.f32 %v695, %v447
    %v698 = vadd.f32 %v696, 1e-05
    %v699 = vadd.f32 %v697, 1e-05
    %v700 = vrsqrt.pop %v698
    %v701 = vmul.f32 %v700, %v698
    %v702 = vmul.f32 %v701, %v700
    %v703 = vmul.f32 0.5, %v702
    %v704 = vsub.f32 1.5, %v703
    %v705 = vmul.f32 %v700, %v704
    %vm706 = vweird.f32 %v698
    %vm707 = vweird.f32 %v700
    %vm708 = vmor %vm706, %vm707
    %v709 = vsel %vm708, %v700, %v705
    %v710 = vrsqrt.pop %v699
    %v711 = vmul.f32 %v710, %v699
    %v712 = vmul.f32 %v711, %v710
    %v713 = vmul.f32 0.5, %v712
    %v714 = vsub.f32 1.5, %v713
    %v715 = vmul.f32 %v710, %v714
    %vm716 = vweird.f32 %v699
    %vm717 = vweird.f32 %v710
    %vm718 = vmor %vm716, %vm717
    %v719 = vsel %vm718, %v710, %v715
    %v720 = vmul.f32 %v678, %v709
    %v721 = vmul.f32 %v679, %v719
    %v723 = vperm.slane %v660, 0
    %v724 = vperm.slane %v660, 1
    %v727 = vmul.f32 %v720, %v723
    %v728 = vmul.f32 %v721, %v724
    %v730 = vperm.slane %v661, 0
    %v731 = vperm.slane %v661, 1
    %v734 = vadd.f32 %v727, %v730
    %v735 = vadd.f32 %v728, %v731
    %v736 = vmax.f32 %v734, 0.0
    %v737 = vmax.f32 %v735, 0.0
    %v738 = vld [vmem:[#allocation13] sm:$0xff]
    %v739 = vld [vmem:[#allocation13 + $0x8] sm:$0xff]
    %v740 = vld [vmem:[#allocation13 + $0x10] sm:$0xff]
    %v741 = vld [vmem:[#allocation13 + $0x18] sm:$0xff]
    %v742 = vld [vmem:[#allocation13 + $0x20] sm:$0xff]
    %v743 = vld [vmem:[#allocation13 + $0x28] sm:$0xff]
    %v744 = vld [vmem:[#allocation13 + $0x30] sm:$0xff]
    %v745 = vld [vmem:[#allocation13 + $0x38] sm:$0xff]
    %v746 = vld [vmem:[#allocation13 + $0x40] sm:$0xff]
    %v747 = vld [vmem:[#allocation13 + $0x48] sm:$0xff]
    %v748 = vld [vmem:[#allocation13 + $0x50] sm:$0xff]
    %v749 = vld [vmem:[#allocation13 + $0x58] sm:$0xff]
    %v750 = vld [vmem:[#allocation13 + $0x60] sm:$0xff]
    %v751 = vld [vmem:[#allocation13 + $0x68] sm:$0xff]
    %v752 = vld [vmem:[#allocation13 + $0x70] sm:$0xff]
    %v753 = vld [vmem:[#allocation13 + $0x78] sm:$0xff]
    %v754 = vld [vmem:[#allocation13 + $0x80] sm:$0xff]
    %v755 = vld [vmem:[#allocation13 + $0x88] sm:$0xff]
    %v756 = vld [vmem:[#allocation13 + $0x90] sm:$0xff]
    %v757 = vld [vmem:[#allocation13 + $0x98] sm:$0xff]
    %v758 = vld [vmem:[#allocation13 + $0xa0] sm:$0xff]
    %v759 = vld [vmem:[#allocation13 + $0xa8] sm:$0xff]
    %v760 = vld [vmem:[#allocation13 + $0xb0] sm:$0xff]
    %v761 = vld [vmem:[#allocation13 + $0xb8] sm:$0xff]
    %v762 = vld [vmem:[#allocation13 + $0xc0] sm:$0xff]
    %v763 = vld [vmem:[#allocation13 + $0xc8] sm:$0xff]
    %v764 = vld [vmem:[#allocation13 + $0xd0] sm:$0xff]
    %v765 = vld [vmem:[#allocation13 + $0xd8] sm:$0xff]
    %v766 = vld [vmem:[#allocation13 + $0xe0] sm:$0xff]
    %v767 = vld [vmem:[#allocation13 + $0xe8] sm:$0xff]
    %v768 = vld [vmem:[#allocation13 + $0xf0] sm:$0xff]
    %v769 = vld [vmem:[#allocation13 + $0xf8] sm:$0xff]
    %v770 = vld [vmem:[#allocation13 + $0x100] sm:$0xff]
    %v771 = vld [vmem:[#allocation13 + $0x108] sm:$0xff]
    %v772 = vld [vmem:[#allocation13 + $0x110] sm:$0xff]
    %v773 = vld [vmem:[#allocation13 + $0x118] sm:$0xff]
    %v774 = vld [vmem:[#allocation13 + $0x120] sm:$0xff]
    %v775 = vld [vmem:[#allocation13 + $0x128] sm:$0xff]
    %v776 = vld [vmem:[#allocation13 + $0x130] sm:$0xff]
    %v777 = vld [vmem:[#allocation13 + $0x138] sm:$0xff]
    %v778 = vld [vmem:[#allocation13 + $0x140] sm:$0xff]
    %v779 = vld [vmem:[#allocation13 + $0x148] sm:$0xff]
    %v780 = vld [vmem:[#allocation13 + $0x150] sm:$0xff]
    %v781 = vld [vmem:[#allocation13 + $0x158] sm:$0xff]
    %v782 = vld [vmem:[#allocation13 + $0x160] sm:$0xff]
    %v783 = vld [vmem:[#allocation13 + $0x168] sm:$0xff]
    %v784 = vld [vmem:[#allocation13 + $0x170] sm:$0xff]
    %v785 = vld [vmem:[#allocation13 + $0x178] sm:$0xff]
    %v786 = vld [vmem:[#allocation13 + $0x180] sm:$0xff]
    %v787 = vld [vmem:[#allocation13 + $0x188] sm:$0xff]
    %v788 = vld [vmem:[#allocation13 + $0x190] sm:$0xff]
    %v789 = vld [vmem:[#allocation13 + $0x198] sm:$0xff]
    %v790 = vld [vmem:[#allocation13 + $0x1a0] sm:$0xff]
    %v791 = vld [vmem:[#allocation13 + $0x1a8] sm:$0xff]
    %v792 = vld [vmem:[#allocation13 + $0x1b0] sm:$0xff]
    %v793 = vld [vmem:[#allocation13 + $0x1b8] sm:$0xff]
    %v794 = vld [vmem:[#allocation13 + $0x1c0] sm:$0xff]
    %v795 = vld [vmem:[#allocation13 + $0x1c8] sm:$0xff]
    %v796 = vld [vmem:[#allocation13 + $0x1d0] sm:$0xff]
    %v797 = vld [vmem:[#allocation13 + $0x1d8] sm:$0xff]
    %v798 = vld [vmem:[#allocation13 + $0x1e0] sm:$0xff]
    %v799 = vld [vmem:[#allocation13 + $0x1e8] sm:$0xff]
    %v800 = vld [vmem:[#allocation13 + $0x1f0] sm:$0xff]
    %v801 = vld [vmem:[#allocation13 + $0x1f8] sm:$0xff]
    %v802 = vld [vmem:[#allocation15] sm:$0x3]
    %v804 = vperm.slane %v802, 0
    %v805 = vperm.slane %v802, 1
    %808 = vmatpush.msra.mxu0 %v768
    %809 = vmatpush.msra.mxu0 %v766
    %810 = vmatpush.msra.mxu0 %v764
    %811 = vmatpush.msra.mxu0 %v762
    %812 = vmatpush.msra.mxu0 %v760
    %813 = vmatpush.msra.mxu0 %v758
    %814 = vmatpush.msra.mxu0 %v756
    %815 = vmatpush.msra.mxu0 %v754
    %816 = vmatpush.msra.mxu0 %v752
    %817 = vmatpush.msra.mxu0 %v750
    %818 = vmatpush.msra.mxu0 %v748
    %819 = vmatpush.msra.mxu0 %v746
    %820 = vmatpush.msra.mxu0 %v744
    %821 = vmatpush.msra.mxu0 %v742
    %822 = vmatpush.msra.mxu0 %v740
    %823 = vmatpush.msra.mxu0 %v738
    %824 = vmatmul.f32.gmra.mxu0 %v736
    %v825 = vpop.f32.mrf.mxu0
    %v826 = vadd.f32 %v804, %v825
    %827 = vdwg.mxu0
    %828 = vmatpush.msra.mxu0 %v800
    %829 = vmatpush.msra.mxu0 %v798
    %830 = vmatpush.msra.mxu0 %v796
    %831 = vmatpush.msra.mxu0 %v794
    %832 = vmatpush.msra.mxu0 %v792
    %833 = vmatpush.msra.mxu0 %v790
    %834 = vmatpush.msra.mxu0 %v788
    %835 = vmatpush.msra.mxu0 %v786
    %836 = vmatpush.msra.mxu0 %v784
    %837 = vmatpush.msra.mxu0 %v782
    %838 = vmatpush.msra.mxu0 %v780
    %839 = vmatpush.msra.mxu0 %v778
    %840 = vmatpush.msra.mxu0 %v776
    %841 = vmatpush.msra.mxu0 %v774
    %842 = vmatpush.msra.mxu0 %v772
    %843 = vmatpush.msra.mxu0 %v770
    %844 = vmatmul.f32.gmra.mxu0 %v737
    %v845 = vpop.f32.mrf.mxu0
    %v846 = vadd.f32 %v826, %v845
    %847 = vdwg.mxu0
    %848 = vmatpush.msra.mxu0 %v769
    %849 = vmatpush.msra.mxu0 %v767
    %850 = vmatpush.msra.mxu0 %v765
    %851 = vmatpush.msra.mxu0 %v763
    %852 = vmatpush.msra.mxu0 %v761
    %853 = vmatpush.msra.mxu0 %v759
    %854 = vmatpush.msra.mxu0 %v757
    %855 = vmatpush.msra.mxu0 %v755
    %856 = vmatpush.msra.mxu0 %v753
    %857 = vmatpush.msra.mxu0 %v751
    %858 = vmatpush.msra.mxu0 %v749
    %859 = vmatpush.msra.mxu0 %v747
    %860 = vmatpush.msra.mxu0 %v745
    %861 = vmatpush.msra.mxu0 %v743
    %862 = vmatpush.msra.mxu0 %v741
    %863 = vmatpush.msra.mxu0 %v739
    %864 = vmatmul.f32.gmra.mxu0 %v736
    %v865 = vpop.f32.mrf.mxu0
    %v866 = vadd.f32 %v805, %v865
    %867 = vdwg.mxu0
    %868 = vmatpush.msra.mxu0 %v801
    %869 = vmatpush.msra.mxu0 %v799
    %870 = vmatpush.msra.mxu0 %v797
    %871 = vmatpush.msra.mxu0 %v795
    %872 = vmatpush.msra.mxu0 %v793
    %873 = vmatpush.msra.mxu0 %v791
    %874 = vmatpush.msra.mxu0 %v789
    %875 = vmatpush.msra.mxu0 %v787
    %876 = vmatpush.msra.mxu0 %v785
    %877 = vmatpush.msra.mxu0 %v783
    %878 = vmatpush.msra.mxu0 %v781
    %879 = vmatpush.msra.mxu0 %v779
    %880 = vmatpush.msra.mxu0 %v777
    %881 = vmatpush.msra.mxu0 %v775
    %882 = vmatpush.msra.mxu0 %v773
    %883 = vmatpush.msra.mxu0 %v771
    %884 = vmatmul.f32.gmra.mxu0 %v737
    %v885 = vpop.f32.mrf.mxu0
    %v886 = vadd.f32 %v866, %v885
    %887 = vdwg.mxu0
    %v888 = vld [vmem:[#allocation16] sm:$0xff]
    %v889 = vld [vmem:[#allocation16 + $0x8] sm:$0xff]
    %v890 = vld [vmem:[#allocation16 + $0x10] sm:$0xff]
    %v891 = vld [vmem:[#allocation16 + $0x18] sm:$0xff]
    %v892 = vld [vmem:[#allocation16 + $0x20] sm:$0xff]
    %v893 = vld [vmem:[#allocation16 + $0x28] sm:$0xff]
    %v894 = vld [vmem:[#allocation16 + $0x30] sm:$0xff]
    %v895 = vld [vmem:[#allocation16 + $0x38] sm:$0xff]
    %v896 = vld [vmem:[#allocation16 + $0x40] sm:$0xff]
    %v897 = vld [vmem:[#allocation16 + $0x48] sm:$0xff]
    %v898 = vld [vmem:[#allocation16 + $0x50] sm:$0xff]
    %v899 = vld [vmem:[#allocation16 + $0x58] sm:$0xff]
    %v900 = vld [vmem:[#allocation16 + $0x60] sm:$0xff]
    %v901 = vld [vmem:[#allocation16 + $0x68] sm:$0xff]
    %v902 = vld [vmem:[#allocation16 + $0x70] sm:$0xff]
    %v903 = vld [vmem:[#allocation16 + $0x78] sm:$0xff]
    %v904 = vld [vmem:[#allocation16 + $0x80] sm:$0xff]
    %v905 = vld [vmem:[#allocation16 + $0x88] sm:$0xff]
    %v906 = vld [vmem:[#allocation16 + $0x90] sm:$0xff]
    %v907 = vld [vmem:[#allocation16 + $0x98] sm:$0xff]
    %v908 = vld [vmem:[#allocation16 + $0xa0] sm:$0xff]
    %v909 = vld [vmem:[#allocation16 + $0xa8] sm:$0xff]
    %v910 = vld [vmem:[#allocation16 + $0xb0] sm:$0xff]
    %v911 = vld [vmem:[#allocation16 + $0xb8] sm:$0xff]
    %v912 = vld [vmem:[#allocation16 + $0xc0] sm:$0xff]
    %v913 = vld [vmem:[#allocation16 + $0xc8] sm:$0xff]
    %v914 = vld [vmem:[#allocation16 + $0xd0] sm:$0xff]
    %v915 = vld [vmem:[#allocation16 + $0xd8] sm:$0xff]
    %v916 = vld [vmem:[#allocation16 + $0xe0] sm:$0xff]
    %v917 = vld [vmem:[#allocation16 + $0xe8] sm:$0xff]
    %v918 = vld [vmem:[#allocation16 + $0xf0] sm:$0xff]
    %v919 = vld [vmem:[#allocation16 + $0xf8] sm:$0xff]
    %v920 = vld [vmem:[#allocation16 + $0x100] sm:$0xff]
    %v921 = vld [vmem:[#allocation16 + $0x108] sm:$0xff]
    %v922 = vld [vmem:[#allocation16 + $0x110] sm:$0xff]
    %v923 = vld [vmem:[#allocation16 + $0x118] sm:$0xff]
    %v924 = vld [vmem:[#allocation16 + $0x120] sm:$0xff]
    %v925 = vld [vmem:[#allocation16 + $0x128] sm:$0xff]
    %v926 = vld [vmem:[#allocation16 + $0x130] sm:$0xff]
    %v927 = vld [vmem:[#allocation16 + $0x138] sm:$0xff]
    %v928 = vld [vmem:[#allocation16 + $0x140] sm:$0xff]
    %v929 = vld [vmem:[#allocation16 + $0x148] sm:$0xff]
    %v930 = vld [vmem:[#allocation16 + $0x150] sm:$0xff]
    %v931 = vld [vmem:[#allocation16 + $0x158] sm:$0xff]
    %v932 = vld [vmem:[#allocation16 + $0x160] sm:$0xff]
    %v933 = vld [vmem:[#allocation16 + $0x168] sm:$0xff]
    %v934 = vld [vmem:[#allocation16 + $0x170] sm:$0xff]
    %v935 = vld [vmem:[#allocation16 + $0x178] sm:$0xff]
    %v936 = vld [vmem:[#allocation16 + $0x180] sm:$0xff]
    %v937 = vld [vmem:[#allocation16 + $0x188] sm:$0xff]
    %v938 = vld [vmem:[#allocation16 + $0x190] sm:$0xff]
    %v939 = vld [vmem:[#allocation16 + $0x198] sm:$0xff]
    %v940 = vld [vmem:[#allocation16 + $0x1a0] sm:$0xff]
    %v941 = vld [vmem:[#allocation16 + $0x1a8] sm:$0xff]
    %v942 = vld [vmem:[#allocation16 + $0x1b0] sm:$0xff]
    %v943 = vld [vmem:[#allocation16 + $0x1b8] sm:$0xff]
    %v944 = vld [vmem:[#allocation16 + $0x1c0] sm:$0xff]
    %v945 = vld [vmem:[#allocation16 + $0x1c8] sm:$0xff]
    %v946 = vld [vmem:[#allocation16 + $0x1d0] sm:$0xff]
    %v947 = vld [vmem:[#allocation16 + $0x1d8] sm:$0xff]
    %v948 = vld [vmem:[#allocation16 + $0x1e0] sm:$0xff]
    %v949 = vld [vmem:[#allocation16 + $0x1e8] sm:$0xff]
    %v950 = vld [vmem:[#allocation16 + $0x1f0] sm:$0xff]
    %v951 = vld [vmem:[#allocation16 + $0x1f8] sm:$0xff]
    %v952 = vld [vmem:[#allocation18] sm:$0x3]
    %v954 = vperm.slane %v952, 0
    %v955 = vperm.slane %v952, 1
    %958 = vmatpush.msra.mxu0 %v918
    %959 = vmatpush.msra.mxu0 %v916
    %960 = vmatpush.msra.mxu0 %v914
    %961 = vmatpush.msra.mxu0 %v912
    %962 = vmatpush.msra.mxu0 %v910
    %963 = vmatpush.msra.mxu0 %v908
    %964 = vmatpush.msra.mxu0 %v906
    %965 = vmatpush.msra.mxu0 %v904
    %966 = vmatpush.msra.mxu0 %v902
    %967 = vmatpush.msra.mxu0 %v900
    %968 = vmatpush.msra.mxu0 %v898
    %969 = vmatpush.msra.mxu0 %v896
    %970 = vmatpush.msra.mxu0 %v894
    %971 = vmatpush.msra.mxu0 %v892
    %972 = vmatpush.msra.mxu0 %v890
    %973 = vmatpush.msra.mxu0 %v888
    %974 = vmatmul.f32.gmra.mxu0 %v846
    %v975 = vpop.f32.mrf.mxu0
    %v976 = vadd.f32 %v954, %v975
    %977 = vdwg.mxu0
    %978 = vmatpush.msra.mxu0 %v950
    %979 = vmatpush.msra.mxu0 %v948
    %980 = vmatpush.msra.mxu0 %v946
    %981 = vmatpush.msra.mxu0 %v944
    %982 = vmatpush.msra.mxu0 %v942
    %983 = vmatpush.msra.mxu0 %v940
    %984 = vmatpush.msra.mxu0 %v938
    %985 = vmatpush.msra.mxu0 %v936
    %986 = vmatpush.msra.mxu0 %v934
    %987 = vmatpush.msra.mxu0 %v932
    %988 = vmatpush.msra.mxu0 %v930
    %989 = vmatpush.msra.mxu0 %v928
    %990 = vmatpush.msra.mxu0 %v926
    %991 = vmatpush.msra.mxu0 %v924
    %992 = vmatpush.msra.mxu0 %v922
    %993 = vmatpush.msra.mxu0 %v920
    %994 = vmatmul.f32.gmra.mxu0 %v886
    %v995 = vpop.f32.mrf.mxu0
    %v996 = vadd.f32 %v976, %v995
    %997 = vdwg.mxu0
    %998 = vmatpush.msra.mxu0 %v919
    %999 = vmatpush.msra.mxu0 %v917
    %1000 = vmatpush.msra.mxu0 %v915
    %1001 = vmatpush.msra.mxu0 %v913
    %1002 = vmatpush.msra.mxu0 %v911
    %1003 = vmatpush.msra.mxu0 %v909
    %1004 = vmatpush.msra.mxu0 %v907
    %1005 = vmatpush.msra.mxu0 %v905
    %1006 = vmatpush.msra.mxu0 %v903
    %1007 = vmatpush.msra.mxu0 %v901
    %1008 = vmatpush.msra.mxu0 %v899
    %1009 = vmatpush.msra.mxu0 %v897
    %1010 = vmatpush.msra.mxu0 %v895
    %1011 = vmatpush.msra.mxu0 %v893
    %1012 = vmatpush.msra.mxu0 %v891
    %1013 = vmatpush.msra.mxu0 %v889
    %1014 = vmatmul.f32.gmra.mxu0 %v846
    %v1015 = vpop.f32.mrf.mxu0
    %v1016 = vadd.f32 %v955, %v1015
    %1017 = vdwg.mxu0
    %1018 = vmatpush.msra.mxu0 %v951
    %1019 = vmatpush.msra.mxu0 %v949
    %1020 = vmatpush.msra.mxu0 %v947
    %1021 = vmatpush.msra.mxu0 %v945
    %1022 = vmatpush.msra.mxu0 %v943
    %1023 = vmatpush.msra.mxu0 %v941
    %1024 = vmatpush.msra.mxu0 %v939
    %1025 = vmatpush.msra.mxu0 %v937
    %1026 = vmatpush.msra.mxu0 %v935
    %1027 = vmatpush.msra.mxu0 %v933
    %1028 = vmatpush.msra.mxu0 %v931
    %1029 = vmatpush.msra.mxu0 %v929
    %1030 = vmatpush.msra.mxu0 %v927
    %1031 = vmatpush.msra.mxu0 %v925
    %1032 = vmatpush.msra.mxu0 %v923
    %1033 = vmatpush.msra.mxu0 %v921
    %1034 = vmatmul.f32.gmra.mxu0 %v886
    %v1035 = vpop.f32.mrf.mxu0
    %v1036 = vadd.f32 %v1016, %v1035
    %1037 = vdwg.mxu0
    %v1038 = vld [vmem:[#allocation19] sm:$0x3]
    %v1039 = vld [vmem:[#allocation21] sm:$0x3]
    %v1040 = vsel %vm426, %v996, 0.0
    %v1041 = vrot.slane %v1040, 4
    %v1042 = vadd.f32 %v1040, %v1041
    %v1043 = vrot.slane %v1042, 2
    %v1044 = vadd.f32 %v1042, %v1043
    %v1045 = vrot.slane %v1044, 1
    %v1046 = vadd.f32 %v1044, %v1045
    %v1047 = vsel %vm426, %v1036, 0.0
    %v1048 = vrot.slane %v1047, 4
    %v1049 = vadd.f32 %v1047, %v1048
    %v1050 = vrot.slane %v1049, 2
    %v1051 = vadd.f32 %v1049, %v1050
    %v1052 = vrot.slane %v1051, 1
    %v1053 = vadd.f32 %v1051, %v1052
    %v1054 = vmul.f32 %v1046, %v447
    %v1055 = vmul.f32 %v1053, %v447
    %v1056 = vsub.f32 %v996, %v1054
    %v1057 = vsub.f32 %v1036, %v1055
    %v1058 = vmul.f32 %v1056, %v1056
    %v1059 = vmul.f32 %v1057, %v1057
    %v1060 = vsel %vm426, %v1058, 0.0
    %v1061 = vrot.slane %v1060, 4
    %v1062 = vadd.f32 %v1060, %v1061
    %v1063 = vrot.slane %v1062, 2
    %v1064 = vadd.f32 %v1062, %v1063
    %v1065 = vrot.slane %v1064, 1
    %v1066 = vadd.f32 %v1064, %v1065
    %v1067 = vsel %vm426, %v1059, 0.0
    %v1068 = vrot.slane %v1067, 4
    %v1069 = vadd.f32 %v1067, %v1068
    %v1070 = vrot.slane %v1069, 2
    %v1071 = vadd.f32 %v1069, %v1070
    %v1072 = vrot.slane %v1071, 1
    %v1073 = vadd.f32 %v1071, %v1072
    %v1074 = vmul.f32 %v1066, %v447
    %v1075 = vmul.f32 %v1073, %v447
    %v1076 = vadd.f32 %v1074, 1e-05
    %v1077 = vadd.f32 %v1075, 1e-05
    %v1078 = vrsqrt.pop %v1076
    %v1079 = vmul.f32 %v1078, %v1076
    %v1080 = vmul.f32 %v1079, %v1078
    %v1081 = vmul.f32 0.5, %v1080
    %v1082 = vsub.f32 1.5, %v1081
    %v1083 = vmul.f32 %v1078, %v1082
    %vm1084 = vweird.f32 %v1076
    %vm1085 = vweird.f32 %v1078
    %vm1086 = vmor %vm1084, %vm1085
    %v1087 = vsel %vm1086, %v1078, %v1083
    %v1088 = vrsqrt.pop %v1077
    %v1089 = vmul.f32 %v1088, %v1077
    %v1090 = vmul.f32 %v1089, %v1088
    %v1091 = vmul.f32 0.5, %v1090
    %v1092 = vsub.f32 1.5, %v1091
    %v1093 = vmul.f32 %v1088, %v1092
    %vm1094 = vweird.f32 %v1077
    %vm1095 = vweird.f32 %v1088
    %vm1096 = vmor %vm1094, %vm1095
    %v1097 = vsel %vm1096, %v1088, %v1093
    %v1098 = vmul.f32 %v1056, %v1087
    %v1099 = vmul.f32 %v1057, %v1097
    %v1101 = vperm.slane %v1038, 0
    %v1102 = vperm.slane %v1038, 1
    %v1105 = vmul.f32 %v1098, %v1101
    %v1106 = vmul.f32 %v1099, %v1102
    %v1108 = vperm.slane %v1039, 0
    %v1109 = vperm.slane %v1039, 1
    %v1112 = vadd.f32 %v1105, %v1108
    %v1113 = vadd.f32 %v1106, %v1109
    %v1114 = vmax.f32 %v1112, 0.0
    %v1115 = vmax.f32 %v1113, 0.0
    %v1116 = vld [vmem:[#allocation22] sm:$0xff]
    %v1117 = vld [vmem:[#allocation22 + $0x8] sm:$0xff]
    %v1118 = vld [vmem:[#allocation22 + $0x10] sm:$0xff]
    %v1119 = vld [vmem:[#allocation22 + $0x18] sm:$0xff]
    %v1120 = vld [vmem:[#allocation22 + $0x20] sm:$0xff]
    %v1121 = vld [vmem:[#allocation22 + $0x28] sm:$0xff]
    %v1122 = vld [vmem:[#allocation22 + $0x30] sm:$0xff]
    %v1123 = vld [vmem:[#allocation22 + $0x38] sm:$0xff]
    %v1124 = vld [vmem:[#allocation22 + $0x40] sm:$0xff]
    %v1125 = vld [vmem:[#allocation22 + $0x48] sm:$0xff]
    %v1126 = vld [vmem:[#allocation22 + $0x50] sm:$0xff]
    %v1127 = vld [vmem:[#allocation22 + $0x58] sm:$0xff]
    %v1128 = vld [vmem:[#allocation22 + $0x60] sm:$0xff]
    %v1129 = vld [vmem:[#allocation22 + $0x68] sm:$0xff]
    %v1130 = vld [vmem:[#allocation22 + $0x70] sm:$0xff]
    %v1131 = vld [vmem:[#allocation22 + $0x78] sm:$0xff]
    %v1132 = vld [vmem:[#allocation22 + $0x80] sm:$0xff]
    %v1133 = vld [vmem:[#allocation22 + $0x88] sm:$0xff]
    %v1134 = vld [vmem:[#allocation22 + $0x90] sm:$0xff]
    %v1135 = vld [vmem:[#allocation22 + $0x98] sm:$0xff]
    %v1136 = vld [vmem:[#allocation22 + $0xa0] sm:$0xff]
    %v1137 = vld [vmem:[#allocation22 + $0xa8] sm:$0xff]
    %v1138 = vld [vmem:[#allocation22 + $0xb0] sm:$0xff]
    %v1139 = vld [vmem:[#allocation22 + $0xb8] sm:$0xff]
    %v1140 = vld [vmem:[#allocation22 + $0xc0] sm:$0xff]
    %v1141 = vld [vmem:[#allocation22 + $0xc8] sm:$0xff]
    %v1142 = vld [vmem:[#allocation22 + $0xd0] sm:$0xff]
    %v1143 = vld [vmem:[#allocation22 + $0xd8] sm:$0xff]
    %v1144 = vld [vmem:[#allocation22 + $0xe0] sm:$0xff]
    %v1145 = vld [vmem:[#allocation22 + $0xe8] sm:$0xff]
    %v1146 = vld [vmem:[#allocation22 + $0xf0] sm:$0xff]
    %v1147 = vld [vmem:[#allocation22 + $0xf8] sm:$0xff]
    %v1148 = vld [vmem:[#allocation22 + $0x100] sm:$0xff]
    %v1149 = vld [vmem:[#allocation22 + $0x108] sm:$0xff]
    %v1150 = vld [vmem:[#allocation22 + $0x110] sm:$0xff]
    %v1151 = vld [vmem:[#allocation22 + $0x118] sm:$0xff]
    %v1152 = vld [vmem:[#allocation22 + $0x120] sm:$0xff]
    %v1153 = vld [vmem:[#allocation22 + $0x128] sm:$0xff]
    %v1154 = vld [vmem:[#allocation22 + $0x130] sm:$0xff]
    %v1155 = vld [vmem:[#allocation22 + $0x138] sm:$0xff]
    %v1156 = vld [vmem:[#allocation22 + $0x140] sm:$0xff]
    %v1157 = vld [vmem:[#allocation22 + $0x148] sm:$0xff]
    %v1158 = vld [vmem:[#allocation22 + $0x150] sm:$0xff]
    %v1159 = vld [vmem:[#allocation22 + $0x158] sm:$0xff]
    %v1160 = vld [vmem:[#allocation22 + $0x160] sm:$0xff]
    %v1161 = vld [vmem:[#allocation22 + $0x168] sm:$0xff]
    %v1162 = vld [vmem:[#allocation22 + $0x170] sm:$0xff]
    %v1163 = vld [vmem:[#allocation22 + $0x178] sm:$0xff]
    %v1164 = vld [vmem:[#allocation22 + $0x180] sm:$0xff]
    %v1165 = vld [vmem:[#allocation22 + $0x188] sm:$0xff]
    %v1166 = vld [vmem:[#allocation22 + $0x190] sm:$0xff]
    %v1167 = vld [vmem:[#allocation22 + $0x198] sm:$0xff]
    %v1168 = vld [vmem:[#allocation22 + $0x1a0] sm:$0xff]
    %v1169 = vld [vmem:[#allocation22 + $0x1a8] sm:$0xff]
    %v1170 = vld [vmem:[#allocation22 + $0x1b0] sm:$0xff]
    %v1171 = vld [vmem:[#allocation22 + $0x1b8] sm:$0xff]
    %v1172 = vld [vmem:[#allocation22 + $0x1c0] sm:$0xff]
    %v1173 = vld [vmem:[#allocation22 + $0x1c8] sm:$0xff]
    %v1174 = vld [vmem:[#allocation22 + $0x1d0] sm:$0xff]
    %v1175 = vld [vmem:[#allocation22 + $0x1d8] sm:$0xff]
    %v1176 = vld [vmem:[#allocation22 + $0x1e0] sm:$0xff]
    %v1177 = vld [vmem:[#allocation22 + $0x1e8] sm:$0xff]
    %v1178 = vld [vmem:[#allocation22 + $0x1f0] sm:$0xff]
    %v1179 = vld [vmem:[#allocation22 + $0x1f8] sm:$0xff]
    %v1180 = vld [vmem:[#allocation24] sm:$0x3]
    %v1182 = vperm.slane %v1180, 0
    %v1183 = vperm.slane %v1180, 1
    %1186 = vmatpush.msra.mxu0 %v1146
    %1187 = vmatpush.msra.mxu0 %v1144
    %1188 = vmatpush.msra.mxu0 %v1142
    %1189 = vmatpush.msra.mxu0 %v1140
    %1190 = vmatpush.msra.mxu0 %v1138
    %1191 = vmatpush.msra.mxu0 %v1136
    %1192 = vmatpush.msra.mxu0 %v1134
    %1193 = vmatpush.msra.mxu0 %v1132
    %1194 = vmatpush.msra.mxu0 %v1130
    %1195 = vmatpush.msra.mxu0 %v1128
    %1196 = vmatpush.msra.mxu0 %v1126
    %1197 = vmatpush.msra.mxu0 %v1124
    %1198 = vmatpush.msra.mxu0 %v1122
    %1199 = vmatpush.msra.mxu0 %v1120
    %1200 = vmatpush.msra.mxu0 %v1118
    %1201 = vmatpush.msra.mxu0 %v1116
    %1202 = vmatmul.f32.gmra.mxu0 %v1114
    %v1203 = vpop.f32.mrf.mxu0
    %v1204 = vadd.f32 %v1182, %v1203
    %1205 = vdwg.mxu0
    %1206 = vmatpush.msra.mxu0 %v1178
    %1207 = vmatpush.msra.mxu0 %v1176
    %1208 = vmatpush.msra.mxu0 %v1174
    %1209 = vmatpush.msra.mxu0 %v1172
    %1210 = vmatpush.msra.mxu0 %v1170
    %1211 = vmatpush.msra.mxu0 %v1168
    %1212 = vmatpush.msra.mxu0 %v1166
    %1213 = vmatpush.msra.mxu0 %v1164
    %1214 = vmatpush.msra.mxu0 %v1162
    %1215 = vmatpush.msra.mxu0 %v1160
    %1216 = vmatpush.msra.mxu0 %v1158
    %1217 = vmatpush.msra.mxu0 %v1156
    %1218 = vmatpush.msra.mxu0 %v1154
    %1219 = vmatpush.msra.mxu0 %v1152
    %1220 = vmatpush.msra.mxu0 %v1150
    %1221 = vmatpush.msra.mxu0 %v1148
    %1222 = vmatmul.f32.gmra.mxu0 %v1115
    %v1223 = vpop.f32.mrf.mxu0
    %v1224 = vadd.f32 %v1204, %v1223
    %1225 = vdwg.mxu0
    %1226 = vmatpush.msra.mxu0 %v1147
    %1227 = vmatpush.msra.mxu0 %v1145
    %1228 = vmatpush.msra.mxu0 %v1143
    %1229 = vmatpush.msra.mxu0 %v1141
    %1230 = vmatpush.msra.mxu0 %v1139
    %1231 = vmatpush.msra.mxu0 %v1137
    %1232 = vmatpush.msra.mxu0 %v1135
    %1233 = vmatpush.msra.mxu0 %v1133
    %1234 = vmatpush.msra.mxu0 %v1131
    %1235 = vmatpush.msra.mxu0 %v1129
    %1236 = vmatpush.msra.mxu0 %v1127
    %1237 = vmatpush.msra.mxu0 %v1125
    %1238 = vmatpush.msra.mxu0 %v1123
    %1239 = vmatpush.msra.mxu0 %v1121
    %1240 = vmatpush.msra.mxu0 %v1119
    %1241 = vmatpush.msra.mxu0 %v1117
    %1242 = vmatmul.f32.gmra.mxu0 %v1114
    %v1243 = vpop.f32.mrf.mxu0
    %v1244 = vadd.f32 %v1183, %v1243
    %1245 = vdwg.mxu0
    %1246 = vmatpush.msra.mxu0 %v1179
    %1247 = vmatpush.msra.mxu0 %v1177
    %1248 = vmatpush.msra.mxu0 %v1175
    %1249 = vmatpush.msra.mxu0 %v1173
    %1250 = vmatpush.msra.mxu0 %v1171
    %1251 = vmatpush.msra.mxu0 %v1169
    %1252 = vmatpush.msra.mxu0 %v1167
    %1253 = vmatpush.msra.mxu0 %v1165
    %1254 = vmatpush.msra.mxu0 %v1163
    %1255 = vmatpush.msra.mxu0 %v1161
    %1256 = vmatpush.msra.mxu0 %v1159
    %1257 = vmatpush.msra.mxu0 %v1157
    %1258 = vmatpush.msra.mxu0 %v1155
    %1259 = vmatpush.msra.mxu0 %v1153
    %1260 = vmatpush.msra.mxu0 %v1151
    %1261 = vmatpush.msra.mxu0 %v1149
    %1262 = vmatmul.f32.gmra.mxu0 %v1115
    %v1263 = vpop.f32.mrf.mxu0
    %v1264 = vadd.f32 %v1244, %v1263
    %1265 = vdwg.mxu0
    %v1266 = vadd.f32 %v846, %v1224
    %v1267 = vadd.f32 %v886, %v1264
    %v1270 = vrot.slane %v1267, 6
    %v1271 = vsel %vm426, %v1266, %v1270
    %1273 = vst [vmem:[%s17] sm:$0xf] %v1271
    // Predicated region
    $region130: #{mfm_forward.6} parent=1 // pred_check
      _
    $region131: #{mfm_forward.6} parent=1 // pred_check_branch
      %1275 = sbr.rel (0) target = $region133
    $region132: #{mfm_forward.6} parent=1 // pred_region
      _
    $region133: #{mfm_forward.6} parent=1 // pred_fallthru
      _
    // Predicated region
    $region134: #{mfm_forward.6} parent=1 // pred_check
      _
    $region135: #{mfm_forward.6} parent=1 // pred_check_branch
      %1277 = sbr.rel (0) target = $region137
    $region136: #{mfm_forward.6} parent=1 // pred_region
      _
    $region137: #{mfm_forward.6} parent=1 // pred_fallthru
      _
    %1278 = vsyncpa [#allocation3], 1
    %1279 = vsyncpa [#allocation5], 1
    %1280 = vsyncpa [#allocation8], 1
    %1281 = vsyncpa [#allocation11], 1
    %1282 = vsyncpa [#allocation14], 1
    %1283 = vsyncpa [#allocation17], 1
    %1284 = vsyncpa [#allocation20], 1
    %1285 = vsyncpa [#allocation23], 1

// kernel: mfm_forward.5
$region0: #{mfm_forward.5}
  #allocation0 [shape = 'u32[]', space=smem, size = 0x4, offset = 0x4, fixed_abs, tag = 'smem constant byte address 0x4 - core index']
  #allocation1 [shape = 'u32[72,128]{1,0:T(1,128)}', space=vmem, size = 0x9000, scoped, tag = 'internal scratch']
  %s0 = inlined_call_operand.vmem [shape: f32[256,256], index: 0, kind: input, shape index: {}]
  %s1 = inlined_call_operand.vmem [shape: f32[2,256], index: 1, kind: input, shape index: {}]
  %s2 = inlined_call_operand.hbm [shape: f32[256,512], index: 2, kind: input, shape index: {}]
  %s3 = inlined_call_operand.hbm [shape: f32[256,512], index: 3, kind: input, shape index: {}]
  %s4 = inlined_call_operand.vmem [shape: f32[1,512], index: 4, kind: input, shape index: {}]
  %s5 = inlined_call_operand.vmem [shape: f32[1,512], index: 5, kind: input, shape index: {}]
  %s6 = inlined_call_operand.vmem [shape: f32[1,512], index: 6, kind: input, shape index: {}]
  %s7 = inlined_call_operand.hbm [shape: f32[512,256], index: 7, kind: input, shape index: {}]
  %s8 = inlined_call_operand.vmem [shape: f32[1,256], index: 8, kind: input, shape index: {}]
  %s9 = inlined_call_operand.vmem [shape: f32[2,256], index: 9, kind: output, shape index: {}]
  %s10 = sld [smem:[#allocation0]]
  $region58: #{mfm_forward.5} parent=0
    _
  %s12 = ssub.s32 1, %s10
  %s13 = scalar_select 0, %s12, %s10
  $region1: #{mfm_forward.5} parent=0
    #allocation2 [shape = 'u8[524288]{0}', space=vmem, size = 0x80000, scoped, tag = 'input window, operand 2, single buffered']
    #allocation3 [shape = 's32[1]{0}', space=sflag, size = 0x4, scoped, tag = 'scoped memory for mfm_forward.5']
    #allocation4 [shape = 'u8[524288]{0}', space=vmem, size = 0x80000, scoped, tag = 'input window, operand 3, single buffered']
    #allocation5 [shape = 's32[1]{0}', space=sflag, size = 0x4, scoped, tag = 'scoped memory for mfm_forward.5']
    #allocation6 [shape = 'u8[524288]{0}', space=vmem, size = 0x80000, scoped, tag = 'input window, operand 7, single buffered']
    %14 = vsyncpa [#allocation3], 0
    %15 = vsyncpa [#allocation5], 0
    // Predicated region
    $region2: #{mfm_forward.5} parent=1 // pred_check
      _
    $region3: #{mfm_forward.5} parent=1 // pred_check_branch
      %17 = sbr.rel (0) target = $region5
    $region4: #{mfm_forward.5} parent=1 // pred_region
      _
    $region5: #{mfm_forward.5} parent=1 // pred_fallthru
      _
    // Predicated region
    $region6: #{mfm_forward.5} parent=1 // pred_check
      _
    $region7: #{mfm_forward.5} parent=1 // pred_check_branch
      %19 = sbr.rel (0) target = $region9
    $region8: #{mfm_forward.5} parent=1 // pred_region
      _
    $region9: #{mfm_forward.5} parent=1 // pred_fallthru
      _
    // Predicated region
    $region10: #{mfm_forward.5} parent=1 // pred_check
      _
    $region11: #{mfm_forward.5} parent=1 // pred_check_branch
      %21 = sbr.rel (0) target = $region13
    $region12: #{mfm_forward.5} parent=1 // pred_region
      %23 = vsyncadd [#allocation3], 0
      %s24 = sshll.u32 %s2, 4
      %s25 = int_to_ptr.hbm [resolvable:$true] %s24
      %s26 = sshll.u32 [#allocation2], 4
      %s27 = int_to_ptr.vmem [resolvable:$true] %s26
      %32 = dma.hbm_to_vmem [thread:$0]  %s25, 16384, %s27, [#allocation3], 512, 512, 32
    $region13: #{mfm_forward.5} parent=1 // pred_fallthru
      _
    // Predicated region
    $region14: #{mfm_forward.5} parent=1 // pred_check
      _
    $region15: #{mfm_forward.5} parent=1 // pred_check_branch
      %34 = sbr.rel (0) target = $region17
    $region16: #{mfm_forward.5} parent=1 // pred_region
      %36 = vsyncadd [#allocation5], 0
      %s37 = sshll.u32 %s3, 4
      %s38 = int_to_ptr.hbm [resolvable:$true] %s37
      %s39 = sshll.u32 [#allocation4], 4
      %s40 = int_to_ptr.vmem [resolvable:$true] %s39
      %45 = dma.hbm_to_vmem [thread:$0]  %s38, 16384, %s40, [#allocation5], 512, 512, 32
    $region17: #{mfm_forward.5} parent=1 // pred_fallthru
      _
    // Predicated region
    $region18: #{mfm_forward.5} parent=1 // pred_check
      _
    $region19: #{mfm_forward.5} parent=1 // pred_check_branch
      %47 = sbr.rel (0) target = $region21
    $region20: #{mfm_forward.5} parent=1 // pred_region
      _
    $region21: #{mfm_forward.5} parent=1 // pred_fallthru
      _
    // Predicated region
    $region22: #{mfm_forward.5} parent=1 // pred_check
      _
    $region23: #{mfm_forward.5} parent=1 // pred_check_branch
      %49 = sbr.rel (0) target = $region25
    $region24: #{mfm_forward.5} parent=1 // pred_region
      _
    $region25: #{mfm_forward.5} parent=1 // pred_fallthru
      _
    // Predicated region
    $region26: #{mfm_forward.5} parent=1 // pred_check
      _
    $region27: #{mfm_forward.5} parent=1 // pred_check_branch
      %51 = sbr.rel (0) target = $region29
    $region28: #{mfm_forward.5} parent=1 // pred_region
      _
    $region29: #{mfm_forward.5} parent=1 // pred_fallthru
      _
    // Predicated region
    $region30: #{mfm_forward.5} parent=1 // pred_check
      _
    $region31: #{mfm_forward.5} parent=1 // pred_check_branch
      %53 = sbr.rel (0) target = $region33
    $region32: #{mfm_forward.5} parent=1 // pred_region
      %55 = vsyncadd [#allocation5], 0
      %s56 = sshll.u32 %s7, 4
      %s57 = int_to_ptr.hbm [resolvable:$true] %s56
      %s58 = sshll.u32 [#allocation6], 4
      %s59 = int_to_ptr.vmem [resolvable:$true] %s58
      %64 = dma.hbm_to_vmem [thread:$0]  %s57, 16384, %s59, [#allocation5], 256, 256, 16
    $region33: #{mfm_forward.5} parent=1 // pred_fallthru
      _
    // Predicated region
    $region34: #{mfm_forward.5} parent=1 // pred_check
      _
    $region35: #{mfm_forward.5} parent=1 // pred_check_branch
      %66 = sbr.rel (0) target = $region37
    $region36: #{mfm_forward.5} parent=1 // pred_region
      _
    $region37: #{mfm_forward.5} parent=1 // pred_fallthru
      _
    // Predicated region
    $region38: #{mfm_forward.5} parent=1 // pred_check
      _
    $region39: #{mfm_forward.5} parent=1 // pred_check_branch
      %68 = sbr.rel (0) target = $region41
    $region40: #{mfm_forward.5} parent=1 // pred_region
      %70 = dma.done [#allocation3], 16384
    $region41: #{mfm_forward.5} parent=1 // pred_fallthru
      _
    // Predicated region
    $region42: #{mfm_forward.5} parent=1 // pred_check
      _
    $region43: #{mfm_forward.5} parent=1 // pred_check_branch
      %72 = sbr.rel (0) target = $region45
    $region44: #{mfm_forward.5} parent=1 // pred_region
      %74 = dma.done [#allocation5], 16384
    $region45: #{mfm_forward.5} parent=1 // pred_fallthru
      _
    // Predicated region
    $region46: #{mfm_forward.5} parent=1 // pred_check
      _
    $region47: #{mfm_forward.5} parent=1 // pred_check_branch
      %76 = sbr.rel (0) target = $region49
    $region48: #{mfm_forward.5} parent=1 // pred_region
      %78 = dma.done [#allocation5], 16384
    $region49: #{mfm_forward.5} parent=1 // pred_fallthru
      _
    %v79 = vld [vmem:[%s1] sm:$0xf]
    %v80 = vld [vmem:[#allocation2] sm:$0xff]
    %v81 = vld [vmem:[#allocation2 + $0x8] sm:$0xff]
    %v82 = vld [vmem:[#allocation2 + $0x10] sm:$0xff]
    %v83 = vld [vmem:[#allocation2 + $0x18] sm:$0xff]
    %v84 = vld [vmem:[#allocation2 + $0x20] sm:$0xff]
    %v85 = vld [vmem:[#allocation2 + $0x28] sm:$0xff]
    %v86 = vld [vmem:[#allocation2 + $0x30] sm:$0xff]
    %v87 = vld [vmem:[#allocation2 + $0x38] sm:$0xff]
    %v88 = vld [vmem:[#allocation2 + $0x40] sm:$0xff]
    %v89 = vld [vmem:[#allocation2 + $0x48] sm:$0xff]
    %v90 = vld [vmem:[#allocation2 + $0x50] sm:$0xff]
    %v91 = vld [vmem:[#allocation2 + $0x58] sm:$0xff]
    %v92 = vld [vmem:[#allocation2 + $0x60] sm:$0xff]
    %v93 = vld [vmem:[#allocation2 + $0x68] sm:$0xff]
    %v94 = vld [vmem:[#allocation2 + $0x70] sm:$0xff]
    %v95 = vld [vmem:[#allocation2 + $0x78] sm:$0xff]
    %v96 = vld [vmem:[#allocation2 + $0x80] sm:$0xff]
    %v97 = vld [vmem:[#allocation2 + $0x88] sm:$0xff]
    %v98 = vld [vmem:[#allocation2 + $0x90] sm:$0xff]
    %v99 = vld [vmem:[#allocation2 + $0x98] sm:$0xff]
    %v100 = vld [vmem:[#allocation2 + $0xa0] sm:$0xff]
    %v101 = vld [vmem:[#allocation2 + $0xa8] sm:$0xff]
    %v102 = vld [vmem:[#allocation2 + $0xb0] sm:$0xff]
    %v103 = vld [vmem:[#allocation2 + $0xb8] sm:$0xff]
    %v104 = vld [vmem:[#allocation2 + $0xc0] sm:$0xff]
    %v105 = vld [vmem:[#allocation2 + $0xc8] sm:$0xff]
    %v106 = vld [vmem:[#allocation2 + $0xd0] sm:$0xff]
    %v107 = vld [vmem:[#allocation2 + $0xd8] sm:$0xff]
    %v108 = vld [vmem:[#allocation2 + $0xe0] sm:$0xff]
    %v109 = vld [vmem:[#allocation2 + $0xe8] sm:$0xff]
    %v110 = vld [vmem:[#allocation2 + $0xf0] sm:$0xff]
    %v111 = vld [vmem:[#allocation2 + $0xf8] sm:$0xff]
    %v112 = vld [vmem:[#allocation2 + $0x100] sm:$0xff]
    %v113 = vld [vmem:[#allocation2 + $0x108] sm:$0xff]
    %v114 = vld [vmem:[#allocation2 + $0x110] sm:$0xff]
    %v115 = vld [vmem:[#allocation2 + $0x118] sm:$0xff]
    %v116 = vld [vmem:[#allocation2 + $0x120] sm:$0xff]
    %v117 = vld [vmem:[#allocation2 + $0x128] sm:$0xff]
    %v118 = vld [vmem:[#allocation2 + $0x130] sm:$0xff]
    %v119 = vld [vmem:[#allocation2 + $0x138] sm:$0xff]
    %v120 = vld [vmem:[#allocation2 + $0x140] sm:$0xff]
    %v121 = vld [vmem:[#allocation2 + $0x148] sm:$0xff]
    %v122 = vld [vmem:[#allocation2 + $0x150] sm:$0xff]
    %v123 = vld [vmem:[#allocation2 + $0x158] sm:$0xff]
    %v124 = vld [vmem:[#allocation2 + $0x160] sm:$0xff]
    %v125 = vld [vmem:[#allocation2 + $0x168] sm:$0xff]
    %v126 = vld [vmem:[#allocation2 + $0x170] sm:$0xff]
    %v127 = vld [vmem:[#allocation2 + $0x178] sm:$0xff]
    %v128 = vld [vmem:[#allocation2 + $0x180] sm:$0xff]
    %v129 = vld [vmem:[#allocation2 + $0x188] sm:$0xff]
    %v130 = vld [vmem:[#allocation2 + $0x190] sm:$0xff]
    %v131 = vld [vmem:[#allocation2 + $0x198] sm:$0xff]
    %v132 = vld [vmem:[#allocation2 + $0x1a0] sm:$0xff]
    %v133 = vld [vmem:[#allocation2 + $0x1a8] sm:$0xff]
    %v134 = vld [vmem:[#allocation2 + $0x1b0] sm:$0xff]
    %v135 = vld [vmem:[#allocation2 + $0x1b8] sm:$0xff]
    %v136 = vld [vmem:[#allocation2 + $0x1c0] sm:$0xff]
    %v137 = vld [vmem:[#allocation2 + $0x1c8] sm:$0xff]
    %v138 = vld [vmem:[#allocation2 + $0x1d0] sm:$0xff]
    %v139 = vld [vmem:[#allocation2 + $0x1d8] sm:$0xff]
    %v140 = vld [vmem:[#allocation2 + $0x1e0] sm:$0xff]
    %v141 = vld [vmem:[#allocation2 + $0x1e8] sm:$0xff]
    %v142 = vld [vmem:[#allocation2 + $0x1f0] sm:$0xff]
    %v143 = vld [vmem:[#allocation2 + $0x1f8] sm:$0xff]
    %v144 = vld [vmem:[#allocation2 + $0x200] sm:$0xff]
    %v145 = vld [vmem:[#allocation2 + $0x208] sm:$0xff]
    %v146 = vld [vmem:[#allocation2 + $0x210] sm:$0xff]
    %v147 = vld [vmem:[#allocation2 + $0x218] sm:$0xff]
    %v148 = vld [vmem:[#allocation2 + $0x220] sm:$0xff]
    %v149 = vld [vmem:[#allocation2 + $0x228] sm:$0xff]
    %v150 = vld [vmem:[#allocation2 + $0x230] sm:$0xff]
    %v151 = vld [vmem:[#allocation2 + $0x238] sm:$0xff]
    %v152 = vld [vmem:[#allocation2 + $0x240] sm:$0xff]
    %v153 = vld [vmem:[#allocation2 + $0x248] sm:$0xff]
    %v154 = vld [vmem:[#allocation2 + $0x250] sm:$0xff]
    %v155 = vld [vmem:[#allocation2 + $0x258] sm:$0xff]
    %v156 = vld [vmem:[#allocation2 + $0x260] sm:$0xff]
    %v157 = vld [vmem:[#allocation2 + $0x268] sm:$0xff]
    %v158 = vld [vmem:[#allocation2 + $0x270] sm:$0xff]
    %v159 = vld [vmem:[#allocation2 + $0x278] sm:$0xff]
    %v160 = vld [vmem:[#allocation2 + $0x280] sm:$0xff]
    %v161 = vld [vmem:[#allocation2 + $0x288] sm:$0xff]
    %v162 = vld [vmem:[#allocation2 + $0x290] sm:$0xff]
    %v163 = vld [vmem:[#allocation2 + $0x298] sm:$0xff]
    %v164 = vld [vmem:[#allocation2 + $0x2a0] sm:$0xff]
    %v165 = vld [vmem:[#allocation2 + $0x2a8] sm:$0xff]
    %v166 = vld [vmem:[#allocation2 + $0x2b0] sm:$0xff]
    %v167 = vld [vmem:[#allocation2 + $0x2b8] sm:$0xff]
    %v168 = vld [vmem:[#allocation2 + $0x2c0] sm:$0xff]
    %v169 = vld [vmem:[#allocation2 + $0x2c8] sm:$0xff]
    %v170 = vld [vmem:[#allocation2 + $0x2d0] sm:$0xff]
    %v171 = vld [vmem:[#allocation2 + $0x2d8] sm:$0xff]
    %v172 = vld [vmem:[#allocation2 + $0x2e0] sm:$0xff]
    %v173 = vld [vmem:[#allocation2 + $0x2e8] sm:$0xff]
    %v174 = vld [vmem:[#allocation2 + $0x2f0] sm:$0xff]
    %v175 = vld [vmem:[#allocation2 + $0x2f8] sm:$0xff]
    %v176 = vld [vmem:[#allocation2 + $0x300] sm:$0xff]
    %v177 = vld [vmem:[#allocation2 + $0x308] sm:$0xff]
    %v178 = vld [vmem:[#allocation2 + $0x310] sm:$0xff]
    %v179 = vld [vmem:[#allocation2 + $0x318] sm:$0xff]
    %v180 = vld [vmem:[#allocation2 + $0x320] sm:$0xff]
    %v181 = vld [vmem:[#allocation2 + $0x328] sm:$0xff]
    %v182 = vld [vmem:[#allocation2 + $0x330] sm:$0xff]
    %v183 = vld [vmem:[#allocation2 + $0x338] sm:$0xff]
    %v184 = vld [vmem:[#allocation2 + $0x340] sm:$0xff]
    %v185 = vld [vmem:[#allocation2 + $0x348] sm:$0xff]
    %v186 = vld [vmem:[#allocation2 + $0x350] sm:$0xff]
    %v187 = vld [vmem:[#allocation2 + $0x358] sm:$0xff]
    %v188 = vld [vmem:[#allocation2 + $0x360] sm:$0xff]
    %v189 = vld [vmem:[#allocation2 + $0x368] sm:$0xff]
    %v190 = vld [vmem:[#allocation2 + $0x370] sm:$0xff]
    %v191 = vld [vmem:[#allocation2 + $0x378] sm:$0xff]
    %v192 = vld [vmem:[#allocation2 + $0x380] sm:$0xff]
    %v193 = vld [vmem:[#allocation2 + $0x388] sm:$0xff]
    %v194 = vld [vmem:[#allocation2 + $0x390] sm:$0xff]
    %v195 = vld [vmem:[#allocation2 + $0x398] sm:$0xff]
    %v196 = vld [vmem:[#allocation2 + $0x3a0] sm:$0xff]
    %v197 = vld [vmem:[#allocation2 + $0x3a8] sm:$0xff]
    %v198 = vld [vmem:[#allocation2 + $0x3b0] sm:$0xff]
    %v199 = vld [vmem:[#allocation2 + $0x3b8] sm:$0xff]
    %v200 = vld [vmem:[#allocation2 + $0x3c0] sm:$0xff]
    %v201 = vld [vmem:[#allocation2 + $0x3c8] sm:$0xff]
    %v202 = vld [vmem:[#allocation2 + $0x3d0] sm:$0xff]
    %v203 = vld [vmem:[#allocation2 + $0x3d8] sm:$0xff]
    %v204 = vld [vmem:[#allocation2 + $0x3e0] sm:$0xff]
    %v205 = vld [vmem:[#allocation2 + $0x3e8] sm:$0xff]
    %v206 = vld [vmem:[#allocation2 + $0x3f0] sm:$0xff]
    %v207 = vld [vmem:[#allocation2 + $0x3f8] sm:$0xff]
    %209 = vst [vmem:[#allocation1] ss:$4 sm:$0xff] %v79
    %v210 = vld.sshfl [vmem:[#allocation1] sm:$0xff pattern:$0x73625140]
    %v211 = vld.sshfl [vmem:[#allocation1 + $0x8] sm:$0xff pattern:$0x73625140]
    %214 = vmatpush.msra.mxu0 %v140
    %215 = vmatpush.msra.mxu0 %v136
    %216 = vmatpush.msra.mxu0 %v132
    %217 = vmatpush.msra.mxu0 %v128
    %218 = vmatpush.msra.mxu0 %v124
    %219 = vmatpush.msra.mxu0 %v120
    %220 = vmatpush.msra.mxu0 %v116
    %221 = vmatpush.msra.mxu0 %v112
    %222 = vmatpush.msra.mxu0 %v108
    %223 = vmatpush.msra.mxu0 %v104
    %224 = vmatpush.msra.mxu0 %v100
    %225 = vmatpush.msra.mxu0 %v96
    %226 = vmatpush.msra.mxu0 %v92
    %227 = vmatpush.msra.mxu0 %v88
    %228 = vmatpush.msra.mxu0 %v84
    %229 = vmatpush.msra.mxu0 %v80
    %230 = vmatmul.f32.gmra.mxu0 %v210
    %v231 = vpop.f32.mrf.mxu0
    %v232 = vadd.f32 0.0, %v231
    %233 = vdwg.mxu0
    %234 = vmatpush.msra.mxu0 %v204
    %235 = vmatpush.msra.mxu0 %v200
    %236 = vmatpush.msra.mxu0 %v196
    %237 = vmatpush.msra.mxu0 %v192
    %238 = vmatpush.msra.mxu0 %v188
    %239 = vmatpush.msra.mxu0 %v184
    %240 = vmatpush.msra.mxu0 %v180
    %241 = vmatpush.msra.mxu0 %v176
    %242 = vmatpush.msra.mxu0 %v172
    %243 = vmatpush.msra.mxu0 %v168
    %244 = vmatpush.msra.mxu0 %v164
    %245 = vmatpush.msra.mxu0 %v160
    %246 = vmatpush.msra.mxu0 %v156
    %247 = vmatpush.msra.mxu0 %v152
    %248 = vmatpush.msra.mxu0 %v148
    %249 = vmatpush.msra.mxu0 %v144
    %250 = vmatmul.f32.gmra.mxu0 %v211
    %v251 = vpop.f32.mrf.mxu0
    %v252 = vadd.f32 %v232, %v251
    %253 = vdwg.mxu0
    %254 = vmatpush.msra.mxu0 %v141
    %255 = vmatpush.msra.mxu0 %v137
    %256 = vmatpush.msra.mxu0 %v133
    %257 = vmatpush.msra.mxu0 %v129
    %258 = vmatpush.msra.mxu0 %v125
    %259 = vmatpush.msra.mxu0 %v121
    %260 = vmatpush.msra.mxu0 %v117
    %261 = vmatpush.msra.mxu0 %v113
    %262 = vmatpush.msra.mxu0 %v109
    %263 = vmatpush.msra.mxu0 %v105
    %264 = vmatpush.msra.mxu0 %v101
    %265 = vmatpush.msra.mxu0 %v97
    %266 = vmatpush.msra.mxu0 %v93
    %267 = vmatpush.msra.mxu0 %v89
    %268 = vmatpush.msra.mxu0 %v85
    %269 = vmatpush.msra.mxu0 %v81
    %270 = vmatmul.f32.gmra.mxu0 %v210
    %v271 = vpop.f32.mrf.mxu0
    %v272 = vadd.f32 0.0, %v271
    %273 = vdwg.mxu0
    %274 = vmatpush.msra.mxu0 %v205
    %275 = vmatpush.msra.mxu0 %v201
    %276 = vmatpush.msra.mxu0 %v197
    %277 = vmatpush.msra.mxu0 %v193
    %278 = vmatpush.msra.mxu0 %v189
    %279 = vmatpush.msra.mxu0 %v185
    %280 = vmatpush.msra.mxu0 %v181
    %281 = vmatpush.msra.mxu0 %v177
    %282 = vmatpush.msra.mxu0 %v173
    %283 = vmatpush.msra.mxu0 %v169
    %284 = vmatpush.msra.mxu0 %v165
    %285 = vmatpush.msra.mxu0 %v161
    %286 = vmatpush.msra.mxu0 %v157
    %287 = vmatpush.msra.mxu0 %v153
    %288 = vmatpush.msra.mxu0 %v149
    %289 = vmatpush.msra.mxu0 %v145
    %290 = vmatmul.f32.gmra.mxu0 %v211
    %v291 = vpop.f32.mrf.mxu0
    %v292 = vadd.f32 %v272, %v291
    %293 = vdwg.mxu0
    %294 = vmatpush.msra.mxu0 %v142
    %295 = vmatpush.msra.mxu0 %v138
    %296 = vmatpush.msra.mxu0 %v134
    %297 = vmatpush.msra.mxu0 %v130
    %298 = vmatpush.msra.mxu0 %v126
    %299 = vmatpush.msra.mxu0 %v122
    %300 = vmatpush.msra.mxu0 %v118
    %301 = vmatpush.msra.mxu0 %v114
    %302 = vmatpush.msra.mxu0 %v110
    %303 = vmatpush.msra.mxu0 %v106
    %304 = vmatpush.msra.mxu0 %v102
    %305 = vmatpush.msra.mxu0 %v98
    %306 = vmatpush.msra.mxu0 %v94
    %307 = vmatpush.msra.mxu0 %v90
    %308 = vmatpush.msra.mxu0 %v86
    %309 = vmatpush.msra.mxu0 %v82
    %310 = vmatmul.f32.gmra.mxu0 %v210
    %v311 = vpop.f32.mrf.mxu0
    %v312 = vadd.f32 0.0, %v311
    %313 = vdwg.mxu0
    %314 = vmatpush.msra.mxu0 %v206
    %315 = vmatpush.msra.mxu0 %v202
    %316 = vmatpush.msra.mxu0 %v198
    %317 = vmatpush.msra.mxu0 %v194
    %318 = vmatpush.msra.mxu0 %v190
    %319 = vmatpush.msra.mxu0 %v186
    %320 = vmatpush.msra.mxu0 %v182
    %321 = vmatpush.msra.mxu0 %v178
    %322 = vmatpush.msra.mxu0 %v174
    %323 = vmatpush.msra.mxu0 %v170
    %324 = vmatpush.msra.mxu0 %v166
    %325 = vmatpush.msra.mxu0 %v162
    %326 = vmatpush.msra.mxu0 %v158
    %327 = vmatpush.msra.mxu0 %v154
    %328 = vmatpush.msra.mxu0 %v150
    %329 = vmatpush.msra.mxu0 %v146
    %330 = vmatmul.f32.gmra.mxu0 %v211
    %v331 = vpop.f32.mrf.mxu0
    %v332 = vadd.f32 %v312, %v331
    %333 = vdwg.mxu0
    %334 = vmatpush.msra.mxu0 %v143
    %335 = vmatpush.msra.mxu0 %v139
    %336 = vmatpush.msra.mxu0 %v135
    %337 = vmatpush.msra.mxu0 %v131
    %338 = vmatpush.msra.mxu0 %v127
    %339 = vmatpush.msra.mxu0 %v123
    %340 = vmatpush.msra.mxu0 %v119
    %341 = vmatpush.msra.mxu0 %v115
    %342 = vmatpush.msra.mxu0 %v111
    %343 = vmatpush.msra.mxu0 %v107
    %344 = vmatpush.msra.mxu0 %v103
    %345 = vmatpush.msra.mxu0 %v99
    %346 = vmatpush.msra.mxu0 %v95
    %347 = vmatpush.msra.mxu0 %v91
    %348 = vmatpush.msra.mxu0 %v87
    %349 = vmatpush.msra.mxu0 %v83
    %350 = vmatmul.f32.gmra.mxu0 %v210
    %v351 = vpop.f32.mrf.mxu0
    %v352 = vadd.f32 0.0, %v351
    %353 = vdwg.mxu0
    %354 = vmatpush.msra.mxu0 %v207
    %355 = vmatpush.msra.mxu0 %v203
    %356 = vmatpush.msra.mxu0 %v199
    %357 = vmatpush.msra.mxu0 %v195
    %358 = vmatpush.msra.mxu0 %v191
    %359 = vmatpush.msra.mxu0 %v187
    %360 = vmatpush.msra.mxu0 %v183
    %361 = vmatpush.msra.mxu0 %v179
    %362 = vmatpush.msra.mxu0 %v175
    %363 = vmatpush.msra.mxu0 %v171
    %364 = vmatpush.msra.mxu0 %v167
    %365 = vmatpush.msra.mxu0 %v163
    %366 = vmatpush.msra.mxu0 %v159
    %367 = vmatpush.msra.mxu0 %v155
    %368 = vmatpush.msra.mxu0 %v151
    %369 = vmatpush.msra.mxu0 %v147
    %370 = vmatmul.f32.gmra.mxu0 %v211
    %v371 = vpop.f32.mrf.mxu0
    %v372 = vadd.f32 %v352, %v371
    %373 = vdwg.mxu0
    %v374 = vld [vmem:[%s0] sm:$0xff]
    %v375 = vld [vmem:[%s0 + $0x8] sm:$0xff]
    %v376 = vld [vmem:[%s0 + $0x10] sm:$0xff]
    %v377 = vld [vmem:[%s0 + $0x18] sm:$0xff]
    %v378 = vld [vmem:[%s0 + $0x20] sm:$0xff]
    %v379 = vld [vmem:[%s0 + $0x28] sm:$0xff]
    %v380 = vld [vmem:[%s0 + $0x30] sm:$0xff]
    %v381 = vld [vmem:[%s0 + $0x38] sm:$0xff]
    %v382 = vld [vmem:[%s0 + $0x40] sm:$0xff]
    %v383 = vld [vmem:[%s0 + $0x48] sm:$0xff]
    %v384 = vld [vmem:[%s0 + $0x50] sm:$0xff]
    %v385 = vld [vmem:[%s0 + $0x58] sm:$0xff]
    %v386 = vld [vmem:[%s0 + $0x60] sm:$0xff]
    %v387 = vld [vmem:[%s0 + $0x68] sm:$0xff]
    %v388 = vld [vmem:[%s0 + $0x70] sm:$0xff]
    %v389 = vld [vmem:[%s0 + $0x78] sm:$0xff]
    %v390 = vld [vmem:[%s0 + $0x80] sm:$0xff]
    %v391 = vld [vmem:[%s0 + $0x88] sm:$0xff]
    %v392 = vld [vmem:[%s0 + $0x90] sm:$0xff]
    %v393 = vld [vmem:[%s0 + $0x98] sm:$0xff]
    %v394 = vld [vmem:[%s0 + $0xa0] sm:$0xff]
    %v395 = vld [vmem:[%s0 + $0xa8] sm:$0xff]
    %v396 = vld [vmem:[%s0 + $0xb0] sm:$0xff]
    %v397 = vld [vmem:[%s0 + $0xb8] sm:$0xff]
    %v398 = vld [vmem:[%s0 + $0xc0] sm:$0xff]
    %v399 = vld [vmem:[%s0 + $0xc8] sm:$0xff]
    %v400 = vld [vmem:[%s0 + $0xd0] sm:$0xff]
    %v401 = vld [vmem:[%s0 + $0xd8] sm:$0xff]
    %v402 = vld [vmem:[%s0 + $0xe0] sm:$0xff]
    %v403 = vld [vmem:[%s0 + $0xe8] sm:$0xff]
    %v404 = vld [vmem:[%s0 + $0xf0] sm:$0xff]
    %v405 = vld [vmem:[%s0 + $0xf8] sm:$0xff]
    %v406 = vld [vmem:[%s0 + $0x100] sm:$0xff]
    %v407 = vld [vmem:[%s0 + $0x108] sm:$0xff]
    %v408 = vld [vmem:[%s0 + $0x110] sm:$0xff]
    %v409 = vld [vmem:[%s0 + $0x118] sm:$0xff]
    %v410 = vld [vmem:[%s0 + $0x120] sm:$0xff]
    %v411 = vld [vmem:[%s0 + $0x128] sm:$0xff]
    %v412 = vld [vmem:[%s0 + $0x130] sm:$0xff]
    %v413 = vld [vmem:[%s0 + $0x138] sm:$0xff]
    %v414 = vld [vmem:[%s0 + $0x140] sm:$0xff]
    %v415 = vld [vmem:[%s0 + $0x148] sm:$0xff]
    %v416 = vld [vmem:[%s0 + $0x150] sm:$0xff]
    %v417 = vld [vmem:[%s0 + $0x158] sm:$0xff]
    %v418 = vld [vmem:[%s0 + $0x160] sm:$0xff]
    %v419 = vld [vmem:[%s0 + $0x168] sm:$0xff]
    %v420 = vld [vmem:[%s0 + $0x170] sm:$0xff]
    %v421 = vld [vmem:[%s0 + $0x178] sm:$0xff]
    %v422 = vld [vmem:[%s0 + $0x180] sm:$0xff]
    %v423 = vld [vmem:[%s0 + $0x188] sm:$0xff]
    %v424 = vld [vmem:[%s0 + $0x190] sm:$0xff]
    %v425 = vld [vmem:[%s0 + $0x198] sm:$0xff]
    %v426 = vld [vmem:[%s0 + $0x1a0] sm:$0xff]
    %v427 = vld [vmem:[%s0 + $0x1a8] sm:$0xff]
    %v428 = vld [vmem:[%s0 + $0x1b0] sm:$0xff]
    %v429 = vld [vmem:[%s0 + $0x1b8] sm:$0xff]
    %v430 = vld [vmem:[%s0 + $0x1c0] sm:$0xff]
    %v431 = vld [vmem:[%s0 + $0x1c8] sm:$0xff]
    %v432 = vld [vmem:[%s0 + $0x1d0] sm:$0xff]
    %v433 = vld [vmem:[%s0 + $0x1d8] sm:$0xff]
    %v434 = vld [vmem:[%s0 + $0x1e0] sm:$0xff]
    %v435 = vld [vmem:[%s0 + $0x1e8] sm:$0xff]
    %v436 = vld [vmem:[%s0 + $0x1f0] sm:$0xff]
    %v437 = vld [vmem:[%s0 + $0x1f8] sm:$0xff]
    %v438 = vld [vmem:[#allocation4] sm:$0xff]
    %v439 = vld [vmem:[#allocation4 + $0x8] sm:$0xff]
    %v440 = vld [vmem:[#allocation4 + $0x10] sm:$0xff]
    %v441 = vld [vmem:[#allocation4 + $0x18] sm:$0xff]
    %v442 = vld [vmem:[#allocation4 + $0x20] sm:$0xff]
    %v443 = vld [vmem:[#allocation4 + $0x28] sm:$0xff]
    %v444 = vld [vmem:[#allocation4 + $0x30] sm:$0xff]
    %v445 = vld [vmem:[#allocation4 + $0x38] sm:$0xff]
    %v446 = vld [vmem:[#allocation4 + $0x40] sm:$0xff]
    %v447 = vld [vmem:[#allocation4 + $0x48] sm:$0xff]
    %v448 = vld [vmem:[#allocation4 + $0x50] sm:$0xff]
    %v449 = vld [vmem:[#allocation4 + $0x58] sm:$0xff]
    %v450 = vld [vmem:[#allocation4 + $0x60] sm:$0xff]
    %v451 = vld [vmem:[#allocation4 + $0x68] sm:$0xff]
    %v452 = vld [vmem:[#allocation4 + $0x70] sm:$0xff]
    %v453 = vld [vmem:[#allocation4 + $0x78] sm:$0xff]
    %v454 = vld [vmem:[#allocation4 + $0x80] sm:$0xff]
    %v455 = vld [vmem:[#allocation4 + $0x88] sm:$0xff]
    %v456 = vld [vmem:[#allocation4 + $0x90] sm:$0xff]
    %v457 = vld [vmem:[#allocation4 + $0x98] sm:$0xff]
    %v458 = vld [vmem:[#allocation4 + $0xa0] sm:$0xff]
    %v459 = vld [vmem:[#allocation4 + $0xa8] sm:$0xff]
    %v460 = vld [vmem:[#allocation4 + $0xb0] sm:$0xff]
    %v461 = vld [vmem:[#allocation4 + $0xb8] sm:$0xff]
    %v462 = vld [vmem:[#allocation4 + $0xc0] sm:$0xff]
    %v463 = vld [vmem:[#allocation4 + $0xc8] sm:$0xff]
    %v464 = vld [vmem:[#allocation4 + $0xd0] sm:$0xff]
    %v465 = vld [vmem:[#allocation4 + $0xd8] sm:$0xff]
    %v466 = vld [vmem:[#allocation4 + $0xe0] sm:$0xff]
    %v467 = vld [vmem:[#allocation4 + $0xe8] sm:$0xff]
    %v468 = vld [vmem:[#allocation4 + $0xf0] sm:$0xff]
    %v469 = vld [vmem:[#allocation4 + $0xf8] sm:$0xff]
    %v470 = vld [vmem:[#allocation4 + $0x100] sm:$0xff]
    %v471 = vld [vmem:[#allocation4 + $0x108] sm:$0xff]
    %v472 = vld [vmem:[#allocation4 + $0x110] sm:$0xff]
    %v473 = vld [vmem:[#allocation4 + $0x118] sm:$0xff]
    %v474 = vld [vmem:[#allocation4 + $0x120] sm:$0xff]
    %v475 = vld [vmem:[#allocation4 + $0x128] sm:$0xff]
    %v476 = vld [vmem:[#allocation4 + $0x130] sm:$0xff]
    %v477 = vld [vmem:[#allocation4 + $0x138] sm:$0xff]
    %v478 = vld [vmem:[#allocation4 + $0x140] sm:$0xff]
    %v479 = vld [vmem:[#allocation4 + $0x148] sm:$0xff]
    %v480 = vld [vmem:[#allocation4 + $0x150] sm:$0xff]
    %v481 = vld [vmem:[#allocation4 + $0x158] sm:$0xff]
    %v482 = vld [vmem:[#allocation4 + $0x160] sm:$0xff]
    %v483 = vld [vmem:[#allocation4 + $0x168] sm:$0xff]
    %v484 = vld [vmem:[#allocation4 + $0x170] sm:$0xff]
    %v485 = vld [vmem:[#allocation4 + $0x178] sm:$0xff]
    %v486 = vld [vmem:[#allocation4 + $0x180] sm:$0xff]
    %v487 = vld [vmem:[#allocation4 + $0x188] sm:$0xff]
    %v488 = vld [vmem:[#allocation4 + $0x190] sm:$0xff]
    %v489 = vld [vmem:[#allocation4 + $0x198] sm:$0xff]
    %v490 = vld [vmem:[#allocation4 + $0x1a0] sm:$0xff]
    %v491 = vld [vmem:[#allocation4 + $0x1a8] sm:$0xff]
    %v492 = vld [vmem:[#allocation4 + $0x1b0] sm:$0xff]
    %v493 = vld [vmem:[#allocation4 + $0x1b8] sm:$0xff]
    %v494 = vld [vmem:[#allocation4 + $0x1c0] sm:$0xff]
    %v495 = vld [vmem:[#allocation4 + $0x1c8] sm:$0xff]
    %v496 = vld [vmem:[#allocation4 + $0x1d0] sm:$0xff]
    %v497 = vld [vmem:[#allocation4 + $0x1d8] sm:$0xff]
    %v498 = vld [vmem:[#allocation4 + $0x1e0] sm:$0xff]
    %v499 = vld [vmem:[#allocation4 + $0x1e8] sm:$0xff]
    %v500 = vld [vmem:[#allocation4 + $0x1f0] sm:$0xff]
    %v501 = vld [vmem:[#allocation4 + $0x1f8] sm:$0xff]
    %v502 = vld [vmem:[#allocation4 + $0x200] sm:$0xff]
    %v503 = vld [vmem:[#allocation4 + $0x208] sm:$0xff]
    %v504 = vld [vmem:[#allocation4 + $0x210] sm:$0xff]
    %v505 = vld [vmem:[#allocation4 + $0x218] sm:$0xff]
    %v506 = vld [vmem:[#allocation4 + $0x220] sm:$0xff]
    %v507 = vld [vmem:[#allocation4 + $0x228] sm:$0xff]
    %v508 = vld [vmem:[#allocation4 + $0x230] sm:$0xff]
    %v509 = vld [vmem:[#allocation4 + $0x238] sm:$0xff]
    %v510 = vld [vmem:[#allocation4 + $0x240] sm:$0xff]
    %v511 = vld [vmem:[#allocation4 + $0x248] sm:$0xff]
    %v512 = vld [vmem:[#allocation4 + $0x250] sm:$0xff]
    %v513 = vld [vmem:[#allocation4 + $0x258] sm:$0xff]
    %v514 = vld [vmem:[#allocation4 + $0x260] sm:$0xff]
    %v515 = vld [vmem:[#allocation4 + $0x268] sm:$0xff]
    %v516 = vld [vmem:[#allocation4 + $0x270] sm:$0xff]
    %v517 = vld [vmem:[#allocation4 + $0x278] sm:$0xff]
    %v518 = vld [vmem:[#allocation4 + $0x280] sm:$0xff]
    %v519 = vld [vmem:[#allocation4 + $0x288] sm:$0xff]
    %v520 = vld [vmem:[#allocation4 + $0x290] sm:$0xff]
    %v521 = vld [vmem:[#allocation4 + $0x298] sm:$0xff]
    %v522 = vld [vmem:[#allocation4 + $0x2a0] sm:$0xff]
    %v523 = vld [vmem:[#allocation4 + $0x2a8] sm:$0xff]
    %v524 = vld [vmem:[#allocation4 + $0x2b0] sm:$0xff]
    %v525 = vld [vmem:[#allocation4 + $0x2b8] sm:$0xff]
    %v526 = vld [vmem:[#allocation4 + $0x2c0] sm:$0xff]
    %v527 = vld [vmem:[#allocation4 + $0x2c8] sm:$0xff]
    %v528 = vld [vmem:[#allocation4 + $0x2d0] sm:$0xff]
    %v529 = vld [vmem:[#allocation4 + $0x2d8] sm:$0xff]
    %v530 = vld [vmem:[#allocation4 + $0x2e0] sm:$0xff]
    %v531 = vld [vmem:[#allocation4 + $0x2e8] sm:$0xff]
    %v532 = vld [vmem:[#allocation4 + $0x2f0] sm:$0xff]
    %v533 = vld [vmem:[#allocation4 + $0x2f8] sm:$0xff]
    %v534 = vld [vmem:[#allocation4 + $0x300] sm:$0xff]
    %v535 = vld [vmem:[#allocation4 + $0x308] sm:$0xff]
    %v536 = vld [vmem:[#allocation4 + $0x310] sm:$0xff]
    %v537 = vld [vmem:[#allocation4 + $0x318] sm:$0xff]
    %v538 = vld [vmem:[#allocation4 + $0x320] sm:$0xff]
    %v539 = vld [vmem:[#allocation4 + $0x328] sm:$0xff]
    %v540 = vld [vmem:[#allocation4 + $0x330] sm:$0xff]
    %v541 = vld [vmem:[#allocation4 + $0x338] sm:$0xff]
    %v542 = vld [vmem:[#allocation4 + $0x340] sm:$0xff]
    %v543 = vld [vmem:[#allocation4 + $0x348] sm:$0xff]
    %v544 = vld [vmem:[#allocation4 + $0x350] sm:$0xff]
    %v545 = vld [vmem:[#allocation4 + $0x358] sm:$0xff]
    %v546 = vld [vmem:[#allocation4 + $0x360] sm:$0xff]
    %v547 = vld [vmem:[#allocation4 + $0x368] sm:$0xff]
    %v548 = vld [vmem:[#allocation4 + $0x370] sm:$0xff]
    %v549 = vld [vmem:[#allocation4 + $0x378] sm:$0xff]
    %v550 = vld [vmem:[#allocation4 + $0x380] sm:$0xff]
    %v551 = vld [vmem:[#allocation4 + $0x388] sm:$0xff]
    %v552 = vld [vmem:[#allocation4 + $0x390] sm:$0xff]
    %v553 = vld [vmem:[#allocation4 + $0x398] sm:$0xff]
    %v554 = vld [vmem:[#allocation4 + $0x3a0] sm:$0xff]
    %v555 = vld [vmem:[#allocation4 + $0x3a8] sm:$0xff]
    %v556 = vld [vmem:[#allocation4 + $0x3b0] sm:$0xff]
    %v557 = vld [vmem:[#allocation4 + $0x3b8] sm:$0xff]
    %v558 = vld [vmem:[#allocation4 + $0x3c0] sm:$0xff]
    %v559 = vld [vmem:[#allocation4 + $0x3c8] sm:$0xff]
    %v560 = vld [vmem:[#allocation4 + $0x3d0] sm:$0xff]
    %v561 = vld [vmem:[#allocation4 + $0x3d8] sm:$0xff]
    %v562 = vld [vmem:[#allocation4 + $0x3e0] sm:$0xff]
    %v563 = vld [vmem:[#allocation4 + $0x3e8] sm:$0xff]
    %v564 = vld [vmem:[#allocation4 + $0x3f0] sm:$0xff]
    %v565 = vld [vmem:[#allocation4 + $0x3f8] sm:$0xff]
    %v566 = vperm.slane %v252, 0
    %v567 = vperm.slane %v292, 0
    %v568 = vperm.slane %v332, 0
    %v569 = vperm.slane %v372, 0
    %v570 = vperm.slane %v252, 1
    %v571 = vperm.slane %v292, 1
    %v572 = vperm.slane %v332, 1
    %v573 = vperm.slane %v372, 1
    %574 = vmatpush.msra.mxu0 %v498
    %575 = vmatpush.msra.mxu0 %v494
    %576 = vmatpush.msra.mxu0 %v490
    %577 = vmatpush.msra.mxu0 %v486
    %578 = vmatpush.msra.mxu0 %v482
    %579 = vmatpush.msra.mxu0 %v478
    %580 = vmatpush.msra.mxu0 %v474
    %581 = vmatpush.msra.mxu0 %v470
    %582 = vmatpush.msra.mxu0 %v466
    %583 = vmatpush.msra.mxu0 %v462
    %584 = vmatpush.msra.mxu0 %v458
    %585 = vmatpush.msra.mxu0 %v454
    %586 = vmatpush.msra.mxu0 %v450
    %587 = vmatpush.msra.mxu0 %v446
    %588 = vmatpush.msra.mxu0 %v442
    %589 = vmatpush.msra.mxu0 %v438
    %590 = vmatmul.f32.gmra.mxu0 %v374
    %v591 = vpop.f32.mrf.mxu0
    %v592 = vadd.f32 %v566, %v591
    %593 = vmatmul.f32.gmra.mxu0 %v376
    %v594 = vpop.f32.mrf.mxu0
    %v595 = vadd.f32 %v566, %v594
    %596 = vmatmul.f32.gmra.mxu0 %v378
    %v597 = vpop.f32.mrf.mxu0
    %v598 = vadd.f32 %v566, %v597
    %599 = vmatmul.f32.gmra.mxu0 %v380
    %v600 = vpop.f32.mrf.mxu0
    %v601 = vadd.f32 %v566, %v600
    %602 = vmatmul.f32.gmra.mxu0 %v382
    %v603 = vpop.f32.mrf.mxu0
    %v604 = vadd.f32 %v566, %v603
    %605 = vmatmul.f32.gmra.mxu0 %v384
    %v606 = vpop.f32.mrf.mxu0
    %v607 = vadd.f32 %v566, %v606
    %608 = vmatmul.f32.gmra.mxu0 %v386
    %v609 = vpop.f32.mrf.mxu0
    %v610 = vadd.f32 %v566, %v609
    %611 = vmatmul.f32.gmra.mxu0 %v388
    %v612 = vpop.f32.mrf.mxu0
    %v613 = vadd.f32 %v566, %v612
    %614 = vmatmul.f32.gmra.mxu0 %v390
    %v615 = vpop.f32.mrf.mxu0
    %v616 = vadd.f32 %v566, %v615
    %617 = vmatmul.f32.gmra.mxu0 %v392
    %v618 = vpop.f32.mrf.mxu0
    %v619 = vadd.f32 %v566, %v618
    %620 = vmatmul.f32.gmra.mxu0 %v394
    %v621 = vpop.f32.mrf.mxu0
    %v622 = vadd.f32 %v566, %v621
    %623 = vmatmul.f32.gmra.mxu0 %v396
    %v624 = vpop.f32.mrf.mxu0
    %v625 = vadd.f32 %v566, %v624
    %626 = vmatmul.f32.gmra.mxu0 %v398
    %v627 = vpop.f32.mrf.mxu0
    %v628 = vadd.f32 %v566, %v627
    %629 = vmatmul.f32.gmra.mxu0 %v400
    %v630 = vpop.f32.mrf.mxu0
    %v631 = vadd.f32 %v566, %v630
    %632 = vmatmul.f32.gmra.mxu0 %v402
    %v633 = vpop.f32.mrf.mxu0
    %v634 = vadd.f32 %v566, %v633
    %635 = vmatmul.f32.gmra.mxu0 %v404
    %v636 = vpop.f32.mrf.mxu0
    %v637 = vadd.f32 %v566, %v636
    %638 = vmatmul.f32.gmra.mxu0 %v406
    %v639 = vpop.f32.mrf.mxu0
    %v640 = vadd.f32 %v570, %v639
    %641 = vmatmul.f32.gmra.mxu0 %v408
    %v642 = vpop.f32.mrf.mxu0
    %v643 = vadd.f32 %v570, %v642
    %644 = vmatmul.f32.gmra.mxu0 %v410
    %v645 = vpop.f32.mrf.mxu0
    %v646 = vadd.f32 %v570, %v645
    %647 = vmatmul.f32.gmra.mxu0 %v412
    %v648 = vpop.f32.mrf.mxu0
    %v649 = vadd.f32 %v570, %v648
    %650 = vmatmul.f32.gmra.mxu0 %v414
    %v651 = vpop.f32.mrf.mxu0
    %v652 = vadd.f32 %v570, %v651
    %653 = vmatmul.f32.gmra.mxu0 %v416
    %v654 = vpop.f32.mrf.mxu0
    %v655 = vadd.f32 %v570, %v654
    %656 = vmatmul.f32.gmra.mxu0 %v418
    %v657 = vpop.f32.mrf.mxu0
    %v658 = vadd.f32 %v570, %v657
    %659 = vmatmul.f32.gmra.mxu0 %v420
    %v660 = vpop.f32.mrf.mxu0
    %v661 = vadd.f32 %v570, %v660
    %662 = vmatmul.f32.gmra.mxu0 %v422
    %v663 = vpop.f32.mrf.mxu0
    %v664 = vadd.f32 %v570, %v663
    %665 = vmatmul.f32.gmra.mxu0 %v424
    %v666 = vpop.f32.mrf.mxu0
    %v667 = vadd.f32 %v570, %v666
    %668 = vmatmul.f32.gmra.mxu0 %v426
    %v669 = vpop.f32.mrf.mxu0
    %v670 = vadd.f32 %v570, %v669
    %671 = vmatmul.f32.gmra.mxu0 %v428
    %v672 = vpop.f32.mrf.mxu0
    %v673 = vadd.f32 %v570, %v672
    %674 = vmatmul.f32.gmra.mxu0 %v430
    %v675 = vpop.f32.mrf.mxu0
    %v676 = vadd.f32 %v570, %v675
    %677 = vmatmul.f32.gmra.mxu0 %v432
    %v678 = vpop.f32.mrf.mxu0
    %v679 = vadd.f32 %v570, %v678
    %680 = vmatmul.f32.gmra.mxu0 %v434
    %v681 = vpop.f32.mrf.mxu0
    %v682 = vadd.f32 %v570, %v681
    %683 = vmatmul.f32.gmra.mxu0 %v436
    %v684 = vpop.f32.mrf.mxu0
    %v685 = vadd.f32 %v570, %v684
    %686 = vdwg.mxu0
    %687 = vmatpush.msra.mxu0 %v562
    %688 = vmatpush.msra.mxu0 %v558
    %689 = vmatpush.msra.mxu0 %v554
    %690 = vmatpush.msra.mxu0 %v550
    %691 = vmatpush.msra.mxu0 %v546
    %692 = vmatpush.msra.mxu0 %v542
    %693 = vmatpush.msra.mxu0 %v538
    %694 = vmatpush.msra.mxu0 %v534
    %695 = vmatpush.msra.mxu0 %v530
    %696 = vmatpush.msra.mxu0 %v526
    %697 = vmatpush.msra.mxu0 %v522
    %698 = vmatpush.msra.mxu0 %v518
    %699 = vmatpush.msra.mxu0 %v514
    %700 = vmatpush.msra.mxu0 %v510
    %701 = vmatpush.msra.mxu0 %v506
    %702 = vmatpush.msra.mxu0 %v502
    %703 = vmatmul.f32.gmra.mxu0 %v375
    %v704 = vpop.f32.mrf.mxu0
    %v705 = vadd.f32 %v592, %v704
    %706 = vmatmul.f32.gmra.mxu0 %v377
    %v707 = vpop.f32.mrf.mxu0
    %v708 = vadd.f32 %v595, %v707
    %709 = vmatmul.f32.gmra.mxu0 %v379
    %v710 = vpop.f32.mrf.mxu0
    %v711 = vadd.f32 %v598, %v710
    %712 = vmatmul.f32.gmra.mxu0 %v381
    %v713 = vpop.f32.mrf.mxu0
    %v714 = vadd.f32 %v601, %v713
    %715 = vmatmul.f32.gmra.mxu0 %v383
    %v716 = vpop.f32.mrf.mxu0
    %v717 = vadd.f32 %v604, %v716
    %718 = vmatmul.f32.gmra.mxu0 %v385
    %v719 = vpop.f32.mrf.mxu0
    %v720 = vadd.f32 %v607, %v719
    %721 = vmatmul.f32.gmra.mxu0 %v387
    %v722 = vpop.f32.mrf.mxu0
    %v723 = vadd.f32 %v610, %v722
    %724 = vmatmul.f32.gmra.mxu0 %v389
    %v725 = vpop.f32.mrf.mxu0
    %v726 = vadd.f32 %v613, %v725
    %727 = vmatmul.f32.gmra.mxu0 %v391
    %v728 = vpop.f32.mrf.mxu0
    %v729 = vadd.f32 %v616, %v728
    %730 = vmatmul.f32.gmra.mxu0 %v393
    %v731 = vpop.f32.mrf.mxu0
    %v732 = vadd.f32 %v619, %v731
    %733 = vmatmul.f32.gmra.mxu0 %v395
    %v734 = vpop.f32.mrf.mxu0
    %v735 = vadd.f32 %v622, %v734
    %736 = vmatmul.f32.gmra.mxu0 %v397
    %v737 = vpop.f32.mrf.mxu0
    %v738 = vadd.f32 %v625, %v737
    %739 = vmatmul.f32.gmra.mxu0 %v399
    %v740 = vpop.f32.mrf.mxu0
    %v741 = vadd.f32 %v628, %v740
    %742 = vmatmul.f32.gmra.mxu0 %v401
    %v743 = vpop.f32.mrf.mxu0
    %v744 = vadd.f32 %v631, %v743
    %745 = vmatmul.f32.gmra.mxu0 %v403
    %v746 = vpop.f32.mrf.mxu0
    %v747 = vadd.f32 %v634, %v746
    %748 = vmatmul.f32.gmra.mxu0 %v405
    %v749 = vpop.f32.mrf.mxu0
    %v750 = vadd.f32 %v637, %v749
    %751 = vmatmul.f32.gmra.mxu0 %v407
    %v752 = vpop.f32.mrf.mxu0
    %v753 = vadd.f32 %v640, %v752
    %754 = vmatmul.f32.gmra.mxu0 %v409
    %v755 = vpop.f32.mrf.mxu0
    %v756 = vadd.f32 %v643, %v755
    %757 = vmatmul.f32.gmra.mxu0 %v411
    %v758 = vpop.f32.mrf.mxu0
    %v759 = vadd.f32 %v646, %v758
    %760 = vmatmul.f32.gmra.mxu0 %v413
    %v761 = vpop.f32.mrf.mxu0
    %v762 = vadd.f32 %v649, %v761
    %763 = vmatmul.f32.gmra.mxu0 %v415
    %v764 = vpop.f32.mrf.mxu0
    %v765 = vadd.f32 %v652, %v764
    %766 = vmatmul.f32.gmra.mxu0 %v417
    %v767 = vpop.f32.mrf.mxu0
    %v768 = vadd.f32 %v655, %v767
    %769 = vmatmul.f32.gmra.mxu0 %v419
    %v770 = vpop.f32.mrf.mxu0
    %v771 = vadd.f32 %v658, %v770
    %772 = vmatmul.f32.gmra.mxu0 %v421
    %v773 = vpop.f32.mrf.mxu0
    %v774 = vadd.f32 %v661, %v773
    %775 = vmatmul.f32.gmra.mxu0 %v423
    %v776 = vpop.f32.mrf.mxu0
    %v777 = vadd.f32 %v664, %v776
    %778 = vmatmul.f32.gmra.mxu0 %v425
    %v779 = vpop.f32.mrf.mxu0
    %v780 = vadd.f32 %v667, %v779
    %781 = vmatmul.f32.gmra.mxu0 %v427
    %v782 = vpop.f32.mrf.mxu0
    %v783 = vadd.f32 %v670, %v782
    %784 = vmatmul.f32.gmra.mxu0 %v429
    %v785 = vpop.f32.mrf.mxu0
    %v786 = vadd.f32 %v673, %v785
    %787 = vmatmul.f32.gmra.mxu0 %v431
    %v788 = vpop.f32.mrf.mxu0
    %v789 = vadd.f32 %v676, %v788
    %790 = vmatmul.f32.gmra.mxu0 %v433
    %v791 = vpop.f32.mrf.mxu0
    %v792 = vadd.f32 %v679, %v791
    %793 = vmatmul.f32.gmra.mxu0 %v435
    %v794 = vpop.f32.mrf.mxu0
    %v795 = vadd.f32 %v682, %v794
    %796 = vmatmul.f32.gmra.mxu0 %v437
    %v797 = vpop.f32.mrf.mxu0
    %v798 = vadd.f32 %v685, %v797
    %799 = vdwg.mxu0
    %800 = vmatpush.msra.mxu0 %v499
    %801 = vmatpush.msra.mxu0 %v495
    %802 = vmatpush.msra.mxu0 %v491
    %803 = vmatpush.msra.mxu0 %v487
    %804 = vmatpush.msra.mxu0 %v483
    %805 = vmatpush.msra.mxu0 %v479
    %806 = vmatpush.msra.mxu0 %v475
    %807 = vmatpush.msra.mxu0 %v471
    %808 = vmatpush.msra.mxu0 %v467
    %809 = vmatpush.msra.mxu0 %v463
    %810 = vmatpush.msra.mxu0 %v459
    %811 = vmatpush.msra.mxu0 %v455
    %812 = vmatpush.msra.mxu0 %v451
    %813 = vmatpush.msra.mxu0 %v447
    %814 = vmatpush.msra.mxu0 %v443
    %815 = vmatpush.msra.mxu0 %v439
    %816 = vmatmul.f32.gmra.mxu0 %v374
    %v817 = vpop.f32.mrf.mxu0
    %v818 = vadd.f32 %v567, %v817
    %819 = vmatmul.f32.gmra.mxu0 %v376
    %v820 = vpop.f32.mrf.mxu0
    %v821 = vadd.f32 %v567, %v820
    %822 = vmatmul.f32.gmra.mxu0 %v378
    %v823 = vpop.f32.mrf.mxu0
    %v824 = vadd.f32 %v567, %v823
    %825 = vmatmul.f32.gmra.mxu0 %v380
    %v826 = vpop.f32.mrf.mxu0
    %v827 = vadd.f32 %v567, %v826
    %828 = vmatmul.f32.gmra.mxu0 %v382
    %v829 = vpop.f32.mrf.mxu0
    %v830 = vadd.f32 %v567, %v829
    %831 = vmatmul.f32.gmra.mxu0 %v384
    %v832 = vpop.f32.mrf.mxu0
    %v833 = vadd.f32 %v567, %v832
    %834 = vmatmul.f32.gmra.mxu0 %v386
    %v835 = vpop.f32.mrf.mxu0
    %v836 = vadd.f32 %v567, %v835
    %837 = vmatmul.f32.gmra.mxu0 %v388
    %v838 = vpop.f32.mrf.mxu0
    %v839 = vadd.f32 %v567, %v838
    %840 = vmatmul.f32.gmra.mxu0 %v390
    %v841 = vpop.f32.mrf.mxu0
    %v842 = vadd.f32 %v567, %v841
    %843 = vmatmul.f32.gmra.mxu0 %v392
    %v844 = vpop.f32.mrf.mxu0
    %v845 = vadd.f32 %v567, %v844
    %846 = vmatmul.f32.gmra.mxu0 %v394
    %v847 = vpop.f32.mrf.mxu0
    %v848 = vadd.f32 %v567, %v847
    %849 = vmatmul.f32.gmra.mxu0 %v396
    %v850 = vpop.f32.mrf.mxu0
    %v851 = vadd.f32 %v567, %v850
    %852 = vmatmul.f32.gmra.mxu0 %v398
    %v853 = vpop.f32.mrf.mxu0
    %v854 = vadd.f32 %v567, %v853
    %855 = vmatmul.f32.gmra.mxu0 %v400
    %v856 = vpop.f32.mrf.mxu0
    %v857 = vadd.f32 %v567, %v856
    %858 = vmatmul.f32.gmra.mxu0 %v402
    %v859 = vpop.f32.mrf.mxu0
    %v860 = vadd.f32 %v567, %v859
    %861 = vmatmul.f32.gmra.mxu0 %v404
    %v862 = vpop.f32.mrf.mxu0
    %v863 = vadd.f32 %v567, %v862
    %864 = vmatmul.f32.gmra.mxu0 %v406
    %v865 = vpop.f32.mrf.mxu0
    %v866 = vadd.f32 %v571, %v865
    %867 = vmatmul.f32.gmra.mxu0 %v408
    %v868 = vpop.f32.mrf.mxu0
    %v869 = vadd.f32 %v571, %v868
    %870 = vmatmul.f32.gmra.mxu0 %v410
    %v871 = vpop.f32.mrf.mxu0
    %v872 = vadd.f32 %v571, %v871
    %873 = vmatmul.f32.gmra.mxu0 %v412
    %v874 = vpop.f32.mrf.mxu0
    %v875 = vadd.f32 %v571, %v874
    %876 = vmatmul.f32.gmra.mxu0 %v414
    %v877 = vpop.f32.mrf.mxu0
    %v878 = vadd.f32 %v571, %v877
    %879 = vmatmul.f32.gmra.mxu0 %v416
    %v880 = vpop.f32.mrf.mxu0
    %v881 = vadd.f32 %v571, %v880
    %882 = vmatmul.f32.gmra.mxu0 %v418
    %v883 = vpop.f32.mrf.mxu0
    %v884 = vadd.f32 %v571, %v883
    %885 = vmatmul.f32.gmra.mxu0 %v420
    %v886 = vpop.f32.mrf.mxu0
    %v887 = vadd.f32 %v571, %v886
    %888 = vmatmul.f32.gmra.mxu0 %v422
    %v889 = vpop.f32.mrf.mxu0
    %v890 = vadd.f32 %v571, %v889
    %891 = vmatmul.f32.gmra.mxu0 %v424
    %v892 = vpop.f32.mrf.mxu0
    %v893 = vadd.f32 %v571, %v892
    %894 = vmatmul.f32.gmra.mxu0 %v426
    %v895 = vpop.f32.mrf.mxu0
    %v896 = vadd.f32 %v571, %v895
    %897 = vmatmul.f32.gmra.mxu0 %v428
    %v898 = vpop.f32.mrf.mxu0
    %v899 = vadd.f32 %v571, %v898
    %900 = vmatmul.f32.gmra.mxu0 %v430
    %v901 = vpop.f32.mrf.mxu0
    %v902 = vadd.f32 %v571, %v901
    %903 = vmatmul.f32.gmra.mxu0 %v432
    %v904 = vpop.f32.mrf.mxu0
    %v905 = vadd.f32 %v571, %v904
    %906 = vmatmul.f32.gmra.mxu0 %v434
    %v907 = vpop.f32.mrf.mxu0
    %v908 = vadd.f32 %v571, %v907
    %909 = vmatmul.f32.gmra.mxu0 %v436
    %v910 = vpop.f32.mrf.mxu0
    %v911 = vadd.f32 %v571, %v910
    %912 = vdwg.mxu0
    %913 = vmatpush.msra.mxu0 %v563
    %914 = vmatpush.msra.mxu0 %v559
    %915 = vmatpush.msra.mxu0 %v555
    %916 = vmatpush.msra.mxu0 %v551
    %917 = vmatpush.msra.mxu0 %v547
    %918 = vmatpush.msra.mxu0 %v543
    %919 = vmatpush.msra.mxu0 %v539
    %920 = vmatpush.msra.mxu0 %v535
    %921 = vmatpush.msra.mxu0 %v531
    %922 = vmatpush.msra.mxu0 %v527
    %923 = vmatpush.msra.mxu0 %v523
    %924 = vmatpush.msra.mxu0 %v519
    %925 = vmatpush.msra.mxu0 %v515
    %926 = vmatpush.msra.mxu0 %v511
    %927 = vmatpush.msra.mxu0 %v507
    %928 = vmatpush.msra.mxu0 %v503
    %929 = vmatmul.f32.gmra.mxu0 %v375
    %v930 = vpop.f32.mrf.mxu0
    %v931 = vadd.f32 %v818, %v930
    %932 = vmatmul.f32.gmra.mxu0 %v377
    %v933 = vpop.f32.mrf.mxu0
    %v934 = vadd.f32 %v821, %v933
    %935 = vmatmul.f32.gmra.mxu0 %v379
    %v936 = vpop.f32.mrf.mxu0
    %v937 = vadd.f32 %v824, %v936
    %938 = vmatmul.f32.gmra.mxu0 %v381
    %v939 = vpop.f32.mrf.mxu0
    %v940 = vadd.f32 %v827, %v939
    %941 = vmatmul.f32.gmra.mxu0 %v383
    %v942 = vpop.f32.mrf.mxu0
    %v943 = vadd.f32 %v830, %v942
    %944 = vmatmul.f32.gmra.mxu0 %v385
    %v945 = vpop.f32.mrf.mxu0
    %v946 = vadd.f32 %v833, %v945
    %947 = vmatmul.f32.gmra.mxu0 %v387
    %v948 = vpop.f32.mrf.mxu0
    %v949 = vadd.f32 %v836, %v948
    %950 = vmatmul.f32.gmra.mxu0 %v389
    %v951 = vpop.f32.mrf.mxu0
    %v952 = vadd.f32 %v839, %v951
    %953 = vmatmul.f32.gmra.mxu0 %v391
    %v954 = vpop.f32.mrf.mxu0
    %v955 = vadd.f32 %v842, %v954
    %956 = vmatmul.f32.gmra.mxu0 %v393
    %v957 = vpop.f32.mrf.mxu0
    %v958 = vadd.f32 %v845, %v957
    %959 = vmatmul.f32.gmra.mxu0 %v395
    %v960 = vpop.f32.mrf.mxu0
    %v961 = vadd.f32 %v848, %v960
    %962 = vmatmul.f32.gmra.mxu0 %v397
    %v963 = vpop.f32.mrf.mxu0
    %v964 = vadd.f32 %v851, %v963
    %965 = vmatmul.f32.gmra.mxu0 %v399
    %v966 = vpop.f32.mrf.mxu0
    %v967 = vadd.f32 %v854, %v966
    %968 = vmatmul.f32.gmra.mxu0 %v401
    %v969 = vpop.f32.mrf.mxu0
    %v970 = vadd.f32 %v857, %v969
    %971 = vmatmul.f32.gmra.mxu0 %v403
    %v972 = vpop.f32.mrf.mxu0
    %v973 = vadd.f32 %v860, %v972
    %974 = vmatmul.f32.gmra.mxu0 %v405
    %v975 = vpop.f32.mrf.mxu0
    %v976 = vadd.f32 %v863, %v975
    %977 = vmatmul.f32.gmra.mxu0 %v407
    %v978 = vpop.f32.mrf.mxu0
    %v979 = vadd.f32 %v866, %v978
    %980 = vmatmul.f32.gmra.mxu0 %v409
    %v981 = vpop.f32.mrf.mxu0
    %v982 = vadd.f32 %v869, %v981
    %983 = vmatmul.f32.gmra.mxu0 %v411
    %v984 = vpop.f32.mrf.mxu0
    %v985 = vadd.f32 %v872, %v984
    %986 = vmatmul.f32.gmra.mxu0 %v413
    %v987 = vpop.f32.mrf.mxu0
    %v988 = vadd.f32 %v875, %v987
    %989 = vmatmul.f32.gmra.mxu0 %v415
    %v990 = vpop.f32.mrf.mxu0
    %v991 = vadd.f32 %v878, %v990
    %992 = vmatmul.f32.gmra.mxu0 %v417
    %v993 = vpop.f32.mrf.mxu0
    %v994 = vadd.f32 %v881, %v993
    %995 = vmatmul.f32.gmra.mxu0 %v419
    %v996 = vpop.f32.mrf.mxu0
    %v997 = vadd.f32 %v884, %v996
    %998 = vmatmul.f32.gmra.mxu0 %v421
    %v999 = vpop.f32.mrf.mxu0
    %v1000 = vadd.f32 %v887, %v999
    %1001 = vmatmul.f32.gmra.mxu0 %v423
    %v1002 = vpop.f32.mrf.mxu0
    %v1003 = vadd.f32 %v890, %v1002
    %1004 = vmatmul.f32.gmra.mxu0 %v425
    %v1005 = vpop.f32.mrf.mxu0
    %v1006 = vadd.f32 %v893, %v1005
    %1007 = vmatmul.f32.gmra.mxu0 %v427
    %v1008 = vpop.f32.mrf.mxu0
    %v1009 = vadd.f32 %v896, %v1008
    %1010 = vmatmul.f32.gmra.mxu0 %v429
    %v1011 = vpop.f32.mrf.mxu0
    %v1012 = vadd.f32 %v899, %v1011
    %1013 = vmatmul.f32.gmra.mxu0 %v431
    %v1014 = vpop.f32.mrf.mxu0
    %v1015 = vadd.f32 %v902, %v1014
    %1016 = vmatmul.f32.gmra.mxu0 %v433
    %v1017 = vpop.f32.mrf.mxu0
    %v1018 = vadd.f32 %v905, %v1017
    %1019 = vmatmul.f32.gmra.mxu0 %v435
    %v1020 = vpop.f32.mrf.mxu0
    %v1021 = vadd.f32 %v908, %v1020
    %1022 = vmatmul.f32.gmra.mxu0 %v437
    %v1023 = vpop.f32.mrf.mxu0
    %v1024 = vadd.f32 %v911, %v1023
    %1025 = vdwg.mxu0
    %1026 = vmatpush.msra.mxu0 %v500
    %1027 = vmatpush.msra.mxu0 %v496
    %1028 = vmatpush.msra.mxu0 %v492
    %1029 = vmatpush.msra.mxu0 %v488
    %1030 = vmatpush.msra.mxu0 %v484
    %1031 = vmatpush.msra.mxu0 %v480
    %1032 = vmatpush.msra.mxu0 %v476
    %1033 = vmatpush.msra.mxu0 %v472
    %1034 = vmatpush.msra.mxu0 %v468
    %1035 = vmatpush.msra.mxu0 %v464
    %1036 = vmatpush.msra.mxu0 %v460
    %1037 = vmatpush.msra.mxu0 %v456
    %1038 = vmatpush.msra.mxu0 %v452
    %1039 = vmatpush.msra.mxu0 %v448
    %1040 = vmatpush.msra.mxu0 %v444
    %1041 = vmatpush.msra.mxu0 %v440
    %1042 = vmatmul.f32.gmra.mxu0 %v374
    %v1043 = vpop.f32.mrf.mxu0
    %v1044 = vadd.f32 %v568, %v1043
    %1045 = vmatmul.f32.gmra.mxu0 %v376
    %v1046 = vpop.f32.mrf.mxu0
    %v1047 = vadd.f32 %v568, %v1046
    %1048 = vmatmul.f32.gmra.mxu0 %v378
    %v1049 = vpop.f32.mrf.mxu0
    %v1050 = vadd.f32 %v568, %v1049
    %1051 = vmatmul.f32.gmra.mxu0 %v380
    %v1052 = vpop.f32.mrf.mxu0
    %v1053 = vadd.f32 %v568, %v1052
    %1054 = vmatmul.f32.gmra.mxu0 %v382
    %v1055 = vpop.f32.mrf.mxu0
    %v1056 = vadd.f32 %v568, %v1055
    %1057 = vmatmul.f32.gmra.mxu0 %v384
    %v1058 = vpop.f32.mrf.mxu0
    %v1059 = vadd.f32 %v568, %v1058
    %1060 = vmatmul.f32.gmra.mxu0 %v386
    %v1061 = vpop.f32.mrf.mxu0
    %v1062 = vadd.f32 %v568, %v1061
    %1063 = vmatmul.f32.gmra.mxu0 %v388
    %v1064 = vpop.f32.mrf.mxu0
    %v1065 = vadd.f32 %v568, %v1064
    %1066 = vmatmul.f32.gmra.mxu0 %v390
    %v1067 = vpop.f32.mrf.mxu0
    %v1068 = vadd.f32 %v568, %v1067
    %1069 = vmatmul.f32.gmra.mxu0 %v392
    %v1070 = vpop.f32.mrf.mxu0
    %v1071 = vadd.f32 %v568, %v1070
    %1072 = vmatmul.f32.gmra.mxu0 %v394
    %v1073 = vpop.f32.mrf.mxu0
    %v1074 = vadd.f32 %v568, %v1073
    %1075 = vmatmul.f32.gmra.mxu0 %v396
    %v1076 = vpop.f32.mrf.mxu0
    %v1077 = vadd.f32 %v568, %v1076
    %1078 = vmatmul.f32.gmra.mxu0 %v398
    %v1079 = vpop.f32.mrf.mxu0
    %v1080 = vadd.f32 %v568, %v1079
    %1081 = vmatmul.f32.gmra.mxu0 %v400
    %v1082 = vpop.f32.mrf.mxu0
    %v1083 = vadd.f32 %v568, %v1082
    %1084 = vmatmul.f32.gmra.mxu0 %v402
    %v1085 = vpop.f32.mrf.mxu0
    %v1086 = vadd.f32 %v568, %v1085
    %1087 = vmatmul.f32.gmra.mxu0 %v404
    %v1088 = vpop.f32.mrf.mxu0
    %v1089 = vadd.f32 %v568, %v1088
    %1090 = vmatmul.f32.gmra.mxu0 %v406
    %v1091 = vpop.f32.mrf.mxu0
    %v1092 = vadd.f32 %v572, %v1091
    %1093 = vmatmul.f32.gmra.mxu0 %v408
    %v1094 = vpop.f32.mrf.mxu0
    %v1095 = vadd.f32 %v572, %v1094
    %1096 = vmatmul.f32.gmra.mxu0 %v410
    %v1097 = vpop.f32.mrf.mxu0
    %v1098 = vadd.f32 %v572, %v1097
    %1099 = vmatmul.f32.gmra.mxu0 %v412
    %v1100 = vpop.f32.mrf.mxu0
    %v1101 = vadd.f32 %v572, %v1100
    %1102 = vmatmul.f32.gmra.mxu0 %v414
    %v1103 = vpop.f32.mrf.mxu0
    %v1104 = vadd.f32 %v572, %v1103
    %1105 = vmatmul.f32.gmra.mxu0 %v416
    %v1106 = vpop.f32.mrf.mxu0
    %v1107 = vadd.f32 %v572, %v1106
    %1108 = vmatmul.f32.gmra.mxu0 %v418
    %v1109 = vpop.f32.mrf.mxu0
    %v1110 = vadd.f32 %v572, %v1109
    %1111 = vmatmul.f32.gmra.mxu0 %v420
    %v1112 = vpop.f32.mrf.mxu0
    %v1113 = vadd.f32 %v572, %v1112
    %1114 = vmatmul.f32.gmra.mxu0 %v422
    %v1115 = vpop.f32.mrf.mxu0
    %v1116 = vadd.f32 %v572, %v1115
    %1117 = vmatmul.f32.gmra.mxu0 %v424
    %v1118 = vpop.f32.mrf.mxu0
    %v1119 = vadd.f32 %v572, %v1118
    %1120 = vmatmul.f32.gmra.mxu0 %v426
    %v1121 = vpop.f32.mrf.mxu0
    %v1122 = vadd.f32 %v572, %v1121
    %1123 = vmatmul.f32.gmra.mxu0 %v428
    %v1124 = vpop.f32.mrf.mxu0
    %v1125 = vadd.f32 %v572, %v1124
    %1126 = vmatmul.f32.gmra.mxu0 %v430
    %v1127 = vpop.f32.mrf.mxu0
    %v1128 = vadd.f32 %v572, %v1127
    %1129 = vmatmul.f32.gmra.mxu0 %v432
    %v1130 = vpop.f32.mrf.mxu0
    %v1131 = vadd.f32 %v572, %v1130
    %1132 = vmatmul.f32.gmra.mxu0 %v434
    %v1133 = vpop.f32.mrf.mxu0
    %v1134 = vadd.f32 %v572, %v1133
    %1135 = vmatmul.f32.gmra.mxu0 %v436
    %v1136 = vpop.f32.mrf.mxu0
    %v1137 = vadd.f32 %v572, %v1136
    %1138 = vdwg.mxu0
    %1139 = vmatpush.msra.mxu0 %v564
    %1140 = vmatpush.msra.mxu0 %v560
    %1141 = vmatpush.msra.mxu0 %v556
    %1142 = vmatpush.msra.mxu0 %v552
    %1143 = vmatpush.msra.mxu0 %v548
    %1144 = vmatpush.msra.mxu0 %v544
    %1145 = vmatpush.msra.mxu0 %v540
    %1146 = vmatpush.msra.mxu0 %v536
    %1147 = vmatpush.msra.mxu0 %v532
    %1148 = vmatpush.msra.mxu0 %v528
    %1149 = vmatpush.msra.mxu0 %v524
    %1150 = vmatpush.msra.mxu0 %v520
    %1151 = vmatpush.msra.mxu0 %v516
    %1152 = vmatpush.msra.mxu0 %v512
    %1153 = vmatpush.msra.mxu0 %v508
    %1154 = vmatpush.msra.mxu0 %v504
    %1155 = vmatmul.f32.gmra.mxu0 %v375
    %v1156 = vpop.f32.mrf.mxu0
    %v1157 = vadd.f32 %v1044, %v1156
    %1158 = vmatmul.f32.gmra.mxu0 %v377
    %v1159 = vpop.f32.mrf.mxu0
    %v1160 = vadd.f32 %v1047, %v1159
    %1161 = vmatmul.f32.gmra.mxu0 %v379
    %v1162 = vpop.f32.mrf.mxu0
    %v1163 = vadd.f32 %v1050, %v1162
    %1164 = vmatmul.f32.gmra.mxu0 %v381
    %v1165 = vpop.f32.mrf.mxu0
    %v1166 = vadd.f32 %v1053, %v1165
    %1167 = vmatmul.f32.gmra.mxu0 %v383
    %v1168 = vpop.f32.mrf.mxu0
    %v1169 = vadd.f32 %v1056, %v1168
    %1170 = vmatmul.f32.gmra.mxu0 %v385
    %v1171 = vpop.f32.mrf.mxu0
    %v1172 = vadd.f32 %v1059, %v1171
    %1173 = vmatmul.f32.gmra.mxu0 %v387
    %v1174 = vpop.f32.mrf.mxu0
    %v1175 = vadd.f32 %v1062, %v1174
    %1176 = vmatmul.f32.gmra.mxu0 %v389
    %v1177 = vpop.f32.mrf.mxu0
    %v1178 = vadd.f32 %v1065, %v1177
    %1179 = vmatmul.f32.gmra.mxu0 %v391
    %v1180 = vpop.f32.mrf.mxu0
    %v1181 = vadd.f32 %v1068, %v1180
    %1182 = vmatmul.f32.gmra.mxu0 %v393
    %v1183 = vpop.f32.mrf.mxu0
    %v1184 = vadd.f32 %v1071, %v1183
    %1185 = vmatmul.f32.gmra.mxu0 %v395
    %v1186 = vpop.f32.mrf.mxu0
    %v1187 = vadd.f32 %v1074, %v1186
    %1188 = vmatmul.f32.gmra.mxu0 %v397
    %v1189 = vpop.f32.mrf.mxu0
    %v1190 = vadd.f32 %v1077, %v1189
    %1191 = vmatmul.f32.gmra.mxu0 %v399
    %v1192 = vpop.f32.mrf.mxu0
    %v1193 = vadd.f32 %v1080, %v1192
    %1194 = vmatmul.f32.gmra.mxu0 %v401
    %v1195 = vpop.f32.mrf.mxu0
    %v1196 = vadd.f32 %v1083, %v1195
    %1197 = vmatmul.f32.gmra.mxu0 %v403
    %v1198 = vpop.f32.mrf.mxu0
    %v1199 = vadd.f32 %v1086, %v1198
    %1200 = vmatmul.f32.gmra.mxu0 %v405
    %v1201 = vpop.f32.mrf.mxu0
    %v1202 = vadd.f32 %v1089, %v1201
    %1203 = vmatmul.f32.gmra.mxu0 %v407
    %v1204 = vpop.f32.mrf.mxu0
    %v1205 = vadd.f32 %v1092, %v1204
    %1206 = vmatmul.f32.gmra.mxu0 %v409
    %v1207 = vpop.f32.mrf.mxu0
    %v1208 = vadd.f32 %v1095, %v1207
    %1209 = vmatmul.f32.gmra.mxu0 %v411
    %v1210 = vpop.f32.mrf.mxu0
    %v1211 = vadd.f32 %v1098, %v1210
    %1212 = vmatmul.f32.gmra.mxu0 %v413
    %v1213 = vpop.f32.mrf.mxu0
    %v1214 = vadd.f32 %v1101, %v1213
    %1215 = vmatmul.f32.gmra.mxu0 %v415
    %v1216 = vpop.f32.mrf.mxu0
    %v1217 = vadd.f32 %v1104, %v1216
    %1218 = vmatmul.f32.gmra.mxu0 %v417
    %v1219 = vpop.f32.mrf.mxu0
    %v1220 = vadd.f32 %v1107, %v1219
    %1221 = vmatmul.f32.gmra.mxu0 %v419
    %v1222 = vpop.f32.mrf.mxu0
    %v1223 = vadd.f32 %v1110, %v1222
    %1224 = vmatmul.f32.gmra.mxu0 %v421
    %v1225 = vpop.f32.mrf.mxu0
    %v1226 = vadd.f32 %v1113, %v1225
    %1227 = vmatmul.f32.gmra.mxu0 %v423
    %v1228 = vpop.f32.mrf.mxu0
    %v1229 = vadd.f32 %v1116, %v1228
    %1230 = vmatmul.f32.gmra.mxu0 %v425
    %v1231 = vpop.f32.mrf.mxu0
    %v1232 = vadd.f32 %v1119, %v1231
    %1233 = vmatmul.f32.gmra.mxu0 %v427
    %v1234 = vpop.f32.mrf.mxu0
    %v1235 = vadd.f32 %v1122, %v1234
    %1236 = vmatmul.f32.gmra.mxu0 %v429
    %v1237 = vpop.f32.mrf.mxu0
    %v1238 = vadd.f32 %v1125, %v1237
    %1239 = vmatmul.f32.gmra.mxu0 %v431
    %v1240 = vpop.f32.mrf.mxu0
    %v1241 = vadd.f32 %v1128, %v1240
    %1242 = vmatmul.f32.gmra.mxu0 %v433
    %v1243 = vpop.f32.mrf.mxu0
    %v1244 = vadd.f32 %v1131, %v1243
    %1245 = vmatmul.f32.gmra.mxu0 %v435
    %v1246 = vpop.f32.mrf.mxu0
    %v1247 = vadd.f32 %v1134, %v1246
    %1248 = vmatmul.f32.gmra.mxu0 %v437
    %v1249 = vpop.f32.mrf.mxu0
    %v1250 = vadd.f32 %v1137, %v1249
    %1251 = vdwg.mxu0
    %1252 = vmatpush.msra.mxu0 %v501
    %1253 = vmatpush.msra.mxu0 %v497
    %1254 = vmatpush.msra.mxu0 %v493
    %1255 = vmatpush.msra.mxu0 %v489
    %1256 = vmatpush.msra.mxu0 %v485
    %1257 = vmatpush.msra.mxu0 %v481
    %1258 = vmatpush.msra.mxu0 %v477
    %1259 = vmatpush.msra.mxu0 %v473
    %1260 = vmatpush.msra.mxu0 %v469
    %1261 = vmatpush.msra.mxu0 %v465
    %1262 = vmatpush.msra.mxu0 %v461
    %1263 = vmatpush.msra.mxu0 %v457
    %1264 = vmatpush.msra.mxu0 %v453
    %1265 = vmatpush.msra.mxu0 %v449
    %1266 = vmatpush.msra.mxu0 %v445
    %1267 = vmatpush.msra.mxu0 %v441
    %1268 = vmatmul.f32.gmra.mxu0 %v374
    %v1269 = vpop.f32.mrf.mxu0
    %v1270 = vadd.f32 %v569, %v1269
    %1271 = vmatmul.f32.gmra.mxu0 %v376
    %v1272 = vpop.f32.mrf.mxu0
    %v1273 = vadd.f32 %v569, %v1272
    %1274 = vmatmul.f32.gmra.mxu0 %v378
    %v1275 = vpop.f32.mrf.mxu0
    %v1276 = vadd.f32 %v569, %v1275
    %1277 = vmatmul.f32.gmra.mxu0 %v380
    %v1278 = vpop.f32.mrf.mxu0
    %v1279 = vadd.f32 %v569, %v1278
    %1280 = vmatmul.f32.gmra.mxu0 %v382
    %v1281 = vpop.f32.mrf.mxu0
    %v1282 = vadd.f32 %v569, %v1281
    %1283 = vmatmul.f32.gmra.mxu0 %v384
    %v1284 = vpop.f32.mrf.mxu0
    %v1285 = vadd.f32 %v569, %v1284
    %1286 = vmatmul.f32.gmra.mxu0 %v386
    %v1287 = vpop.f32.mrf.mxu0
    %v1288 = vadd.f32 %v569, %v1287
    %1289 = vmatmul.f32.gmra.mxu0 %v388
    %v1290 = vpop.f32.mrf.mxu0
    %v1291 = vadd.f32 %v569, %v1290
    %1292 = vmatmul.f32.gmra.mxu0 %v390
    %v1293 = vpop.f32.mrf.mxu0
    %v1294 = vadd.f32 %v569, %v1293
    %1295 = vmatmul.f32.gmra.mxu0 %v392
    %v1296 = vpop.f32.mrf.mxu0
    %v1297 = vadd.f32 %v569, %v1296
    %1298 = vmatmul.f32.gmra.mxu0 %v394
    %v1299 = vpop.f32.mrf.mxu0
    %v1300 = vadd.f32 %v569, %v1299
    %1301 = vmatmul.f32.gmra.mxu0 %v396
    %v1302 = vpop.f32.mrf.mxu0
    %v1303 = vadd.f32 %v569, %v1302
    %1304 = vmatmul.f32.gmra.mxu0 %v398
    %v1305 = vpop.f32.mrf.mxu0
    %v1306 = vadd.f32 %v569, %v1305
    %1307 = vmatmul.f32.gmra.mxu0 %v400
    %v1308 = vpop.f32.mrf.mxu0
    %v1309 = vadd.f32 %v569, %v1308
    %1310 = vmatmul.f32.gmra.mxu0 %v402
    %v1311 = vpop.f32.mrf.mxu0
    %v1312 = vadd.f32 %v569, %v1311
    %1313 = vmatmul.f32.gmra.mxu0 %v404
    %v1314 = vpop.f32.mrf.mxu0
    %v1315 = vadd.f32 %v569, %v1314
    %1316 = vmatmul.f32.gmra.mxu0 %v406
    %v1317 = vpop.f32.mrf.mxu0
    %v1318 = vadd.f32 %v573, %v1317
    %1319 = vmatmul.f32.gmra.mxu0 %v408
    %v1320 = vpop.f32.mrf.mxu0
    %v1321 = vadd.f32 %v573, %v1320
    %1322 = vmatmul.f32.gmra.mxu0 %v410
    %v1323 = vpop.f32.mrf.mxu0
    %v1324 = vadd.f32 %v573, %v1323
    %1325 = vmatmul.f32.gmra.mxu0 %v412
    %v1326 = vpop.f32.mrf.mxu0
    %v1327 = vadd.f32 %v573, %v1326
    %1328 = vmatmul.f32.gmra.mxu0 %v414
    %v1329 = vpop.f32.mrf.mxu0
    %v1330 = vadd.f32 %v573, %v1329
    %1331 = vmatmul.f32.gmra.mxu0 %v416
    %v1332 = vpop.f32.mrf.mxu0
    %v1333 = vadd.f32 %v573, %v1332
    %1334 = vmatmul.f32.gmra.mxu0 %v418
    %v1335 = vpop.f32.mrf.mxu0
    %v1336 = vadd.f32 %v573, %v1335
    %1337 = vmatmul.f32.gmra.mxu0 %v420
    %v1338 = vpop.f32.mrf.mxu0
    %v1339 = vadd.f32 %v573, %v1338
    %1340 = vmatmul.f32.gmra.mxu0 %v422
    %v1341 = vpop.f32.mrf.mxu0
    %v1342 = vadd.f32 %v573, %v1341
    %1343 = vmatmul.f32.gmra.mxu0 %v424
    %v1344 = vpop.f32.mrf.mxu0
    %v1345 = vadd.f32 %v573, %v1344
    %1346 = vmatmul.f32.gmra.mxu0 %v426
    %v1347 = vpop.f32.mrf.mxu0
    %v1348 = vadd.f32 %v573, %v1347
    %1349 = vmatmul.f32.gmra.mxu0 %v428
    %v1350 = vpop.f32.mrf.mxu0
    %v1351 = vadd.f32 %v573, %v1350
    %1352 = vmatmul.f32.gmra.mxu0 %v430
    %v1353 = vpop.f32.mrf.mxu0
    %v1354 = vadd.f32 %v573, %v1353
    %1355 = vmatmul.f32.gmra.mxu0 %v432
    %v1356 = vpop.f32.mrf.mxu0
    %v1357 = vadd.f32 %v573, %v1356
    %1358 = vmatmul.f32.gmra.mxu0 %v434
    %v1359 = vpop.f32.mrf.mxu0
    %v1360 = vadd.f32 %v573, %v1359
    %1361 = vmatmul.f32.gmra.mxu0 %v436
    %v1362 = vpop.f32.mrf.mxu0
    %v1363 = vadd.f32 %v573, %v1362
    %1364 = vdwg.mxu0
    %1365 = vmatpush.msra.mxu0 %v565
    %1366 = vmatpush.msra.mxu0 %v561
    %1367 = vmatpush.msra.mxu0 %v557
    %1368 = vmatpush.msra.mxu0 %v553
    %1369 = vmatpush.msra.mxu0 %v549
    %1370 = vmatpush.msra.mxu0 %v545
    %1371 = vmatpush.msra.mxu0 %v541
    %1372 = vmatpush.msra.mxu0 %v537
    %1373 = vmatpush.msra.mxu0 %v533
    %1374 = vmatpush.msra.mxu0 %v529
    %1375 = vmatpush.msra.mxu0 %v525
    %1376 = vmatpush.msra.mxu0 %v521
    %1377 = vmatpush.msra.mxu0 %v517
    %1378 = vmatpush.msra.mxu0 %v513
    %1379 = vmatpush.msra.mxu0 %v509
    %1380 = vmatpush.msra.mxu0 %v505
    %1381 = vmatmul.f32.gmra.mxu0 %v375
    %v1382 = vpop.f32.mrf.mxu0
    %v1383 = vadd.f32 %v1270, %v1382
    %1384 = vmatmul.f32.gmra.mxu0 %v377
    %v1385 = vpop.f32.mrf.mxu0
    %v1386 = vadd.f32 %v1273, %v1385
    %1387 = vmatmul.f32.gmra.mxu0 %v379
    %v1388 = vpop.f32.mrf.mxu0
    %v1389 = vadd.f32 %v1276, %v1388
    %1390 = vmatmul.f32.gmra.mxu0 %v381
    %v1391 = vpop.f32.mrf.mxu0
    %v1392 = vadd.f32 %v1279, %v1391
    %1393 = vmatmul.f32.gmra.mxu0 %v383
    %v1394 = vpop.f32.mrf.mxu0
    %v1395 = vadd.f32 %v1282, %v1394
    %1396 = vmatmul.f32.gmra.mxu0 %v385
    %v1397 = vpop.f32.mrf.mxu0
    %v1398 = vadd.f32 %v1285, %v1397
    %1399 = vmatmul.f32.gmra.mxu0 %v387
    %v1400 = vpop.f32.mrf.mxu0
    %v1401 = vadd.f32 %v1288, %v1400
    %1402 = vmatmul.f32.gmra.mxu0 %v389
    %v1403 = vpop.f32.mrf.mxu0
    %v1404 = vadd.f32 %v1291, %v1403
    %1405 = vmatmul.f32.gmra.mxu0 %v391
    %v1406 = vpop.f32.mrf.mxu0
    %v1407 = vadd.f32 %v1294, %v1406
    %1408 = vmatmul.f32.gmra.mxu0 %v393
    %v1409 = vpop.f32.mrf.mxu0
    %v1410 = vadd.f32 %v1297, %v1409
    %1411 = vmatmul.f32.gmra.mxu0 %v395
    %v1412 = vpop.f32.mrf.mxu0
    %v1413 = vadd.f32 %v1300, %v1412
    %1414 = vmatmul.f32.gmra.mxu0 %v397
    %v1415 = vpop.f32.mrf.mxu0
    %v1416 = vadd.f32 %v1303, %v1415
    %1417 = vmatmul.f32.gmra.mxu0 %v399
    %v1418 = vpop.f32.mrf.mxu0
    %v1419 = vadd.f32 %v1306, %v1418
    %1420 = vmatmul.f32.gmra.mxu0 %v401
    %v1421 = vpop.f32.mrf.mxu0
    %v1422 = vadd.f32 %v1309, %v1421
    %1423 = vmatmul.f32.gmra.mxu0 %v403
    %v1424 = vpop.f32.mrf.mxu0
    %v1425 = vadd.f32 %v1312, %v1424
    %1426 = vmatmul.f32.gmra.mxu0 %v405
    %v1427 = vpop.f32.mrf.mxu0
    %v1428 = vadd.f32 %v1315, %v1427
    %1429 = vmatmul.f32.gmra.mxu0 %v407
    %v1430 = vpop.f32.mrf.mxu0
    %v1431 = vadd.f32 %v1318, %v1430
    %1432 = vmatmul.f32.gmra.mxu0 %v409
    %v1433 = vpop.f32.mrf.mxu0
    %v1434 = vadd.f32 %v1321, %v1433
    %1435 = vmatmul.f32.gmra.mxu0 %v411
    %v1436 = vpop.f32.mrf.mxu0
    %v1437 = vadd.f32 %v1324, %v1436
    %1438 = vmatmul.f32.gmra.mxu0 %v413
    %v1439 = vpop.f32.mrf.mxu0
    %v1440 = vadd.f32 %v1327, %v1439
    %1441 = vmatmul.f32.gmra.mxu0 %v415
    %v1442 = vpop.f32.mrf.mxu0
    %v1443 = vadd.f32 %v1330, %v1442
    %1444 = vmatmul.f32.gmra.mxu0 %v417
    %v1445 = vpop.f32.mrf.mxu0
    %v1446 = vadd.f32 %v1333, %v1445
    %1447 = vmatmul.f32.gmra.mxu0 %v419
    %v1448 = vpop.f32.mrf.mxu0
    %v1449 = vadd.f32 %v1336, %v1448
    %1450 = vmatmul.f32.gmra.mxu0 %v421
    %v1451 = vpop.f32.mrf.mxu0
    %v1452 = vadd.f32 %v1339, %v1451
    %1453 = vmatmul.f32.gmra.mxu0 %v423
    %v1454 = vpop.f32.mrf.mxu0
    %v1455 = vadd.f32 %v1342, %v1454
    %1456 = vmatmul.f32.gmra.mxu0 %v425
    %v1457 = vpop.f32.mrf.mxu0
    %v1458 = vadd.f32 %v1345, %v1457
    %1459 = vmatmul.f32.gmra.mxu0 %v427
    %v1460 = vpop.f32.mrf.mxu0
    %v1461 = vadd.f32 %v1348, %v1460
    %1462 = vmatmul.f32.gmra.mxu0 %v429
    %v1463 = vpop.f32.mrf.mxu0
    %v1464 = vadd.f32 %v1351, %v1463
    %1465 = vmatmul.f32.gmra.mxu0 %v431
    %v1466 = vpop.f32.mrf.mxu0
    %v1467 = vadd.f32 %v1354, %v1466
    %1468 = vmatmul.f32.gmra.mxu0 %v433
    %v1469 = vpop.f32.mrf.mxu0
    %v1470 = vadd.f32 %v1357, %v1469
    %1471 = vmatmul.f32.gmra.mxu0 %v435
    %v1472 = vpop.f32.mrf.mxu0
    %v1473 = vadd.f32 %v1360, %v1472
    %1474 = vmatmul.f32.gmra.mxu0 %v437
    %v1475 = vpop.f32.mrf.mxu0
    %v1476 = vadd.f32 %v1363, %v1475
    %1477 = vdwg.mxu0
    %v1478 = vld [vmem:[%s4] sm:$0xf]
    %v1480 = vperm.slane %v1478, 0
    %v1481 = vperm.slane %v1478, 1
    %v1482 = vperm.slane %v1478, 2
    %v1483 = vperm.slane %v1478, 3
    %v1488 = vadd.f32 %v705, %v1480
    %v1489 = vadd.f32 %v931, %v1481
    %v1490 = vadd.f32 %v1157, %v1482
    %v1491 = vadd.f32 %v1383, %v1483
    %v1492 = vadd.f32 %v708, %v1480
    %v1493 = vadd.f32 %v934, %v1481
    %v1494 = vadd.f32 %v1160, %v1482
    %v1495 = vadd.f32 %v1386, %v1483
    %v1496 = vadd.f32 %v711, %v1480
    %v1497 = vadd.f32 %v937, %v1481
    %v1498 = vadd.f32 %v1163, %v1482
    %v1499 = vadd.f32 %v1389, %v1483
    %v1500 = vadd.f32 %v714, %v1480
    %v1501 = vadd.f32 %v940, %v1481
    %v1502 = vadd.f32 %v1166, %v1482
    %v1503 = vadd.f32 %v1392, %v1483
    %v1504 = vadd.f32 %v717, %v1480
    %v1505 = vadd.f32 %v943, %v1481
    %v1506 = vadd.f32 %v1169, %v1482
    %v1507 = vadd.f32 %v1395, %v1483
    %v1508 = vadd.f32 %v720, %v1480
    %v1509 = vadd.f32 %v946, %v1481
    %v1510 = vadd.f32 %v1172, %v1482
    %v1511 = vadd.f32 %v1398, %v1483
    %v1512 = vadd.f32 %v723, %v1480
    %v1513 = vadd.f32 %v949, %v1481
    %v1514 = vadd.f32 %v1175, %v1482
    %v1515 = vadd.f32 %v1401, %v1483
    %v1516 = vadd.f32 %v726, %v1480
    %v1517 = vadd.f32 %v952, %v1481
    %v1518 = vadd.f32 %v1178, %v1482
    %v1519 = vadd.f32 %v1404, %v1483
    %v1520 = vadd.f32 %v729, %v1480
    %v1521 = vadd.f32 %v955, %v1481
    %v1522 = vadd.f32 %v1181, %v1482
    %v1523 = vadd.f32 %v1407, %v1483
    %v1524 = vadd.f32 %v732, %v1480
    %v1525 = vadd.f32 %v958, %v1481
    %v1526 = vadd.f32 %v1184, %v1482
    %v1527 = vadd.f32 %v1410, %v1483
    %v1528 = vadd.f32 %v735, %v1480
    %v1529 = vadd.f32 %v961, %v1481
    %v1530 = vadd.f32 %v1187, %v1482
    %v1531 = vadd.f32 %v1413, %v1483
    %v1532 = vadd.f32 %v738, %v1480
    %v1533 = vadd.f32 %v964, %v1481
    %v1534 = vadd.f32 %v1190, %v1482
    %v1535 = vadd.f32 %v1416, %v1483
    %v1536 = vadd.f32 %v741, %v1480
    %v1537 = vadd.f32 %v967, %v1481
    %v1538 = vadd.f32 %v1193, %v1482
    %v1539 = vadd.f32 %v1419, %v1483
    %v1540 = vadd.f32 %v744, %v1480
    %v1541 = vadd.f32 %v970, %v1481
    %v1542 = vadd.f32 %v1196, %v1482
    %v1543 = vadd.f32 %v1422, %v1483
    %v1544 = vadd.f32 %v747, %v1480
    %v1545 = vadd.f32 %v973, %v1481
    %v1546 = vadd.f32 %v1199, %v1482
    %v1547 = vadd.f32 %v1425, %v1483
    %v1548 = vadd.f32 %v750, %v1480
    %v1549 = vadd.f32 %v976, %v1481
    %v1550 = vadd.f32 %v1202, %v1482
    %v1551 = vadd.f32 %v1428, %v1483
    %v1552 = vadd.f32 %v753, %v1480
    %v1553 = vadd.f32 %v979, %v1481
    %v1554 = vadd.f32 %v1205, %v1482
    %v1555 = vadd.f32 %v1431, %v1483
    %v1556 = vadd.f32 %v756, %v1480
    %v1557 = vadd.f32 %v982, %v1481
    %v1558 = vadd.f32 %v1208, %v1482
    %v1559 = vadd.f32 %v1434, %v1483
    %v1560 = vadd.f32 %v759, %v1480
    %v1561 = vadd.f32 %v985, %v1481
    %v1562 = vadd.f32 %v1211, %v1482
    %v1563 = vadd.f32 %v1437, %v1483
    %v1564 = vadd.f32 %v762, %v1480
    %v1565 = vadd.f32 %v988, %v1481
    %v1566 = vadd.f32 %v1214, %v1482
    %v1567 = vadd.f32 %v1440, %v1483
    %v1568 = vadd.f32 %v765, %v1480
    %v1569 = vadd.f32 %v991, %v1481
    %v1570 = vadd.f32 %v1217, %v1482
    %v1571 = vadd.f32 %v1443, %v1483
    %v1572 = vadd.f32 %v768, %v1480
    %v1573 = vadd.f32 %v994, %v1481
    %v1574 = vadd.f32 %v1220, %v1482
    %v1575 = vadd.f32 %v1446, %v1483
    %v1576 = vadd.f32 %v771, %v1480
    %v1577 = vadd.f32 %v997, %v1481
    %v1578 = vadd.f32 %v1223, %v1482
    %v1579 = vadd.f32 %v1449, %v1483
    %v1580 = vadd.f32 %v774, %v1480
    %v1581 = vadd.f32 %v1000, %v1481
    %v1582 = vadd.f32 %v1226, %v1482
    %v1583 = vadd.f32 %v1452, %v1483
    %v1584 = vadd.f32 %v777, %v1480
    %v1585 = vadd.f32 %v1003, %v1481
    %v1586 = vadd.f32 %v1229, %v1482
    %v1587 = vadd.f32 %v1455, %v1483
    %v1588 = vadd.f32 %v780, %v1480
    %v1589 = vadd.f32 %v1006, %v1481
    %v1590 = vadd.f32 %v1232, %v1482
    %v1591 = vadd.f32 %v1458, %v1483
    %v1592 = vadd.f32 %v783, %v1480
    %v1593 = vadd.f32 %v1009, %v1481
    %v1594 = vadd.f32 %v1235, %v1482
    %v1595 = vadd.f32 %v1461, %v1483
    %v1596 = vadd.f32 %v786, %v1480
    %v1597 = vadd.f32 %v1012, %v1481
    %v1598 = vadd.f32 %v1238, %v1482
    %v1599 = vadd.f32 %v1464, %v1483
    %v1600 = vadd.f32 %v789, %v1480
    %v1601 = vadd.f32 %v1015, %v1481
    %v1602 = vadd.f32 %v1241, %v1482
    %v1603 = vadd.f32 %v1467, %v1483
    %v1604 = vadd.f32 %v792, %v1480
    %v1605 = vadd.f32 %v1018, %v1481
    %v1606 = vadd.f32 %v1244, %v1482
    %v1607 = vadd.f32 %v1470, %v1483
    %v1608 = vadd.f32 %v795, %v1480
    %v1609 = vadd.f32 %v1021, %v1481
    %v1610 = vadd.f32 %v1247, %v1482
    %v1611 = vadd.f32 %v1473, %v1483
    %v1612 = vadd.f32 %v798, %v1480
    %v1613 = vadd.f32 %v1024, %v1481
    %v1614 = vadd.f32 %v1250, %v1482
    %v1615 = vadd.f32 %v1476, %v1483
    %v1616 = vld [vmem:[%s5] sm:$0xf]
    %v1617 = vld [vmem:[%s6] sm:$0xf]
    %v1618 = vadd.f32 %v1488, %v1492
    %v1619 = vadd.f32 %v1618, %v1496
    %v1620 = vadd.f32 %v1619, %v1500
    %v1621 = vadd.f32 %v1620, %v1504
    %v1622 = vadd.f32 %v1621, %v1508
    %v1623 = vadd.f32 %v1622, %v1512
    %v1624 = vadd.f32 %v1623, %v1516
    %v1625 = vadd.f32 %v1624, %v1520
    %v1626 = vadd.f32 %v1625, %v1524
    %v1627 = vadd.f32 %v1626, %v1528
    %v1628 = vadd.f32 %v1627, %v1532
    %v1629 = vadd.f32 %v1628, %v1536
    %v1630 = vadd.f32 %v1629, %v1540
    %v1631 = vadd.f32 %v1630, %v1544
    %v1632 = vadd.f32 %v1631, %v1548
    %v1633 = vadd.f32 %v1632, %v1552
    %v1634 = vadd.f32 %v1633, %v1556
    %v1635 = vadd.f32 %v1634, %v1560
    %v1636 = vadd.f32 %v1635, %v1564
    %v1637 = vadd.f32 %v1636, %v1568
    %v1638 = vadd.f32 %v1637, %v1572
    %v1639 = vadd.f32 %v1638, %v1576
    %v1640 = vadd.f32 %v1639, %v1580
    %v1641 = vadd.f32 %v1640, %v1584
    %v1642 = vadd.f32 %v1641, %v1588
    %v1643 = vadd.f32 %v1642, %v1592
    %v1644 = vadd.f32 %v1643, %v1596
    %v1645 = vadd.f32 %v1644, %v1600
    %v1646 = vadd.f32 %v1645, %v1604
    %v1647 = vadd.f32 %v1646, %v1608
    %v1648 = vadd.f32 %v1647, %v1612
    %v1649 = vrot.slane %v1648, 4
    %v1650 = vadd.f32 %v1648, %v1649
    %v1651 = vrot.slane %v1650, 2
    %v1652 = vadd.f32 %v1650, %v1651
    %v1653 = vrot.slane %v1652, 1
    %v1654 = vadd.f32 %v1652, %v1653
    %v1655 = vadd.f32 %v1489, %v1493
    %v1656 = vadd.f32 %v1655, %v1497
    %v1657 = vadd.f32 %v1656, %v1501
    %v1658 = vadd.f32 %v1657, %v1505
    %v1659 = vadd.f32 %v1658, %v1509
    %v1660 = vadd.f32 %v1659, %v1513
    %v1661 = vadd.f32 %v1660, %v1517
    %v1662 = vadd.f32 %v1661, %v1521
    %v1663 = vadd.f32 %v1662, %v1525
    %v1664 = vadd.f32 %v1663, %v1529
    %v1665 = vadd.f32 %v1664, %v1533
    %v1666 = vadd.f32 %v1665, %v1537
    %v1667 = vadd.f32 %v1666, %v1541
    %v1668 = vadd.f32 %v1667, %v1545
    %v1669 = vadd.f32 %v1668, %v1549
    %v1670 = vadd.f32 %v1669, %v1553
    %v1671 = vadd.f32 %v1670, %v1557
    %v1672 = vadd.f32 %v1671, %v1561
    %v1673 = vadd.f32 %v1672, %v1565
    %v1674 = vadd.f32 %v1673, %v1569
    %v1675 = vadd.f32 %v1674, %v1573
    %v1676 = vadd.f32 %v1675, %v1577
    %v1677 = vadd.f32 %v1676, %v1581
    %v1678 = vadd.f32 %v1677, %v1585
    %v1679 = vadd.f32 %v1678, %v1589
    %v1680 = vadd.f32 %v1679, %v1593
    %v1681 = vadd.f32 %v1680, %v1597
    %v1682 = vadd.f32 %v1681, %v1601
    %v1683 = vadd.f32 %v1682, %v1605
    %v1684 = vadd.f32 %v1683, %v1609
    %v1685 = vadd.f32 %v1684, %v1613
    %v1686 = vrot.slane %v1685, 4
    %v1687 = vadd.f32 %v1685, %v1686
    %v1688 = vrot.slane %v1687, 2
    %v1689 = vadd.f32 %v1687, %v1688
    %v1690 = vrot.slane %v1689, 1
    %v1691 = vadd.f32 %v1689, %v1690
    %v1692 = vadd.f32 %v1490, %v1494
    %v1693 = vadd.f32 %v1692, %v1498
    %v1694 = vadd.f32 %v1693, %v1502
    %v1695 = vadd.f32 %v1694, %v1506
    %v1696 = vadd.f32 %v1695, %v1510
    %v1697 = vadd.f32 %v1696, %v1514
    %v1698 = vadd.f32 %v1697, %v1518
    %v1699 = vadd.f32 %v1698, %v1522
    %v1700 = vadd.f32 %v1699, %v1526
    %v1701 = vadd.f32 %v1700, %v1530
    %v1702 = vadd.f32 %v1701, %v1534
    %v1703 = vadd.f32 %v1702, %v1538
    %v1704 = vadd.f32 %v1703, %v1542
    %v1705 = vadd.f32 %v1704, %v1546
    %v1706 = vadd.f32 %v1705, %v1550
    %v1707 = vadd.f32 %v1706, %v1554
    %v1708 = vadd.f32 %v1707, %v1558
    %v1709 = vadd.f32 %v1708, %v1562
    %v1710 = vadd.f32 %v1709, %v1566
    %v1711 = vadd.f32 %v1710, %v1570
    %v1712 = vadd.f32 %v1711, %v1574
    %v1713 = vadd.f32 %v1712, %v1578
    %v1714 = vadd.f32 %v1713, %v1582
    %v1715 = vadd.f32 %v1714, %v1586
    %v1716 = vadd.f32 %v1715, %v1590
    %v1717 = vadd.f32 %v1716, %v1594
    %v1718 = vadd.f32 %v1717, %v1598
    %v1719 = vadd.f32 %v1718, %v1602
    %v1720 = vadd.f32 %v1719, %v1606
    %v1721 = vadd.f32 %v1720, %v1610
    %v1722 = vadd.f32 %v1721, %v1614
    %v1723 = vrot.slane %v1722, 4
    %v1724 = vadd.f32 %v1722, %v1723
    %v1725 = vrot.slane %v1724, 2
    %v1726 = vadd.f32 %v1724, %v1725
    %v1727 = vrot.slane %v1726, 1
    %v1728 = vadd.f32 %v1726, %v1727
    %v1729 = vadd.f32 %v1491, %v1495
    %v1730 = vadd.f32 %v1729, %v1499
    %v1731 = vadd.f32 %v1730, %v1503
    %v1732 = vadd.f32 %v1731, %v1507
    %v1733 = vadd.f32 %v1732, %v1511
    %v1734 = vadd.f32 %v1733, %v1515
    %v1735 = vadd.f32 %v1734, %v1519
    %v1736 = vadd.f32 %v1735, %v1523
    %v1737 = vadd.f32 %v1736, %v1527
    %v1738 = vadd.f32 %v1737, %v1531
    %v1739 = vadd.f32 %v1738, %v1535
    %v1740 = vadd.f32 %v1739, %v1539
    %v1741 = vadd.f32 %v1740, %v1543
    %v1742 = vadd.f32 %v1741, %v1547
    %v1743 = vadd.f32 %v1742, %v1551
    %v1744 = vadd.f32 %v1743, %v1555
    %v1745 = vadd.f32 %v1744, %v1559
    %v1746 = vadd.f32 %v1745, %v1563
    %v1747 = vadd.f32 %v1746, %v1567
    %v1748 = vadd.f32 %v1747, %v1571
    %v1749 = vadd.f32 %v1748, %v1575
    %v1750 = vadd.f32 %v1749, %v1579
    %v1751 = vadd.f32 %v1750, %v1583
    %v1752 = vadd.f32 %v1751, %v1587
    %v1753 = vadd.f32 %v1752, %v1591
    %v1754 = vadd.f32 %v1753, %v1595
    %v1755 = vadd.f32 %v1754, %v1599
    %v1756 = vadd.f32 %v1755, %v1603
    %v1757 = vadd.f32 %v1756, %v1607
    %v1758 = vadd.f32 %v1757, %v1611
    %v1759 = vadd.f32 %v1758, %v1615
    %v1760 = vrot.slane %v1759, 4
    %v1761 = vadd.f32 %v1759, %v1760
    %v1762 = vrot.slane %v1761, 2
    %v1763 = vadd.f32 %v1761, %v1762
    %v1764 = vrot.slane %v1763, 1
    %v1765 = vadd.f32 %v1763, %v1764
    %v1766 = vrcp.pop 256.0
    %v1767 = vmul.f32 256.0, %v1766
    %v1768 = vsub.f32 1.0, %v1767
    %v1769 = vmul.f32 %v1766, %v1768
    %v1770 = vadd.f32 %v1766, %v1769
    %vm1771 = vweird.f32 %v1766
    %v1772 = vsel %vm1771, %v1766, %v1770
    %v1773 = vmul.f32 %v1654, %v1772
    %v1774 = vmul.f32 %v1691, %v1772
    %v1775 = vmul.f32 %v1728, %v1772
    %v1776 = vmul.f32 %v1765, %v1772
    %v1777 = vsub.f32 %v1488, %v1773
    %v1778 = vsub.f32 %v1489, %v1774
    %v1779 = vsub.f32 %v1490, %v1775
    %v1780 = vsub.f32 %v1491, %v1776
    %v1781 = vsub.f32 %v1492, %v1773
    %v1782 = vsub.f32 %v1493, %v1774
    %v1783 = vsub.f32 %v1494, %v1775
    %v1784 = vsub.f32 %v1495, %v1776
    %v1785 = vsub.f32 %v1496, %v1773
    %v1786 = vsub.f32 %v1497, %v1774
    %v1787 = vsub.f32 %v1498, %v1775
    %v1788 = vsub.f32 %v1499, %v1776
    %v1789 = vsub.f32 %v1500, %v1773
    %v1790 = vsub.f32 %v1501, %v1774
    %v1791 = vsub.f32 %v1502, %v1775
    %v1792 = vsub.f32 %v1503, %v1776
    %v1793 = vsub.f32 %v1504, %v1773
    %v1794 = vsub.f32 %v1505, %v1774
    %v1795 = vsub.f32 %v1506, %v1775
    %v1796 = vsub.f32 %v1507, %v1776
    %v1797 = vsub.f32 %v1508, %v1773
    %v1798 = vsub.f32 %v1509, %v1774
    %v1799 = vsub.f32 %v1510, %v1775
    %v1800 = vsub.f32 %v1511, %v1776
    %v1801 = vsub.f32 %v1512, %v1773
    %v1802 = vsub.f32 %v1513, %v1774
    %v1803 = vsub.f32 %v1514, %v1775
    %v1804 = vsub.f32 %v1515, %v1776
    %v1805 = vsub.f32 %v1516, %v1773
    %v1806 = vsub.f32 %v1517, %v1774
    %v1807 = vsub.f32 %v1518, %v1775
    %v1808 = vsub.f32 %v1519, %v1776
    %v1809 = vsub.f32 %v1520, %v1773
    %v1810 = vsub.f32 %v1521, %v1774
    %v1811 = vsub.f32 %v1522, %v1775
    %v1812 = vsub.f32 %v1523, %v1776
    %v1813 = vsub.f32 %v1524, %v1773
    %v1814 = vsub.f32 %v1525, %v1774
    %v1815 = vsub.f32 %v1526, %v1775
    %v1816 = vsub.f32 %v1527, %v1776
    %v1817 = vsub.f32 %v1528, %v1773
    %v1818 = vsub.f32 %v1529, %v1774
    %v1819 = vsub.f32 %v1530, %v1775
    %v1820 = vsub.f32 %v1531, %v1776
    %v1821 = vsub.f32 %v1532, %v1773
    %v1822 = vsub.f32 %v1533, %v1774
    %v1823 = vsub.f32 %v1534, %v1775
    %v1824 = vsub.f32 %v1535, %v1776
    %v1825 = vsub.f32 %v1536, %v1773
    %v1826 = vsub.f32 %v1537, %v1774
    %v1827 = vsub.f32 %v1538, %v1775
    %v1828 = vsub.f32 %v1539, %v1776
    %v1829 = vsub.f32 %v1540, %v1773
    %v1830 = vsub.f32 %v1541, %v1774
    %v1831 = vsub.f32 %v1542, %v1775
    %v1832 = vsub.f32 %v1543, %v1776
    %v1833 = vsub.f32 %v1544, %v1773
    %v1834 = vsub.f32 %v1545, %v1774
    %v1835 = vsub.f32 %v1546, %v1775
    %v1836 = vsub.f32 %v1547, %v1776
    %v1837 = vsub.f32 %v1548, %v1773
    %v1838 = vsub.f32 %v1549, %v1774
    %v1839 = vsub.f32 %v1550, %v1775
    %v1840 = vsub.f32 %v1551, %v1776
    %v1841 = vsub.f32 %v1552, %v1773
    %v1842 = vsub.f32 %v1553, %v1774
    %v1843 = vsub.f32 %v1554, %v1775
    %v1844 = vsub.f32 %v1555, %v1776
    %v1845 = vsub.f32 %v1556, %v1773
    %v1846 = vsub.f32 %v1557, %v1774
    %v1847 = vsub.f32 %v1558, %v1775
    %v1848 = vsub.f32 %v1559, %v1776
    %v1849 = vsub.f32 %v1560, %v1773
    %v1850 = vsub.f32 %v1561, %v1774
    %v1851 = vsub.f32 %v1562, %v1775
    %v1852 = vsub.f32 %v1563, %v1776
    %v1853 = vsub.f32 %v1564, %v1773
    %v1854 = vsub.f32 %v1565, %v1774
    %v1855 = vsub.f32 %v1566, %v1775
    %v1856 = vsub.f32 %v1567, %v1776
    %v1857 = vsub.f32 %v1568, %v1773
    %v1858 = vsub.f32 %v1569, %v1774
    %v1859 = vsub.f32 %v1570, %v1775
    %v1860 = vsub.f32 %v1571, %v1776
    %v1861 = vsub.f32 %v1572, %v1773
    %v1862 = vsub.f32 %v1573, %v1774
    %v1863 = vsub.f32 %v1574, %v1775
    %v1864 = vsub.f32 %v1575, %v1776
    %v1865 = vsub.f32 %v1576, %v1773
    %v1866 = vsub.f32 %v1577, %v1774
    %v1867 = vsub.f32 %v1578, %v1775
    %v1868 = vsub.f32 %v1579, %v1776
    %v1869 = vsub.f32 %v1580, %v1773
    %v1870 = vsub.f32 %v1581, %v1774
    %v1871 = vsub.f32 %v1582, %v1775
    %v1872 = vsub.f32 %v1583, %v1776
    %v1873 = vsub.f32 %v1584, %v1773
    %v1874 = vsub.f32 %v1585, %v1774
    %v1875 = vsub.f32 %v1586, %v1775
    %v1876 = vsub.f32 %v1587, %v1776
    %v1877 = vsub.f32 %v1588, %v1773
    %v1878 = vsub.f32 %v1589, %v1774
    %v1879 = vsub.f32 %v1590, %v1775
    %v1880 = vsub.f32 %v1591, %v1776
    %v1881 = vsub.f32 %v1592, %v1773
    %v1882 = vsub.f32 %v1593, %v1774
    %v1883 = vsub.f32 %v1594, %v1775
    %v1884 = vsub.f32 %v1595, %v1776
    %v1885 = vsub.f32 %v1596, %v1773
    %v1886 = vsub.f32 %v1597, %v1774
    %v1887 = vsub.f32 %v1598, %v1775
    %v1888 = vsub.f32 %v1599, %v1776
    %v1889 = vsub.f32 %v1600, %v1773
    %v1890 = vsub.f32 %v1601, %v1774
    %v1891 = vsub.f32 %v1602, %v1775
    %v1892 = vsub.f32 %v1603, %v1776
    %v1893 = vsub.f32 %v1604, %v1773
    %v1894 = vsub.f32 %v1605, %v1774
    %v1895 = vsub.f32 %v1606, %v1775
    %v1896 = vsub.f32 %v1607, %v1776
    %v1897 = vsub.f32 %v1608, %v1773
    %v1898 = vsub.f32 %v1609, %v1774
    %v1899 = vsub.f32 %v1610, %v1775
    %v1900 = vsub.f32 %v1611, %v1776
    %v1901 = vsub.f32 %v1612, %v1773
    %v1902 = vsub.f32 %v1613, %v1774
    %v1903 = vsub.f32 %v1614, %v1775
    %v1904 = vsub.f32 %v1615, %v1776
    %v1905 = vmul.f32 %v1777, %v1777
    %v1906 = vmul.f32 %v1778, %v1778
    %v1907 = vmul.f32 %v1779, %v1779
    %v1908 = vmul.f32 %v1780, %v1780
    %v1909 = vmul.f32 %v1781, %v1781
    %v1910 = vmul.f32 %v1782, %v1782
    %v1911 = vmul.f32 %v1783, %v1783
    %v1912 = vmul.f32 %v1784, %v1784
    %v1913 = vmul.f32 %v1785, %v1785
    %v1914 = vmul.f32 %v1786, %v1786
    %v1915 = vmul.f32 %v1787, %v1787
    %v1916 = vmul.f32 %v1788, %v1788
    %v1917 = vmul.f32 %v1789, %v1789
    %v1918 = vmul.f32 %v1790, %v1790
    %v1919 = vmul.f32 %v1791, %v1791
    %v1920 = vmul.f32 %v1792, %v1792
    %v1921 = vmul.f32 %v1793, %v1793
    %v1922 = vmul.f32 %v1794, %v1794
    %v1923 = vmul.f32 %v1795, %v1795
    %v1924 = vmul.f32 %v1796, %v1796
    %v1925 = vmul.f32 %v1797, %v1797
    %v1926 = vmul.f32 %v1798, %v1798
    %v1927 = vmul.f32 %v1799, %v1799
    %v1928 = vmul.f32 %v1800, %v1800
    %v1929 = vmul.f32 %v1801, %v1801
    %v1930 = vmul.f32 %v1802, %v1802
    %v1931 = vmul.f32 %v1803, %v1803
    %v1932 = vmul.f32 %v1804, %v1804
    %v1933 = vmul.f32 %v1805, %v1805
    %v1934 = vmul.f32 %v1806, %v1806
    %v1935 = vmul.f32 %v1807, %v1807
    %v1936 = vmul.f32 %v1808, %v1808
    %v1937 = vmul.f32 %v1809, %v1809
    %v1938 = vmul.f32 %v1810, %v1810
    %v1939 = vmul.f32 %v1811, %v1811
    %v1940 = vmul.f32 %v1812, %v1812
    %v1941 = vmul.f32 %v1813, %v1813
    %v1942 = vmul.f32 %v1814, %v1814
    %v1943 = vmul.f32 %v1815, %v1815
    %v1944 = vmul.f32 %v1816, %v1816
    %v1945 = vmul.f32 %v1817, %v1817
    %v1946 = vmul.f32 %v1818, %v1818
    %v1947 = vmul.f32 %v1819, %v1819
    %v1948 = vmul.f32 %v1820, %v1820
    %v1949 = vmul.f32 %v1821, %v1821
    %v1950 = vmul.f32 %v1822, %v1822
    %v1951 = vmul.f32 %v1823, %v1823
    %v1952 = vmul.f32 %v1824, %v1824
    %v1953 = vmul.f32 %v1825, %v1825
    %v1954 = vmul.f32 %v1826, %v1826
    %v1955 = vmul.f32 %v1827, %v1827
    %v1956 = vmul.f32 %v1828, %v1828
    %v1957 = vmul.f32 %v1829, %v1829
    %v1958 = vmul.f32 %v1830, %v1830
    %v1959 = vmul.f32 %v1831, %v1831
    %v1960 = vmul.f32 %v1832, %v1832
    %v1961 = vmul.f32 %v1833, %v1833
    %v1962 = vmul.f32 %v1834, %v1834
    %v1963 = vmul.f32 %v1835, %v1835
    %v1964 = vmul.f32 %v1836, %v1836
    %v1965 = vmul.f32 %v1837, %v1837
    %v1966 = vmul.f32 %v1838, %v1838
    %v1967 = vmul.f32 %v1839, %v1839
    %v1968 = vmul.f32 %v1840, %v1840
    %v1969 = vmul.f32 %v1841, %v1841
    %v1970 = vmul.f32 %v1842, %v1842
    %v1971 = vmul.f32 %v1843, %v1843
    %v1972 = vmul.f32 %v1844, %v1844
    %v1973 = vmul.f32 %v1845, %v1845
    %v1974 = vmul.f32 %v1846, %v1846
    %v1975 = vmul.f32 %v1847, %v1847
    %v1976 = vmul.f32 %v1848, %v1848
    %v1977 = vmul.f32 %v1849, %v1849
    %v1978 = vmul.f32 %v1850, %v1850
    %v1979 = vmul.f32 %v1851, %v1851
    %v1980 = vmul.f32 %v1852, %v1852
    %v1981 = vmul.f32 %v1853, %v1853
    %v1982 = vmul.f32 %v1854, %v1854
    %v1983 = vmul.f32 %v1855, %v1855
    %v1984 = vmul.f32 %v1856, %v1856
    %v1985 = vmul.f32 %v1857, %v1857
    %v1986 = vmul.f32 %v1858, %v1858
    %v1987 = vmul.f32 %v1859, %v1859
    %v1988 = vmul.f32 %v1860, %v1860
    %v1989 = vmul.f32 %v1861, %v1861
    %v1990 = vmul.f32 %v1862, %v1862
    %v1991 = vmul.f32 %v1863, %v1863
    %v1992 = vmul.f32 %v1864, %v1864
    %v1993 = vmul.f32 %v1865, %v1865
    %v1994 = vmul.f32 %v1866, %v1866
    %v1995 = vmul.f32 %v1867, %v1867
    %v1996 = vmul.f32 %v1868, %v1868
    %v1997 = vmul.f32 %v1869, %v1869
    %v1998 = vmul.f32 %v1870, %v1870
    %v1999 = vmul.f32 %v1871, %v1871
    %v2000 = vmul.f32 %v1872, %v1872
    %v2001 = vmul.f32 %v1873, %v1873
    %v2002 = vmul.f32 %v1874, %v1874
    %v2003 = vmul.f32 %v1875, %v1875
    %v2004 = vmul.f32 %v1876, %v1876
    %v2005 = vmul.f32 %v1877, %v1877
    %v2006 = vmul.f32 %v1878, %v1878
    %v2007 = vmul.f32 %v1879, %v1879
    %v2008 = vmul.f32 %v1880, %v1880
    %v2009 = vmul.f32 %v1881, %v1881
    %v2010 = vmul.f32 %v1882, %v1882
    %v2011 = vmul.f32 %v1883, %v1883
    %v2012 = vmul.f32 %v1884, %v1884
    %v2013 = vmul.f32 %v1885, %v1885
    %v2014 = vmul.f32 %v1886, %v1886
    %v2015 = vmul.f32 %v1887, %v1887
    %v2016 = vmul.f32 %v1888, %v1888
    %v2017 = vmul.f32 %v1889, %v1889
    %v2018 = vmul.f32 %v1890, %v1890
    %v2019 = vmul.f32 %v1891, %v1891
    %v2020 = vmul.f32 %v1892, %v1892
    %v2021 = vmul.f32 %v1893, %v1893
    %v2022 = vmul.f32 %v1894, %v1894
    %v2023 = vmul.f32 %v1895, %v1895
    %v2024 = vmul.f32 %v1896, %v1896
    %v2025 = vmul.f32 %v1897, %v1897
    %v2026 = vmul.f32 %v1898, %v1898
    %v2027 = vmul.f32 %v1899, %v1899
    %v2028 = vmul.f32 %v1900, %v1900
    %v2029 = vmul.f32 %v1901, %v1901
    %v2030 = vmul.f32 %v1902, %v1902
    %v2031 = vmul.f32 %v1903, %v1903
    %v2032 = vmul.f32 %v1904, %v1904
    %v2033 = vadd.f32 %v1905, %v1909
    %v2034 = vadd.f32 %v2033, %v1913
    %v2035 = vadd.f32 %v2034, %v1917
    %v2036 = vadd.f32 %v2035, %v1921
    %v2037 = vadd.f32 %v2036, %v1925
    %v2038 = vadd.f32 %v2037, %v1929
    %v2039 = vadd.f32 %v2038, %v1933
    %v2040 = vadd.f32 %v2039, %v1937
    %v2041 = vadd.f32 %v2040, %v1941
    %v2042 = vadd.f32 %v2041, %v1945
    %v2043 = vadd.f32 %v2042, %v1949
    %v2044 = vadd.f32 %v2043, %v1953
    %v2045 = vadd.f32 %v2044, %v1957
    %v2046 = vadd.f32 %v2045, %v1961
    %v2047 = vadd.f32 %v2046, %v1965
    %v2048 = vadd.f32 %v2047, %v1969
    %v2049 = vadd.f32 %v2048, %v1973
    %v2050 = vadd.f32 %v2049, %v1977
    %v2051 = vadd.f32 %v2050, %v1981
    %v2052 = vadd.f32 %v2051, %v1985
    %v2053 = vadd.f32 %v2052, %v1989
    %v2054 = vadd.f32 %v2053, %v1993
    %v2055 = vadd.f32 %v2054, %v1997
    %v2056 = vadd.f32 %v2055, %v2001
    %v2057 = vadd.f32 %v2056, %v2005
    %v2058 = vadd.f32 %v2057, %v2009
    %v2059 = vadd.f32 %v2058, %v2013
    %v2060 = vadd.f32 %v2059, %v2017
    %v2061 = vadd.f32 %v2060, %v2021
    %v2062 = vadd.f32 %v2061, %v2025
    %v2063 = vadd.f32 %v2062, %v2029
    %v2064 = vrot.slane %v2063, 4
    %v2065 = vadd.f32 %v2063, %v2064
    %v2066 = vrot.slane %v2065, 2
    %v2067 = vadd.f32 %v2065, %v2066
    %v2068 = vrot.slane %v2067, 1
    %v2069 = vadd.f32 %v2067, %v2068
    %v2070 = vadd.f32 %v1906, %v1910
    %v2071 = vadd.f32 %v2070, %v1914
    %v2072 = vadd.f32 %v2071, %v1918
    %v2073 = vadd.f32 %v2072, %v1922
    %v2074 = vadd.f32 %v2073, %v1926
    %v2075 = vadd.f32 %v2074, %v1930
    %v2076 = vadd.f32 %v2075, %v1934
    %v2077 = vadd.f32 %v2076, %v1938
    %v2078 = vadd.f32 %v2077, %v1942
    %v2079 = vadd.f32 %v2078, %v1946
    %v2080 = vadd.f32 %v2079, %v1950
    %v2081 = vadd.f32 %v2080, %v1954
    %v2082 = vadd.f32 %v2081, %v1958
    %v2083 = vadd.f32 %v2082, %v1962
    %v2084 = vadd.f32 %v2083, %v1966
    %v2085 = vadd.f32 %v2084, %v1970
    %v2086 = vadd.f32 %v2085, %v1974
    %v2087 = vadd.f32 %v2086, %v1978
    %v2088 = vadd.f32 %v2087, %v1982
    %v2089 = vadd.f32 %v2088, %v1986
    %v2090 = vadd.f32 %v2089, %v1990
    %v2091 = vadd.f32 %v2090, %v1994
    %v2092 = vadd.f32 %v2091, %v1998
    %v2093 = vadd.f32 %v2092, %v2002
    %v2094 = vadd.f32 %v2093, %v2006
    %v2095 = vadd.f32 %v2094, %v2010
    %v2096 = vadd.f32 %v2095, %v2014
    %v2097 = vadd.f32 %v2096, %v2018
    %v2098 = vadd.f32 %v2097, %v2022
    %v2099 = vadd.f32 %v2098, %v2026
    %v2100 = vadd.f32 %v2099, %v2030
    %v2101 = vrot.slane %v2100, 4
    %v2102 = vadd.f32 %v2100, %v2101
    %v2103 = vrot.slane %v2102, 2
    %v2104 = vadd.f32 %v2102, %v2103
    %v2105 = vrot.slane %v2104, 1
    %v2106 = vadd.f32 %v2104, %v2105
    %v2107 = vadd.f32 %v1907, %v1911
    %v2108 = vadd.f32 %v2107, %v1915
    %v2109 = vadd.f32 %v2108, %v1919
    %v2110 = vadd.f32 %v2109, %v1923
    %v2111 = vadd.f32 %v2110, %v1927
    %v2112 = vadd.f32 %v2111, %v1931
    %v2113 = vadd.f32 %v2112, %v1935
    %v2114 = vadd.f32 %v2113, %v1939
    %v2115 = vadd.f32 %v2114, %v1943
    %v2116 = vadd.f32 %v2115, %v1947
    %v2117 = vadd.f32 %v2116, %v1951
    %v2118 = vadd.f32 %v2117, %v1955
    %v2119 = vadd.f32 %v2118, %v1959
    %v2120 = vadd.f32 %v2119, %v1963
    %v2121 = vadd.f32 %v2120, %v1967
    %v2122 = vadd.f32 %v2121, %v1971
    %v2123 = vadd.f32 %v2122, %v1975
    %v2124 = vadd.f32 %v2123, %v1979
    %v2125 = vadd.f32 %v2124, %v1983
    %v2126 = vadd.f32 %v2125, %v1987
    %v2127 = vadd.f32 %v2126, %v1991
    %v2128 = vadd.f32 %v2127, %v1995
    %v2129 = vadd.f32 %v2128, %v1999
    %v2130 = vadd.f32 %v2129, %v2003
    %v2131 = vadd.f32 %v2130, %v2007
    %v2132 = vadd.f32 %v2131, %v2011
    %v2133 = vadd.f32 %v2132, %v2015
    %v2134 = vadd.f32 %v2133, %v2019
    %v2135 = vadd.f32 %v2134, %v2023
    %v2136 = vadd.f32 %v2135, %v2027
    %v2137 = vadd.f32 %v2136, %v2031
    %v2138 = vrot.slane %v2137, 4
    %v2139 = vadd.f32 %v2137, %v2138
    %v2140 = vrot.slane %v2139, 2
    %v2141 = vadd.f32 %v2139, %v2140
    %v2142 = vrot.slane %v2141, 1
    %v2143 = vadd.f32 %v2141, %v2142
    %v2144 = vadd.f32 %v1908, %v1912
    %v2145 = vadd.f32 %v2144, %v1916
    %v2146 = vadd.f32 %v2145, %v1920
    %v2147 = vadd.f32 %v2146, %v1924
    %v2148 = vadd.f32 %v2147, %v1928
    %v2149 = vadd.f32 %v2148, %v1932
    %v2150 = vadd.f32 %v2149, %v1936
    %v2151 = vadd.f32 %v2150, %v1940
    %v2152 = vadd.f32 %v2151, %v1944
    %v2153 = vadd.f32 %v2152, %v1948
    %v2154 = vadd.f32 %v2153, %v1952
    %v2155 = vadd.f32 %v2154, %v1956
    %v2156 = vadd.f32 %v2155, %v1960
    %v2157 = vadd.f32 %v2156, %v1964
    %v2158 = vadd.f32 %v2157, %v1968
    %v2159 = vadd.f32 %v2158, %v1972
    %v2160 = vadd.f32 %v2159, %v1976
    %v2161 = vadd.f32 %v2160, %v1980
    %v2162 = vadd.f32 %v2161, %v1984
    %v2163 = vadd.f32 %v2162, %v1988
    %v2164 = vadd.f32 %v2163, %v1992
    %v2165 = vadd.f32 %v2164, %v1996
    %v2166 = vadd.f32 %v2165, %v2000
    %v2167 = vadd.f32 %v2166, %v2004
    %v2168 = vadd.f32 %v2167, %v2008
    %v2169 = vadd.f32 %v2168, %v2012
    %v2170 = vadd.f32 %v2169, %v2016
    %v2171 = vadd.f32 %v2170, %v2020
    %v2172 = vadd.f32 %v2171, %v2024
    %v2173 = vadd.f32 %v2172, %v2028
    %v2174 = vadd.f32 %v2173, %v2032
    %v2175 = vrot.slane %v2174, 4
    %v2176 = vadd.f32 %v2174, %v2175
    %v2177 = vrot.slane %v2176, 2
    %v2178 = vadd.f32 %v2176, %v2177
    %v2179 = vrot.slane %v2178, 1
    %v2180 = vadd.f32 %v2178, %v2179
    %v2181 = vmul.f32 %v2069, %v1772
    %v2182 = vmul.f32 %v2106, %v1772
    %v2183 = vmul.f32 %v2143, %v1772
    %v2184 = vmul.f32 %v2180, %v1772
    %v2185 = vadd.f32 %v2181, 1e-05
    %v2186 = vadd.f32 %v2182, 1e-05
    %v2187 = vadd.f32 %v2183, 1e-05
    %v2188 = vadd.f32 %v2184, 1e-05
    %v2189 = vrsqrt.pop %v2185
    %v2190 = vmul.f32 %v2189, %v2185
    %v2191 = vmul.f32 %v2190, %v2189
    %v2192 = vmul.f32 0.5, %v2191
    %v2193 = vsub.f32 1.5, %v2192
    %v2194 = vmul.f32 %v2189, %v2193
    %vm2195 = vweird.f32 %v2185
    %vm2196 = vweird.f32 %v2189
    %vm2197 = vmor %vm2195, %vm2196
    %v2198 = vsel %vm2197, %v2189, %v2194
    %v2199 = vrsqrt.pop %v2186
    %v2200 = vmul.f32 %v2199, %v2186
    %v2201 = vmul.f32 %v2200, %v2199
    %v2202 = vmul.f32 0.5, %v2201
    %v2203 = vsub.f32 1.5, %v2202
    %v2204 = vmul.f32 %v2199, %v2203
    %vm2205 = vweird.f32 %v2186
    %vm2206 = vweird.f32 %v2199
    %vm2207 = vmor %vm2205, %vm2206
    %v2208 = vsel %vm2207, %v2199, %v2204
    %v2209 = vrsqrt.pop %v2187
    %v2210 = vmul.f32 %v2209, %v2187
    %v2211 = vmul.f32 %v2210, %v2209
    %v2212 = vmul.f32 0.5, %v2211
    %v2213 = vsub.f32 1.5, %v2212
    %v2214 = vmul.f32 %v2209, %v2213
    %vm2215 = vweird.f32 %v2187
    %vm2216 = vweird.f32 %v2209
    %vm2217 = vmor %vm2215, %vm2216
    %v2218 = vsel %vm2217, %v2209, %v2214
    %v2219 = vrsqrt.pop %v2188
    %v2220 = vmul.f32 %v2219, %v2188
    %v2221 = vmul.f32 %v2220, %v2219
    %v2222 = vmul.f32 0.5, %v2221
    %v2223 = vsub.f32 1.5, %v2222
    %v2224 = vmul.f32 %v2219, %v2223
    %vm2225 = vweird.f32 %v2188
    %vm2226 = vweird.f32 %v2219
    %vm2227 = vmor %vm2225, %vm2226
    %v2228 = vsel %vm2227, %v2219, %v2224
    %v2229 = vmul.f32 %v1777, %v2198
    %v2230 = vmul.f32 %v1778, %v2208
    %v2231 = vmul.f32 %v1779, %v2218
    %v2232 = vmul.f32 %v1780, %v2228
    %v2233 = vmul.f32 %v1781, %v2198
    %v2234 = vmul.f32 %v1782, %v2208
    %v2235 = vmul.f32 %v1783, %v2218
    %v2236 = vmul.f32 %v1784, %v2228
    %v2237 = vmul.f32 %v1785, %v2198
    %v2238 = vmul.f32 %v1786, %v2208
    %v2239 = vmul.f32 %v1787, %v2218
    %v2240 = vmul.f32 %v1788, %v2228
    %v2241 = vmul.f32 %v1789, %v2198
    %v2242 = vmul.f32 %v1790, %v2208
    %v2243 = vmul.f32 %v1791, %v2218
    %v2244 = vmul.f32 %v1792, %v2228
    %v2245 = vmul.f32 %v1793, %v2198
    %v2246 = vmul.f32 %v1794, %v2208
    %v2247 = vmul.f32 %v1795, %v2218
    %v2248 = vmul.f32 %v1796, %v2228
    %v2249 = vmul.f32 %v1797, %v2198
    %v2250 = vmul.f32 %v1798, %v2208
    %v2251 = vmul.f32 %v1799, %v2218
    %v2252 = vmul.f32 %v1800, %v2228
    %v2253 = vmul.f32 %v1801, %v2198
    %v2254 = vmul.f32 %v1802, %v2208
    %v2255 = vmul.f32 %v1803, %v2218
    %v2256 = vmul.f32 %v1804, %v2228
    %v2257 = vmul.f32 %v1805, %v2198
    %v2258 = vmul.f32 %v1806, %v2208
    %v2259 = vmul.f32 %v1807, %v2218
    %v2260 = vmul.f32 %v1808, %v2228
    %v2261 = vmul.f32 %v1809, %v2198
    %v2262 = vmul.f32 %v1810, %v2208
    %v2263 = vmul.f32 %v1811, %v2218
    %v2264 = vmul.f32 %v1812, %v2228
    %v2265 = vmul.f32 %v1813, %v2198
    %v2266 = vmul.f32 %v1814, %v2208
    %v2267 = vmul.f32 %v1815, %v2218
    %v2268 = vmul.f32 %v1816, %v2228
    %v2269 = vmul.f32 %v1817, %v2198
    %v2270 = vmul.f32 %v1818, %v2208
    %v2271 = vmul.f32 %v1819, %v2218
    %v2272 = vmul.f32 %v1820, %v2228
    %v2273 = vmul.f32 %v1821, %v2198
    %v2274 = vmul.f32 %v1822, %v2208
    %v2275 = vmul.f32 %v1823, %v2218
    %v2276 = vmul.f32 %v1824, %v2228
    %v2277 = vmul.f32 %v1825, %v2198
    %v2278 = vmul.f32 %v1826, %v2208
    %v2279 = vmul.f32 %v1827, %v2218
    %v2280 = vmul.f32 %v1828, %v2228
    %v2281 = vmul.f32 %v1829, %v2198
    %v2282 = vmul.f32 %v1830, %v2208
    %v2283 = vmul.f32 %v1831, %v2218
    %v2284 = vmul.f32 %v1832, %v2228
    %v2285 = vmul.f32 %v1833, %v2198
    %v2286 = vmul.f32 %v1834, %v2208
    %v2287 = vmul.f32 %v1835, %v2218
    %v2288 = vmul.f32 %v1836, %v2228
    %v2289 = vmul.f32 %v1837, %v2198
    %v2290 = vmul.f32 %v1838, %v2208
    %v2291 = vmul.f32 %v1839, %v2218
    %v2292 = vmul.f32 %v1840, %v2228
    %v2293 = vmul.f32 %v1841, %v2198
    %v2294 = vmul.f32 %v1842, %v2208
    %v2295 = vmul.f32 %v1843, %v2218
    %v2296 = vmul.f32 %v1844, %v2228
    %v2297 = vmul.f32 %v1845, %v2198
    %v2298 = vmul.f32 %v1846, %v2208
    %v2299 = vmul.f32 %v1847, %v2218
    %v2300 = vmul.f32 %v1848, %v2228
    %v2301 = vmul.f32 %v1849, %v2198
    %v2302 = vmul.f32 %v1850, %v2208
    %v2303 = vmul.f32 %v1851, %v2218
    %v2304 = vmul.f32 %v1852, %v2228
    %v2305 = vmul.f32 %v1853, %v2198
    %v2306 = vmul.f32 %v1854, %v2208
    %v2307 = vmul.f32 %v1855, %v2218
    %v2308 = vmul.f32 %v1856, %v2228
    %v2309 = vmul.f32 %v1857, %v2198
    %v2310 = vmul.f32 %v1858, %v2208
    %v2311 = vmul.f32 %v1859, %v2218
    %v2312 = vmul.f32 %v1860, %v2228
    %v2313 = vmul.f32 %v1861, %v2198
    %v2314 = vmul.f32 %v1862, %v2208
    %v2315 = vmul.f32 %v1863, %v2218
    %v2316 = vmul.f32 %v1864, %v2228
    %v2317 = vmul.f32 %v1865, %v2198
    %v2318 = vmul.f32 %v1866, %v2208
    %v2319 = vmul.f32 %v1867, %v2218
    %v2320 = vmul.f32 %v1868, %v2228
    %v2321 = vmul.f32 %v1869, %v2198
    %v2322 = vmul.f32 %v1870, %v2208
    %v2323 = vmul.f32 %v1871, %v2218
    %v2324 = vmul.f32 %v1872, %v2228
    %v2325 = vmul.f32 %v1873, %v2198
    %v2326 = vmul.f32 %v1874, %v2208
    %v2327 = vmul.f32 %v1875, %v2218
    %v2328 = vmul.f32 %v1876, %v2228
    %v2329 = vmul.f32 %v1877, %v2198
    %v2330 = vmul.f32 %v1878, %v2208
    %v2331 = vmul.f32 %v1879, %v2218
    %v2332 = vmul.f32 %v1880, %v2228
    %v2333 = vmul.f32 %v1881, %v2198
    %v2334 = vmul.f32 %v1882, %v2208
    %v2335 = vmul.f32 %v1883, %v2218
    %v2336 = vmul.f32 %v1884, %v2228
    %v2337 = vmul.f32 %v1885, %v2198
    %v2338 = vmul.f32 %v1886, %v2208
    %v2339 = vmul.f32 %v1887, %v2218
    %v2340 = vmul.f32 %v1888, %v2228
    %v2341 = vmul.f32 %v1889, %v2198
    %v2342 = vmul.f32 %v1890, %v2208
    %v2343 = vmul.f32 %v1891, %v2218
    %v2344 = vmul.f32 %v1892, %v2228
    %v2345 = vmul.f32 %v1893, %v2198
    %v2346 = vmul.f32 %v1894, %v2208
    %v2347 = vmul.f32 %v1895, %v2218
    %v2348 = vmul.f32 %v1896, %v2228
    %v2349 = vmul.f32 %v1897, %v2198
    %v2350 = vmul.f32 %v1898, %v2208
    %v2351 = vmul.f32 %v1899, %v2218
    %v2352 = vmul.f32 %v1900, %v2228
    %v2353 = vmul.f32 %v1901, %v2198
    %v2354 = vmul.f32 %v1902, %v2208
    %v2355 = vmul.f32 %v1903, %v2218
    %v2356 = vmul.f32 %v1904, %v2228
    %v2358 = vperm.slane %v1616, 0
    %v2359 = vperm.slane %v1616, 1
    %v2360 = vperm.slane %v1616, 2
    %v2361 = vperm.slane %v1616, 3
    %v2366 = vmul.f32 %v2229, %v2358
    %v2367 = vmul.f32 %v2230, %v2359
    %v2368 = vmul.f32 %v2231, %v2360
    %v2369 = vmul.f32 %v2232, %v2361
    %v2370 = vmul.f32 %v2233, %v2358
    %v2371 = vmul.f32 %v2234, %v2359
    %v2372 = vmul.f32 %v2235, %v2360
    %v2373 = vmul.f32 %v2236, %v2361
    %v2374 = vmul.f32 %v2237, %v2358
    %v2375 = vmul.f32 %v2238, %v2359
    %v2376 = vmul.f32 %v2239, %v2360
    %v2377 = vmul.f32 %v2240, %v2361
    %v2378 = vmul.f32 %v2241, %v2358
    %v2379 = vmul.f32 %v2242, %v2359
    %v2380 = vmul.f32 %v2243, %v2360
    %v2381 = vmul.f32 %v2244, %v2361
    %v2382 = vmul.f32 %v2245, %v2358
    %v2383 = vmul.f32 %v2246, %v2359
    %v2384 = vmul.f32 %v2247, %v2360
    %v2385 = vmul.f32 %v2248, %v2361
    %v2386 = vmul.f32 %v2249, %v2358
    %v2387 = vmul.f32 %v2250, %v2359
    %v2388 = vmul.f32 %v2251, %v2360
    %v2389 = vmul.f32 %v2252, %v2361
    %v2390 = vmul.f32 %v2253, %v2358
    %v2391 = vmul.f32 %v2254, %v2359
    %v2392 = vmul.f32 %v2255, %v2360
    %v2393 = vmul.f32 %v2256, %v2361
    %v2394 = vmul.f32 %v2257, %v2358
    %v2395 = vmul.f32 %v2258, %v2359
    %v2396 = vmul.f32 %v2259, %v2360
    %v2397 = vmul.f32 %v2260, %v2361
    %v2398 = vmul.f32 %v2261, %v2358
    %v2399 = vmul.f32 %v2262, %v2359
    %v2400 = vmul.f32 %v2263, %v2360
    %v2401 = vmul.f32 %v2264, %v2361
    %v2402 = vmul.f32 %v2265, %v2358
    %v2403 = vmul.f32 %v2266, %v2359
    %v2404 = vmul.f32 %v2267, %v2360
    %v2405 = vmul.f32 %v2268, %v2361
    %v2406 = vmul.f32 %v2269, %v2358
    %v2407 = vmul.f32 %v2270, %v2359
    %v2408 = vmul.f32 %v2271, %v2360
    %v2409 = vmul.f32 %v2272, %v2361
    %v2410 = vmul.f32 %v2273, %v2358
    %v2411 = vmul.f32 %v2274, %v2359
    %v2412 = vmul.f32 %v2275, %v2360
    %v2413 = vmul.f32 %v2276, %v2361
    %v2414 = vmul.f32 %v2277, %v2358
    %v2415 = vmul.f32 %v2278, %v2359
    %v2416 = vmul.f32 %v2279, %v2360
    %v2417 = vmul.f32 %v2280, %v2361
    %v2418 = vmul.f32 %v2281, %v2358
    %v2419 = vmul.f32 %v2282, %v2359
    %v2420 = vmul.f32 %v2283, %v2360
    %v2421 = vmul.f32 %v2284, %v2361
    %v2422 = vmul.f32 %v2285, %v2358
    %v2423 = vmul.f32 %v2286, %v2359
    %v2424 = vmul.f32 %v2287, %v2360
    %v2425 = vmul.f32 %v2288, %v2361
    %v2426 = vmul.f32 %v2289, %v2358
    %v2427 = vmul.f32 %v2290, %v2359
    %v2428 = vmul.f32 %v2291, %v2360
    %v2429 = vmul.f32 %v2292, %v2361
    %v2430 = vmul.f32 %v2293, %v2358
    %v2431 = vmul.f32 %v2294, %v2359
    %v2432 = vmul.f32 %v2295, %v2360
    %v2433 = vmul.f32 %v2296, %v2361
    %v2434 = vmul.f32 %v2297, %v2358
    %v2435 = vmul.f32 %v2298, %v2359
    %v2436 = vmul.f32 %v2299, %v2360
    %v2437 = vmul.f32 %v2300, %v2361
    %v2438 = vmul.f32 %v2301, %v2358
    %v2439 = vmul.f32 %v2302, %v2359
    %v2440 = vmul.f32 %v2303, %v2360
    %v2441 = vmul.f32 %v2304, %v2361
    %v2442 = vmul.f32 %v2305, %v2358
    %v2443 = vmul.f32 %v2306, %v2359
    %v2444 = vmul.f32 %v2307, %v2360
    %v2445 = vmul.f32 %v2308, %v2361
    %v2446 = vmul.f32 %v2309, %v2358
    %v2447 = vmul.f32 %v2310, %v2359
    %v2448 = vmul.f32 %v2311, %v2360
    %v2449 = vmul.f32 %v2312, %v2361
    %v2450 = vmul.f32 %v2313, %v2358
    %v2451 = vmul.f32 %v2314, %v2359
    %v2452 = vmul.f32 %v2315, %v2360
    %v2453 = vmul.f32 %v2316, %v2361
    %v2454 = vmul.f32 %v2317, %v2358
    %v2455 = vmul.f32 %v2318, %v2359
    %v2456 = vmul.f32 %v2319, %v2360
    %v2457 = vmul.f32 %v2320, %v2361
    %v2458 = vmul.f32 %v2321, %v2358
    %v2459 = vmul.f32 %v2322, %v2359
    %v2460 = vmul.f32 %v2323, %v2360
    %v2461 = vmul.f32 %v2324, %v2361
    %v2462 = vmul.f32 %v2325, %v2358
    %v2463 = vmul.f32 %v2326, %v2359
    %v2464 = vmul.f32 %v2327, %v2360
    %v2465 = vmul.f32 %v2328, %v2361
    %v2466 = vmul.f32 %v2329, %v2358
    %v2467 = vmul.f32 %v2330, %v2359
    %v2468 = vmul.f32 %v2331, %v2360
    %v2469 = vmul.f32 %v2332, %v2361
    %v2470 = vmul.f32 %v2333, %v2358
    %v2471 = vmul.f32 %v2334, %v2359
    %v2472 = vmul.f32 %v2335, %v2360
    %v2473 = vmul.f32 %v2336, %v2361
    %v2474 = vmul.f32 %v2337, %v2358
    %v2475 = vmul.f32 %v2338, %v2359
    %v2476 = vmul.f32 %v2339, %v2360
    %v2477 = vmul.f32 %v2340, %v2361
    %v2478 = vmul.f32 %v2341, %v2358
    %v2479 = vmul.f32 %v2342, %v2359
    %v2480 = vmul.f32 %v2343, %v2360
    %v2481 = vmul.f32 %v2344, %v2361
    %v2482 = vmul.f32 %v2345, %v2358
    %v2483 = vmul.f32 %v2346, %v2359
    %v2484 = vmul.f32 %v2347, %v2360
    %v2485 = vmul.f32 %v2348, %v2361
    %v2486 = vmul.f32 %v2349, %v2358
    %v2487 = vmul.f32 %v2350, %v2359
    %v2488 = vmul.f32 %v2351, %v2360
    %v2489 = vmul.f32 %v2352, %v2361
    %v2490 = vmul.f32 %v2353, %v2358
    %v2491 = vmul.f32 %v2354, %v2359
    %v2492 = vmul.f32 %v2355, %v2360
    %v2493 = vmul.f32 %v2356, %v2361
    %v2495 = vperm.slane %v1617, 0
    %v2496 = vperm.slane %v1617, 1
    %v2497 = vperm.slane %v1617, 2
    %v2498 = vperm.slane %v1617, 3
    %v2503 = vadd.f32 %v2366, %v2495
    %v2504 = vadd.f32 %v2367, %v2496
    %v2505 = vadd.f32 %v2368, %v2497
    %v2506 = vadd.f32 %v2369, %v2498
    %v2507 = vadd.f32 %v2370, %v2495
    %v2508 = vadd.f32 %v2371, %v2496
    %v2509 = vadd.f32 %v2372, %v2497
    %v2510 = vadd.f32 %v2373, %v2498
    %v2511 = vadd.f32 %v2374, %v2495
    %v2512 = vadd.f32 %v2375, %v2496
    %v2513 = vadd.f32 %v2376, %v2497
    %v2514 = vadd.f32 %v2377, %v2498
    %v2515 = vadd.f32 %v2378, %v2495
    %v2516 = vadd.f32 %v2379, %v2496
    %v2517 = vadd.f32 %v2380, %v2497
    %v2518 = vadd.f32 %v2381, %v2498
    %v2519 = vadd.f32 %v2382, %v2495
    %v2520 = vadd.f32 %v2383, %v2496
    %v2521 = vadd.f32 %v2384, %v2497
    %v2522 = vadd.f32 %v2385, %v2498
    %v2523 = vadd.f32 %v2386, %v2495
    %v2524 = vadd.f32 %v2387, %v2496
    %v2525 = vadd.f32 %v2388, %v2497
    %v2526 = vadd.f32 %v2389, %v2498
    %v2527 = vadd.f32 %v2390, %v2495
    %v2528 = vadd.f32 %v2391, %v2496
    %v2529 = vadd.f32 %v2392, %v2497
    %v2530 = vadd.f32 %v2393, %v2498
    %v2531 = vadd.f32 %v2394, %v2495
    %v2532 = vadd.f32 %v2395, %v2496
    %v2533 = vadd.f32 %v2396, %v2497
    %v2534 = vadd.f32 %v2397, %v2498
    %v2535 = vadd.f32 %v2398, %v2495
    %v2536 = vadd.f32 %v2399, %v2496
    %v2537 = vadd.f32 %v2400, %v2497
    %v2538 = vadd.f32 %v2401, %v2498
    %v2539 = vadd.f32 %v2402, %v2495
    %v2540 = vadd.f32 %v2403, %v2496
    %v2541 = vadd.f32 %v2404, %v2497
    %v2542 = vadd.f32 %v2405, %v2498
    %v2543 = vadd.f32 %v2406, %v2495
    %v2544 = vadd.f32 %v2407, %v2496
    %v2545 = vadd.f32 %v2408, %v2497
    %v2546 = vadd.f32 %v2409, %v2498
    %v2547 = vadd.f32 %v2410, %v2495
    %v2548 = vadd.f32 %v2411, %v2496
    %v2549 = vadd.f32 %v2412, %v2497
    %v2550 = vadd.f32 %v2413, %v2498
    %v2551 = vadd.f32 %v2414, %v2495
    %v2552 = vadd.f32 %v2415, %v2496
    %v2553 = vadd.f32 %v2416, %v2497
    %v2554 = vadd.f32 %v2417, %v2498
    %v2555 = vadd.f32 %v2418, %v2495
    %v2556 = vadd.f32 %v2419, %v2496
    %v2557 = vadd.f32 %v2420, %v2497
    %v2558 = vadd.f32 %v2421, %v2498
    %v2559 = vadd.f32 %v2422, %v2495
    %v2560 = vadd.f32 %v2423, %v2496
    %v2561 = vadd.f32 %v2424, %v2497
    %v2562 = vadd.f32 %v2425, %v2498
    %v2563 = vadd.f32 %v2426, %v2495
    %v2564 = vadd.f32 %v2427, %v2496
    %v2565 = vadd.f32 %v2428, %v2497
    %v2566 = vadd.f32 %v2429, %v2498
    %v2567 = vadd.f32 %v2430, %v2495
    %v2568 = vadd.f32 %v2431, %v2496
    %v2569 = vadd.f32 %v2432, %v2497
    %v2570 = vadd.f32 %v2433, %v2498
    %v2571 = vadd.f32 %v2434, %v2495
    %v2572 = vadd.f32 %v2435, %v2496
    %v2573 = vadd.f32 %v2436, %v2497
    %v2574 = vadd.f32 %v2437, %v2498
    %v2575 = vadd.f32 %v2438, %v2495
    %v2576 = vadd.f32 %v2439, %v2496
    %v2577 = vadd.f32 %v2440, %v2497
    %v2578 = vadd.f32 %v2441, %v2498
    %v2579 = vadd.f32 %v2442, %v2495
    %v2580 = vadd.f32 %v2443, %v2496
    %v2581 = vadd.f32 %v2444, %v2497
    %v2582 = vadd.f32 %v2445, %v2498
    %v2583 = vadd.f32 %v2446, %v2495
    %v2584 = vadd.f32 %v2447, %v2496
    %v2585 = vadd.f32 %v2448, %v2497
    %v2586 = vadd.f32 %v2449, %v2498
    %v2587 = vadd.f32 %v2450, %v2495
    %v2588 = vadd.f32 %v2451, %v2496
    %v2589 = vadd.f32 %v2452, %v2497
    %v2590 = vadd.f32 %v2453, %v2498
    %v2591 = vadd.f32 %v2454, %v2495
    %v2592 = vadd.f32 %v2455, %v2496
    %v2593 = vadd.f32 %v2456, %v2497
    %v2594 = vadd.f32 %v2457, %v2498
    %v2595 = vadd.f32 %v2458, %v2495
    %v2596 = vadd.f32 %v2459, %v2496
    %v2597 = vadd.f32 %v2460, %v2497
    %v2598 = vadd.f32 %v2461, %v2498
    %v2599 = vadd.f32 %v2462, %v2495
    %v2600 = vadd.f32 %v2463, %v2496
    %v2601 = vadd.f32 %v2464, %v2497
    %v2602 = vadd.f32 %v2465, %v2498
    %v2603 = vadd.f32 %v2466, %v2495
    %v2604 = vadd.f32 %v2467, %v2496
    %v2605 = vadd.f32 %v2468, %v2497
    %v2606 = vadd.f32 %v2469, %v2498
    %v2607 = vadd.f32 %v2470, %v2495
    %v2608 = vadd.f32 %v2471, %v2496
    %v2609 = vadd.f32 %v2472, %v2497
    %v2610 = vadd.f32 %v2473, %v2498
    %v2611 = vadd.f32 %v2474, %v2495
    %v2612 = vadd.f32 %v2475, %v2496
    %v2613 = vadd.f32 %v2476, %v2497
    %v2614 = vadd.f32 %v2477, %v2498
    %v2615 = vadd.f32 %v2478, %v2495
    %v2616 = vadd.f32 %v2479, %v2496
    %v2617 = vadd.f32 %v2480, %v2497
    %v2618 = vadd.f32 %v2481, %v2498
    %v2619 = vadd.f32 %v2482, %v2495
    %v2620 = vadd.f32 %v2483, %v2496
    %v2621 = vadd.f32 %v2484, %v2497
    %v2622 = vadd.f32 %v2485, %v2498
    %v2623 = vadd.f32 %v2486, %v2495
    %v2624 = vadd.f32 %v2487, %v2496
    %v2625 = vadd.f32 %v2488, %v2497
    %v2626 = vadd.f32 %v2489, %v2498
    %v2627 = vadd.f32 %v2490, %v2495
    %v2628 = vadd.f32 %v2491, %v2496
    %v2629 = vadd.f32 %v2492, %v2497
    %v2630 = vadd.f32 %v2493, %v2498
    %v2631 = vmax.f32 %v2503, 0.0
    %v2632 = vmax.f32 %v2504, 0.0
    %v2633 = vmax.f32 %v2505, 0.0
    %v2634 = vmax.f32 %v2506, 0.0
    %v2635 = vmax.f32 %v2507, 0.0
    %v2636 = vmax.f32 %v2508, 0.0
    %v2637 = vmax.f32 %v2509, 0.0
    %v2638 = vmax.f32 %v2510, 0.0
    %v2639 = vmax.f32 %v2511, 0.0
    %v2640 = vmax.f32 %v2512, 0.0
    %v2641 = vmax.f32 %v2513, 0.0
    %v2642 = vmax.f32 %v2514, 0.0
    %v2643 = vmax.f32 %v2515, 0.0
    %v2644 = vmax.f32 %v2516, 0.0
    %v2645 = vmax.f32 %v2517, 0.0
    %v2646 = vmax.f32 %v2518, 0.0
    %v2647 = vmax.f32 %v2519, 0.0
    %v2648 = vmax.f32 %v2520, 0.0
    %v2649 = vmax.f32 %v2521, 0.0
    %v2650 = vmax.f32 %v2522, 0.0
    %v2651 = vmax.f32 %v2523, 0.0
    %v2652 = vmax.f32 %v2524, 0.0
    %v2653 = vmax.f32 %v2525, 0.0
    %v2654 = vmax.f32 %v2526, 0.0
    %v2655 = vmax.f32 %v2527, 0.0
    %v2656 = vmax.f32 %v2528, 0.0
    %v2657 = vmax.f32 %v2529, 0.0
    %v2658 = vmax.f32 %v2530, 0.0
    %v2659 = vmax.f32 %v2531, 0.0
    %v2660 = vmax.f32 %v2532, 0.0
    %v2661 = vmax.f32 %v2533, 0.0
    %v2662 = vmax.f32 %v2534, 0.0
    %v2663 = vmax.f32 %v2535, 0.0
    %v2664 = vmax.f32 %v2536, 0.0
    %v2665 = vmax.f32 %v2537, 0.0
    %v2666 = vmax.f32 %v2538, 0.0
    %v2667 = vmax.f32 %v2539, 0.0
    %v2668 = vmax.f32 %v2540, 0.0
    %v2669 = vmax.f32 %v2541, 0.0
    %v2670 = vmax.f32 %v2542, 0.0
    %v2671 = vmax.f32 %v2543, 0.0
    %v2672 = vmax.f32 %v2544, 0.0
    %v2673 = vmax.f32 %v2545, 0.0
    %v2674 = vmax.f32 %v2546, 0.0
    %v2675 = vmax.f32 %v2547, 0.0
    %v2676 = vmax.f32 %v2548, 0.0
    %v2677 = vmax.f32 %v2549, 0.0
    %v2678 = vmax.f32 %v2550, 0.0
    %v2679 = vmax.f32 %v2551, 0.0
    %v2680 = vmax.f32 %v2552, 0.0
    %v2681 = vmax.f32 %v2553, 0.0
    %v2682 = vmax.f32 %v2554, 0.0
    %v2683 = vmax.f32 %v2555, 0.0
    %v2684 = vmax.f32 %v2556, 0.0
    %v2685 = vmax.f32 %v2557, 0.0
    %v2686 = vmax.f32 %v2558, 0.0
    %v2687 = vmax.f32 %v2559, 0.0
    %v2688 = vmax.f32 %v2560, 0.0
    %v2689 = vmax.f32 %v2561, 0.0
    %v2690 = vmax.f32 %v2562, 0.0
    %v2691 = vmax.f32 %v2563, 0.0
    %v2692 = vmax.f32 %v2564, 0.0
    %v2693 = vmax.f32 %v2565, 0.0
    %v2694 = vmax.f32 %v2566, 0.0
    %v2695 = vmax.f32 %v2567, 0.0
    %v2696 = vmax.f32 %v2568, 0.0
    %v2697 = vmax.f32 %v2569, 0.0
    %v2698 = vmax.f32 %v2570, 0.0
    %v2699 = vmax.f32 %v2571, 0.0
    %v2700 = vmax.f32 %v2572, 0.0
    %v2701 = vmax.f32 %v2573, 0.0
    %v2702 = vmax.f32 %v2574, 0.0
    %v2703 = vmax.f32 %v2575, 0.0
    %v2704 = vmax.f32 %v2576, 0.0
    %v2705 = vmax.f32 %v2577, 0.0
    %v2706 = vmax.f32 %v2578, 0.0
    %v2707 = vmax.f32 %v2579, 0.0
    %v2708 = vmax.f32 %v2580, 0.0
    %v2709 = vmax.f32 %v2581, 0.0
    %v2710 = vmax.f32 %v2582, 0.0
    %v2711 = vmax.f32 %v2583, 0.0
    %v2712 = vmax.f32 %v2584, 0.0
    %v2713 = vmax.f32 %v2585, 0.0
    %v2714 = vmax.f32 %v2586, 0.0
    %v2715 = vmax.f32 %v2587, 0.0
    %v2716 = vmax.f32 %v2588, 0.0
    %v2717 = vmax.f32 %v2589, 0.0
    %v2718 = vmax.f32 %v2590, 0.0
    %v2719 = vmax.f32 %v2591, 0.0
    %v2720 = vmax.f32 %v2592, 0.0
    %v2721 = vmax.f32 %v2593, 0.0
    %v2722 = vmax.f32 %v2594, 0.0
    %v2723 = vmax.f32 %v2595, 0.0
    %v2724 = vmax.f32 %v2596, 0.0
    %v2725 = vmax.f32 %v2597, 0.0
    %v2726 = vmax.f32 %v2598, 0.0
    %v2727 = vmax.f32 %v2599, 0.0
    %v2728 = vmax.f32 %v2600, 0.0
    %v2729 = vmax.f32 %v2601, 0.0
    %v2730 = vmax.f32 %v2602, 0.0
    %v2731 = vmax.f32 %v2603, 0.0
    %v2732 = vmax.f32 %v2604, 0.0
    %v2733 = vmax.f32 %v2605, 0.0
    %v2734 = vmax.f32 %v2606, 0.0
    %v2735 = vmax.f32 %v2607, 0.0
    %v2736 = vmax.f32 %v2608, 0.0
    %v2737 = vmax.f32 %v2609, 0.0
    %v2738 = vmax.f32 %v2610, 0.0
    %v2739 = vmax.f32 %v2611, 0.0
    %v2740 = vmax.f32 %v2612, 0.0
    %v2741 = vmax.f32 %v2613, 0.0
    %v2742 = vmax.f32 %v2614, 0.0
    %v2743 = vmax.f32 %v2615, 0.0
    %v2744 = vmax.f32 %v2616, 0.0
    %v2745 = vmax.f32 %v2617, 0.0
    %v2746 = vmax.f32 %v2618, 0.0
    %v2747 = vmax.f32 %v2619, 0.0
    %v2748 = vmax.f32 %v2620, 0.0
    %v2749 = vmax.f32 %v2621, 0.0
    %v2750 = vmax.f32 %v2622, 0.0
    %v2751 = vmax.f32 %v2623, 0.0
    %v2752 = vmax.f32 %v2624, 0.0
    %v2753 = vmax.f32 %v2625, 0.0
    %v2754 = vmax.f32 %v2626, 0.0
    %v2755 = vmax.f32 %v2627, 0.0
    %v2756 = vmax.f32 %v2628, 0.0
    %v2757 = vmax.f32 %v2629, 0.0
    %v2758 = vmax.f32 %v2630, 0.0
    %v2759 = vld [vmem:[#allocation6] sm:$0xff]
    %v2760 = vld [vmem:[#allocation6 + $0x8] sm:$0xff]
    %v2761 = vld [vmem:[#allocation6 + $0x10] sm:$0xff]
    %v2762 = vld [vmem:[#allocation6 + $0x18] sm:$0xff]
    %v2763 = vld [vmem:[#allocation6 + $0x20] sm:$0xff]
    %v2764 = vld [vmem:[#allocation6 + $0x28] sm:$0xff]
    %v2765 = vld [vmem:[#allocation6 + $0x30] sm:$0xff]
    %v2766 = vld [vmem:[#allocation6 + $0x38] sm:$0xff]
    %v2767 = vld [vmem:[#allocation6 + $0x40] sm:$0xff]
    %v2768 = vld [vmem:[#allocation6 + $0x48] sm:$0xff]
    %v2769 = vld [vmem:[#allocation6 + $0x50] sm:$0xff]
    %v2770 = vld [vmem:[#allocation6 + $0x58] sm:$0xff]
    %v2771 = vld [vmem:[#allocation6 + $0x60] sm:$0xff]
    %v2772 = vld [vmem:[#allocation6 + $0x68] sm:$0xff]
    %v2773 = vld [vmem:[#allocation6 + $0x70] sm:$0xff]
    %v2774 = vld [vmem:[#allocation6 + $0x78] sm:$0xff]
    %v2775 = vld [vmem:[#allocation6 + $0x80] sm:$0xff]
    %v2776 = vld [vmem:[#allocation6 + $0x88] sm:$0xff]
    %v2777 = vld [vmem:[#allocation6 + $0x90] sm:$0xff]
    %v2778 = vld [vmem:[#allocation6 + $0x98] sm:$0xff]
    %v2779 = vld [vmem:[#allocation6 + $0xa0] sm:$0xff]
    %v2780 = vld [vmem:[#allocation6 + $0xa8] sm:$0xff]
    %v2781 = vld [vmem:[#allocation6 + $0xb0] sm:$0xff]
    %v2782 = vld [vmem:[#allocation6 + $0xb8] sm:$0xff]
    %v2783 = vld [vmem:[#allocation6 + $0xc0] sm:$0xff]
    %v2784 = vld [vmem:[#allocation6 + $0xc8] sm:$0xff]
    %v2785 = vld [vmem:[#allocation6 + $0xd0] sm:$0xff]
    %v2786 = vld [vmem:[#allocation6 + $0xd8] sm:$0xff]
    %v2787 = vld [vmem:[#allocation6 + $0xe0] sm:$0xff]
    %v2788 = vld [vmem:[#allocation6 + $0xe8] sm:$0xff]
    %v2789 = vld [vmem:[#allocation6 + $0xf0] sm:$0xff]
    %v2790 = vld [vmem:[#allocation6 + $0xf8] sm:$0xff]
    %v2791 = vld [vmem:[#allocation6 + $0x100] sm:$0xff]
    %v2792 = vld [vmem:[#allocation6 + $0x108] sm:$0xff]
    %v2793 = vld [vmem:[#allocation6 + $0x110] sm:$0xff]
    %v2794 = vld [vmem:[#allocation6 + $0x118] sm:$0xff]
    %v2795 = vld [vmem:[#allocation6 + $0x120] sm:$0xff]
    %v2796 = vld [vmem:[#allocation6 + $0x128] sm:$0xff]
    %v2797 = vld [vmem:[#allocation6 + $0x130] sm:$0xff]
    %v2798 = vld [vmem:[#allocation6 + $0x138] sm:$0xff]
    %v2799 = vld [vmem:[#allocation6 + $0x140] sm:$0xff]
    %v2800 = vld [vmem:[#allocation6 + $0x148] sm:$0xff]
    %v2801 = vld [vmem:[#allocation6 + $0x150] sm:$0xff]
    %v2802 = vld [vmem:[#allocation6 + $0x158] sm:$0xff]
    %v2803 = vld [vmem:[#allocation6 + $0x160] sm:$0xff]
    %v2804 = vld [vmem:[#allocation6 + $0x168] sm:$0xff]
    %v2805 = vld [vmem:[#allocation6 + $0x170] sm:$0xff]
    %v2806 = vld [vmem:[#allocation6 + $0x178] sm:$0xff]
    %v2807 = vld [vmem:[#allocation6 + $0x180] sm:$0xff]
    %v2808 = vld [vmem:[#allocation6 + $0x188] sm:$0xff]
    %v2809 = vld [vmem:[#allocation6 + $0x190] sm:$0xff]
    %v2810 = vld [vmem:[#allocation6 + $0x198] sm:$0xff]
    %v2811 = vld [vmem:[#allocation6 + $0x1a0] sm:$0xff]
    %v2812 = vld [vmem:[#allocation6 + $0x1a8] sm:$0xff]
    %v2813 = vld [vmem:[#allocation6 + $0x1b0] sm:$0xff]
    %v2814 = vld [vmem:[#allocation6 + $0x1b8] sm:$0xff]
    %v2815 = vld [vmem:[#allocation6 + $0x1c0] sm:$0xff]
    %v2816 = vld [vmem:[#allocation6 + $0x1c8] sm:$0xff]
    %v2817 = vld [vmem:[#allocation6 + $0x1d0] sm:$0xff]
    %v2818 = vld [vmem:[#allocation6 + $0x1d8] sm:$0xff]
    %v2819 = vld [vmem:[#allocation6 + $0x1e0] sm:$0xff]
    %v2820 = vld [vmem:[#allocation6 + $0x1e8] sm:$0xff]
    %v2821 = vld [vmem:[#allocation6 + $0x1f0] sm:$0xff]
    %v2822 = vld [vmem:[#allocation6 + $0x1f8] sm:$0xff]
    %v2823 = vld [vmem:[#allocation6 + $0x200] sm:$0xff]
    %v2824 = vld [vmem:[#allocation6 + $0x208] sm:$0xff]
    %v2825 = vld [vmem:[#allocation6 + $0x210] sm:$0xff]
    %v2826 = vld [vmem:[#allocation6 + $0x218] sm:$0xff]
    %v2827 = vld [vmem:[#allocation6 + $0x220] sm:$0xff]
    %v2828 = vld [vmem:[#allocation6 + $0x228] sm:$0xff]
    %v2829 = vld [vmem:[#allocation6 + $0x230] sm:$0xff]
    %v2830 = vld [vmem:[#allocation6 + $0x238] sm:$0xff]
    %v2831 = vld [vmem:[#allocation6 + $0x240] sm:$0xff]
    %v2832 = vld [vmem:[#allocation6 + $0x248] sm:$0xff]
    %v2833 = vld [vmem:[#allocation6 + $0x250] sm:$0xff]
    %v2834 = vld [vmem:[#allocation6 + $0x258] sm:$0xff]
    %v2835 = vld [vmem:[#allocation6 + $0x260] sm:$0xff]
    %v2836 = vld [vmem:[#allocation6 + $0x268] sm:$0xff]
    %v2837 = vld [vmem:[#allocation6 + $0x270] sm:$0xff]
    %v2838 = vld [vmem:[#allocation6 + $0x278] sm:$0xff]
    %v2839 = vld [vmem:[#allocation6 + $0x280] sm:$0xff]
    %v2840 = vld [vmem:[#allocation6 + $0x288] sm:$0xff]
    %v2841 = vld [vmem:[#allocation6 + $0x290] sm:$0xff]
    %v2842 = vld [vmem:[#allocation6 + $0x298] sm:$0xff]
    %v2843 = vld [vmem:[#allocation6 + $0x2a0] sm:$0xff]
    %v2844 = vld [vmem:[#allocation6 + $0x2a8] sm:$0xff]
    %v2845 = vld [vmem:[#allocation6 + $0x2b0] sm:$0xff]
    %v2846 = vld [vmem:[#allocation6 + $0x2b8] sm:$0xff]
    %v2847 = vld [vmem:[#allocation6 + $0x2c0] sm:$0xff]
    %v2848 = vld [vmem:[#allocation6 + $0x2c8] sm:$0xff]
    %v2849 = vld [vmem:[#allocation6 + $0x2d0] sm:$0xff]
    %v2850 = vld [vmem:[#allocation6 + $0x2d8] sm:$0xff]
    %v2851 = vld [vmem:[#allocation6 + $0x2e0] sm:$0xff]
    %v2852 = vld [vmem:[#allocation6 + $0x2e8] sm:$0xff]
    %v2853 = vld [vmem:[#allocation6 + $0x2f0] sm:$0xff]
    %v2854 = vld [vmem:[#allocation6 + $0x2f8] sm:$0xff]
    %v2855 = vld [vmem:[#allocation6 + $0x300] sm:$0xff]
    %v2856 = vld [vmem:[#allocation6 + $0x308] sm:$0xff]
    %v2857 = vld [vmem:[#allocation6 + $0x310] sm:$0xff]
    %v2858 = vld [vmem:[#allocation6 + $0x318] sm:$0xff]
    %v2859 = vld [vmem:[#allocation6 + $0x320] sm:$0xff]
    %v2860 = vld [vmem:[#allocation6 + $0x328] sm:$0xff]
    %v2861 = vld [vmem:[#allocation6 + $0x330] sm:$0xff]
    %v2862 = vld [vmem:[#allocation6 + $0x338] sm:$0xff]
    %v2863 = vld [vmem:[#allocation6 + $0x340] sm:$0xff]
    %v2864 = vld [vmem:[#allocation6 + $0x348] sm:$0xff]
    %v2865 = vld [vmem:[#allocation6 + $0x350] sm:$0xff]
    %v2866 = vld [vmem:[#allocation6 + $0x358] sm:$0xff]
    %v2867 = vld [vmem:[#allocation6 + $0x360] sm:$0xff]
    %v2868 = vld [vmem:[#allocation6 + $0x368] sm:$0xff]
    %v2869 = vld [vmem:[#allocation6 + $0x370] sm:$0xff]
    %v2870 = vld [vmem:[#allocation6 + $0x378] sm:$0xff]
    %v2871 = vld [vmem:[#allocation6 + $0x380] sm:$0xff]
    %v2872 = vld [vmem:[#allocation6 + $0x388] sm:$0xff]
    %v2873 = vld [vmem:[#allocation6 + $0x390] sm:$0xff]
    %v2874 = vld [vmem:[#allocation6 + $0x398] sm:$0xff]
    %v2875 = vld [vmem:[#allocation6 + $0x3a0] sm:$0xff]
    %v2876 = vld [vmem:[#allocation6 + $0x3a8] sm:$0xff]
    %v2877 = vld [vmem:[#allocation6 + $0x3b0] sm:$0xff]
    %v2878 = vld [vmem:[#allocation6 + $0x3b8] sm:$0xff]
    %v2879 = vld [vmem:[#allocation6 + $0x3c0] sm:$0xff]
    %v2880 = vld [vmem:[#allocation6 + $0x3c8] sm:$0xff]
    %v2881 = vld [vmem:[#allocation6 + $0x3d0] sm:$0xff]
    %v2882 = vld [vmem:[#allocation6 + $0x3d8] sm:$0xff]
    %v2883 = vld [vmem:[#allocation6 + $0x3e0] sm:$0xff]
    %v2884 = vld [vmem:[#allocation6 + $0x3e8] sm:$0xff]
    %v2885 = vld [vmem:[#allocation6 + $0x3f0] sm:$0xff]
    %v2886 = vld [vmem:[#allocation6 + $0x3f8] sm:$0xff]
    %v2887 = vld [vmem:[%s8] sm:$0x3]
    %v2889 = vperm.slane %v2887, 0
    %v2890 = vperm.slane %v2887, 1
    %2893 = vmatpush.msra.mxu0 %v2789
    %2894 = vmatpush.msra.mxu0 %v2787
    %2895 = vmatpush.msra.mxu0 %v2785
    %2896 = vmatpush.msra.mxu0 %v2783
    %2897 = vmatpush.msra.mxu0 %v2781
    %2898 = vmatpush.msra.mxu0 %v2779
    %2899 = vmatpush.msra.mxu0 %v2777
    %2900 = vmatpush.msra.mxu0 %v2775
    %2901 = vmatpush.msra.mxu0 %v2773
    %2902 = vmatpush.msra.mxu0 %v2771
    %2903 = vmatpush.msra.mxu0 %v2769
    %2904 = vmatpush.msra.mxu0 %v2767
    %2905 = vmatpush.msra.mxu0 %v2765
    %2906 = vmatpush.msra.mxu0 %v2763
    %2907 = vmatpush.msra.mxu0 %v2761
    %2908 = vmatpush.msra.mxu0 %v2759
    %2909 = vmatmul.f32.gmra.mxu0 %v2631
    %v2910 = vpop.f32.mrf.mxu0
    %v2911 = vadd.f32 %v2889, %v2910
    %2912 = vmatmul.f32.gmra.mxu0 %v2635
    %v2913 = vpop.f32.mrf.mxu0
    %v2914 = vadd.f32 %v2889, %v2913
    %2915 = vmatmul.f32.gmra.mxu0 %v2639
    %v2916 = vpop.f32.mrf.mxu0
    %v2917 = vadd.f32 %v2889, %v2916
    %2918 = vmatmul.f32.gmra.mxu0 %v2643
    %v2919 = vpop.f32.mrf.mxu0
    %v2920 = vadd.f32 %v2889, %v2919
    %2921 = vmatmul.f32.gmra.mxu0 %v2647
    %v2922 = vpop.f32.mrf.mxu0
    %v2923 = vadd.f32 %v2889, %v2922
    %2924 = vmatmul.f32.gmra.mxu0 %v2651
    %v2925 = vpop.f32.mrf.mxu0
    %v2926 = vadd.f32 %v2889, %v2925
    %2927 = vmatmul.f32.gmra.mxu0 %v2655
    %v2928 = vpop.f32.mrf.mxu0
    %v2929 = vadd.f32 %v2889, %v2928
    %2930 = vmatmul.f32.gmra.mxu0 %v2659
    %v2931 = vpop.f32.mrf.mxu0
    %v2932 = vadd.f32 %v2889, %v2931
    %2933 = vmatmul.f32.gmra.mxu0 %v2663
    %v2934 = vpop.f32.mrf.mxu0
    %v2935 = vadd.f32 %v2889, %v2934
    %2936 = vmatmul.f32.gmra.mxu0 %v2667
    %v2937 = vpop.f32.mrf.mxu0
    %v2938 = vadd.f32 %v2889, %v2937
    %2939 = vmatmul.f32.gmra.mxu0 %v2671
    %v2940 = vpop.f32.mrf.mxu0
    %v2941 = vadd.f32 %v2889, %v2940
    %2942 = vmatmul.f32.gmra.mxu0 %v2675
    %v2943 = vpop.f32.mrf.mxu0
    %v2944 = vadd.f32 %v2889, %v2943
    %2945 = vmatmul.f32.gmra.mxu0 %v2679
    %v2946 = vpop.f32.mrf.mxu0
    %v2947 = vadd.f32 %v2889, %v2946
    %2948 = vmatmul.f32.gmra.mxu0 %v2683
    %v2949 = vpop.f32.mrf.mxu0
    %v2950 = vadd.f32 %v2889, %v2949
    %2951 = vmatmul.f32.gmra.mxu0 %v2687
    %v2952 = vpop.f32.mrf.mxu0
    %v2953 = vadd.f32 %v2889, %v2952
    %2954 = vmatmul.f32.gmra.mxu0 %v2691
    %v2955 = vpop.f32.mrf.mxu0
    %v2956 = vadd.f32 %v2889, %v2955
    %2957 = vmatmul.f32.gmra.mxu0 %v2695
    %v2958 = vpop.f32.mrf.mxu0
    %v2959 = vadd.f32 %v2889, %v2958
    %2960 = vmatmul.f32.gmra.mxu0 %v2699
    %v2961 = vpop.f32.mrf.mxu0
    %v2962 = vadd.f32 %v2889, %v2961
    %2963 = vmatmul.f32.gmra.mxu0 %v2703
    %v2964 = vpop.f32.mrf.mxu0
    %v2965 = vadd.f32 %v2889, %v2964
    %2966 = vmatmul.f32.gmra.mxu0 %v2707
    %v2967 = vpop.f32.mrf.mxu0
    %v2968 = vadd.f32 %v2889, %v2967
    %2969 = vmatmul.f32.gmra.mxu0 %v2711
    %v2970 = vpop.f32.mrf.mxu0
    %v2971 = vadd.f32 %v2889, %v2970
    %2972 = vmatmul.f32.gmra.mxu0 %v2715
    %v2973 = vpop.f32.mrf.mxu0
    %v2974 = vadd.f32 %v2889, %v2973
    %2975 = vmatmul.f32.gmra.mxu0 %v2719
    %v2976 = vpop.f32.mrf.mxu0
    %v2977 = vadd.f32 %v2889, %v2976
    %2978 = vmatmul.f32.gmra.mxu0 %v2723
    %v2979 = vpop.f32.mrf.mxu0
    %v2980 = vadd.f32 %v2889, %v2979
    %2981 = vmatmul.f32.gmra.mxu0 %v2727
    %v2982 = vpop.f32.mrf.mxu0
    %v2983 = vadd.f32 %v2889, %v2982
    %2984 = vmatmul.f32.gmra.mxu0 %v2731
    %v2985 = vpop.f32.mrf.mxu0
    %v2986 = vadd.f32 %v2889, %v2985
    %2987 = vmatmul.f32.gmra.mxu0 %v2735
    %v2988 = vpop.f32.mrf.mxu0
    %v2989 = vadd.f32 %v2889, %v2988
    %2990 = vmatmul.f32.gmra.mxu0 %v2739
    %v2991 = vpop.f32.mrf.mxu0
    %v2992 = vadd.f32 %v2889, %v2991
    %2993 = vmatmul.f32.gmra.mxu0 %v2743
    %v2994 = vpop.f32.mrf.mxu0
    %v2995 = vadd.f32 %v2889, %v2994
    %2996 = vmatmul.f32.gmra.mxu0 %v2747
    %v2997 = vpop.f32.mrf.mxu0
    %v2998 = vadd.f32 %v2889, %v2997
    %2999 = vmatmul.f32.gmra.mxu0 %v2751
    %v3000 = vpop.f32.mrf.mxu0
    %v3001 = vadd.f32 %v2889, %v3000
    %3002 = vmatmul.f32.gmra.mxu0 %v2755
    %v3003 = vpop.f32.mrf.mxu0
    %v3004 = vadd.f32 %v2889, %v3003
    %3005 = vdwg.mxu0
    %3006 = vmatpush.msra.mxu0 %v2821
    %3007 = vmatpush.msra.mxu0 %v2819
    %3008 = vmatpush.msra.mxu0 %v2817
    %3009 = vmatpush.msra.mxu0 %v2815
    %3010 = vmatpush.msra.mxu0 %v2813
    %3011 = vmatpush.msra.mxu0 %v2811
    %3012 = vmatpush.msra.mxu0 %v2809
    %3013 = vmatpush.msra.mxu0 %v2807
    %3014 = vmatpush.msra.mxu0 %v2805
    %3015 = vmatpush.msra.mxu0 %v2803
    %3016 = vmatpush.msra.mxu0 %v2801
    %3017 = vmatpush.msra.mxu0 %v2799
    %3018 = vmatpush.msra.mxu0 %v2797
    %3019 = vmatpush.msra.mxu0 %v2795
    %3020 = vmatpush.msra.mxu0 %v2793
    %3021 = vmatpush.msra.mxu0 %v2791
    %3022 = vmatmul.f32.gmra.mxu0 %v2632
    %v3023 = vpop.f32.mrf.mxu0
    %v3024 = vadd.f32 %v2911, %v3023
    %3025 = vmatmul.f32.gmra.mxu0 %v2636
    %v3026 = vpop.f32.mrf.mxu0
    %v3027 = vadd.f32 %v2914, %v3026
    %3028 = vmatmul.f32.gmra.mxu0 %v2640
    %v3029 = vpop.f32.mrf.mxu0
    %v3030 = vadd.f32 %v2917, %v3029
    %3031 = vmatmul.f32.gmra.mxu0 %v2644
    %v3032 = vpop.f32.mrf.mxu0
    %v3033 = vadd.f32 %v2920, %v3032
    %3034 = vmatmul.f32.gmra.mxu0 %v2648
    %v3035 = vpop.f32.mrf.mxu0
    %v3036 = vadd.f32 %v2923, %v3035
    %3037 = vmatmul.f32.gmra.mxu0 %v2652
    %v3038 = vpop.f32.mrf.mxu0
    %v3039 = vadd.f32 %v2926, %v3038
    %3040 = vmatmul.f32.gmra.mxu0 %v2656
    %v3041 = vpop.f32.mrf.mxu0
    %v3042 = vadd.f32 %v2929, %v3041
    %3043 = vmatmul.f32.gmra.mxu0 %v2660
    %v3044 = vpop.f32.mrf.mxu0
    %v3045 = vadd.f32 %v2932, %v3044
    %3046 = vmatmul.f32.gmra.mxu0 %v2664
    %v3047 = vpop.f32.mrf.mxu0
    %v3048 = vadd.f32 %v2935, %v3047
    %3049 = vmatmul.f32.gmra.mxu0 %v2668
    %v3050 = vpop.f32.mrf.mxu0
    %v3051 = vadd.f32 %v2938, %v3050
    %3052 = vmatmul.f32.gmra.mxu0 %v2672
    %v3053 = vpop.f32.mrf.mxu0
    %v3054 = vadd.f32 %v2941, %v3053
    %3055 = vmatmul.f32.gmra.mxu0 %v2676
    %v3056 = vpop.f32.mrf.mxu0
    %v3057 = vadd.f32 %v2944, %v3056
    %3058 = vmatmul.f32.gmra.mxu0 %v2680
    %v3059 = vpop.f32.mrf.mxu0
    %v3060 = vadd.f32 %v2947, %v3059
    %3061 = vmatmul.f32.gmra.mxu0 %v2684
    %v3062 = vpop.f32.mrf.mxu0
    %v3063 = vadd.f32 %v2950, %v3062
    %3064 = vmatmul.f32.gmra.mxu0 %v2688
    %v3065 = vpop.f32.mrf.mxu0
    %v3066 = vadd.f32 %v2953, %v3065
    %3067 = vmatmul.f32.gmra.mxu0 %v2692
    %v3068 = vpop.f32.mrf.mxu0
    %v3069 = vadd.f32 %v2956, %v3068
    %3070 = vmatmul.f32.gmra.mxu0 %v2696
    %v3071 = vpop.f32.mrf.mxu0
    %v3072 = vadd.f32 %v2959, %v3071
    %3073 = vmatmul.f32.gmra.mxu0 %v2700
    %v3074 = vpop.f32.mrf.mxu0
    %v3075 = vadd.f32 %v2962, %v3074
    %3076 = vmatmul.f32.gmra.mxu0 %v2704
    %v3077 = vpop.f32.mrf.mxu0
    %v3078 = vadd.f32 %v2965, %v3077
    %3079 = vmatmul.f32.gmra.mxu0 %v2708
    %v3080 = vpop.f32.mrf.mxu0
    %v3081 = vadd.f32 %v2968, %v3080
    %3082 = vmatmul.f32.gmra.mxu0 %v2712
    %v3083 = vpop.f32.mrf.mxu0
    %v3084 = vadd.f32 %v2971, %v3083
    %3085 = vmatmul.f32.gmra.mxu0 %v2716
    %v3086 = vpop.f32.mrf.mxu0
    %v3087 = vadd.f32 %v2974, %v3086
    %3088 = vmatmul.f32.gmra.mxu0 %v2720
    %v3089 = vpop.f32.mrf.mxu0
    %v3090 = vadd.f32 %v2977, %v3089
    %3091 = vmatmul.f32.gmra.mxu0 %v2724
    %v3092 = vpop.f32.mrf.mxu0
    %v3093 = vadd.f32 %v2980, %v3092
    %3094 = vmatmul.f32.gmra.mxu0 %v2728
    %v3095 = vpop.f32.mrf.mxu0
    %v3096 = vadd.f32 %v2983, %v3095
    %3097 = vmatmul.f32.gmra.mxu0 %v2732
    %v3098 = vpop.f32.mrf.mxu0
    %v3099 = vadd.f32 %v2986, %v3098
    %3100 = vmatmul.f32.gmra.mxu0 %v2736
    %v3101 = vpop.f32.mrf.mxu0
    %v3102 = vadd.f32 %v2989, %v3101
    %3103 = vmatmul.f32.gmra.mxu0 %v2740
    %v3104 = vpop.f32.mrf.mxu0
    %v3105 = vadd.f32 %v2992, %v3104
    %3106 = vmatmul.f32.gmra.mxu0 %v2744
    %v3107 = vpop.f32.mrf.mxu0
    %v3108 = vadd.f32 %v2995, %v3107
    %3109 = vmatmul.f32.gmra.mxu0 %v2748
    %v3110 = vpop.f32.mrf.mxu0
    %v3111 = vadd.f32 %v2998, %v3110
    %3112 = vmatmul.f32.gmra.mxu0 %v2752
    %v3113 = vpop.f32.mrf.mxu0
    %v3114 = vadd.f32 %v3001, %v3113
    %3115 = vmatmul.f32.gmra.mxu0 %v2756
    %v3116 = vpop.f32.mrf.mxu0
    %v3117 = vadd.f32 %v3004, %v3116
    %3118 = vdwg.mxu0
    %3119 = vmatpush.msra.mxu0 %v2853
    %3120 = vmatpush.msra.mxu0 %v2851
    %3121 = vmatpush.msra.mxu0 %v2849
    %3122 = vmatpush.msra.mxu0 %v2847
    %3123 = vmatpush.msra.mxu0 %v2845
    %3124 = vmatpush.msra.mxu0 %v2843
    %3125 = vmatpush.msra.mxu0 %v2841
    %3126 = vmatpush.msra.mxu0 %v2839
    %3127 = vmatpush.msra.mxu0 %v2837
    %3128 = vmatpush.msra.mxu0 %v2835
    %3129 = vmatpush.msra.mxu0 %v2833
    %3130 = vmatpush.msra.mxu0 %v2831
    %3131 = vmatpush.msra.mxu0 %v2829
    %3132 = vmatpush.msra.mxu0 %v2827
    %3133 = vmatpush.msra.mxu0 %v2825
    %3134 = vmatpush.msra.mxu0 %v2823
    %3135 = vmatmul.f32.gmra.mxu0 %v2633
    %v3136 = vpop.f32.mrf.mxu0
    %v3137 = vadd.f32 %v3024, %v3136
    %3138 = vmatmul.f32.gmra.mxu0 %v2637
    %v3139 = vpop.f32.mrf.mxu0
    %v3140 = vadd.f32 %v3027, %v3139
    %3141 = vmatmul.f32.gmra.mxu0 %v2641
    %v3142 = vpop.f32.mrf.mxu0
    %v3143 = vadd.f32 %v3030, %v3142
    %3144 = vmatmul.f32.gmra.mxu0 %v2645
    %v3145 = vpop.f32.mrf.mxu0
    %v3146 = vadd.f32 %v3033, %v3145
    %3147 = vmatmul.f32.gmra.mxu0 %v2649
    %v3148 = vpop.f32.mrf.mxu0
    %v3149 = vadd.f32 %v3036, %v3148
    %3150 = vmatmul.f32.gmra.mxu0 %v2653
    %v3151 = vpop.f32.mrf.mxu0
    %v3152 = vadd.f32 %v3039, %v3151
    %3153 = vmatmul.f32.gmra.mxu0 %v2657
    %v3154 = vpop.f32.mrf.mxu0
    %v3155 = vadd.f32 %v3042, %v3154
    %3156 = vmatmul.f32.gmra.mxu0 %v2661
    %v3157 = vpop.f32.mrf.mxu0
    %v3158 = vadd.f32 %v3045, %v3157
    %3159 = vmatmul.f32.gmra.mxu0 %v2665
    %v3160 = vpop.f32.mrf.mxu0
    %v3161 = vadd.f32 %v3048, %v3160
    %3162 = vmatmul.f32.gmra.mxu0 %v2669
    %v3163 = vpop.f32.mrf.mxu0
    %v3164 = vadd.f32 %v3051, %v3163
    %3165 = vmatmul.f32.gmra.mxu0 %v2673
    %v3166 = vpop.f32.mrf.mxu0
    %v3167 = vadd.f32 %v3054, %v3166
    %3168 = vmatmul.f32.gmra.mxu0 %v2677
    %v3169 = vpop.f32.mrf.mxu0
    %v3170 = vadd.f32 %v3057, %v3169
    %3171 = vmatmul.f32.gmra.mxu0 %v2681
    %v3172 = vpop.f32.mrf.mxu0
    %v3173 = vadd.f32 %v3060, %v3172
    %3174 = vmatmul.f32.gmra.mxu0 %v2685
    %v3175 = vpop.f32.mrf.mxu0
    %v3176 = vadd.f32 %v3063, %v3175
    %3177 = vmatmul.f32.gmra.mxu0 %v2689
    %v3178 = vpop.f32.mrf.mxu0
    %v3179 = vadd.f32 %v3066, %v3178
    %3180 = vmatmul.f32.gmra.mxu0 %v2693
    %v3181 = vpop.f32.mrf.mxu0
    %v3182 = vadd.f32 %v3069, %v3181
    %3183 = vmatmul.f32.gmra.mxu0 %v2697
    %v3184 = vpop.f32.mrf.mxu0
    %v3185 = vadd.f32 %v3072, %v3184
    %3186 = vmatmul.f32.gmra.mxu0 %v2701
    %v3187 = vpop.f32.mrf.mxu0
    %v3188 = vadd.f32 %v3075, %v3187
    %3189 = vmatmul.f32.gmra.mxu0 %v2705
    %v3190 = vpop.f32.mrf.mxu0
    %v3191 = vadd.f32 %v3078, %v3190
    %3192 = vmatmul.f32.gmra.mxu0 %v2709
    %v3193 = vpop.f32.mrf.mxu0
    %v3194 = vadd.f32 %v3081, %v3193
    %3195 = vmatmul.f32.gmra.mxu0 %v2713
    %v3196 = vpop.f32.mrf.mxu0
    %v3197 = vadd.f32 %v3084, %v3196
    %3198 = vmatmul.f32.gmra.mxu0 %v2717
    %v3199 = vpop.f32.mrf.mxu0
    %v3200 = vadd.f32 %v3087, %v3199
    %3201 = vmatmul.f32.gmra.mxu0 %v2721
    %v3202 = vpop.f32.mrf.mxu0
    %v3203 = vadd.f32 %v3090, %v3202
    %3204 = vmatmul.f32.gmra.mxu0 %v2725
    %v3205 = vpop.f32.mrf.mxu0
    %v3206 = vadd.f32 %v3093, %v3205
    %3207 = vmatmul.f32.gmra.mxu0 %v2729
    %v3208 = vpop.f32.mrf.mxu0
    %v3209 = vadd.f32 %v3096, %v3208
    %3210 = vmatmul.f32.gmra.mxu0 %v2733
    %v3211 = vpop.f32.mrf.mxu0
    %v3212 = vadd.f32 %v3099, %v3211
    %3213 = vmatmul.f32.gmra.mxu0 %v2737
    %v3214 = vpop.f32.mrf.mxu0
    %v3215 = vadd.f32 %v3102, %v3214
    %3216 = vmatmul.f32.gmra.mxu0 %v2741
    %v3217 = vpop.f32.mrf.mxu0
    %v3218 = vadd.f32 %v3105, %v3217
    %3219 = vmatmul.f32.gmra.mxu0 %v2745
    %v3220 = vpop.f32.mrf.mxu0
    %v3221 = vadd.f32 %v3108, %v3220
    %3222 = vmatmul.f32.gmra.mxu0 %v2749
    %v3223 = vpop.f32.mrf.mxu0
    %v3224 = vadd.f32 %v3111, %v3223
    %3225 = vmatmul.f32.gmra.mxu0 %v2753
    %v3226 = vpop.f32.mrf.mxu0
    %v3227 = vadd.f32 %v3114, %v3226
    %3228 = vmatmul.f32.gmra.mxu0 %v2757
    %v3229 = vpop.f32.mrf.mxu0
    %v3230 = vadd.f32 %v3117, %v3229
    %3231 = vdwg.mxu0
    %3232 = vmatpush.msra.mxu0 %v2885
    %3233 = vmatpush.msra.mxu0 %v2883
    %3234 = vmatpush.msra.mxu0 %v2881
    %3235 = vmatpush.msra.mxu0 %v2879
    %3236 = vmatpush.msra.mxu0 %v2877
    %3237 = vmatpush.msra.mxu0 %v2875
    %3238 = vmatpush.msra.mxu0 %v2873
    %3239 = vmatpush.msra.mxu0 %v2871
    %3240 = vmatpush.msra.mxu0 %v2869
    %3241 = vmatpush.msra.mxu0 %v2867
    %3242 = vmatpush.msra.mxu0 %v2865
    %3243 = vmatpush.msra.mxu0 %v2863
    %3244 = vmatpush.msra.mxu0 %v2861
    %3245 = vmatpush.msra.mxu0 %v2859
    %3246 = vmatpush.msra.mxu0 %v2857
    %3247 = vmatpush.msra.mxu0 %v2855
    %3248 = vmatmul.f32.gmra.mxu0 %v2634
    %v3249 = vpop.f32.mrf.mxu0
    %v3250 = vadd.f32 %v3137, %v3249
    %3251 = vmatmul.f32.gmra.mxu0 %v2638
    %v3252 = vpop.f32.mrf.mxu0
    %v3253 = vadd.f32 %v3140, %v3252
    %3254 = vmatmul.f32.gmra.mxu0 %v2642
    %v3255 = vpop.f32.mrf.mxu0
    %v3256 = vadd.f32 %v3143, %v3255
    %3257 = vmatmul.f32.gmra.mxu0 %v2646
    %v3258 = vpop.f32.mrf.mxu0
    %v3259 = vadd.f32 %v3146, %v3258
    %3260 = vmatmul.f32.gmra.mxu0 %v2650
    %v3261 = vpop.f32.mrf.mxu0
    %v3262 = vadd.f32 %v3149, %v3261
    %3263 = vmatmul.f32.gmra.mxu0 %v2654
    %v3264 = vpop.f32.mrf.mxu0
    %v3265 = vadd.f32 %v3152, %v3264
    %3266 = vmatmul.f32.gmra.mxu0 %v2658
    %v3267 = vpop.f32.mrf.mxu0
    %v3268 = vadd.f32 %v3155, %v3267
    %3269 = vmatmul.f32.gmra.mxu0 %v2662
    %v3270 = vpop.f32.mrf.mxu0
    %v3271 = vadd.f32 %v3158, %v3270
    %3272 = vmatmul.f32.gmra.mxu0 %v2666
    %v3273 = vpop.f32.mrf.mxu0
    %v3274 = vadd.f32 %v3161, %v3273
    %3275 = vmatmul.f32.gmra.mxu0 %v2670
    %v3276 = vpop.f32.mrf.mxu0
    %v3277 = vadd.f32 %v3164, %v3276
    %3278 = vmatmul.f32.gmra.mxu0 %v2674
    %v3279 = vpop.f32.mrf.mxu0
    %v3280 = vadd.f32 %v3167, %v3279
    %3281 = vmatmul.f32.gmra.mxu0 %v2678
    %v3282 = vpop.f32.mrf.mxu0
    %v3283 = vadd.f32 %v3170, %v3282
    %3284 = vmatmul.f32.gmra.mxu0 %v2682
    %v3285 = vpop.f32.mrf.mxu0
    %v3286 = vadd.f32 %v3173, %v3285
    %3287 = vmatmul.f32.gmra.mxu0 %v2686
    %v3288 = vpop.f32.mrf.mxu0
    %v3289 = vadd.f32 %v3176, %v3288
    %3290 = vmatmul.f32.gmra.mxu0 %v2690
    %v3291 = vpop.f32.mrf.mxu0
    %v3292 = vadd.f32 %v3179, %v3291
    %3293 = vmatmul.f32.gmra.mxu0 %v2694
    %v3294 = vpop.f32.mrf.mxu0
    %v3295 = vadd.f32 %v3182, %v3294
    %3296 = vmatmul.f32.gmra.mxu0 %v2698
    %v3297 = vpop.f32.mrf.mxu0
    %v3298 = vadd.f32 %v3185, %v3297
    %3299 = vmatmul.f32.gmra.mxu0 %v2702
    %v3300 = vpop.f32.mrf.mxu0
    %v3301 = vadd.f32 %v3188, %v3300
    %3302 = vmatmul.f32.gmra.mxu0 %v2706
    %v3303 = vpop.f32.mrf.mxu0
    %v3304 = vadd.f32 %v3191, %v3303
    %3305 = vmatmul.f32.gmra.mxu0 %v2710
    %v3306 = vpop.f32.mrf.mxu0
    %v3307 = vadd.f32 %v3194, %v3306
    %3308 = vmatmul.f32.gmra.mxu0 %v2714
    %v3309 = vpop.f32.mrf.mxu0
    %v3310 = vadd.f32 %v3197, %v3309
    %3311 = vmatmul.f32.gmra.mxu0 %v2718
    %v3312 = vpop.f32.mrf.mxu0
    %v3313 = vadd.f32 %v3200, %v3312
    %3314 = vmatmul.f32.gmra.mxu0 %v2722
    %v3315 = vpop.f32.mrf.mxu0
    %v3316 = vadd.f32 %v3203, %v3315
    %3317 = vmatmul.f32.gmra.mxu0 %v2726
    %v3318 = vpop.f32.mrf.mxu0
    %v3319 = vadd.f32 %v3206, %v3318
    %3320 = vmatmul.f32.gmra.mxu0 %v2730
    %v3321 = vpop.f32.mrf.mxu0
    %v3322 = vadd.f32 %v3209, %v3321
    %3323 = vmatmul.f32.gmra.mxu0 %v2734
    %v3324 = vpop.f32.mrf.mxu0
    %v3325 = vadd.f32 %v3212, %v3324
    %3326 = vmatmul.f32.gmra.mxu0 %v2738
    %v3327 = vpop.f32.mrf.mxu0
    %v3328 = vadd.f32 %v3215, %v3327
    %3329 = vmatmul.f32.gmra.mxu0 %v2742
    %v3330 = vpop.f32.mrf.mxu0
    %v3331 = vadd.f32 %v3218, %v3330
    %3332 = vmatmul.f32.gmra.mxu0 %v2746
    %v3333 = vpop.f32.mrf.mxu0
    %v3334 = vadd.f32 %v3221, %v3333
    %3335 = vmatmul.f32.gmra.mxu0 %v2750
    %v3336 = vpop.f32.mrf.mxu0
    %v3337 = vadd.f32 %v3224, %v3336
    %3338 = vmatmul.f32.gmra.mxu0 %v2754
    %v3339 = vpop.f32.mrf.mxu0
    %v3340 = vadd.f32 %v3227, %v3339
    %3341 = vmatmul.f32.gmra.mxu0 %v2758
    %v3342 = vpop.f32.mrf.mxu0
    %v3343 = vadd.f32 %v3230, %v3342
    %3344 = vdwg.mxu0
    %3345 = vmatpush.msra.mxu0 %v2790
    %3346 = vmatpush.msra.mxu0 %v2788
    %3347 = vmatpush.msra.mxu0 %v2786
    %3348 = vmatpush.msra.mxu0 %v2784
    %3349 = vmatpush.msra.mxu0 %v2782
    %3350 = vmatpush.msra.mxu0 %v2780
    %3351 = vmatpush.msra.mxu0 %v2778
    %3352 = vmatpush.msra.mxu0 %v2776
    %3353 = vmatpush.msra.mxu0 %v2774
    %3354 = vmatpush.msra.mxu0 %v2772
    %3355 = vmatpush.msra.mxu0 %v2770
    %3356 = vmatpush.msra.mxu0 %v2768
    %3357 = vmatpush.msra.mxu0 %v2766
    %3358 = vmatpush.msra.mxu0 %v2764
    %3359 = vmatpush.msra.mxu0 %v2762
    %3360 = vmatpush.msra.mxu0 %v2760
    %3361 = vmatmul.f32.gmra.mxu0 %v2631
    %v3362 = vpop.f32.mrf.mxu0
    %v3363 = vadd.f32 %v2890, %v3362
    %3364 = vmatmul.f32.gmra.mxu0 %v2635
    %v3365 = vpop.f32.mrf.mxu0
    %v3366 = vadd.f32 %v2890, %v3365
    %3367 = vmatmul.f32.gmra.mxu0 %v2639
    %v3368 = vpop.f32.mrf.mxu0
    %v3369 = vadd.f32 %v2890, %v3368
    %3370 = vmatmul.f32.gmra.mxu0 %v2643
    %v3371 = vpop.f32.mrf.mxu0
    %v3372 = vadd.f32 %v2890, %v3371
    %3373 = vmatmul.f32.gmra.mxu0 %v2647
    %v3374 = vpop.f32.mrf.mxu0
    %v3375 = vadd.f32 %v2890, %v3374
    %3376 = vmatmul.f32.gmra.mxu0 %v2651
    %v3377 = vpop.f32.mrf.mxu0
    %v3378 = vadd.f32 %v2890, %v3377
    %3379 = vmatmul.f32.gmra.mxu0 %v2655
    %v3380 = vpop.f32.mrf.mxu0
    %v3381 = vadd.f32 %v2890, %v3380
    %3382 = vmatmul.f32.gmra.mxu0 %v2659
    %v3383 = vpop.f32.mrf.mxu0
    %v3384 = vadd.f32 %v2890, %v3383
    %3385 = vmatmul.f32.gmra.mxu0 %v2663
    %v3386 = vpop.f32.mrf.mxu0
    %v3387 = vadd.f32 %v2890, %v3386
    %3388 = vmatmul.f32.gmra.mxu0 %v2667
    %v3389 = vpop.f32.mrf.mxu0
    %v3390 = vadd.f32 %v2890, %v3389
    %3391 = vmatmul.f32.gmra.mxu0 %v2671
    %v3392 = vpop.f32.mrf.mxu0
    %v3393 = vadd.f32 %v2890, %v3392
    %3394 = vmatmul.f32.gmra.mxu0 %v2675
    %v3395 = vpop.f32.mrf.mxu0
    %v3396 = vadd.f32 %v2890, %v3395
    %3397 = vmatmul.f32.gmra.mxu0 %v2679
    %v3398 = vpop.f32.mrf.mxu0
    %v3399 = vadd.f32 %v2890, %v3398
    %3400 = vmatmul.f32.gmra.mxu0 %v2683
    %v3401 = vpop.f32.mrf.mxu0
    %v3402 = vadd.f32 %v2890, %v3401
    %3403 = vmatmul.f32.gmra.mxu0 %v2687
    %v3404 = vpop.f32.mrf.mxu0
    %v3405 = vadd.f32 %v2890, %v3404
    %3406 = vmatmul.f32.gmra.mxu0 %v2691
    %v3407 = vpop.f32.mrf.mxu0
    %v3408 = vadd.f32 %v2890, %v3407
    %3409 = vmatmul.f32.gmra.mxu0 %v2695
    %v3410 = vpop.f32.mrf.mxu0
    %v3411 = vadd.f32 %v2890, %v3410
    %3412 = vmatmul.f32.gmra.mxu0 %v2699
    %v3413 = vpop.f32.mrf.mxu0
    %v3414 = vadd.f32 %v2890, %v3413
    %3415 = vmatmul.f32.gmra.mxu0 %v2703
    %v3416 = vpop.f32.mrf.mxu0
    %v3417 = vadd.f32 %v2890, %v3416
    %3418 = vmatmul.f32.gmra.mxu0 %v2707
    %v3419 = vpop.f32.mrf.mxu0
    %v3420 = vadd.f32 %v2890, %v3419
    %3421 = vmatmul.f32.gmra.mxu0 %v2711
    %v3422 = vpop.f32.mrf.mxu0
    %v3423 = vadd.f32 %v2890, %v3422
    %3424 = vmatmul.f32.gmra.mxu0 %v2715
    %v3425 = vpop.f32.mrf.mxu0
    %v3426 = vadd.f32 %v2890, %v3425
    %3427 = vmatmul.f32.gmra.mxu0 %v2719
    %v3428 = vpop.f32.mrf.mxu0
    %v3429 = vadd.f32 %v2890, %v3428
    %3430 = vmatmul.f32.gmra.mxu0 %v2723
    %v3431 = vpop.f32.mrf.mxu0
    %v3432 = vadd.f32 %v2890, %v3431
    %3433 = vmatmul.f32.gmra.mxu0 %v2727
    %v3434 = vpop.f32.mrf.mxu0
    %v3435 = vadd.f32 %v2890, %v3434
    %3436 = vmatmul.f32.gmra.mxu0 %v2731
    %v3437 = vpop.f32.mrf.mxu0
    %v3438 = vadd.f32 %v2890, %v3437
    %3439 = vmatmul.f32.gmra.mxu0 %v2735
    %v3440 = vpop.f32.mrf.mxu0
    %v3441 = vadd.f32 %v2890, %v3440
    %3442 = vmatmul.f32.gmra.mxu0 %v2739
    %v3443 = vpop.f32.mrf.mxu0
    %v3444 = vadd.f32 %v2890, %v3443
    %3445 = vmatmul.f32.gmra.mxu0 %v2743
    %v3446 = vpop.f32.mrf.mxu0
    %v3447 = vadd.f32 %v2890, %v3446
    %3448 = vmatmul.f32.gmra.mxu0 %v2747
    %v3449 = vpop.f32.mrf.mxu0
    %v3450 = vadd.f32 %v2890, %v3449
    %3451 = vmatmul.f32.gmra.mxu0 %v2751
    %v3452 = vpop.f32.mrf.mxu0
    %v3453 = vadd.f32 %v2890, %v3452
    %3454 = vmatmul.f32.gmra.mxu0 %v2755
    %v3455 = vpop.f32.mrf.mxu0
    %v3456 = vadd.f32 %v2890, %v3455
    %3457 = vdwg.mxu0
    %3458 = vmatpush.msra.mxu0 %v2822
    %3459 = vmatpush.msra.mxu0 %v2820
    %3460 = vmatpush.msra.mxu0 %v2818
    %3461 = vmatpush.msra.mxu0 %v2816
    %3462 = vmatpush.msra.mxu0 %v2814
    %3463 = vmatpush.msra.mxu0 %v2812
    %3464 = vmatpush.msra.mxu0 %v2810
    %3465 = vmatpush.msra.mxu0 %v2808
    %3466 = vmatpush.msra.mxu0 %v2806
    %3467 = vmatpush.msra.mxu0 %v2804
    %3468 = vmatpush.msra.mxu0 %v2802
    %3469 = vmatpush.msra.mxu0 %v2800
    %3470 = vmatpush.msra.mxu0 %v2798
    %3471 = vmatpush.msra.mxu0 %v2796
    %3472 = vmatpush.msra.mxu0 %v2794
    %3473 = vmatpush.msra.mxu0 %v2792
    %3474 = vmatmul.f32.gmra.mxu0 %v2632
    %v3475 = vpop.f32.mrf.mxu0
    %v3476 = vadd.f32 %v3363, %v3475
    %3477 = vmatmul.f32.gmra.mxu0 %v2636
    %v3478 = vpop.f32.mrf.mxu0
    %v3479 = vadd.f32 %v3366, %v3478
    %3480 = vmatmul.f32.gmra.mxu0 %v2640
    %v3481 = vpop.f32.mrf.mxu0
    %v3482 = vadd.f32 %v3369, %v3481
    %3483 = vmatmul.f32.gmra.mxu0 %v2644
    %v3484 = vpop.f32.mrf.mxu0
    %v3485 = vadd.f32 %v3372, %v3484
    %3486 = vmatmul.f32.gmra.mxu0 %v2648
    %v3487 = vpop.f32.mrf.mxu0
    %v3488 = vadd.f32 %v3375, %v3487
    %3489 = vmatmul.f32.gmra.mxu0 %v2652
    %v3490 = vpop.f32.mrf.mxu0
    %v3491 = vadd.f32 %v3378, %v3490
    %3492 = vmatmul.f32.gmra.mxu0 %v2656
    %v3493 = vpop.f32.mrf.mxu0
    %v3494 = vadd.f32 %v3381, %v3493
    %3495 = vmatmul.f32.gmra.mxu0 %v2660
    %v3496 = vpop.f32.mrf.mxu0
    %v3497 = vadd.f32 %v3384, %v3496
    %3498 = vmatmul.f32.gmra.mxu0 %v2664
    %v3499 = vpop.f32.mrf.mxu0
    %v3500 = vadd.f32 %v3387, %v3499
    %3501 = vmatmul.f32.gmra.mxu0 %v2668
    %v3502 = vpop.f32.mrf.mxu0
    %v3503 = vadd.f32 %v3390, %v3502
    %3504 = vmatmul.f32.gmra.mxu0 %v2672
    %v3505 = vpop.f32.mrf.mxu0
    %v3506 = vadd.f32 %v3393, %v3505
    %3507 = vmatmul.f32.gmra.mxu0 %v2676
    %v3508 = vpop.f32.mrf.mxu0
    %v3509 = vadd.f32 %v3396, %v3508
    %3510 = vmatmul.f32.gmra.mxu0 %v2680
    %v3511 = vpop.f32.mrf.mxu0
    %v3512 = vadd.f32 %v3399, %v3511
    %3513 = vmatmul.f32.gmra.mxu0 %v2684
    %v3514 = vpop.f32.mrf.mxu0
    %v3515 = vadd.f32 %v3402, %v3514
    %3516 = vmatmul.f32.gmra.mxu0 %v2688
    %v3517 = vpop.f32.mrf.mxu0
    %v3518 = vadd.f32 %v3405, %v3517
    %3519 = vmatmul.f32.gmra.mxu0 %v2692
    %v3520 = vpop.f32.mrf.mxu0
    %v3521 = vadd.f32 %v3408, %v3520
    %3522 = vmatmul.f32.gmra.mxu0 %v2696
    %v3523 = vpop.f32.mrf.mxu0
    %v3524 = vadd.f32 %v3411, %v3523
    %3525 = vmatmul.f32.gmra.mxu0 %v2700
    %v3526 = vpop.f32.mrf.mxu0
    %v3527 = vadd.f32 %v3414, %v3526
    %3528 = vmatmul.f32.gmra.mxu0 %v2704
    %v3529 = vpop.f32.mrf.mxu0
    %v3530 = vadd.f32 %v3417, %v3529
    %3531 = vmatmul.f32.gmra.mxu0 %v2708
    %v3532 = vpop.f32.mrf.mxu0
    %v3533 = vadd.f32 %v3420, %v3532
    %3534 = vmatmul.f32.gmra.mxu0 %v2712
    %v3535 = vpop.f32.mrf.mxu0
    %v3536 = vadd.f32 %v3423, %v3535
    %3537 = vmatmul.f32.gmra.mxu0 %v2716
    %v3538 = vpop.f32.mrf.mxu0
    %v3539 = vadd.f32 %v3426, %v3538
    %3540 = vmatmul.f32.gmra.mxu0 %v2720
    %v3541 = vpop.f32.mrf.mxu0
    %v3542 = vadd.f32 %v3429, %v3541
    %3543 = vmatmul.f32.gmra.mxu0 %v2724
    %v3544 = vpop.f32.mrf.mxu0
    %v3545 = vadd.f32 %v3432, %v3544
    %3546 = vmatmul.f32.gmra.mxu0 %v2728
    %v3547 = vpop.f32.mrf.mxu0
    %v3548 = vadd.f32 %v3435, %v3547
    %3549 = vmatmul.f32.gmra.mxu0 %v2732
    %v3550 = vpop.f32.mrf.mxu0
    %v3551 = vadd.f32 %v3438, %v3550
    %3552 = vmatmul.f32.gmra.mxu0 %v2736
    %v3553 = vpop.f32.mrf.mxu0
    %v3554 = vadd.f32 %v3441, %v3553
    %3555 = vmatmul.f32.gmra.mxu0 %v2740
    %v3556 = vpop.f32.mrf.mxu0
    %v3557 = vadd.f32 %v3444, %v3556
    %3558 = vmatmul.f32.gmra.mxu0 %v2744
    %v3559 = vpop.f32.mrf.mxu0
    %v3560 = vadd.f32 %v3447, %v3559
    %3561 = vmatmul.f32.gmra.mxu0 %v2748
    %v3562 = vpop.f32.mrf.mxu0
    %v3563 = vadd.f32 %v3450, %v3562
    %3564 = vmatmul.f32.gmra.mxu0 %v2752
    %v3565 = vpop.f32.mrf.mxu0
    %v3566 = vadd.f32 %v3453, %v3565
    %3567 = vmatmul.f32.gmra.mxu0 %v2756
    %v3568 = vpop.f32.mrf.mxu0
    %v3569 = vadd.f32 %v3456, %v3568
    %3570 = vdwg.mxu0
    %3571 = vmatpush.msra.mxu0 %v2854
    %3572 = vmatpush.msra.mxu0 %v2852
    %3573 = vmatpush.msra.mxu0 %v2850
    %3574 = vmatpush.msra.mxu0 %v2848
    %3575 = vmatpush.msra.mxu0 %v2846
    %3576 = vmatpush.msra.mxu0 %v2844
    %3577 = vmatpush.msra.mxu0 %v2842
    %3578 = vmatpush.msra.mxu0 %v2840
    %3579 = vmatpush.msra.mxu0 %v2838
    %3580 = vmatpush.msra.mxu0 %v2836
    %3581 = vmatpush.msra.mxu0 %v2834
    %3582 = vmatpush.msra.mxu0 %v2832
    %3583 = vmatpush.msra.mxu0 %v2830
    %3584 = vmatpush.msra.mxu0 %v2828
    %3585 = vmatpush.msra.mxu0 %v2826
    %3586 = vmatpush.msra.mxu0 %v2824
    %3587 = vmatmul.f32.gmra.mxu0 %v2633
    %v3588 = vpop.f32.mrf.mxu0
    %v3589 = vadd.f32 %v3476, %v3588
    %3590 = vmatmul.f32.gmra.mxu0 %v2637
    %v3591 = vpop.f32.mrf.mxu0
    %v3592 = vadd.f32 %v3479, %v3591
    %3593 = vmatmul.f32.gmra.mxu0 %v2641
    %v3594 = vpop.f32.mrf.mxu0
    %v3595 = vadd.f32 %v3482, %v3594
    %3596 = vmatmul.f32.gmra.mxu0 %v2645
    %v3597 = vpop.f32.mrf.mxu0
    %v3598 = vadd.f32 %v3485, %v3597
    %3599 = vmatmul.f32.gmra.mxu0 %v2649
    %v3600 = vpop.f32.mrf.mxu0
    %v3601 = vadd.f32 %v3488, %v3600
    %3602 = vmatmul.f32.gmra.mxu0 %v2653
    %v3603 = vpop.f32.mrf.mxu0
    %v3604 = vadd.f32 %v3491, %v3603
    %3605 = vmatmul.f32.gmra.mxu0 %v2657
    %v3606 = vpop.f32.mrf.mxu0
    %v3607 = vadd.f32 %v3494, %v3606
    %3608 = vmatmul.f32.gmra.mxu0 %v2661
    %v3609 = vpop.f32.mrf.mxu0
    %v3610 = vadd.f32 %v3497, %v3609
    %3611 = vmatmul.f32.gmra.mxu0 %v2665
    %v3612 = vpop.f32.mrf.mxu0
    %v3613 = vadd.f32 %v3500, %v3612
    %3614 = vmatmul.f32.gmra.mxu0 %v2669
    %v3615 = vpop.f32.mrf.mxu0
    %v3616 = vadd.f32 %v3503, %v3615
    %3617 = vmatmul.f32.gmra.mxu0 %v2673
    %v3618 = vpop.f32.mrf.mxu0
    %v3619 = vadd.f32 %v3506, %v3618
    %3620 = vmatmul.f32.gmra.mxu0 %v2677
    %v3621 = vpop.f32.mrf.mxu0
    %v3622 = vadd.f32 %v3509, %v3621
    %3623 = vmatmul.f32.gmra.mxu0 %v2681
    %v3624 = vpop.f32.mrf.mxu0
    %v3625 = vadd.f32 %v3512, %v3624
    %3626 = vmatmul.f32.gmra.mxu0 %v2685
    %v3627 = vpop.f32.mrf.mxu0
    %v3628 = vadd.f32 %v3515, %v3627
    %3629 = vmatmul.f32.gmra.mxu0 %v2689
    %v3630 = vpop.f32.mrf.mxu0
    %v3631 = vadd.f32 %v3518, %v3630
    %3632 = vmatmul.f32.gmra.mxu0 %v2693
    %v3633 = vpop.f32.mrf.mxu0
    %v3634 = vadd.f32 %v3521, %v3633
    %3635 = vmatmul.f32.gmra.mxu0 %v2697
    %v3636 = vpop.f32.mrf.mxu0
    %v3637 = vadd.f32 %v3524, %v3636
    %3638 = vmatmul.f32.gmra.mxu0 %v2701
    %v3639 = vpop.f32.mrf.mxu0
    %v3640 = vadd.f32 %v3527, %v3639
    %3641 = vmatmul.f32.gmra.mxu0 %v2705
    %v3642 = vpop.f32.mrf.mxu0
    %v3643 = vadd.f32 %v3530, %v3642
    %3644 = vmatmul.f32.gmra.mxu0 %v2709
    %v3645 = vpop.f32.mrf.mxu0
    %v3646 = vadd.f32 %v3533, %v3645
    %3647 = vmatmul.f32.gmra.mxu0 %v2713
    %v3648 = vpop.f32.mrf.mxu0
    %v3649 = vadd.f32 %v3536, %v3648
    %3650 = vmatmul.f32.gmra.mxu0 %v2717
    %v3651 = vpop.f32.mrf.mxu0
    %v3652 = vadd.f32 %v3539, %v3651
    %3653 = vmatmul.f32.gmra.mxu0 %v2721
    %v3654 = vpop.f32.mrf.mxu0
    %v3655 = vadd.f32 %v3542, %v3654
    %3656 = vmatmul.f32.gmra.mxu0 %v2725
    %v3657 = vpop.f32.mrf.mxu0
    %v3658 = vadd.f32 %v3545, %v3657
    %3659 = vmatmul.f32.gmra.mxu0 %v2729
    %v3660 = vpop.f32.mrf.mxu0
    %v3661 = vadd.f32 %v3548, %v3660
    %3662 = vmatmul.f32.gmra.mxu0 %v2733
    %v3663 = vpop.f32.mrf.mxu0
    %v3664 = vadd.f32 %v3551, %v3663
    %3665 = vmatmul.f32.gmra.mxu0 %v2737
    %v3666 = vpop.f32.mrf.mxu0
    %v3667 = vadd.f32 %v3554, %v3666
    %3668 = vmatmul.f32.gmra.mxu0 %v2741
    %v3669 = vpop.f32.mrf.mxu0
    %v3670 = vadd.f32 %v3557, %v3669
    %3671 = vmatmul.f32.gmra.mxu0 %v2745
    %v3672 = vpop.f32.mrf.mxu0
    %v3673 = vadd.f32 %v3560, %v3672
    %3674 = vmatmul.f32.gmra.mxu0 %v2749
    %v3675 = vpop.f32.mrf.mxu0
    %v3676 = vadd.f32 %v3563, %v3675
    %3677 = vmatmul.f32.gmra.mxu0 %v2753
    %v3678 = vpop.f32.mrf.mxu0
    %v3679 = vadd.f32 %v3566, %v3678
    %3680 = vmatmul.f32.gmra.mxu0 %v2757
    %v3681 = vpop.f32.mrf.mxu0
    %v3682 = vadd.f32 %v3569, %v3681
    %3683 = vdwg.mxu0
    %3684 = vmatpush.msra.mxu0 %v2886
    %3685 = vmatpush.msra.mxu0 %v2884
    %3686 = vmatpush.msra.mxu0 %v2882
    %3687 = vmatpush.msra.mxu0 %v2880
    %3688 = vmatpush.msra.mxu0 %v2878
    %3689 = vmatpush.msra.mxu0 %v2876
    %3690 = vmatpush.msra.mxu0 %v2874
    %3691 = vmatpush.msra.mxu0 %v2872
    %3692 = vmatpush.msra.mxu0 %v2870
    %3693 = vmatpush.msra.mxu0 %v2868
    %3694 = vmatpush.msra.mxu0 %v2866
    %3695 = vmatpush.msra.mxu0 %v2864
    %3696 = vmatpush.msra.mxu0 %v2862
    %3697 = vmatpush.msra.mxu0 %v2860
    %3698 = vmatpush.msra.mxu0 %v2858
    %3699 = vmatpush.msra.mxu0 %v2856
    %3700 = vmatmul.f32.gmra.mxu0 %v2634
    %v3701 = vpop.f32.mrf.mxu0
    %v3702 = vadd.f32 %v3589, %v3701
    %3703 = vmatmul.f32.gmra.mxu0 %v2638
    %v3704 = vpop.f32.mrf.mxu0
    %v3705 = vadd.f32 %v3592, %v3704
    %3706 = vmatmul.f32.gmra.mxu0 %v2642
    %v3707 = vpop.f32.mrf.mxu0
    %v3708 = vadd.f32 %v3595, %v3707
    %3709 = vmatmul.f32.gmra.mxu0 %v2646
    %v3710 = vpop.f32.mrf.mxu0
    %v3711 = vadd.f32 %v3598, %v3710
    %3712 = vmatmul.f32.gmra.mxu0 %v2650
    %v3713 = vpop.f32.mrf.mxu0
    %v3714 = vadd.f32 %v3601, %v3713
    %3715 = vmatmul.f32.gmra.mxu0 %v2654
    %v3716 = vpop.f32.mrf.mxu0
    %v3717 = vadd.f32 %v3604, %v3716
    %3718 = vmatmul.f32.gmra.mxu0 %v2658
    %v3719 = vpop.f32.mrf.mxu0
    %v3720 = vadd.f32 %v3607, %v3719
    %3721 = vmatmul.f32.gmra.mxu0 %v2662
    %v3722 = vpop.f32.mrf.mxu0
    %v3723 = vadd.f32 %v3610, %v3722
    %3724 = vmatmul.f32.gmra.mxu0 %v2666
    %v3725 = vpop.f32.mrf.mxu0
    %v3726 = vadd.f32 %v3613, %v3725
    %3727 = vmatmul.f32.gmra.mxu0 %v2670
    %v3728 = vpop.f32.mrf.mxu0
    %v3729 = vadd.f32 %v3616, %v3728
    %3730 = vmatmul.f32.gmra.mxu0 %v2674
    %v3731 = vpop.f32.mrf.mxu0
    %v3732 = vadd.f32 %v3619, %v3731
    %3733 = vmatmul.f32.gmra.mxu0 %v2678
    %v3734 = vpop.f32.mrf.mxu0
    %v3735 = vadd.f32 %v3622, %v3734
    %3736 = vmatmul.f32.gmra.mxu0 %v2682
    %v3737 = vpop.f32.mrf.mxu0
    %v3738 = vadd.f32 %v3625, %v3737
    %3739 = vmatmul.f32.gmra.mxu0 %v2686
    %v3740 = vpop.f32.mrf.mxu0
    %v3741 = vadd.f32 %v3628, %v3740
    %3742 = vmatmul.f32.gmra.mxu0 %v2690
    %v3743 = vpop.f32.mrf.mxu0
    %v3744 = vadd.f32 %v3631, %v3743
    %3745 = vmatmul.f32.gmra.mxu0 %v2694
    %v3746 = vpop.f32.mrf.mxu0
    %v3747 = vadd.f32 %v3634, %v3746
    %3748 = vmatmul.f32.gmra.mxu0 %v2698
    %v3749 = vpop.f32.mrf.mxu0
    %v3750 = vadd.f32 %v3637, %v3749
    %3751 = vmatmul.f32.gmra.mxu0 %v2702
    %v3752 = vpop.f32.mrf.mxu0
    %v3753 = vadd.f32 %v3640, %v3752
    %3754 = vmatmul.f32.gmra.mxu0 %v2706
    %v3755 = vpop.f32.mrf.mxu0
    %v3756 = vadd.f32 %v3643, %v3755
    %3757 = vmatmul.f32.gmra.mxu0 %v2710
    %v3758 = vpop.f32.mrf.mxu0
    %v3759 = vadd.f32 %v3646, %v3758
    %3760 = vmatmul.f32.gmra.mxu0 %v2714
    %v3761 = vpop.f32.mrf.mxu0
    %v3762 = vadd.f32 %v3649, %v3761
    %3763 = vmatmul.f32.gmra.mxu0 %v2718
    %v3764 = vpop.f32.mrf.mxu0
    %v3765 = vadd.f32 %v3652, %v3764
    %3766 = vmatmul.f32.gmra.mxu0 %v2722
    %v3767 = vpop.f32.mrf.mxu0
    %v3768 = vadd.f32 %v3655, %v3767
    %3769 = vmatmul.f32.gmra.mxu0 %v2726
    %v3770 = vpop.f32.mrf.mxu0
    %v3771 = vadd.f32 %v3658, %v3770
    %3772 = vmatmul.f32.gmra.mxu0 %v2730
    %v3773 = vpop.f32.mrf.mxu0
    %v3774 = vadd.f32 %v3661, %v3773
    %3775 = vmatmul.f32.gmra.mxu0 %v2734
    %v3776 = vpop.f32.mrf.mxu0
    %v3777 = vadd.f32 %v3664, %v3776
    %3778 = vmatmul.f32.gmra.mxu0 %v2738
    %v3779 = vpop.f32.mrf.mxu0
    %v3780 = vadd.f32 %v3667, %v3779
    %3781 = vmatmul.f32.gmra.mxu0 %v2742
    %v3782 = vpop.f32.mrf.mxu0
    %v3783 = vadd.f32 %v3670, %v3782
    %3784 = vmatmul.f32.gmra.mxu0 %v2746
    %v3785 = vpop.f32.mrf.mxu0
    %v3786 = vadd.f32 %v3673, %v3785
    %3787 = vmatmul.f32.gmra.mxu0 %v2750
    %v3788 = vpop.f32.mrf.mxu0
    %v3789 = vadd.f32 %v3676, %v3788
    %3790 = vmatmul.f32.gmra.mxu0 %v2754
    %v3791 = vpop.f32.mrf.mxu0
    %v3792 = vadd.f32 %v3679, %v3791
    %3793 = vmatmul.f32.gmra.mxu0 %v2758
    %v3794 = vpop.f32.mrf.mxu0
    %v3795 = vadd.f32 %v3682, %v3794
    %3796 = vdwg.mxu0
    %v3797 = vmax.f32 %v3250, %v3256
    %v3798 = vmax.f32 %v3253, %v3259
    %v3799 = vmax.f32 %v3797, %v3262
    %v3800 = vmax.f32 %v3798, %v3265
    %v3801 = vmax.f32 %v3799, %v3268
    %v3802 = vmax.f32 %v3800, %v3271
    %v3803 = vmax.f32 %v3801, %v3274
    %v3804 = vmax.f32 %v3802, %v3277
    %v3805 = vmax.f32 %v3803, %v3280
    %v3806 = vmax.f32 %v3804, %v3283
    %v3807 = vmax.f32 %v3805, %v3286
    %v3808 = vmax.f32 %v3806, %v3289
    %v3809 = vmax.f32 %v3807, %v3292
    %v3810 = vmax.f32 %v3808, %v3295
    %v3811 = vmax.f32 %v3809, %v3810
    %v3812 = vrot.slane %v3811, 4
    %v3813 = vmax.f32 %v3811, %v3812
    %v3814 = vrot.slane %v3813, 2
    %v3815 = vmax.f32 %v3813, %v3814
    %v3816 = vrot.slane %v3815, 1
    %v3817 = vmax.f32 %v3815, %v3816
    %v3818 = vmax.f32 %v3702, %v3708
    %v3819 = vmax.f32 %v3705, %v3711
    %v3820 = vmax.f32 %v3818, %v3714
    %v3821 = vmax.f32 %v3819, %v3717
    %v3822 = vmax.f32 %v3820, %v3720
    %v3823 = vmax.f32 %v3821, %v3723
    %v3824 = vmax.f32 %v3822, %v3726
    %v3825 = vmax.f32 %v3823, %v3729
    %v3826 = vmax.f32 %v3824, %v3732
    %v3827 = vmax.f32 %v3825, %v3735
    %v3828 = vmax.f32 %v3826, %v3738
    %v3829 = vmax.f32 %v3827, %v3741
    %v3830 = vmax.f32 %v3828, %v3744
    %v3831 = vmax.f32 %v3829, %v3747
    %v3832 = vmax.f32 %v3830, %v3831
    %v3833 = vrot.slane %v3832, 4
    %v3834 = vmax.f32 %v3832, %v3833
    %v3835 = vrot.slane %v3834, 2
    %v3836 = vmax.f32 %v3834, %v3835
    %v3837 = vrot.slane %v3836, 1
    %v3838 = vmax.f32 %v3836, %v3837
    %v3841 = vrot.slane %v3838, 7
    %vm3842 = vcmask 1040384
    %v3843 = vsel %vm3842, %v3817, %v3841
    %v3845 = vlaneseq
    %vm3846 = vcmp.ge.s32.totalorder %v3845, 0
    %vm3847 = vcmp.lt.s32.totalorder %v3845, 256
    %vm3848 = vmand %vm3846, %vm3847
    %3849 = vst.msk [vmem:[%s9] ss:$2 sm:$0x3] %vm3848, %v3843
    %v3850 = vmax.f32 %v3298, %v3304
    %v3851 = vmax.f32 %v3301, %v3307
    %v3852 = vmax.f32 %v3850, %v3310
    %v3853 = vmax.f32 %v3851, %v3313
    %v3854 = vmax.f32 %v3852, %v3316
    %v3855 = vmax.f32 %v3853, %v3319
    %v3856 = vmax.f32 %v3854, %v3322
    %v3857 = vmax.f32 %v3855, %v3325
    %v3858 = vmax.f32 %v3856, %v3328
    %v3859 = vmax.f32 %v3857, %v3331
    %v3860 = vmax.f32 %v3858, %v3334
    %v3861 = vmax.f32 %v3859, %v3337
    %v3862 = vmax.f32 %v3860, %v3340
    %v3863 = vmax.f32 %v3861, %v3343
    %v3864 = vmax.f32 %v3862, %v3863
    %v3865 = vrot.slane %v3864, 4
    %v3866 = vmax.f32 %v3864, %v3865
    %v3867 = vrot.slane %v3866, 2
    %v3868 = vmax.f32 %v3866, %v3867
    %v3869 = vrot.slane %v3868, 1
    %v3870 = vmax.f32 %v3868, %v3869
    %v3871 = vmax.f32 %v3750, %v3756
    %v3872 = vmax.f32 %v3753, %v3759
    %v3873 = vmax.f32 %v3871, %v3762
    %v3874 = vmax.f32 %v3872, %v3765
    %v3875 = vmax.f32 %v3873, %v3768
    %v3876 = vmax.f32 %v3874, %v3771
    %v3877 = vmax.f32 %v3875, %v3774
    %v3878 = vmax.f32 %v3876, %v3777
    %v3879 = vmax.f32 %v3877, %v3780
    %v3880 = vmax.f32 %v3878, %v3783
    %v3881 = vmax.f32 %v3879, %v3786
    %v3882 = vmax.f32 %v3880, %v3789
    %v3883 = vmax.f32 %v3881, %v3792
    %v3884 = vmax.f32 %v3882, %v3795
    %v3885 = vmax.f32 %v3883, %v3884
    %v3886 = vrot.slane %v3885, 4
    %v3887 = vmax.f32 %v3885, %v3886
    %v3888 = vrot.slane %v3887, 2
    %v3889 = vmax.f32 %v3887, %v3888
    %v3890 = vrot.slane %v3889, 1
    %v3891 = vmax.f32 %v3889, %v3890
    %v3894 = vrot.slane %v3891, 7
    %v3895 = vsel %vm3842, %v3870, %v3894
    %s3897 = scalar_lea.vmem %s9, 1
    %3898 = vst.msk [vmem:[%s3897] ss:$2 sm:$0x3] %vm3848, %v3895
    // Predicated region
    $region50: #{mfm_forward.5} parent=1 // pred_check
      _
    $region51: #{mfm_forward.5} parent=1 // pred_check_branch
      %3900 = sbr.rel (0) target = $region53
    $region52: #{mfm_forward.5} parent=1 // pred_region
      _
    $region53: #{mfm_forward.5} parent=1 // pred_fallthru
      _
    // Predicated region
    $region54: #{mfm_forward.5} parent=1 // pred_check
      _
    $region55: #{mfm_forward.5} parent=1 // pred_check_branch
      %3902 = sbr.rel (0) target = $region57
    $region56: #{mfm_forward.5} parent=1 // pred_region
      _
    $region57: #{mfm_forward.5} parent=1 // pred_fallthru
      _
    %3903 = vsyncpa [#allocation3], 1
    %3904 = vsyncpa [#allocation5], 1

</llo_original>
